<compile_context>
chip_gen: v7x
topology: tpu7x:2x2x1
jax: 0.10.0
libtpu: 0.0.40
codegen_flags: <defaults>
</compile_context>

<pallas_src>
import functools

import jax
import jax.numpy as jnp
from jax.experimental import pallas as pl
from jax.experimental.pallas import tpu as pltpu


# ---------------------------------------------------------------------------
# Fused kernel: BN + 4-phase ConvTranspose2d + ReLU + (concat) + conv1 + ReLU
#               + conv2 + ReLU, all intermediates kept in VMEM.
# ---------------------------------------------------------------------------
def _decoder_block_kernel(x_ref, skip_ref, scale_ref, shift_ref,
                          wt_ref, bt_ref, w1_ref, b1_ref, w2_ref, b2_ref,
                          o_ref, xpad_ref, cat_ref, y1_ref,
                          *, H, W, Cin, Ct, Cskip, C1, C2):
    f32, bf16 = jnp.float32, jnp.bfloat16
    H2, W2 = 2 * H, 2 * W
    Ccat = Ct + Cskip

    # --- zero the halo rows/cols only (interiors are fully overwritten) -----
    xpad_ref[H, :, :] = jnp.zeros((W + 1, Cin), bf16)
    xpad_ref[:, W, :] = jnp.zeros((H + 1, Cin), bf16)
    for ref, c in ((cat_ref, Ccat), (y1_ref, C1)):
        ref[0, :, :] = jnp.zeros((W2 + 2, c), bf16)
        ref[H2 + 1, :, :] = jnp.zeros((W2 + 2, c), bf16)
        ref[:, 0, :] = jnp.zeros((H2 + 2, c), bf16)
        ref[:, W2 + 1, :] = jnp.zeros((H2 + 2, c), bf16)

    # --- Stage 0: NCHW -> channels-last (2-D transpose) + BatchNorm (f32) ---
    xr = jnp.transpose(x_ref[0], (1, 0)).astype(f32)             # (H*W, Cin)
    xr = xr * scale_ref[...] + shift_ref[...]
    xpad_ref[0:H, 0:W, :] = xr.reshape(H, W, Cin).astype(bf16)

    # --- Stage 1: ConvTranspose2d(k3,s2,p1,op1) as one 4-shift K-packed dot -
    lhs = jnp.concatenate(
        [xpad_ref[di:di + H, dj:dj + W, :]
         for di, dj in ((0, 0), (0, 1), (1, 0), (1, 1))],
        axis=-1).reshape(H * W, 4 * Cin)
    u = jnp.dot(lhs, wt_ref[...], preferred_element_type=f32)    # (H*W, 4*Ct)
    u = jnp.maximum(u + bt_ref[...], 0.0)                        # bias + ReLU

    # --- Stage 2: in-VMEM depth-to-space (phase-packed -> spatial) ----------
    # Phase blocks along the lane axis: [(0,0) | (0,1) | (1,0) | (1,1)].
    # All reshapes below keep the last (lane) dim = Ct -> no lane<->sublane
    # relayout; row/col interleave is done via concatenates + leading merges.
    ub = [u[:, p * Ct:(p + 1) * Ct].reshape(H, W, 1, Ct) for p in range(4)]
    row0 = jnp.concatenate(ub[0:2], axis=2).reshape(H, 1, W2, Ct)  # even rows
    row1 = jnp.concatenate(ub[2:4], axis=2).reshape(H, 1, W2, Ct)  # odd rows
    up = jnp.concatenate([row0, row1], axis=1).reshape(H2, W2, Ct)
    cat_ref[1:H2 + 1, 1:W2 + 1, 0:Ct] = up.astype(bf16)

    # --- skip connection: channels-last into the same padded buffer ---------
    sk = jnp.transpose(skip_ref[0], (1, 0))                       # (4HW, Cskip)
    cat_ref[1:H2 + 1, 1:W2 + 1, Ct:Ccat] = (
        sk.reshape(H2, W2, Cskip).astype(bf16))

    # --- Stage 3: conv1 3x3 + ReLU (one im2col K-packed dot, concat-free) ---
    p1 = jnp.concatenate(
        [cat_ref[kh:kh + H2, kw:kw + W2, :]
         for kh in range(3) for kw in range(3)],
        axis=-1).reshape(H2 * W2, 9 * Ccat)
    y1 = jnp.dot(p1, w1_ref[...], preferred_element_type=f32)
    y1 = jnp.maximum(y1 + b1_ref[...], 0.0)
    y1_ref[1:H2 + 1, 1:W2 + 1, :] = y1.reshape(H2, W2, C1).astype(bf16)

    # --- Stage 4: conv2 3x3 + ReLU -------------------------------------------
    p2 = jnp.concatenate(
        [y1_ref[kh:kh + H2, kw:kw + W2, :]
         for kh in range(3) for kw in range(3)],
        axis=-1).reshape(H2 * W2, 9 * C1)
    y2 = jnp.dot(p2, w2_ref[...], preferred_element_type=f32)
    y2 = jnp.maximum(y2 + b2_ref[...], 0.0)                       # (4HW, C2)

    # --- store NCHW; lane axis = H2*W2 (128-multiple => unmasked stores) ----
    o_ref[0] = jnp.transpose(y2, (1, 0)).astype(o_ref.dtype)      # (C2, 4HW)


def decoder_block_forward(pp, x_nchw, skip_nchw):
    N, Cin, H, W = x_nchw.shape
    Cskip = skip_nchw.shape[1]
    H2, W2 = 2 * H, 2 * W
    Ct = pp["bt"].shape[-1] // 4
    C1 = pp["b1"].shape[-1]
    C2 = pp["b2"].shape[-1]
    Ccat = Ct + Cskip

    # Free (bitcast) reshapes only -- no wrapper HBM transpose / cast passes.
    x3 = x_nchw.reshape(N, Cin, H * W)
    s3 = skip_nchw.reshape(N, Cskip, H2 * W2)

    kernel = functools.partial(_decoder_block_kernel, H=H, W=W, Cin=Cin,
                               Ct=Ct, Cskip=Cskip, C1=C1, C2=C2)

    flops = 2 * N * (H * W * (4 * Cin) * (4 * Ct)
                     + H2 * W2 * (9 * Ccat) * C1
                     + H2 * W2 * (9 * C1) * C2)
    bytes_accessed = (4 * (x3.size + s3.size + N * C2 * H2 * W2)
                      + 2 * (pp["wt"].size + pp["w1"].size + pp["w2"].size)
                      + 4 * (pp["scale"].size + pp["shift"].size
                             + pp["bt"].size + pp["b1"].size + pp["b2"].size))

    out = pl.pallas_call(
        kernel,
        out_shape=jax.ShapeDtypeStruct((N, C2, H2 * W2), jnp.float32),
        grid=(N,),
        in_specs=[
            pl.BlockSpec((1, Cin, H * W), lambda n: (n, 0, 0)),
            pl.BlockSpec((1, Cskip, H2 * W2), lambda n: (n, 0, 0)),
            pl.BlockSpec((1, Cin), lambda n: (0, 0)),
            pl.BlockSpec((1, Cin), lambda n: (0, 0)),
            pl.BlockSpec((4 * Cin, 4 * Ct), lambda n: (0, 0)),
            pl.BlockSpec((1, 4 * Ct), lambda n: (0, 0)),
            pl.BlockSpec((9 * Ccat, C1), lambda n: (0, 0)),
            pl.BlockSpec((1, C1), lambda n: (0, 0)),
            pl.BlockSpec((9 * C1, C2), lambda n: (0, 0)),
            pl.BlockSpec((1, C2), lambda n: (0, 0)),
        ],
        out_specs=pl.BlockSpec((1, C2, H2 * W2), lambda n: (n, 0, 0)),
        scratch_shapes=[
            pltpu.VMEM((H + 1, W + 1, Cin), jnp.bfloat16),        # ConvT halo
            pltpu.VMEM((H2 + 2, W2 + 2, Ccat), jnp.bfloat16),     # up||skip halo
            pltpu.VMEM((H2 + 2, W2 + 2, C1), jnp.bfloat16),       # conv1 halo
        ],
        compiler_params=pltpu.CompilerParams(
            dimension_semantics=("parallel",),
            vmem_limit_bytes=48 * 1024 * 1024),
        cost_estimate=pl.CostEstimate(flops=flops, transcendentals=0,
                                      bytes_accessed=bytes_accessed),
    )(x3, s3, pp["scale"], pp["shift"], pp["wt"], pp["bt"],
      pp["w1"], pp["b1"], pp["w2"], pp["b2"])

    return out.reshape(N, C2, H2, W2)          # free reshape back to NCHW


# ---------------------------------------------------------------------------
# One-time parameter preparation (outside the jitted forward)
# ---------------------------------------------------------------------------
def _pack_convt_weight(wt):
    """Pack ConvTranspose2d(k3,s2,p1,op1) weight (Cin, Ct, 3, 3) into the
    K-packed 4-phase form W[s*Cin + cin, ph*Ct + cout]: shift s over the
    un-dilated input in {(0,0),(0,1),(1,0),(1,1)}, phase ph = output
    (row,col) parity in the same order."""
    Cin, Ct = wt.shape[0], wt.shape[1]
    tap = {(0, 0): 1, (1, 0): 2, (1, 1): 0}   # (output parity, input shift) -> tap
    shifts = ((0, 0), (0, 1), (1, 0), (1, 1))
    w = jnp.zeros((4, Cin, 4 * Ct), jnp.float32)
    for s, (di, dj) in enumerate(shifts):
        for ph, (dp, dq) in enumerate(shifts):
            kh = tap.get((dp, di))
            kw = tap.get((dq, dj))
            if kh is None or kw is None:
                continue
            w = w.at[s, :, ph * Ct:(ph + 1) * Ct].set(wt[:, :, kh, kw])
    return w.reshape(4 * Cin, 4 * Ct)


def prepare_params(p, eps=1e-5):
    scale = (p["bn_gamma"] / jnp.sqrt(p["bn_var"] + eps)).astype(jnp.float32)
    shift = (p["bn_beta"] - p["bn_mean"] * scale).astype(jnp.float32)
    Cin = scale.shape[0]
    Ct = p["convt_w"].shape[1]

    def pack_conv(w):          # (Cout, Cin, 3, 3) -> (9*Cin, Cout), tap-major
        co, ci = w.shape[0], w.shape[1]
        return jnp.transpose(w, (2, 3, 1, 0)).reshape(9 * ci, co)

    return {
        "scale": scale.reshape(1, Cin),
        "shift": shift.reshape(1, Cin),
        "wt": _pack_convt_weight(p["convt_w"]).astype(jnp.bfloat16),
        "bt": jnp.tile(p["convt_b"], 4).reshape(1, 4 * Ct).astype(jnp.float32),
        "w1": pack_conv(p["conv1_w"]).astype(jnp.bfloat16),
        "b1": p["conv1_b"].reshape(1, -1).astype(jnp.float32),
        "w2": pack_conv(p["conv2_w"]).astype(jnp.bfloat16),
        "b2": p["conv2_b"].reshape(1, -1).astype(jnp.float32),
    }


# ---------------------------------------------------------------------------
# Pure-JAX reference (lax convs, HIGHEST precision) for correctness check
# ---------------------------------------------------------------------------
def _conv_ref(x_pad, w_hwio, bias):
    y = jax.lax.conv_general_dilated(
        x_pad, w_hwio, window_strides=(1, 1), padding="VALID",
        dimension_numbers=("NHWC", "HWIO", "NHWC"),
        precision=jax.lax.Precision.HIGHEST)
    return jnp.maximum(y + bias.reshape(1, 1, 1, -1), 0.0)


def decoder_block_ref(params, x_nchw, skip_nchw):
    x = jnp.transpose(x_nchw, (0, 2, 3, 1)).astype(jnp.float32)
    skip = jnp.transpose(skip_nchw, (0, 2, 3, 1)).astype(jnp.float32)
    eps = 1e-5
    scale = params["bn_gamma"] / jnp.sqrt(params["bn_var"] + eps)
    shift = params["bn_beta"] - params["bn_mean"] * scale
    x = x * scale.reshape(1, 1, 1, -1) + shift.reshape(1, 1, 1, -1)
    N, H, W, C = x.shape
    xd = jnp.zeros((N, 2 * H - 1, 2 * W - 1, C), x.dtype)
    xd = xd.at[:, ::2, ::2, :].set(x)
    xd = jnp.pad(xd, ((0, 0), (1, 2), (1, 2), (0, 0)))
    wt = params["convt_w"]
    w_conv = jnp.transpose(wt[:, :, ::-1, ::-1], (2, 3, 0, 1))
    x = _conv_ref(xd, w_conv, params["convt_b"])
    x = jnp.concatenate([x, skip], axis=-1)
    w1 = jnp.transpose(params["conv1_w"], (2, 3, 1, 0))
    x = _conv_ref(jnp.pad(x, ((0, 0), (1, 1), (1, 1), (0, 0))), w1, params["conv1_b"])
    w2 = jnp.transpose(params["conv2_w"], (2, 3, 1, 0))
    x = _conv_ref(jnp.pad(x, ((0, 0), (1, 1), (1, 1), (0, 0))), w2, params["conv2_b"])
    return jnp.transpose(x, (0, 3, 1, 2))


# ---------------------------------------------------------------------------
if __name__ == "__main__":
    in_ch, out_ch = 4, 8
    N, H, W = 2, 8, 8          # x: (N, in_ch, H, W); skip_x: (N, in_ch, 2H, 2W)

    key = jax.random.PRNGKey(0)
    ks = jax.random.split(key, 12)
    f32 = jnp.float32
    params = {
        "bn_gamma": (1.0 + 0.1 * jax.random.normal(ks[0], (in_ch,))).astype(f32),
        "bn_beta": (0.1 * jax.random.normal(ks[1], (in_ch,))).astype(f32),
        "bn_mean": (0.1 * jax.random.normal(ks[2], (in_ch,))).astype(f32),
        "bn_var": jax.random.uniform(ks[3], (in_ch,), minval=0.5, maxval=1.5).astype(f32),
        "convt_w": (0.1 * jax.random.normal(ks[4], (in_ch, in_ch, 3, 3))).astype(f32),
        "convt_b": (0.1 * jax.random.normal(ks[5], (in_ch,))).astype(f32),
        "conv1_w": (0.1 * jax.random.normal(ks[6], (out_ch, 2 * in_ch, 3, 3))).astype(f32),
        "conv1_b": (0.1 * jax.random.normal(ks[7], (out_ch,))).astype(f32),
        "conv2_w": (0.1 * jax.random.normal(ks[8], (out_ch, out_ch, 3, 3))).astype(f32),
        "conv2_b": (0.1 * jax.random.normal(ks[9], (out_ch,))).astype(f32),
    }
    x = jax.random.normal(ks[10], (N, in_ch, H, W), dtype=f32)
    skip_x = jax.random.normal(ks[11], (N, in_ch, 2 * H, 2 * W), dtype=f32)

    prepared = prepare_params(params)           # one-time weight prep
    fwd = jax.jit(decoder_block_forward)
    out = jax.block_until_ready(fwd(prepared, x, skip_x))
    assert out.shape == (N, out_ch, 2 * H, 2 * W), out.shape

    ref = jax.block_until_ready(decoder_block_ref(params, x, skip_x))
    # bf16 MXU operands (f32 accumulation) => slightly looser tolerance than a
    # Precision.HIGHEST f32 reference.
    err = float(jnp.abs(out - ref).max())
    assert jnp.allclose(out, ref, atol=3e-2, rtol=3e-2), err

    print("KERNEL_OK")
</pallas_src>

<mosaic_0001>
module attributes {stable_mosaic.version = 11 : i64} {
  func.func @_decoder_block_kernel(%arg0: i32, %arg1: memref<1x4x64xf32, #tpu.memory_space<vmem>>, %arg2: memref<1x4x256xf32, #tpu.memory_space<vmem>>, %arg3: memref<1x4xf32, #tpu.memory_space<vmem>>, %arg4: memref<1x4xf32, #tpu.memory_space<vmem>>, %arg5: memref<16x16xbf16, #tpu.memory_space<vmem>>, %arg6: memref<1x16xf32, #tpu.memory_space<vmem>>, %arg7: memref<72x8xbf16, #tpu.memory_space<vmem>>, %arg8: memref<1x8xf32, #tpu.memory_space<vmem>>, %arg9: memref<72x8xbf16, #tpu.memory_space<vmem>>, %arg10: memref<1x8xf32, #tpu.memory_space<vmem>>, %arg11: memref<1x8x256xf32, #tpu.memory_space<vmem>>, %arg12: memref<9x9x4xbf16, #tpu.memory_space<vmem>>, %arg13: memref<18x18x8xbf16, #tpu.memory_space<vmem>>, %arg14: memref<18x18x8xbf16, #tpu.memory_space<vmem>>) attributes {dimension_semantics = [#tpu.dimension_semantics<parallel>], iteration_bounds = array<i64: 2>, scalar_prefetch = 0 : i64, scratch_operands = 3 : i64, tpu.core_type = #tpu.core_type<tc>, window_params = [{transform_indices = @transform_0, window_bounds = array<i64: 1, 4, 64>}, {transform_indices = @transform_1, window_bounds = array<i64: 1, 4, 256>}, {pipeline_mode = #tpu.pipeline_mode<synchronous>, transform_indices = @transform_2, window_bounds = array<i64: 1, 4>}, {pipeline_mode = #tpu.pipeline_mode<synchronous>, transform_indices = @transform_3, window_bounds = array<i64: 1, 4>}, {pipeline_mode = #tpu.pipeline_mode<synchronous>, transform_indices = @transform_4, window_bounds = array<i64: 16, 16>}, {pipeline_mode = #tpu.pipeline_mode<synchronous>, transform_indices = @transform_5, window_bounds = array<i64: 1, 16>}, {pipeline_mode = #tpu.pipeline_mode<synchronous>, transform_indices = @transform_6, window_bounds = array<i64: 72, 8>}, {pipeline_mode = #tpu.pipeline_mode<synchronous>, transform_indices = @transform_7, window_bounds = array<i64: 1, 8>}, {pipeline_mode = #tpu.pipeline_mode<synchronous>, transform_indices = @transform_8, window_bounds = array<i64: 72, 8>}, {pipeline_mode = #tpu.pipeline_mode<synchronous>, transform_indices = @transform_9, window_bounds = array<i64: 1, 8>}, {transform_indices = @transform_10, window_bounds = array<i64: 1, 8, 256>}]} {
    %cst = arith.constant 0.000000e+00 : bf16
    %0 = vector.broadcast %cst : bf16 to vector<9x4xbf16>
    %c8 = arith.constant 8 : index
    %c0 = arith.constant 0 : index
    %c0_0 = arith.constant 0 : index
    %1 = vector.load %arg12[%c8, %c0, %c0_0] : memref<9x9x4xbf16, #tpu.memory_space<vmem>>, vector<1x9x4xbf16>
    %2 = vector.shape_cast %1 : vector<1x9x4xbf16> to vector<9x4xbf16>
    %3 = vector.shape_cast %0 : vector<9x4xbf16> to vector<1x9x4xbf16>
    tpu.vector_store %arg12[%c8, %c0, %c0_0], %3 {strides = array<i32>} : memref<9x9x4xbf16, #tpu.memory_space<vmem>>, vector<1x9x4xbf16>,
    %cst_1 = arith.constant 0.000000e+00 : bf16
    %4 = vector.broadcast %cst_1 : bf16 to vector<9x4xbf16>
    %c0_2 = arith.constant 0 : index
    %c8_3 = arith.constant 8 : index
    %c0_4 = arith.constant 0 : index
    %5 = vector.load %arg12[%c0_2, %c8_3, %c0_4] : memref<9x9x4xbf16, #tpu.memory_space<vmem>>, vector<9x1x4xbf16>
    %6 = vector.shape_cast %5 : vector<9x1x4xbf16> to vector<9x4xbf16>
    %7 = vector.shape_cast %4 : vector<9x4xbf16> to vector<9x1x4xbf16>
    tpu.vector_store %arg12[%c0_2, %c8_3, %c0_4], %7 {strides = array<i32>} : memref<9x9x4xbf16, #tpu.memory_space<vmem>>, vector<9x1x4xbf16>,
    %cst_5 = arith.constant 0.000000e+00 : bf16
    %8 = vector.broadcast %cst_5 : bf16 to vector<18x8xbf16>
    %c0_6 = arith.constant 0 : index
    %c0_7 = arith.constant 0 : index
    %c0_8 = arith.constant 0 : index
    %9 = vector.load %arg13[%c0_6, %c0_7, %c0_8] : memref<18x18x8xbf16, #tpu.memory_space<vmem>>, vector<1x18x8xbf16>
    %10 = vector.shape_cast %9 : vector<1x18x8xbf16> to vector<18x8xbf16>
    %11 = vector.shape_cast %8 : vector<18x8xbf16> to vector<1x18x8xbf16>
    tpu.vector_store %arg13[%c0_6, %c0_7, %c0_8], %11 {strides = array<i32>} : memref<18x18x8xbf16, #tpu.memory_space<vmem>>, vector<1x18x8xbf16>,
    %cst_9 = arith.constant 0.000000e+00 : bf16
    %12 = vector.broadcast %cst_9 : bf16 to vector<18x8xbf16>
    %c17 = arith.constant 17 : index
    %c0_10 = arith.constant 0 : index
    %c0_11 = arith.constant 0 : index
    %13 = vector.load %arg13[%c17, %c0_10, %c0_11] : memref<18x18x8xbf16, #tpu.memory_space<vmem>>, vector<1x18x8xbf16>
    %14 = vector.shape_cast %13 : vector<1x18x8xbf16> to vector<18x8xbf16>
    %15 = vector.shape_cast %12 : vector<18x8xbf16> to vector<1x18x8xbf16>
    tpu.vector_store %arg13[%c17, %c0_10, %c0_11], %15 {strides = array<i32>} : memref<18x18x8xbf16, #tpu.memory_space<vmem>>, vector<1x18x8xbf16>,
    %cst_12 = arith.constant 0.000000e+00 : bf16
    %16 = vector.broadcast %cst_12 : bf16 to vector<18x8xbf16>
    %c0_13 = arith.constant 0 : index
    %c0_14 = arith.constant 0 : index
    %c0_15 = arith.constant 0 : index
    %17 = vector.load %arg13[%c0_13, %c0_14, %c0_15] : memref<18x18x8xbf16, #tpu.memory_space<vmem>>, vector<18x1x8xbf16>
    %18 = vector.shape_cast %17 : vector<18x1x8xbf16> to vector<18x8xbf16>
    %19 = vector.shape_cast %16 : vector<18x8xbf16> to vector<18x1x8xbf16>
    tpu.vector_store %arg13[%c0_13, %c0_14, %c0_15], %19 {strides = array<i32>} : memref<18x18x8xbf16, #tpu.memory_space<vmem>>, vector<18x1x8xbf16>,
    %cst_16 = arith.constant 0.000000e+00 : bf16
    %20 = vector.broadcast %cst_16 : bf16 to vector<18x8xbf16>
    %c0_17 = arith.constant 0 : index
    %c17_18 = arith.constant 17 : index
    %c0_19 = arith.constant 0 : index
    %21 = vector.load %arg13[%c0_17, %c17_18, %c0_19] : memref<18x18x8xbf16, #tpu.memory_space<vmem>>, vector<18x1x8xbf16>
    %22 = vector.shape_cast %21 : vector<18x1x8xbf16> to vector<18x8xbf16>
    %23 = vector.shape_cast %20 : vector<18x8xbf16> to vector<18x1x8xbf16>
    tpu.vector_store %arg13[%c0_17, %c17_18, %c0_19], %23 {strides = array<i32>} : memref<18x18x8xbf16, #tpu.memory_space<vmem>>, vector<18x1x8xbf16>,
    %cst_20 = arith.constant 0.000000e+00 : bf16
    %24 = vector.broadcast %cst_20 : bf16 to vector<18x8xbf16>
    %c0_21 = arith.constant 0 : index
    %c0_22 = arith.constant 0 : index
    %c0_23 = arith.constant 0 : index
    %25 = vector.load %arg14[%c0_21, %c0_22, %c0_23] : memref<18x18x8xbf16, #tpu.memory_space<vmem>>, vector<1x18x8xbf16>
    %26 = vector.shape_cast %25 : vector<1x18x8xbf16> to vector<18x8xbf16>
    %27 = vector.shape_cast %24 : vector<18x8xbf16> to vector<1x18x8xbf16>
    tpu.vector_store %arg14[%c0_21, %c0_22, %c0_23], %27 {strides = array<i32>} : memref<18x18x8xbf16, #tpu.memory_space<vmem>>, vector<1x18x8xbf16>,
    %cst_24 = arith.constant 0.000000e+00 : bf16
    %28 = vector.broadcast %cst_24 : bf16 to vector<18x8xbf16>
    %c17_25 = arith.constant 17 : index
    %c0_26 = arith.constant 0 : index
    %c0_27 = arith.constant 0 : index
    %29 = vector.load %arg14[%c17_25, %c0_26, %c0_27] : memref<18x18x8xbf16, #tpu.memory_space<vmem>>, vector<1x18x8xbf16>
    %30 = vector.shape_cast %29 : vector<1x18x8xbf16> to vector<18x8xbf16>
    %31 = vector.shape_cast %28 : vector<18x8xbf16> to vector<1x18x8xbf16>
    tpu.vector_store %arg14[%c17_25, %c0_26, %c0_27], %31 {strides = array<i32>} : memref<18x18x8xbf16, #tpu.memory_space<vmem>>, vector<1x18x8xbf16>,
    %cst_28 = arith.constant 0.000000e+00 : bf16
    %32 = vector.broadcast %cst_28 : bf16 to vector<18x8xbf16>
    %c0_29 = arith.constant 0 : index
    %c0_30 = arith.constant 0 : index
    %c0_31 = arith.constant 0 : index
    %33 = vector.load %arg14[%c0_29, %c0_30, %c0_31] : memref<18x18x8xbf16, #tpu.memory_space<vmem>>, vector<18x1x8xbf16>
    %34 = vector.shape_cast %33 : vector<18x1x8xbf16> to vector<18x8xbf16>
    %35 = vector.shape_cast %32 : vector<18x8xbf16> to vector<18x1x8xbf16>
    tpu.vector_store %arg14[%c0_29, %c0_30, %c0_31], %35 {strides = array<i32>} : memref<18x18x8xbf16, #tpu.memory_space<vmem>>, vector<18x1x8xbf16>,
    %cst_32 = arith.constant 0.000000e+00 : bf16
    %36 = vector.broadcast %cst_32 : bf16 to vector<18x8xbf16>
    %c0_33 = arith.constant 0 : index
    %c17_34 = arith.constant 17 : index
    %c0_35 = arith.constant 0 : index
    %37 = vector.load %arg14[%c0_33, %c17_34, %c0_35] : memref<18x18x8xbf16, #tpu.memory_space<vmem>>, vector<18x1x8xbf16>
    %38 = vector.shape_cast %37 : vector<18x1x8xbf16> to vector<18x8xbf16>
    %39 = vector.shape_cast %36 : vector<18x8xbf16> to vector<18x1x8xbf16>
    tpu.vector_store %arg14[%c0_33, %c17_34, %c0_35], %39 {strides = array<i32>} : memref<18x18x8xbf16, #tpu.memory_space<vmem>>, vector<18x1x8xbf16>,
    %c0_36 = arith.constant 0 : index
    %c0_37 = arith.constant 0 : index
    %c0_38 = arith.constant 0 : index
    %40 = vector.load %arg1[%c0_36, %c0_37, %c0_38] : memref<1x4x64xf32, #tpu.memory_space<vmem>>, vector<1x4x64xf32>
    %41 = vector.shape_cast %40 : vector<1x4x64xf32> to vector<4x64xf32>
    %42 = tpu.transpose %41, [1, 0] : vector<4x64xf32> -> vector<64x4xf32>
    %c0_39 = arith.constant 0 : index
    %c0_40 = arith.constant 0 : index
    %43 = vector.load %arg3[%c0_39, %c0_40] : memref<1x4xf32, #tpu.memory_space<vmem>>, vector<1x4xf32>
    %44 = vector.broadcast %43 : vector<1x4xf32> to vector<64x4xf32>
    %45 = arith.mulf %42, %44 : vector<64x4xf32>
    %c0_41 = arith.constant 0 : index
    %c0_42 = arith.constant 0 : index
    %46 = vector.load %arg4[%c0_41, %c0_42] : memref<1x4xf32, #tpu.memory_space<vmem>>, vector<1x4xf32>
    %47 = vector.broadcast %46 : vector<1x4xf32> to vector<64x4xf32>
    %48 = arith.addf %45, %47 : vector<64x4xf32>
    %49 = vector.shape_cast %48 : vector<64x4xf32> to vector<8x8x4xf32>
    %50 = arith.truncf %49 : vector<8x8x4xf32> to vector<8x8x4xbf16>
    %c0_43 = arith.constant 0 : index
    %c0_44 = arith.constant 0 : index
    %c0_45 = arith.constant 0 : index
    %51 = vector.load %arg12[%c0_43, %c0_44, %c0_45] : memref<9x9x4xbf16, #tpu.memory_space<vmem>>, vector<8x8x4xbf16>
    tpu.vector_store %arg12[%c0_43, %c0_44, %c0_45], %50 {strides = array<i32>} : memref<9x9x4xbf16, #tpu.memory_space<vmem>>, vector<8x8x4xbf16>,
    %c0_46 = arith.constant 0 : index
    %c0_47 = arith.constant 0 : index
    %c0_48 = arith.constant 0 : index
    %52 = vector.load %arg12[%c0_46, %c0_47, %c0_48] : memref<9x9x4xbf16, #tpu.memory_space<vmem>>, vector<8x8x4xbf16>
    %c0_49 = arith.constant 0 : index
    %c1 = arith.constant 1 : index
    %c0_50 = arith.constant 0 : index
    %53 = vector.load %arg12[%c0_49, %c1, %c0_50] : memref<9x9x4xbf16, #tpu.memory_space<vmem>>, vector<8x8x4xbf16>
    %c1_51 = arith.constant 1 : index
    %c0_52 = arith.constant 0 : index
    %c0_53 = arith.constant 0 : index
    %54 = vector.load %arg12[%c1_51, %c0_52, %c0_53] : memref<9x9x4xbf16, #tpu.memory_space<vmem>>, vector<8x8x4xbf16>
    %c1_54 = arith.constant 1 : index
    %c1_55 = arith.constant 1 : index
    %c0_56 = arith.constant 0 : index
    %55 = vector.load %arg12[%c1_54, %c1_55, %c0_56] : memref<9x9x4xbf16, #tpu.memory_space<vmem>>, vector<8x8x4xbf16>
    %56 = tpu.concatenate %52, %53, %54, %55 in 2 : vector<8x8x4xbf16>, vector<8x8x4xbf16>, vector<8x8x4xbf16>, vector<8x8x4xbf16> -> vector<8x8x16xbf16>
    %57 = vector.shape_cast %56 : vector<8x8x16xbf16> to vector<64x16xbf16>
    %c0_57 = arith.constant 0 : index
    %c0_58 = arith.constant 0 : index
    %58 = vector.load %arg5[%c0_57, %c0_58] : memref<16x16xbf16, #tpu.memory_space<vmem>>, vector<16x16xbf16>
    %cst_59 = arith.constant dense<0.000000e+00> : vector<64x16xf32>
    %59 = tpu.matmul %57, %58, %cst_59 {dimension_numbers = #tpu.dot_dimension_numbers<[1], [0], [0], [1], [0, 0, 1, 1], [], []>} : vector<64x16xbf16>, vector<16x16xbf16>, vector<64x16xf32> -> vector<64x16xf32>
    %c0_60 = arith.constant 0 : index
    %c0_61 = arith.constant 0 : index
    %60 = vector.load %arg6[%c0_60, %c0_61] : memref<1x16xf32, #tpu.memory_space<vmem>>, vector<1x16xf32>
    %61 = vector.broadcast %60 : vector<1x16xf32> to vector<64x16xf32>
    %62 = arith.addf %59, %61 : vector<64x16xf32>
    %cst_62 = arith.constant 0.000000e+00 : f32
    %63 = vector.broadcast %cst_62 : f32 to vector<64x16xf32>
    %64 = arith.maximumf %62, %63 : vector<64x16xf32>
    %65 = vector.extract_strided_slice %64 {offsets = [0, 0], sizes = [64, 4], strides = [1, 1]} : vector<64x16xf32> to vector<64x4xf32>
    %66 = vector.shape_cast %65 : vector<64x4xf32> to vector<8x8x1x4xf32>
    %67 = vector.extract_strided_slice %64 {offsets = [0, 4], sizes = [64, 4], strides = [1, 1]} : vector<64x16xf32> to vector<64x4xf32>
    %68 = vector.shape_cast %67 : vector<64x4xf32> to vector<8x8x1x4xf32>
    %69 = vector.extract_strided_slice %64 {offsets = [0, 8], sizes = [64, 4], strides = [1, 1]} : vector<64x16xf32> to vector<64x4xf32>
    %70 = vector.shape_cast %69 : vector<64x4xf32> to vector<8x8x1x4xf32>
    %71 = vector.extract_strided_slice %64 {offsets = [0, 12], sizes = [64, 4], strides = [1, 1]} : vector<64x16xf32> to vector<64x4xf32>
    %72 = vector.shape_cast %71 : vector<64x4xf32> to vector<8x8x1x4xf32>
    %73 = tpu.concatenate %66, %68 in 2 : vector<8x8x1x4xf32>, vector<8x8x1x4xf32> -> vector<8x8x2x4xf32>
    %74 = vector.shape_cast %73 : vector<8x8x2x4xf32> to vector<8x1x16x4xf32>
    %75 = tpu.concatenate %70, %72 in 2 : vector<8x8x1x4xf32>, vector<8x8x1x4xf32> -> vector<8x8x2x4xf32>
    %76 = vector.shape_cast %75 : vector<8x8x2x4xf32> to vector<8x1x16x4xf32>
    %77 = tpu.concatenate %74, %76 in 1 : vector<8x1x16x4xf32>, vector<8x1x16x4xf32> -> vector<8x2x16x4xf32>
    %78 = vector.shape_cast %77 : vector<8x2x16x4xf32> to vector<16x16x4xf32>
    %79 = arith.truncf %78 : vector<16x16x4xf32> to vector<16x16x4xbf16>
    %c1_63 = arith.constant 1 : index
    %c1_64 = arith.constant 1 : index
    %c0_65 = arith.constant 0 : index
    %80 = vector.load %arg13[%c1_63, %c1_64, %c0_65] : memref<18x18x8xbf16, #tpu.memory_space<vmem>>, vector<16x16x4xbf16>
    tpu.vector_store %arg13[%c1_63, %c1_64, %c0_65], %79 {strides = array<i32>} : memref<18x18x8xbf16, #tpu.memory_space<vmem>>, vector<16x16x4xbf16>,
    %c0_66 = arith.constant 0 : index
    %c0_67 = arith.constant 0 : index
    %c0_68 = arith.constant 0 : index
    %81 = vector.load %arg2[%c0_66, %c0_67, %c0_68] : memref<1x4x256xf32, #tpu.memory_space<vmem>>, vector<1x4x256xf32>
    %82 = vector.shape_cast %81 : vector<1x4x256xf32> to vector<4x256xf32>
    %83 = tpu.transpose %82, [1, 0] : vector<4x256xf32> -> vector<256x4xf32>
    %84 = vector.shape_cast %83 : vector<256x4xf32> to vector<16x16x4xf32>
    %85 = arith.truncf %84 : vector<16x16x4xf32> to vector<16x16x4xbf16>
    %c1_69 = arith.constant 1 : index
    %c1_70 = arith.constant 1 : index
    %c4 = arith.constant 4 : index
    %86 = vector.load %arg13[%c1_69, %c1_70, %c4] : memref<18x18x8xbf16, #tpu.memory_space<vmem>>, vector<16x16x4xbf16>
    tpu.vector_store %arg13[%c1_69, %c1_70, %c4], %85 {strides = array<i32>} : memref<18x18x8xbf16, #tpu.memory_space<vmem>>, vector<16x16x4xbf16>,
    %c0_71 = arith.constant 0 : index
    %c0_72 = arith.constant 0 : index
    %c0_73 = arith.constant 0 : index
    %87 = vector.load %arg13[%c0_71, %c0_72, %c0_73] : memref<18x18x8xbf16, #tpu.memory_space<vmem>>, vector<16x16x8xbf16>
    %c0_74 = arith.constant 0 : index
    %c1_75 = arith.constant 1 : index
    %c0_76 = arith.constant 0 : index
    %88 = vector.load %arg13[%c0_74, %c1_75, %c0_76] : memref<18x18x8xbf16, #tpu.memory_space<vmem>>, vector<16x16x8xbf16>
    %c0_77 = arith.constant 0 : index
    %c2 = arith.constant 2 : index
    %c0_78 = arith.constant 0 : index
    %89 = vector.load %arg13[%c0_77, %c2, %c0_78] : memref<18x18x8xbf16, #tpu.memory_space<vmem>>, vector<16x16x8xbf16>
    %c1_79 = arith.constant 1 : index
    %c0_80 = arith.constant 0 : index
    %c0_81 = arith.constant 0 : index
    %90 = vector.load %arg13[%c1_79, %c0_80, %c0_81] : memref<18x18x8xbf16, #tpu.memory_space<vmem>>, vector<16x16x8xbf16>
    %c1_82 = arith.constant 1 : index
    %c1_83 = arith.constant 1 : index
    %c0_84 = arith.constant 0 : index
    %91 = vector.load %arg13[%c1_82, %c1_83, %c0_84] : memref<18x18x8xbf16, #tpu.memory_space<vmem>>, vector<16x16x8xbf16>
    %c1_85 = arith.constant 1 : index
    %c2_86 = arith.constant 2 : index
    %c0_87 = arith.constant 0 : index
    %92 = vector.load %arg13[%c1_85, %c2_86, %c0_87] : memref<18x18x8xbf16, #tpu.memory_space<vmem>>, vector<16x16x8xbf16>
    %c2_88 = arith.constant 2 : index
    %c0_89 = arith.constant 0 : index
    %c0_90 = arith.constant 0 : index
    %93 = vector.load %arg13[%c2_88, %c0_89, %c0_90] : memref<18x18x8xbf16, #tpu.memory_space<vmem>>, vector<16x16x8xbf16>
    %c2_91 = arith.constant 2 : index
    %c1_92 = arith.constant 1 : index
    %c0_93 = arith.constant 0 : index
    %94 = vector.load %arg13[%c2_91, %c1_92, %c0_93] : memref<18x18x8xbf16, #tpu.memory_space<vmem>>, vector<16x16x8xbf16>
    %c2_94 = arith.constant 2 : index
    %c2_95 = arith.constant 2 : index
    %c0_96 = arith.constant 0 : index
    %95 = vector.load %arg13[%c2_94, %c2_95, %c0_96] : memref<18x18x8xbf16, #tpu.memory_space<vmem>>, vector<16x16x8xbf16>
    %96 = tpu.concatenate %87, %88, %89, %90, %91, %92, %93, %94, %95 in 2 : vector<16x16x8xbf16>, vector<16x16x8xbf16>, vector<16x16x8xbf16>, vector<16x16x8xbf16>, vector<16x16x8xbf16>, vector<16x16x8xbf16>, vector<16x16x8xbf16>, vector<16x16x8xbf16>, vector<16x16x8xbf16> -> vector<16x16x72xbf16>
    %97 = vector.shape_cast %96 : vector<16x16x72xbf16> to vector<256x72xbf16>
    %c0_97 = arith.constant 0 : index
    %c0_98 = arith.constant 0 : index
    %98 = vector.load %arg7[%c0_97, %c0_98] : memref<72x8xbf16, #tpu.memory_space<vmem>>, vector<72x8xbf16>
    %cst_99 = arith.constant dense<0.000000e+00> : vector<256x8xf32>
    %99 = tpu.matmul %97, %98, %cst_99 {dimension_numbers = #tpu.dot_dimension_numbers<[1], [0], [0], [1], [0, 0, 1, 1], [], []>} : vector<256x72xbf16>, vector<72x8xbf16>, vector<256x8xf32> -> vector<256x8xf32>
    %c0_100 = arith.constant 0 : index
    %c0_101 = arith.constant 0 : index
    %100 = vector.load %arg8[%c0_100, %c0_101] : memref<1x8xf32, #tpu.memory_space<vmem>>, vector<1x8xf32>
    %101 = vector.broadcast %100 : vector<1x8xf32> to vector<256x8xf32>
    %102 = arith.addf %99, %101 : vector<256x8xf32>
    %cst_102 = arith.constant 0.000000e+00 : f32
    %103 = vector.broadcast %cst_102 : f32 to vector<256x8xf32>
    %104 = arith.maximumf %102, %103 : vector<256x8xf32>
    %105 = vector.shape_cast %104 : vector<256x8xf32> to vector<16x16x8xf32>
    %106 = arith.truncf %105 : vector<16x16x8xf32> to vector<16x16x8xbf16>
    %c1_103 = arith.constant 1 : index
    %c1_104 = arith.constant 1 : index
    %c0_105 = arith.constant 0 : index
    %107 = vector.load %arg14[%c1_103, %c1_104, %c0_105] : memref<18x18x8xbf16, #tpu.memory_space<vmem>>, vector<16x16x8xbf16>
    tpu.vector_store %arg14[%c1_103, %c1_104, %c0_105], %106 {strides = array<i32>} : memref<18x18x8xbf16, #tpu.memory_space<vmem>>, vector<16x16x8xbf16>,
    %c0_106 = arith.constant 0 : index
    %c0_107 = arith.constant 0 : index
    %c0_108 = arith.constant 0 : index
    %108 = vector.load %arg14[%c0_106, %c0_107, %c0_108] : memref<18x18x8xbf16, #tpu.memory_space<vmem>>, vector<16x16x8xbf16>
    %c0_109 = arith.constant 0 : index
    %c1_110 = arith.constant 1 : index
    %c0_111 = arith.constant 0 : index
    %109 = vector.load %arg14[%c0_109, %c1_110, %c0_111] : memref<18x18x8xbf16, #tpu.memory_space<vmem>>, vector<16x16x8xbf16>
    %c0_112 = arith.constant 0 : index
    %c2_113 = arith.constant 2 : index
    %c0_114 = arith.constant 0 : index
    %110 = vector.load %arg14[%c0_112, %c2_113, %c0_114] : memref<18x18x8xbf16, #tpu.memory_space<vmem>>, vector<16x16x8xbf16>
    %c1_115 = arith.constant 1 : index
    %c0_116 = arith.constant 0 : index
    %c0_117 = arith.constant 0 : index
    %111 = vector.load %arg14[%c1_115, %c0_116, %c0_117] : memref<18x18x8xbf16, #tpu.memory_space<vmem>>, vector<16x16x8xbf16>
    %c1_118 = arith.constant 1 : index
    %c1_119 = arith.constant 1 : index
    %c0_120 = arith.constant 0 : index
    %112 = vector.load %arg14[%c1_118, %c1_119, %c0_120] : memref<18x18x8xbf16, #tpu.memory_space<vmem>>, vector<16x16x8xbf16>
    %c1_121 = arith.constant 1 : index
    %c2_122 = arith.constant 2 : index
    %c0_123 = arith.constant 0 : index
    %113 = vector.load %arg14[%c1_121, %c2_122, %c0_123] : memref<18x18x8xbf16, #tpu.memory_space<vmem>>, vector<16x16x8xbf16>
    %c2_124 = arith.constant 2 : index
    %c0_125 = arith.constant 0 : index
    %c0_126 = arith.constant 0 : index
    %114 = vector.load %arg14[%c2_124, %c0_125, %c0_126] : memref<18x18x8xbf16, #tpu.memory_space<vmem>>, vector<16x16x8xbf16>
    %c2_127 = arith.constant 2 : index
    %c1_128 = arith.constant 1 : index
    %c0_129 = arith.constant 0 : index
    %115 = vector.load %arg14[%c2_127, %c1_128, %c0_129] : memref<18x18x8xbf16, #tpu.memory_space<vmem>>, vector<16x16x8xbf16>
    %c2_130 = arith.constant 2 : index
    %c2_131 = arith.constant 2 : index
    %c0_132 = arith.constant 0 : index
    %116 = vector.load %arg14[%c2_130, %c2_131, %c0_132] : memref<18x18x8xbf16, #tpu.memory_space<vmem>>, vector<16x16x8xbf16>
    %117 = tpu.concatenate %108, %109, %110, %111, %112, %113, %114, %115, %116 in 2 : vector<16x16x8xbf16>, vector<16x16x8xbf16>, vector<16x16x8xbf16>, vector<16x16x8xbf16>, vector<16x16x8xbf16>, vector<16x16x8xbf16>, vector<16x16x8xbf16>, vector<16x16x8xbf16>, vector<16x16x8xbf16> -> vector<16x16x72xbf16>
    %118 = vector.shape_cast %117 : vector<16x16x72xbf16> to vector<256x72xbf16>
    %c0_133 = arith.constant 0 : index
    %c0_134 = arith.constant 0 : index
    %119 = vector.load %arg9[%c0_133, %c0_134] : memref<72x8xbf16, #tpu.memory_space<vmem>>, vector<72x8xbf16>
    %cst_135 = arith.constant dense<0.000000e+00> : vector<256x8xf32>
    %120 = tpu.matmul %118, %119, %cst_135 {dimension_numbers = #tpu.dot_dimension_numbers<[1], [0], [0], [1], [0, 0, 1, 1], [], []>} : vector<256x72xbf16>, vector<72x8xbf16>, vector<256x8xf32> -> vector<256x8xf32>
    %c0_136 = arith.constant 0 : index
    %c0_137 = arith.constant 0 : index
    %121 = vector.load %arg10[%c0_136, %c0_137] : memref<1x8xf32, #tpu.memory_space<vmem>>, vector<1x8xf32>
    %122 = vector.broadcast %121 : vector<1x8xf32> to vector<256x8xf32>
    %123 = arith.addf %120, %122 : vector<256x8xf32>
    %cst_138 = arith.constant 0.000000e+00 : f32
    %124 = vector.broadcast %cst_138 : f32 to vector<256x8xf32>
    %125 = arith.maximumf %123, %124 : vector<256x8xf32>
    %126 = tpu.transpose %125, [1, 0] : vector<256x8xf32> -> vector<8x256xf32>
    %c0_139 = arith.constant 0 : index
    %c0_140 = arith.constant 0 : index
    %c0_141 = arith.constant 0 : index
    %127 = vector.load %arg11[%c0_139, %c0_140, %c0_141] : memref<1x8x256xf32, #tpu.memory_space<vmem>>, vector<1x8x256xf32>
    %128 = vector.shape_cast %127 : vector<1x8x256xf32> to vector<8x256xf32>
    %129 = vector.shape_cast %126 : vector<8x256xf32> to vector<1x8x256xf32>
    tpu.vector_store %arg11[%c0_139, %c0_140, %c0_141], %129 {strides = array<i32>} : memref<1x8x256xf32, #tpu.memory_space<vmem>>, vector<1x8x256xf32>,
    return
  }
  func.func @transform_0(%arg0: i32) -> (i32, i32, i32) {
    %c0_i32 = arith.constant 0 : i32
    %c0_i32_0 = arith.constant 0 : i32
    %c0_i32_1 = arith.constant 0 : i32
    return %arg0, %c0_i32, %c0_i32_0 : i32, i32, i32
  }
  func.func @transform_1(%arg0: i32) -> (i32, i32, i32) {
    %c0_i32 = arith.constant 0 : i32
    %c0_i32_0 = arith.constant 0 : i32
    %c0_i32_1 = arith.constant 0 : i32
    return %arg0, %c0_i32, %c0_i32_0 : i32, i32, i32
  }
  func.func @transform_2(%arg0: i32) -> (i32, i32) {
    %c0_i32 = arith.constant 0 : i32
    %c0_i32_0 = arith.constant 0 : i32
    %c0_i32_1 = arith.constant 0 : i32
    return %c0_i32, %c0_i32_0 : i32, i32
  }
  func.func @transform_3(%arg0: i32) -> (i32, i32) {
    %c0_i32 = arith.constant 0 : i32
    %c0_i32_0 = arith.constant 0 : i32
    %c0_i32_1 = arith.constant 0 : i32
    return %c0_i32, %c0_i32_0 : i32, i32
  }
  func.func @transform_4(%arg0: i32) -> (i32, i32) {
    %c0_i32 = arith.constant 0 : i32
    %c0_i32_0 = arith.constant 0 : i32
    %c0_i32_1 = arith.constant 0 : i32
    return %c0_i32, %c0_i32_0 : i32, i32
  }
  func.func @transform_5(%arg0: i32) -> (i32, i32) {
    %c0_i32 = arith.constant 0 : i32
    %c0_i32_0 = arith.constant 0 : i32
    %c0_i32_1 = arith.constant 0 : i32
    return %c0_i32, %c0_i32_0 : i32, i32
  }
  func.func @transform_6(%arg0: i32) -> (i32, i32) {
    %c0_i32 = arith.constant 0 : i32
    %c0_i32_0 = arith.constant 0 : i32
    %c0_i32_1 = arith.constant 0 : i32
    return %c0_i32, %c0_i32_0 : i32, i32
  }
  func.func @transform_7(%arg0: i32) -> (i32, i32) {
    %c0_i32 = arith.constant 0 : i32
    %c0_i32_0 = arith.constant 0 : i32
    %c0_i32_1 = arith.constant 0 : i32
    return %c0_i32, %c0_i32_0 : i32, i32
  }
  func.func @transform_8(%arg0: i32) -> (i32, i32) {
    %c0_i32 = arith.constant 0 : i32
    %c0_i32_0 = arith.constant 0 : i32
    %c0_i32_1 = arith.constant 0 : i32
    return %c0_i32, %c0_i32_0 : i32, i32
  }
  func.func @transform_9(%arg0: i32) -> (i32, i32) {
    %c0_i32 = arith.constant 0 : i32
    %c0_i32_0 = arith.constant 0 : i32
    %c0_i32_1 = arith.constant 0 : i32
    return %c0_i32, %c0_i32_0 : i32, i32
  }
  func.func @transform_10(%arg0: i32) -> (i32, i32, i32) {
    %c0_i32 = arith.constant 0 : i32
    %c0_i32_0 = arith.constant 0 : i32
    %c0_i32_1 = arith.constant 0 : i32
    return %arg0, %c0_i32, %c0_i32_0 : i32, i32, i32
  }
}

</mosaic_0001>

<llo_original>
// kernel: decoder_block_forward.1
$region0: #{decoder_block_forward.1}
  #allocation0 [shape = 'u32[]', space=smem, size = 0x4, offset = 0x4, fixed_abs, tag = 'smem constant byte address 0x4 - core index']
  #allocation1 [shape = 'u32[144,128]{1,0:T(1,128)}', space=vmem, size = 0x12000, scoped, tag = 'internal scratch']
  #allocation2 [shape = 'bf16[9,9,4]{2,1,0:T(8,128)(2,1)}', space=vmem, size = 0x9000, scoped, tag = 'scratch operand']
  #allocation3 [shape = 'bf16[18,18,8]{2,1,0:T(8,128)(2,1)}', space=vmem, size = 0x1b000, scoped, tag = 'scratch operand']
  #allocation4 [shape = 'bf16[18,18,8]{2,1,0:T(8,128)(2,1)}', space=vmem, size = 0x1b000, scoped, tag = 'scratch operand']
  %s0 = inlined_call_operand.vmem [shape: f32[2,4,64], index: 0, kind: input, shape index: {}]
  %s1 = inlined_call_operand.vmem [shape: f32[2,4,256], index: 1, kind: input, shape index: {}]
  %s2 = inlined_call_operand.vmem [shape: f32[1,4], index: 2, kind: input, shape index: {}]
  %s3 = inlined_call_operand.vmem [shape: f32[1,4], index: 3, kind: input, shape index: {}]
  %s4 = inlined_call_operand.vmem [shape: bf16[16,16], index: 4, kind: input, shape index: {}]
  %s5 = inlined_call_operand.vmem [shape: f32[1,16], index: 5, kind: input, shape index: {}]
  %s6 = inlined_call_operand.vmem [shape: bf16[72,8], index: 6, kind: input, shape index: {}]
  %s7 = inlined_call_operand.vmem [shape: f32[1,8], index: 7, kind: input, shape index: {}]
  %s8 = inlined_call_operand.vmem [shape: bf16[72,8], index: 8, kind: input, shape index: {}]
  %s9 = inlined_call_operand.vmem [shape: f32[1,8], index: 9, kind: input, shape index: {}]
  %s10 = inlined_call_operand.vmem [shape: f32[2,8,256], index: 10, kind: output, shape index: {}]
  %s11 = sld [smem:[#allocation0]]
  $region73: #{decoder_block_forward.1} parent=0
    _
  %s13 = ssub.s32 1, %s11
  %s14 = scalar_select 0, %s13, %s11
  loop: start=0, step=1, limit=4
  $region2: #{decoder_block_forward.1} parent=0 // loop_pre_header
    _
  $region3: #{decoder_block_forward.1} parent=0 // loop_header
    %s16 = sphi 0, %s20
    %p17 = scmp.ge.s32.totalorder %s16, 4
    %s26 = sphi 0, %s28
    %s29 = sphi 0, %s26
    %s30 = sphi 0, %s29
    %s46 = sphi 0, %s30
    %s52 = sphi 0, %s54
    %s55 = sphi 0, %s52
    %s56 = sphi 0, %s55
    %s72 = sphi 0, %s56
    %s76 = sphi 0, %s76
    %s78 = sphi 0, %s76
    %s79 = sphi 0, %s78
    %s93 = sphi 0, %s79
    %s97 = sphi 0, %s97
    %s99 = sphi 0, %s97
    %s100 = sphi 0, %s99
    %s114 = sphi 0, %s100
    %s118 = sphi 0, %s118
    %s120 = sphi 0, %s118
    %s121 = sphi 0, %s120
    %s135 = sphi 0, %s121
    %s139 = sphi 0, %s139
    %s141 = sphi 0, %s139
    %s142 = sphi 0, %s141
    %s156 = sphi 0, %s142
    %s160 = sphi 0, %s160
    %s162 = sphi 0, %s160
    %s163 = sphi 0, %s162
    %s177 = sphi 0, %s163
    %s181 = sphi 0, %s181
    %s183 = sphi 0, %s181
    %s184 = sphi 0, %s183
    %s198 = sphi 0, %s184
    %s202 = sphi 0, %s202
    %s204 = sphi 0, %s202
    %s205 = sphi 0, %s204
    %s219 = sphi 0, %s205
    %s223 = sphi 0, %s223
    %s225 = sphi 0, %s223
    %s226 = sphi 0, %s225
    %s240 = sphi 0, %s226
    %s246 = sphi 0, %s248
    %s249 = sphi 0, %s246
    %s250 = sphi 0, %s249
    %s266 = sphi 0, %s250
  $region4: #{decoder_block_forward.1} parent=0 // loop_header_branch
    %19 = sbr.rel (%p17) target = $region8
  $region5: #{decoder_block_forward.1} parent=0 // loop_body
    %s21 = ssub.s32 %s16, 1
    %s22 = ssub.s32 %s16, 2
    %s23 = sadd.s32 %s16, 1
    %s24 = ssub.s32 %s16, %s23
    %p25 = scmp.eq.s32.totalorder %s24, 0
    %s27 = sadd.s32 %s26, 1
    %s28 = scalar_select %p25, %s26, %s27
    %p31 = pneg %p25
    %p32 = scmp.eq.s32.totalorder %s16, 1
    %p33 = por %p31, %p32
    %p34 = scmp.ne.s32.totalorder %s26, %s29
    %p35 = scmp.eq.s32.totalorder %s16, 0
    %p36 = por %p34, %p35
    %p37 = scmp.ne.s32.totalorder %s26, %s29
    %p38 = scmp.eq.s32.totalorder %s21, 1
    %p39 = por %p37, %p38
    %p40 = scmp.ne.s32.totalorder %s29, %s30
    %p41 = scmp.eq.s32.totalorder %s21, 0
    %p42 = por %p40, %p41
    %p43 = scmp.ne.s32.totalorder %s29, %s30
    %p44 = scmp.eq.s32.totalorder %s22, 1
    %p45 = por %p43, %p44
    %p47 = scmp.ne.s32.totalorder %s30, %s46
    %p48 = scmp.eq.s32.totalorder %s22, 0
    %p49 = por %p47, %p48
    %s50 = ssub.s32 %s16, %s23
    %p51 = scmp.eq.s32.totalorder %s50, 0
    %s53 = sadd.s32 %s52, 1
    %s54 = scalar_select %p51, %s52, %s53
    %p57 = pneg %p51
    %p58 = scmp.eq.s32.totalorder %s16, 1
    %p59 = por %p57, %p58
    %p60 = scmp.ne.s32.totalorder %s52, %s55
    %p61 = scmp.eq.s32.totalorder %s16, 0
    %p62 = por %p60, %p61
    %p63 = scmp.ne.s32.totalorder %s52, %s55
    %p64 = scmp.eq.s32.totalorder %s21, 1
    %p65 = por %p63, %p64
    %p66 = scmp.ne.s32.totalorder %s55, %s56
    %p67 = scmp.eq.s32.totalorder %s21, 0
    %p68 = por %p66, %p67
    %p69 = scmp.ne.s32.totalorder %s55, %s56
    %p70 = scmp.eq.s32.totalorder %s22, 1
    %p71 = por %p69, %p70
    %p73 = scmp.ne.s32.totalorder %s56, %s72
    %p74 = scmp.eq.s32.totalorder %s22, 0
    %p75 = por %p73, %p74
    %s77 = sadd.s32 %s76, 1
    %p80 = scmp.eq.s32.totalorder %s16, 1
    %p81 = scmp.ne.s32.totalorder %s76, %s78
    %p82 = scmp.eq.s32.totalorder %s16, 0
    %p83 = por %p81, %p82
    %p84 = scmp.ne.s32.totalorder %s76, %s78
    %p85 = scmp.eq.s32.totalorder %s21, 1
    %p86 = por %p84, %p85
    %p87 = scmp.ne.s32.totalorder %s78, %s79
    %p88 = scmp.eq.s32.totalorder %s21, 0
    %p89 = por %p87, %p88
    %p90 = scmp.ne.s32.totalorder %s78, %s79
    %p91 = scmp.eq.s32.totalorder %s22, 1
    %p92 = por %p90, %p91
    %p94 = scmp.ne.s32.totalorder %s79, %s93
    %p95 = scmp.eq.s32.totalorder %s22, 0
    %p96 = por %p94, %p95
    %s98 = sadd.s32 %s97, 1
    %p101 = scmp.eq.s32.totalorder %s16, 1
    %p102 = scmp.ne.s32.totalorder %s97, %s99
    %p103 = scmp.eq.s32.totalorder %s16, 0
    %p104 = por %p102, %p103
    %p105 = scmp.ne.s32.totalorder %s97, %s99
    %p106 = scmp.eq.s32.totalorder %s21, 1
    %p107 = por %p105, %p106
    %p108 = scmp.ne.s32.totalorder %s99, %s100
    %p109 = scmp.eq.s32.totalorder %s21, 0
    %p110 = por %p108, %p109
    %p111 = scmp.ne.s32.totalorder %s99, %s100
    %p112 = scmp.eq.s32.totalorder %s22, 1
    %p113 = por %p111, %p112
    %p115 = scmp.ne.s32.totalorder %s100, %s114
    %p116 = scmp.eq.s32.totalorder %s22, 0
    %p117 = por %p115, %p116
    %s119 = sadd.s32 %s118, 1
    %p122 = scmp.eq.s32.totalorder %s16, 1
    %p123 = scmp.ne.s32.totalorder %s118, %s120
    %p124 = scmp.eq.s32.totalorder %s16, 0
    %p125 = por %p123, %p124
    %p126 = scmp.ne.s32.totalorder %s118, %s120
    %p127 = scmp.eq.s32.totalorder %s21, 1
    %p128 = por %p126, %p127
    %p129 = scmp.ne.s32.totalorder %s120, %s121
    %p130 = scmp.eq.s32.totalorder %s21, 0
    %p131 = por %p129, %p130
    %p132 = scmp.ne.s32.totalorder %s120, %s121
    %p133 = scmp.eq.s32.totalorder %s22, 1
    %p134 = por %p132, %p133
    %p136 = scmp.ne.s32.totalorder %s121, %s135
    %p137 = scmp.eq.s32.totalorder %s22, 0
    %p138 = por %p136, %p137
    %s140 = sadd.s32 %s139, 1
    %p143 = scmp.eq.s32.totalorder %s16, 1
    %p144 = scmp.ne.s32.totalorder %s139, %s141
    %p145 = scmp.eq.s32.totalorder %s16, 0
    %p146 = por %p144, %p145
    %p147 = scmp.ne.s32.totalorder %s139, %s141
    %p148 = scmp.eq.s32.totalorder %s21, 1
    %p149 = por %p147, %p148
    %p150 = scmp.ne.s32.totalorder %s141, %s142
    %p151 = scmp.eq.s32.totalorder %s21, 0
    %p152 = por %p150, %p151
    %p153 = scmp.ne.s32.totalorder %s141, %s142
    %p154 = scmp.eq.s32.totalorder %s22, 1
    %p155 = por %p153, %p154
    %p157 = scmp.ne.s32.totalorder %s142, %s156
    %p158 = scmp.eq.s32.totalorder %s22, 0
    %p159 = por %p157, %p158
    %s161 = sadd.s32 %s160, 1
    %p164 = scmp.eq.s32.totalorder %s16, 1
    %p165 = scmp.ne.s32.totalorder %s160, %s162
    %p166 = scmp.eq.s32.totalorder %s16, 0
    %p167 = por %p165, %p166
    %p168 = scmp.ne.s32.totalorder %s160, %s162
    %p169 = scmp.eq.s32.totalorder %s21, 1
    %p170 = por %p168, %p169
    %p171 = scmp.ne.s32.totalorder %s162, %s163
    %p172 = scmp.eq.s32.totalorder %s21, 0
    %p173 = por %p171, %p172
    %p174 = scmp.ne.s32.totalorder %s162, %s163
    %p175 = scmp.eq.s32.totalorder %s22, 1
    %p176 = por %p174, %p175
    %p178 = scmp.ne.s32.totalorder %s163, %s177
    %p179 = scmp.eq.s32.totalorder %s22, 0
    %p180 = por %p178, %p179
    %s182 = sadd.s32 %s181, 1
    %p185 = scmp.eq.s32.totalorder %s16, 1
    %p186 = scmp.ne.s32.totalorder %s181, %s183
    %p187 = scmp.eq.s32.totalorder %s16, 0
    %p188 = por %p186, %p187
    %p189 = scmp.ne.s32.totalorder %s181, %s183
    %p190 = scmp.eq.s32.totalorder %s21, 1
    %p191 = por %p189, %p190
    %p192 = scmp.ne.s32.totalorder %s183, %s184
    %p193 = scmp.eq.s32.totalorder %s21, 0
    %p194 = por %p192, %p193
    %p195 = scmp.ne.s32.totalorder %s183, %s184
    %p196 = scmp.eq.s32.totalorder %s22, 1
    %p197 = por %p195, %p196
    %p199 = scmp.ne.s32.totalorder %s184, %s198
    %p200 = scmp.eq.s32.totalorder %s22, 0
    %p201 = por %p199, %p200
    %s203 = sadd.s32 %s202, 1
    %p206 = scmp.eq.s32.totalorder %s16, 1
    %p207 = scmp.ne.s32.totalorder %s202, %s204
    %p208 = scmp.eq.s32.totalorder %s16, 0
    %p209 = por %p207, %p208
    %p210 = scmp.ne.s32.totalorder %s202, %s204
    %p211 = scmp.eq.s32.totalorder %s21, 1
    %p212 = por %p210, %p211
    %p213 = scmp.ne.s32.totalorder %s204, %s205
    %p214 = scmp.eq.s32.totalorder %s21, 0
    %p215 = por %p213, %p214
    %p216 = scmp.ne.s32.totalorder %s204, %s205
    %p217 = scmp.eq.s32.totalorder %s22, 1
    %p218 = por %p216, %p217
    %p220 = scmp.ne.s32.totalorder %s205, %s219
    %p221 = scmp.eq.s32.totalorder %s22, 0
    %p222 = por %p220, %p221
    %s224 = sadd.s32 %s223, 1
    %p227 = scmp.eq.s32.totalorder %s16, 1
    %p228 = scmp.ne.s32.totalorder %s223, %s225
    %p229 = scmp.eq.s32.totalorder %s16, 0
    %p230 = por %p228, %p229
    %p231 = scmp.ne.s32.totalorder %s223, %s225
    %p232 = scmp.eq.s32.totalorder %s21, 1
    %p233 = por %p231, %p232
    %p234 = scmp.ne.s32.totalorder %s225, %s226
    %p235 = scmp.eq.s32.totalorder %s21, 0
    %p236 = por %p234, %p235
    %p237 = scmp.ne.s32.totalorder %s225, %s226
    %p238 = scmp.eq.s32.totalorder %s22, 1
    %p239 = por %p237, %p238
    %p241 = scmp.ne.s32.totalorder %s226, %s240
    %p242 = scmp.eq.s32.totalorder %s22, 0
    %p243 = por %p241, %p242
    %s244 = ssub.s32 %s16, %s23
    %p245 = scmp.eq.s32.totalorder %s244, 0
    %s247 = sadd.s32 %s246, 1
    %s248 = scalar_select %p245, %s246, %s247
    %p251 = pneg %p245
    %p252 = scmp.eq.s32.totalorder %s16, 1
    %p253 = por %p251, %p252
    %p254 = scmp.ne.s32.totalorder %s246, %s249
    %p255 = scmp.eq.s32.totalorder %s16, 0
    %p256 = por %p254, %p255
    %p257 = scmp.ne.s32.totalorder %s246, %s249
    %p258 = scmp.eq.s32.totalorder %s21, 1
    %p259 = por %p257, %p258
    %p260 = scmp.ne.s32.totalorder %s249, %s250
    %p261 = scmp.eq.s32.totalorder %s21, 0
    %p262 = por %p260, %p261
    %p263 = scmp.ne.s32.totalorder %s249, %s250
    %p264 = scmp.eq.s32.totalorder %s22, 1
    %p265 = por %p263, %p264
    %p267 = scmp.ne.s32.totalorder %s250, %s266
    %p268 = scmp.eq.s32.totalorder %s22, 0
    %p269 = por %p267, %p268
    %p270 = scmp.le.s32.totalorder 1, %s16
    %p271 = scmp.lt.s32.totalorder %s16, 3
    %p272 = pnand %p270, %p271
    %p273 = pneg %p272
    // Predicated region
    $region9: #{decoder_block_forward.1} parent=5 // pred_check
      _
    $region10: #{decoder_block_forward.1} parent=5 // pred_check_branch
      %275 = sbr.rel (%p272) target = $region12
    $region11: #{decoder_block_forward.1} parent=5 // pred_region
      %s276 = ssub.s32 %s16, 1
      // Predicated region
      $region13: #{decoder_block_forward.1} parent=11 // pred_check
        %p277 = pneg %p89
      $region14: #{decoder_block_forward.1} parent=11 // pred_check_branch
        %279 = sbr.rel (%p277) target = $region16
      $region15: #{decoder_block_forward.1} parent=11 // pred_region
        _
      $region16: #{decoder_block_forward.1} parent=11 // pred_fallthru
        _
      // Predicated region
      $region17: #{decoder_block_forward.1} parent=11 // pred_check
        %p280 = pneg %p110
      $region18: #{decoder_block_forward.1} parent=11 // pred_check_branch
        %282 = sbr.rel (%p280) target = $region20
      $region19: #{decoder_block_forward.1} parent=11 // pred_region
        _
      $region20: #{decoder_block_forward.1} parent=11 // pred_fallthru
        _
      // Predicated region
      $region21: #{decoder_block_forward.1} parent=11 // pred_check
        %p283 = pneg %p131
      $region22: #{decoder_block_forward.1} parent=11 // pred_check_branch
        %285 = sbr.rel (%p283) target = $region24
      $region23: #{decoder_block_forward.1} parent=11 // pred_region
        _
      $region24: #{decoder_block_forward.1} parent=11 // pred_fallthru
        _
      // Predicated region
      $region25: #{decoder_block_forward.1} parent=11 // pred_check
        %p286 = pneg %p152
      $region26: #{decoder_block_forward.1} parent=11 // pred_check_branch
        %288 = sbr.rel (%p286) target = $region28
      $region27: #{decoder_block_forward.1} parent=11 // pred_region
        _
      $region28: #{decoder_block_forward.1} parent=11 // pred_fallthru
        _
      // Predicated region
      $region29: #{decoder_block_forward.1} parent=11 // pred_check
        %p289 = pneg %p173
      $region30: #{decoder_block_forward.1} parent=11 // pred_check_branch
        %291 = sbr.rel (%p289) target = $region32
      $region31: #{decoder_block_forward.1} parent=11 // pred_region
        _
      $region32: #{decoder_block_forward.1} parent=11 // pred_fallthru
        _
      // Predicated region
      $region33: #{decoder_block_forward.1} parent=11 // pred_check
        %p292 = pneg %p194
      $region34: #{decoder_block_forward.1} parent=11 // pred_check_branch
        %294 = sbr.rel (%p292) target = $region36
      $region35: #{decoder_block_forward.1} parent=11 // pred_region
        _
      $region36: #{decoder_block_forward.1} parent=11 // pred_fallthru
        _
      // Predicated region
      $region37: #{decoder_block_forward.1} parent=11 // pred_check
        %p295 = pneg %p215
      $region38: #{decoder_block_forward.1} parent=11 // pred_check_branch
        %297 = sbr.rel (%p295) target = $region40
      $region39: #{decoder_block_forward.1} parent=11 // pred_region
        _
      $region40: #{decoder_block_forward.1} parent=11 // pred_fallthru
        _
      // Predicated region
      $region41: #{decoder_block_forward.1} parent=11 // pred_check
        %p298 = pneg %p236
      $region42: #{decoder_block_forward.1} parent=11 // pred_check_branch
        %300 = sbr.rel (%p298) target = $region44
      $region43: #{decoder_block_forward.1} parent=11 // pred_region
        _
      $region44: #{decoder_block_forward.1} parent=11 // pred_fallthru
        _
    $region12: #{decoder_block_forward.1} parent=5 // pred_fallthru
      _
    %p301 = scmp.lt.s32.totalorder %s16, 2
    // Predicated region
    $region45: #{decoder_block_forward.1} parent=5 // pred_check
      %p302 = pneg %p301
    $region46: #{decoder_block_forward.1} parent=5 // pred_check_branch
      %304 = sbr.rel (%p302) target = $region48
    $region47: #{decoder_block_forward.1} parent=5 // pred_region
      // Predicated region
      $region49: #{decoder_block_forward.1} parent=47 // pred_check
        %p305 = pneg %p36
      $region50: #{decoder_block_forward.1} parent=47 // pred_check_branch
        %307 = sbr.rel (%p305) target = $region52
      $region51: #{decoder_block_forward.1} parent=47 // pred_region
        %p308 = scmp.lt.s32.totalorder %s16, 1
        %s309 = scalar_select %p308, %s16, 1
        %s310 = smul.addr %s309, 4
        %s311 = scalar_lea.vmem %s0, %s310
      $region52: #{decoder_block_forward.1} parent=47 // pred_fallthru
        _
      // Predicated region
      $region53: #{decoder_block_forward.1} parent=47 // pred_check
        %p312 = pneg %p62
      $region54: #{decoder_block_forward.1} parent=47 // pred_check_branch
        %314 = sbr.rel (%p312) target = $region56
      $region55: #{decoder_block_forward.1} parent=47 // pred_region
        %p315 = scmp.lt.s32.totalorder %s16, 1
        %s316 = scalar_select %p315, %s16, 1
        %s317 = smul.addr %s316, 2
        %s318 = smul.addr %s317, 4
        %s319 = scalar_lea.vmem %s1, %s318
      $region56: #{decoder_block_forward.1} parent=47 // pred_fallthru
        _
    $region48: #{decoder_block_forward.1} parent=5 // pred_fallthru
      _
    %p320 = scmp.le.s32.totalorder 1, %s16
    %p321 = scmp.lt.s32.totalorder %s16, 3
    %p322 = pnand %p320, %p321
    %p323 = pneg %p322
    // Predicated region
    $region57: #{decoder_block_forward.1} parent=5 // pred_check
      _
    $region58: #{decoder_block_forward.1} parent=5 // pred_check_branch
      %325 = sbr.rel (%p322) target = $region60
    $region59: #{decoder_block_forward.1} parent=5 // pred_region
      %s326 = ssub.s32 %s16, 1
      %p327 = scmp.lt.s32.totalorder %s21, 1
      %s328 = scalar_select %p327, %s21, 1
      %s329 = smul.addr %s328, 4
      %s330 = scalar_lea.vmem %s0, %s329
      %p331 = pneg %p42
      %p332 = pneg %p39
      %p333 = scmp.lt.s32.totalorder %s21, 1
      %s334 = scalar_select %p333, %s21, 1
      %s335 = smul.addr %s334, 2
      %s336 = smul.addr %s335, 4
      %s337 = scalar_lea.vmem %s1, %s336
      %p338 = pneg %p68
      %p339 = pneg %p65
      %p340 = pneg %p89
      %p341 = pneg %p86
      %p342 = pneg %p110
      %p343 = pneg %p107
      %p344 = pneg %p131
      %p345 = pneg %p128
      %p346 = pneg %p152
      %p347 = pneg %p149
      %p348 = pneg %p173
      %p349 = pneg %p170
      %p350 = pneg %p194
      %p351 = pneg %p191
      %p352 = pneg %p215
      %p353 = pneg %p212
      %p354 = pneg %p236
      %p355 = pneg %p233
      %p356 = pneg %p262
      %p357 = pneg %p259
      %p358 = scmp.lt.s32.totalorder %s21, 1
      %s359 = scalar_select %p358, %s21, 1
      %s360 = smul.addr %s359, 2
      %s361 = smul.addr %s360, 8
      %s362 = scalar_lea.vmem %s10, %s361
      %p363 = scmp.lt.s32.totalorder %s21, 1
      %s364 = scalar_select %p363, %s21, 1
      %s365 = smul.addr %s364, 4
      %s366 = scalar_lea.vmem %s0, %s365
      %p367 = scmp.lt.s32.totalorder %s21, 1
      %s368 = scalar_select %p367, %s21, 1
      %s369 = smul.addr %s368, 2
      %s370 = smul.addr %s369, 4
      %s371 = scalar_lea.vmem %s1, %s370
      %p372 = scmp.lt.s32.totalorder %s21, 1
      %s373 = scalar_select %p372, %s21, 1
      %s374 = smul.addr %s373, 2
      %s375 = smul.addr %s374, 8
      %s376 = scalar_lea.vmem %s10, %s375
      %s378 = scalar_lea.vmem [#allocation2], 64
      %vm379 = vcmask 27648
      %380 = vst.msk [vmem:[%s378] sm:$0xf] %vm379, 0
      %vm381 = vcmask 24576
      %vm382 = vsmask.f32 256
      %vm383 = vmand %vm381, %vm382
      %v384 = vld [vmem:[%s378 + $0x4] sm:$0x1]
      %v385 = vsel %vm383, 0, %v384
      %386 = vst [vmem:[%s378 + $0x4] sm:$0x1] %v385
      %v387 = vld [vmem:[#allocation2 + $0x4] sm:$0x1]
      %v388 = vsel %vm383, 0, %v387
      %389 = vst [vmem:[#allocation2 + $0x4] sm:$0x1] %v388
      %v390 = vld [vmem:[#allocation2 + $0xc] sm:$0x1]
      %v391 = vsel %vm383, 0, %v390
      %392 = vst [vmem:[#allocation2 + $0xc] sm:$0x1] %v391
      %v393 = vld [vmem:[#allocation2 + $0x14] sm:$0x1]
      %v394 = vsel %vm383, 0, %v393
      %395 = vst [vmem:[#allocation2 + $0x14] sm:$0x1] %v394
      %v396 = vld [vmem:[#allocation2 + $0x1c] sm:$0x1]
      %v397 = vsel %vm383, 0, %v396
      %398 = vst [vmem:[#allocation2 + $0x1c] sm:$0x1] %v397
      %v399 = vld [vmem:[#allocation2 + $0x24] sm:$0x1]
      %v400 = vsel %vm383, 0, %v399
      %401 = vst [vmem:[#allocation2 + $0x24] sm:$0x1] %v400
      %v402 = vld [vmem:[#allocation2 + $0x2c] sm:$0x1]
      %v403 = vsel %vm383, 0, %v402
      %404 = vst [vmem:[#allocation2 + $0x2c] sm:$0x1] %v403
      %v405 = vld [vmem:[#allocation2 + $0x34] sm:$0x1]
      %v406 = vsel %vm383, 0, %v405
      %407 = vst [vmem:[#allocation2 + $0x34] sm:$0x1] %v406
      %v408 = vld [vmem:[#allocation2 + $0x3c] sm:$0x1]
      %v409 = vsel %vm383, 0, %v408
      %410 = vst [vmem:[#allocation2 + $0x3c] sm:$0x1] %v409
      %v411 = vld [vmem:[#allocation2 + $0x44] sm:$0x1]
      %v412 = vsel %vm383, 0, %v411
      %413 = vst [vmem:[#allocation2 + $0x44] sm:$0x1] %v412
      %vm414 = vcmask 60416
      %415 = vst.msk [vmem:[#allocation3] sm:$0xf] %vm414, 0
      %416 = vst.msk [vmem:[#allocation3 + $0x4] sm:$0xf] %vm414, 0
      %vm417 = vcmask 57344
      %418 = vst.msk [vmem:[#allocation3 + $0x8] sm:$0x1] %vm417, 0
      %s419 = scalar_lea.vmem [#allocation3], 204
      %420 = vst.msk [vmem:[%s419] sm:$0xf] %vm414, 0
      %421 = vst.msk [vmem:[%s419 + $0x4] sm:$0xf] %vm414, 0
      %422 = vst.msk [vmem:[%s419 + $0x8] sm:$0x1] %vm417, 0
      %vm423 = vcmask 57344
      %vm424 = vmand %vm423, %vm382
      %v425 = vld [vmem:[#allocation3] sm:$0x1]
      %v426 = vsel %vm424, 0, %v425
      %427 = vst [vmem:[#allocation3] sm:$0x1] %v426
      %v428 = vld [vmem:[#allocation3 + $0xc] sm:$0x1]
      %v429 = vsel %vm424, 0, %v428
      %430 = vst [vmem:[#allocation3 + $0xc] sm:$0x1] %v429
      %v431 = vld [vmem:[#allocation3 + $0x18] sm:$0x1]
      %v432 = vsel %vm424, 0, %v431
      %433 = vst [vmem:[#allocation3 + $0x18] sm:$0x1] %v432
      %v434 = vld [vmem:[#allocation3 + $0x24] sm:$0x1]
      %v435 = vsel %vm424, 0, %v434
      %436 = vst [vmem:[#allocation3 + $0x24] sm:$0x1] %v435
      %v437 = vld [vmem:[#allocation3 + $0x30] sm:$0x1]
      %v438 = vsel %vm424, 0, %v437
      %439 = vst [vmem:[#allocation3 + $0x30] sm:$0x1] %v438
      %v440 = vld [vmem:[#allocation3 + $0x3c] sm:$0x1]
      %v441 = vsel %vm424, 0, %v440
      %442 = vst [vmem:[#allocation3 + $0x3c] sm:$0x1] %v441
      %v443 = vld [vmem:[#allocation3 + $0x48] sm:$0x1]
      %v444 = vsel %vm424, 0, %v443
      %445 = vst [vmem:[#allocation3 + $0x48] sm:$0x1] %v444
      %v446 = vld [vmem:[#allocation3 + $0x54] sm:$0x1]
      %v447 = vsel %vm424, 0, %v446
      %448 = vst [vmem:[#allocation3 + $0x54] sm:$0x1] %v447
      %v449 = vld [vmem:[#allocation3 + $0x60] sm:$0x1]
      %v450 = vsel %vm424, 0, %v449
      %451 = vst [vmem:[#allocation3 + $0x60] sm:$0x1] %v450
      %v452 = vld [vmem:[#allocation3 + $0x6c] sm:$0x1]
      %v453 = vsel %vm424, 0, %v452
      %454 = vst [vmem:[#allocation3 + $0x6c] sm:$0x1] %v453
      %v455 = vld [vmem:[#allocation3 + $0x78] sm:$0x1]
      %v456 = vsel %vm424, 0, %v455
      %457 = vst [vmem:[#allocation3 + $0x78] sm:$0x1] %v456
      %v458 = vld [vmem:[#allocation3 + $0x84] sm:$0x1]
      %v459 = vsel %vm424, 0, %v458
      %460 = vst [vmem:[#allocation3 + $0x84] sm:$0x1] %v459
      %v461 = vld [vmem:[#allocation3 + $0x90] sm:$0x1]
      %v462 = vsel %vm424, 0, %v461
      %463 = vst [vmem:[#allocation3 + $0x90] sm:$0x1] %v462
      %v464 = vld [vmem:[#allocation3 + $0x9c] sm:$0x1]
      %v465 = vsel %vm424, 0, %v464
      %466 = vst [vmem:[#allocation3 + $0x9c] sm:$0x1] %v465
      %v467 = vld [vmem:[#allocation3 + $0xa8] sm:$0x1]
      %v468 = vsel %vm424, 0, %v467
      %469 = vst [vmem:[#allocation3 + $0xa8] sm:$0x1] %v468
      %v470 = vld [vmem:[#allocation3 + $0xb4] sm:$0x1]
      %v471 = vsel %vm424, 0, %v470
      %472 = vst [vmem:[#allocation3 + $0xb4] sm:$0x1] %v471
      %v473 = vld [vmem:[#allocation3 + $0xc0] sm:$0x1]
      %v474 = vsel %vm424, 0, %v473
      %475 = vst [vmem:[#allocation3 + $0xc0] sm:$0x1] %v474
      %v476 = vld [vmem:[#allocation3 + $0xcc] sm:$0x1]
      %v477 = vsel %vm424, 0, %v476
      %478 = vst [vmem:[#allocation3 + $0xcc] sm:$0x1] %v477
      %vm479 = vsmask.f32 7938
      %vm480 = vmand %vm423, %vm479
      %v481 = vld [vmem:[#allocation3 + $0x8] sm:$0x1]
      %v482 = vsel %vm480, 0, %v481
      %483 = vst [vmem:[#allocation3 + $0x8] sm:$0x1] %v482
      %v484 = vld [vmem:[#allocation3 + $0x14] sm:$0x1]
      %v485 = vsel %vm480, 0, %v484
      %486 = vst [vmem:[#allocation3 + $0x14] sm:$0x1] %v485
      %v487 = vld [vmem:[#allocation3 + $0x20] sm:$0x1]
      %v488 = vsel %vm480, 0, %v487
      %489 = vst [vmem:[#allocation3 + $0x20] sm:$0x1] %v488
      %v490 = vld [vmem:[#allocation3 + $0x2c] sm:$0x1]
      %v491 = vsel %vm480, 0, %v490
      %492 = vst [vmem:[#allocation3 + $0x2c] sm:$0x1] %v491
      %v493 = vld [vmem:[#allocation3 + $0x38] sm:$0x1]
      %v494 = vsel %vm480, 0, %v493
      %495 = vst [vmem:[#allocation3 + $0x38] sm:$0x1] %v494
      %v496 = vld [vmem:[#allocation3 + $0x44] sm:$0x1]
      %v497 = vsel %vm480, 0, %v496
      %498 = vst [vmem:[#allocation3 + $0x44] sm:$0x1] %v497
      %v499 = vld [vmem:[#allocation3 + $0x50] sm:$0x1]
      %v500 = vsel %vm480, 0, %v499
      %501 = vst [vmem:[#allocation3 + $0x50] sm:$0x1] %v500
      %v502 = vld [vmem:[#allocation3 + $0x5c] sm:$0x1]
      %v503 = vsel %vm480, 0, %v502
      %504 = vst [vmem:[#allocation3 + $0x5c] sm:$0x1] %v503
      %v505 = vld [vmem:[#allocation3 + $0x68] sm:$0x1]
      %v506 = vsel %vm480, 0, %v505
      %507 = vst [vmem:[#allocation3 + $0x68] sm:$0x1] %v506
      %v508 = vld [vmem:[#allocation3 + $0x74] sm:$0x1]
      %v509 = vsel %vm480, 0, %v508
      %510 = vst [vmem:[#allocation3 + $0x74] sm:$0x1] %v509
      %v511 = vld [vmem:[#allocation3 + $0x80] sm:$0x1]
      %v512 = vsel %vm480, 0, %v511
      %513 = vst [vmem:[#allocation3 + $0x80] sm:$0x1] %v512
      %v514 = vld [vmem:[#allocation3 + $0x8c] sm:$0x1]
      %v515 = vsel %vm480, 0, %v514
      %516 = vst [vmem:[#allocation3 + $0x8c] sm:$0x1] %v515
      %v517 = vld [vmem:[#allocation3 + $0x98] sm:$0x1]
      %v518 = vsel %vm480, 0, %v517
      %519 = vst [vmem:[#allocation3 + $0x98] sm:$0x1] %v518
      %v520 = vld [vmem:[#allocation3 + $0xa4] sm:$0x1]
      %v521 = vsel %vm480, 0, %v520
      %522 = vst [vmem:[#allocation3 + $0xa4] sm:$0x1] %v521
      %v523 = vld [vmem:[#allocation3 + $0xb0] sm:$0x1]
      %v524 = vsel %vm480, 0, %v523
      %525 = vst [vmem:[#allocation3 + $0xb0] sm:$0x1] %v524
      %v526 = vld [vmem:[#allocation3 + $0xbc] sm:$0x1]
      %v527 = vsel %vm480, 0, %v526
      %528 = vst [vmem:[#allocation3 + $0xbc] sm:$0x1] %v527
      %v529 = vld [vmem:[#allocation3 + $0xc8] sm:$0x1]
      %v530 = vsel %vm480, 0, %v529
      %531 = vst [vmem:[#allocation3 + $0xc8] sm:$0x1] %v530
      %v532 = vld [vmem:[#allocation3 + $0xd4] sm:$0x1]
      %v533 = vsel %vm480, 0, %v532
      %534 = vst [vmem:[#allocation3 + $0xd4] sm:$0x1] %v533
      %535 = vst.msk [vmem:[#allocation4] sm:$0xf] %vm414, 0
      %536 = vst.msk [vmem:[#allocation4 + $0x4] sm:$0xf] %vm414, 0
      %537 = vst.msk [vmem:[#allocation4 + $0x8] sm:$0x1] %vm417, 0
      %s538 = scalar_lea.vmem [#allocation4], 204
      %539 = vst.msk [vmem:[%s538] sm:$0xf] %vm414, 0
      %540 = vst.msk [vmem:[%s538 + $0x4] sm:$0xf] %vm414, 0
      %541 = vst.msk [vmem:[%s538 + $0x8] sm:$0x1] %vm417, 0
      %v542 = vld [vmem:[#allocation4] sm:$0x1]
      %v543 = vsel %vm424, 0, %v542
      %544 = vst [vmem:[#allocation4] sm:$0x1] %v543
      %v545 = vld [vmem:[#allocation4 + $0xc] sm:$0x1]
      %v546 = vsel %vm424, 0, %v545
      %547 = vst [vmem:[#allocation4 + $0xc] sm:$0x1] %v546
      %v548 = vld [vmem:[#allocation4 + $0x18] sm:$0x1]
      %v549 = vsel %vm424, 0, %v548
      %550 = vst [vmem:[#allocation4 + $0x18] sm:$0x1] %v549
      %v551 = vld [vmem:[#allocation4 + $0x24] sm:$0x1]
      %v552 = vsel %vm424, 0, %v551
      %553 = vst [vmem:[#allocation4 + $0x24] sm:$0x1] %v552
      %v554 = vld [vmem:[#allocation4 + $0x30] sm:$0x1]
      %v555 = vsel %vm424, 0, %v554
      %556 = vst [vmem:[#allocation4 + $0x30] sm:$0x1] %v555
      %v557 = vld [vmem:[#allocation4 + $0x3c] sm:$0x1]
      %v558 = vsel %vm424, 0, %v557
      %559 = vst [vmem:[#allocation4 + $0x3c] sm:$0x1] %v558
      %v560 = vld [vmem:[#allocation4 + $0x48] sm:$0x1]
      %v561 = vsel %vm424, 0, %v560
      %562 = vst [vmem:[#allocation4 + $0x48] sm:$0x1] %v561
      %v563 = vld [vmem:[#allocation4 + $0x54] sm:$0x1]
      %v564 = vsel %vm424, 0, %v563
      %565 = vst [vmem:[#allocation4 + $0x54] sm:$0x1] %v564
      %v566 = vld [vmem:[#allocation4 + $0x60] sm:$0x1]
      %v567 = vsel %vm424, 0, %v566
      %568 = vst [vmem:[#allocation4 + $0x60] sm:$0x1] %v567
      %v569 = vld [vmem:[#allocation4 + $0x6c] sm:$0x1]
      %v570 = vsel %vm424, 0, %v569
      %571 = vst [vmem:[#allocation4 + $0x6c] sm:$0x1] %v570
      %v572 = vld [vmem:[#allocation4 + $0x78] sm:$0x1]
      %v573 = vsel %vm424, 0, %v572
      %574 = vst [vmem:[#allocation4 + $0x78] sm:$0x1] %v573
      %v575 = vld [vmem:[#allocation4 + $0x84] sm:$0x1]
      %v576 = vsel %vm424, 0, %v575
      %577 = vst [vmem:[#allocation4 + $0x84] sm:$0x1] %v576
      %v578 = vld [vmem:[#allocation4 + $0x90] sm:$0x1]
      %v579 = vsel %vm424, 0, %v578
      %580 = vst [vmem:[#allocation4 + $0x90] sm:$0x1] %v579
      %v581 = vld [vmem:[#allocation4 + $0x9c] sm:$0x1]
      %v582 = vsel %vm424, 0, %v581
      %583 = vst [vmem:[#allocation4 + $0x9c] sm:$0x1] %v582
      %v584 = vld [vmem:[#allocation4 + $0xa8] sm:$0x1]
      %v585 = vsel %vm424, 0, %v584
      %586 = vst [vmem:[#allocation4 + $0xa8] sm:$0x1] %v585
      %v587 = vld [vmem:[#allocation4 + $0xb4] sm:$0x1]
      %v588 = vsel %vm424, 0, %v587
      %589 = vst [vmem:[#allocation4 + $0xb4] sm:$0x1] %v588
      %v590 = vld [vmem:[#allocation4 + $0xc0] sm:$0x1]
      %v591 = vsel %vm424, 0, %v590
      %592 = vst [vmem:[#allocation4 + $0xc0] sm:$0x1] %v591
      %v593 = vld [vmem:[#allocation4 + $0xcc] sm:$0x1]
      %v594 = vsel %vm424, 0, %v593
      %595 = vst [vmem:[#allocation4 + $0xcc] sm:$0x1] %v594
      %v596 = vld [vmem:[#allocation4 + $0x8] sm:$0x1]
      %v597 = vsel %vm480, 0, %v596
      %598 = vst [vmem:[#allocation4 + $0x8] sm:$0x1] %v597
      %v599 = vld [vmem:[#allocation4 + $0x14] sm:$0x1]
      %v600 = vsel %vm480, 0, %v599
      %601 = vst [vmem:[#allocation4 + $0x14] sm:$0x1] %v600
      %v602 = vld [vmem:[#allocation4 + $0x20] sm:$0x1]
      %v603 = vsel %vm480, 0, %v602
      %604 = vst [vmem:[#allocation4 + $0x20] sm:$0x1] %v603
      %v605 = vld [vmem:[#allocation4 + $0x2c] sm:$0x1]
      %v606 = vsel %vm480, 0, %v605
      %607 = vst [vmem:[#allocation4 + $0x2c] sm:$0x1] %v606
      %v608 = vld [vmem:[#allocation4 + $0x38] sm:$0x1]
      %v609 = vsel %vm480, 0, %v608
      %610 = vst [vmem:[#allocation4 + $0x38] sm:$0x1] %v609
      %v611 = vld [vmem:[#allocation4 + $0x44] sm:$0x1]
      %v612 = vsel %vm480, 0, %v611
      %613 = vst [vmem:[#allocation4 + $0x44] sm:$0x1] %v612
      %v614 = vld [vmem:[#allocation4 + $0x50] sm:$0x1]
      %v615 = vsel %vm480, 0, %v614
      %616 = vst [vmem:[#allocation4 + $0x50] sm:$0x1] %v615
      %v617 = vld [vmem:[#allocation4 + $0x5c] sm:$0x1]
      %v618 = vsel %vm480, 0, %v617
      %619 = vst [vmem:[#allocation4 + $0x5c] sm:$0x1] %v618
      %v620 = vld [vmem:[#allocation4 + $0x68] sm:$0x1]
      %v621 = vsel %vm480, 0, %v620
      %622 = vst [vmem:[#allocation4 + $0x68] sm:$0x1] %v621
      %v623 = vld [vmem:[#allocation4 + $0x74] sm:$0x1]
      %v624 = vsel %vm480, 0, %v623
      %625 = vst [vmem:[#allocation4 + $0x74] sm:$0x1] %v624
      %v626 = vld [vmem:[#allocation4 + $0x80] sm:$0x1]
      %v627 = vsel %vm480, 0, %v626
      %628 = vst [vmem:[#allocation4 + $0x80] sm:$0x1] %v627
      %v629 = vld [vmem:[#allocation4 + $0x8c] sm:$0x1]
      %v630 = vsel %vm480, 0, %v629
      %631 = vst [vmem:[#allocation4 + $0x8c] sm:$0x1] %v630
      %v632 = vld [vmem:[#allocation4 + $0x98] sm:$0x1]
      %v633 = vsel %vm480, 0, %v632
      %634 = vst [vmem:[#allocation4 + $0x98] sm:$0x1] %v633
      %v635 = vld [vmem:[#allocation4 + $0xa4] sm:$0x1]
      %v636 = vsel %vm480, 0, %v635
      %637 = vst [vmem:[#allocation4 + $0xa4] sm:$0x1] %v636
      %v638 = vld [vmem:[#allocation4 + $0xb0] sm:$0x1]
      %v639 = vsel %vm480, 0, %v638
      %640 = vst [vmem:[#allocation4 + $0xb0] sm:$0x1] %v639
      %v641 = vld [vmem:[#allocation4 + $0xbc] sm:$0x1]
      %v642 = vsel %vm480, 0, %v641
      %643 = vst [vmem:[#allocation4 + $0xbc] sm:$0x1] %v642
      %v644 = vld [vmem:[#allocation4 + $0xc8] sm:$0x1]
      %v645 = vsel %vm480, 0, %v644
      %646 = vst [vmem:[#allocation4 + $0xc8] sm:$0x1] %v645
      %v647 = vld [vmem:[#allocation4 + $0xd4] sm:$0x1]
      %v648 = vsel %vm480, 0, %v647
      %649 = vst [vmem:[#allocation4 + $0xd4] sm:$0x1] %v648
      %v650 = vld [vmem:[%s366] sm:$0xf]
      %651 = vxpose.xlu0.b32.start [1/16] %v650, 128
      %652 = vxpose.xlu0.b32.cont [2/16] 0.0, 128
      %653 = vxpose.xlu0.b32.cont [3/16] 0.0, 128
      %654 = vxpose.xlu0.b32.cont [4/16] 0.0, 128
      %655 = vxpose.xlu0.b32.cont [5/16] 0.0, 128
      %656 = vxpose.xlu0.b32.cont [6/16] 0.0, 128
      %657 = vxpose.xlu0.b32.cont [7/16] 0.0, 128
      %658 = vxpose.xlu0.b32.cont [8/16] 0.0, 128
      %659 = vxpose.xlu0.b32.cont [9/16] 0.0, 128
      %660 = vxpose.xlu0.b32.cont [10/16] 0.0, 128
      %661 = vxpose.xlu0.b32.cont [11/16] 0.0, 128
      %662 = vxpose.xlu0.b32.cont [12/16] 0.0, 128
      %663 = vxpose.xlu0.b32.cont [13/16] 0.0, 128
      %664 = vxpose.xlu0.b32.cont [14/16] 0.0, 128
      %665 = vxpose.xlu0.b32.cont [15/16] 0.0, 128
      %666 = vxpose.xlu0.b32.end [16/16] 0.0, 128
      %v667 = vpop.trf.xlu0
      %v668 = vpop.trf.xlu0
      %v669 = vpop.trf.xlu0
      %v670 = vpop.trf.xlu0
      %v671 = vpop.trf.xlu0
      %v672 = vpop.trf.xlu0
      %v673 = vpop.trf.xlu0
      %v674 = vpop.trf.xlu0
      %v675 = vpop.trf.xlu0
      %v676 = vpop.trf.xlu0
      %v677 = vpop.trf.xlu0
      %v678 = vpop.trf.xlu0
      %v679 = vpop.trf.xlu0
      %v680 = vpop.trf.xlu0
      %v681 = vpop.trf.xlu0
      %v682 = vpop.trf.xlu0
      %v683 = vld [vmem:[%s2] sm:$0x1]
      %v685 = vlaneseq
      %v686 = vshrl.u32 %v685, 7
      %v687 = vsub.s32 0, %v686
      %v688 = vrot.slane %v683, %v687
      %v690 = vmul.f32 %v667, %v688
      %v691 = vmul.f32 %v668, %v688
      %v692 = vmul.f32 %v669, %v688
      %v693 = vmul.f32 %v670, %v688
      %v694 = vmul.f32 %v671, %v688
      %v695 = vmul.f32 %v672, %v688
      %v696 = vmul.f32 %v673, %v688
      %v697 = vmul.f32 %v674, %v688
      %v698 = vld [vmem:[%s3] sm:$0x1]
      %v700 = vlaneseq
      %v701 = vshrl.u32 %v700, 7
      %v702 = vsub.s32 0, %v701
      %v703 = vrot.slane %v698, %v702
      %v705 = vadd.f32 %v690, %v703
      %v706 = vadd.f32 %v691, %v703
      %v707 = vadd.f32 %v692, %v703
      %v708 = vadd.f32 %v693, %v703
      %v709 = vadd.f32 %v694, %v703
      %v710 = vadd.f32 %v695, %v703
      %v711 = vadd.f32 %v696, %v703
      %v712 = vadd.f32 %v697, %v703
      %v713 = vpack.c.bf16 %v705, %v705
      %v714 = vpack.c.bf16 %v706, %v706
      %v715 = vpack.c.bf16 %v707, %v707
      %v716 = vpack.c.bf16 %v708, %v708
      %v717 = vpack.c.bf16 %v709, %v709
      %v718 = vpack.c.bf16 %v710, %v710
      %v719 = vpack.c.bf16 %v711, %v711
      %v720 = vpack.c.bf16 %v712, %v712
      %721 = vst.msk [vmem:[#allocation2] sm:$0xf] %vm379, %v713
      %722 = vst.msk [vmem:[#allocation2 + $0x8] sm:$0xf] %vm379, %v714
      %723 = vst.msk [vmem:[#allocation2 + $0x10] sm:$0xf] %vm379, %v715
      %724 = vst.msk [vmem:[#allocation2 + $0x18] sm:$0xf] %vm379, %v716
      %725 = vst.msk [vmem:[#allocation2 + $0x20] sm:$0xf] %vm379, %v717
      %726 = vst.msk [vmem:[#allocation2 + $0x28] sm:$0xf] %vm379, %v718
      %727 = vst.msk [vmem:[#allocation2 + $0x30] sm:$0xf] %vm379, %v719
      %728 = vst.msk [vmem:[#allocation2 + $0x38] sm:$0xf] %vm379, %v720
      %v729 = vld [vmem:[#allocation2] sm:$0xf]
      %v730 = vld [vmem:[#allocation2 + $0x8] sm:$0xf]
      %v731 = vld [vmem:[#allocation2 + $0x10] sm:$0xf]
      %v732 = vld [vmem:[#allocation2 + $0x18] sm:$0xf]
      %v733 = vld [vmem:[#allocation2 + $0x20] sm:$0xf]
      %v734 = vld [vmem:[#allocation2 + $0x28] sm:$0xf]
      %v735 = vld [vmem:[#allocation2 + $0x30] sm:$0xf]
      %v736 = vld [vmem:[#allocation2 + $0x38] sm:$0xf]
      %v737 = vld [vmem:[#allocation2 + $0x4] sm:$0x1]
      %v738 = vld [vmem:[#allocation2 + $0xc] sm:$0x1]
      %v739 = vld [vmem:[#allocation2 + $0x14] sm:$0x1]
      %v740 = vld [vmem:[#allocation2 + $0x1c] sm:$0x1]
      %v741 = vld [vmem:[#allocation2 + $0x24] sm:$0x1]
      %v742 = vld [vmem:[#allocation2 + $0x2c] sm:$0x1]
      %v743 = vld [vmem:[#allocation2 + $0x34] sm:$0x1]
      %v744 = vld [vmem:[#allocation2 + $0x3c] sm:$0x1]
      %s745 = scalar_lea.vmem [#allocation2], 8
      %v746 = vld [vmem:[%s745] sm:$0xf]
      %v747 = vld [vmem:[%s745 + $0x8] sm:$0xf]
      %v748 = vld [vmem:[%s745 + $0x10] sm:$0xf]
      %v749 = vld [vmem:[%s745 + $0x18] sm:$0xf]
      %v750 = vld [vmem:[%s745 + $0x20] sm:$0xf]
      %v751 = vld [vmem:[%s745 + $0x28] sm:$0xf]
      %v752 = vld [vmem:[%s745 + $0x30] sm:$0xf]
      %v753 = vld [vmem:[%s745 + $0x38] sm:$0xf]
      %v754 = vld [vmem:[%s745 + $0x4] sm:$0x1]
      %v755 = vld [vmem:[%s745 + $0xc] sm:$0x1]
      %v756 = vld [vmem:[%s745 + $0x14] sm:$0x1]
      %v757 = vld [vmem:[%s745 + $0x1c] sm:$0x1]
      %v758 = vld [vmem:[%s745 + $0x24] sm:$0x1]
      %v759 = vld [vmem:[%s745 + $0x2c] sm:$0x1]
      %v760 = vld [vmem:[%s745 + $0x34] sm:$0x1]
      %v761 = vld [vmem:[%s745 + $0x3c] sm:$0x1]
      %v778 = vunpack.c.l.b16 %v729
      %v779 = vunpack.c.l.b16 %v737
      %v780 = vunpack.c.l.b16 %v730
      %v781 = vunpack.c.l.b16 %v738
      %v782 = vunpack.c.l.b16 %v731
      %v783 = vunpack.c.l.b16 %v739
      %v784 = vunpack.c.l.b16 %v732
      %v785 = vunpack.c.l.b16 %v740
      %v786 = vunpack.c.l.b16 %v733
      %v787 = vunpack.c.l.b16 %v741
      %v788 = vunpack.c.l.b16 %v734
      %v789 = vunpack.c.l.b16 %v742
      %v790 = vunpack.c.l.b16 %v735
      %v791 = vunpack.c.l.b16 %v743
      %v792 = vunpack.c.l.b16 %v736
      %v793 = vunpack.c.l.b16 %v744
      %v794 = vpack.c.b16 %v779, %v778
      %v795 = vpack.c.b16 %v781, %v780
      %v796 = vpack.c.b16 %v783, %v782
      %v797 = vpack.c.b16 %v785, %v784
      %v798 = vpack.c.b16 %v787, %v786
      %v799 = vpack.c.b16 %v789, %v788
      %v800 = vpack.c.b16 %v791, %v790
      %v801 = vpack.c.b16 %v793, %v792
      %v803 = vshrl.u32 %v794, 16
      %v805 = vshll.u32 %v794, 16
      %v807 = vrot.slane %v805, 1
      %v808 = vor.u32 %v803, %v807
      %v810 = vshrl.u32 %v795, 16
      %v812 = vshll.u32 %v795, 16
      %v814 = vrot.slane %v812, 1
      %v815 = vor.u32 %v810, %v814
      %v817 = vshrl.u32 %v796, 16
      %v819 = vshll.u32 %v796, 16
      %v821 = vrot.slane %v819, 1
      %v822 = vor.u32 %v817, %v821
      %v824 = vshrl.u32 %v797, 16
      %v826 = vshll.u32 %v797, 16
      %v828 = vrot.slane %v826, 1
      %v829 = vor.u32 %v824, %v828
      %v831 = vshrl.u32 %v798, 16
      %v833 = vshll.u32 %v798, 16
      %v835 = vrot.slane %v833, 1
      %v836 = vor.u32 %v831, %v835
      %v838 = vshrl.u32 %v799, 16
      %v840 = vshll.u32 %v799, 16
      %v842 = vrot.slane %v840, 1
      %v843 = vor.u32 %v838, %v842
      %v845 = vshrl.u32 %v800, 16
      %v847 = vshll.u32 %v800, 16
      %v849 = vrot.slane %v847, 1
      %v850 = vor.u32 %v845, %v849
      %v852 = vshrl.u32 %v801, 16
      %v854 = vshll.u32 %v801, 16
      %v856 = vrot.slane %v854, 1
      %v857 = vor.u32 %v852, %v856
      %858 = vrot.lane.b32.xlu0 %v808, 4
      %v859 = vpop.permute.xlu0 %858
      %860 = vrot.lane.b32.xlu0 %v815, 4
      %v861 = vpop.permute.xlu0 %860
      %862 = vrot.lane.b32.xlu0 %v822, 4
      %v863 = vpop.permute.xlu0 %862
      %864 = vrot.lane.b32.xlu0 %v829, 4
      %v865 = vpop.permute.xlu0 %864
      %866 = vrot.lane.b32.xlu0 %v836, 4
      %v867 = vpop.permute.xlu0 %866
      %868 = vrot.lane.b32.xlu0 %v843, 4
      %v869 = vpop.permute.xlu0 %868
      %870 = vrot.lane.b32.xlu0 %v850, 4
      %v871 = vpop.permute.xlu0 %870
      %872 = vrot.lane.b32.xlu0 %v857, 4
      %v873 = vpop.permute.xlu0 %872
      %v882 = vunpack.c.l.b16 %v746
      %v883 = vunpack.c.l.b16 %v747
      %v884 = vunpack.c.l.b16 %v748
      %v885 = vunpack.c.l.b16 %v749
      %v886 = vunpack.c.l.b16 %v750
      %v887 = vunpack.c.l.b16 %v751
      %v888 = vunpack.c.l.b16 %v752
      %v889 = vunpack.c.l.b16 %v753
      %v890 = vpack.c.b16 %v882, %v882
      %v891 = vpack.c.b16 %v883, %v883
      %v892 = vpack.c.b16 %v884, %v884
      %v893 = vpack.c.b16 %v885, %v885
      %v894 = vpack.c.b16 %v886, %v886
      %v895 = vpack.c.b16 %v887, %v887
      %v896 = vpack.c.b16 %v888, %v888
      %v897 = vpack.c.b16 %v889, %v889
      %898 = vrot.lane.b32.xlu0 %v890, 8
      %v899 = vpop.permute.xlu0 %898
      %900 = vrot.lane.b32.xlu0 %v891, 8
      %v901 = vpop.permute.xlu0 %900
      %902 = vrot.lane.b32.xlu0 %v892, 8
      %v903 = vpop.permute.xlu0 %902
      %904 = vrot.lane.b32.xlu0 %v893, 8
      %v905 = vpop.permute.xlu0 %904
      %906 = vrot.lane.b32.xlu0 %v894, 8
      %v907 = vpop.permute.xlu0 %906
      %908 = vrot.lane.b32.xlu0 %v895, 8
      %v909 = vpop.permute.xlu0 %908
      %910 = vrot.lane.b32.xlu0 %v896, 8
      %v911 = vpop.permute.xlu0 %910
      %912 = vrot.lane.b32.xlu0 %v897, 8
      %v913 = vpop.permute.xlu0 %912
      %v922 = vunpack.c.l.b16 %v754
      %v923 = vunpack.c.l.b16 %v755
      %v924 = vunpack.c.l.b16 %v756
      %v925 = vunpack.c.l.b16 %v757
      %v926 = vunpack.c.l.b16 %v758
      %v927 = vunpack.c.l.b16 %v759
      %v928 = vunpack.c.l.b16 %v760
      %v929 = vunpack.c.l.b16 %v761
      %v930 = vpack.c.b16 %v922, %v882
      %v931 = vpack.c.b16 %v923, %v883
      %v932 = vpack.c.b16 %v924, %v884
      %v933 = vpack.c.b16 %v925, %v885
      %v934 = vpack.c.b16 %v926, %v886
      %v935 = vpack.c.b16 %v927, %v887
      %v936 = vpack.c.b16 %v928, %v888
      %v937 = vpack.c.b16 %v929, %v889
      %v939 = vshrl.u32 %v930, 16
      %v941 = vshll.u32 %v930, 16
      %v943 = vrot.slane %v941, 1
      %v944 = vor.u32 %v939, %v943
      %v946 = vshrl.u32 %v931, 16
      %v948 = vshll.u32 %v931, 16
      %v950 = vrot.slane %v948, 1
      %v951 = vor.u32 %v946, %v950
      %v953 = vshrl.u32 %v932, 16
      %v955 = vshll.u32 %v932, 16
      %v957 = vrot.slane %v955, 1
      %v958 = vor.u32 %v953, %v957
      %v960 = vshrl.u32 %v933, 16
      %v962 = vshll.u32 %v933, 16
      %v964 = vrot.slane %v962, 1
      %v965 = vor.u32 %v960, %v964
      %v967 = vshrl.u32 %v934, 16
      %v969 = vshll.u32 %v934, 16
      %v971 = vrot.slane %v969, 1
      %v972 = vor.u32 %v967, %v971
      %v974 = vshrl.u32 %v935, 16
      %v976 = vshll.u32 %v935, 16
      %v978 = vrot.slane %v976, 1
      %v979 = vor.u32 %v974, %v978
      %v981 = vshrl.u32 %v936, 16
      %v983 = vshll.u32 %v936, 16
      %v985 = vrot.slane %v983, 1
      %v986 = vor.u32 %v981, %v985
      %v988 = vshrl.u32 %v937, 16
      %v990 = vshll.u32 %v937, 16
      %v992 = vrot.slane %v990, 1
      %v993 = vor.u32 %v988, %v992
      %994 = vrot.lane.b32.xlu0 %v944, 12
      %v995 = vpop.permute.xlu0 %994
      %996 = vrot.lane.b32.xlu0 %v951, 12
      %v997 = vpop.permute.xlu0 %996
      %998 = vrot.lane.b32.xlu0 %v958, 12
      %v999 = vpop.permute.xlu0 %998
      %1000 = vrot.lane.b32.xlu0 %v965, 12
      %v1001 = vpop.permute.xlu0 %1000
      %1002 = vrot.lane.b32.xlu0 %v972, 12
      %v1003 = vpop.permute.xlu0 %1002
      %1004 = vrot.lane.b32.xlu0 %v979, 12
      %v1005 = vpop.permute.xlu0 %1004
      %1006 = vrot.lane.b32.xlu0 %v986, 12
      %v1007 = vpop.permute.xlu0 %1006
      %1008 = vrot.lane.b32.xlu0 %v993, 12
      %v1009 = vpop.permute.xlu0 %1008
      %vm1010 = vcmask 31744
      %v1013 = vsel %vm1010, %v729, %v859
      %v1016 = vsel %vm1010, %v730, %v861
      %v1019 = vsel %vm1010, %v731, %v863
      %v1022 = vsel %vm1010, %v732, %v865
      %v1025 = vsel %vm1010, %v733, %v867
      %v1028 = vsel %vm1010, %v734, %v869
      %v1031 = vsel %vm1010, %v735, %v871
      %v1034 = vsel %vm1010, %v736, %v873
      %vm1035 = vcmask 64512
      %v1037 = vsel %vm1035, %v1013, %v899
      %v1039 = vsel %vm1035, %v1016, %v901
      %v1041 = vsel %vm1035, %v1019, %v903
      %v1043 = vsel %vm1035, %v1022, %v905
      %v1045 = vsel %vm1035, %v1025, %v907
      %v1047 = vsel %vm1035, %v1028, %v909
      %v1049 = vsel %vm1035, %v1031, %v911
      %v1051 = vsel %vm1035, %v1034, %v913
      %vm1052 = vcmask 97280
      %v1054 = vsel %vm1052, %v1037, %v995
      %v1056 = vsel %vm1052, %v1039, %v997
      %v1058 = vsel %vm1052, %v1041, %v999
      %v1060 = vsel %vm1052, %v1043, %v1001
      %v1062 = vsel %vm1052, %v1045, %v1003
      %v1064 = vsel %vm1052, %v1047, %v1005
      %v1066 = vsel %vm1052, %v1049, %v1007
      %v1068 = vsel %vm1052, %v1051, %v1009
      %v1069 = vld [vmem:[%s4] sm:$0xf]
      %v1070 = vld [vmem:[%s4 + $0x4] sm:$0xf]
      %v1071 = vld [vmem:[%s5] sm:$0x1]
      %v1073 = vlaneseq
      %v1074 = vshrl.u32 %v1073, 7
      %v1075 = vsub.s32 0, %v1074
      %v1076 = vrot.slane %v1071, %v1075
      %v1086 = vunpack.c.l.b16 %v1054
      %v1087 = vunpack.c.l.b16 %v1056
      %v1088 = vunpack.c.l.b16 %v1058
      %v1089 = vunpack.c.l.b16 %v1060
      %v1090 = vunpack.c.l.b16 %v1062
      %v1091 = vunpack.c.l.b16 %v1064
      %v1092 = vunpack.c.l.b16 %v1066
      %v1093 = vunpack.c.l.b16 %v1068
      %v1094 = vpack.c.b16 %v1087, %v1086
      %v1095 = vpack.c.b16 %v1089, %v1088
      %v1096 = vpack.c.b16 %v1091, %v1090
      %v1097 = vpack.c.b16 %v1093, %v1092
      %v1100 = vunpack.c.l.b16 %v1069
      %v1101 = vunpack.c.l.b16 %v1070
      %v1102 = vpack.c.b16 %v1101, %v1100
      %vm1104 = vcmask 130048
      %v1106 = vsel %vm1104, %v1094, 0
      %v1109 = vsel %vm1104, %v1095, 0
      %v1112 = vsel %vm1104, %v1096, 0
      %v1115 = vsel %vm1104, %v1097, 0
      %1117 = vmatprep.subr.bf16.mxu0 0
      %1118 = vmatpush1.bf16.msra.mxu0 %v1102
      %1119 = vmatprep.subr.bf16.mxu0 0
      %1120 = vmatpush1.bf16.msra.mxu0 0
      %1121 = vmatprep.subr.bf16.mxu0 0
      %1122 = vmatpush1.bf16.msra.mxu0 0
      %1123 = vmatprep.subr.bf16.mxu0 0
      %1124 = vmatpush1.bf16.msra.mxu0 0
      %1125 = vmatprep.subr.bf16.mxu0 0
      %1126 = vmatpush1.bf16.msra.mxu0 0
      %1127 = vmatprep.subr.bf16.mxu0 0
      %1128 = vmatpush1.bf16.msra.mxu0 0
      %1129 = vmatprep.subr.bf16.mxu0 0
      %1130 = vmatpush1.bf16.msra.mxu0 0
      %1131 = vmatprep.subr.bf16.mxu0 0
      %1132 = vmatpush1.bf16.msra.mxu0 0
      %1133 = vmatprep.subr.bf16.mxu0 0
      %1134 = vmatpush1.bf16.msra.mxu0 0
      %1135 = vmatprep.subr.bf16.mxu0 0
      %1136 = vmatpush1.bf16.msra.mxu0 0
      %1137 = vmatprep.subr.bf16.mxu0 0
      %1138 = vmatpush1.bf16.msra.mxu0 0
      %1139 = vmatprep.subr.bf16.mxu0 0
      %1140 = vmatpush1.bf16.msra.mxu0 0
      %1141 = vmatprep.subr.bf16.mxu0 0
      %1142 = vmatpush1.bf16.msra.mxu0 0
      %1143 = vmatprep.subr.bf16.mxu0 0
      %1144 = vmatpush1.bf16.msra.mxu0 0
      %1145 = vmatprep.subr.bf16.mxu0 0
      %1146 = vmatpush1.bf16.msra.mxu0 0
      %1147 = vmatprep.subr.bf16.mxu0 0
      %1148 = vmatpush1.bf16.msra.mxu0 0
      %1149 = vmatprep.mubr.bf16.mxu0 0
      %1150 = vmatmul.mubr.bf16.gmra.mrb[0].mxu0 %v1106
      %v1151 = vpop.f32.mrb[0].mxu0
      %v1152 = vadd.f32 %v1076, %v1151
      %v1153 = vpop.f32.mrb[0].mxu0
      %v1154 = vpop.f32.mrb[0].mxu0
      %v1155 = vadd.f32 %v1076, %v1154
      %v1156 = vpop.f32.mrb[0].mxu0
      %1157 = vmatprep.mubr.bf16.mxu0 0
      %1158 = vmatmul.mubr.bf16.gmra.mrb[0].mxu0 %v1109
      %v1159 = vpop.f32.mrb[0].mxu0
      %v1160 = vadd.f32 %v1076, %v1159
      %v1161 = vpop.f32.mrb[0].mxu0
      %v1162 = vpop.f32.mrb[0].mxu0
      %v1163 = vadd.f32 %v1076, %v1162
      %v1164 = vpop.f32.mrb[0].mxu0
      %1165 = vmatprep.mubr.bf16.mxu0 0
      %1166 = vmatmul.mubr.bf16.gmra.mrb[0].mxu0 %v1112
      %v1167 = vpop.f32.mrb[0].mxu0
      %v1168 = vadd.f32 %v1076, %v1167
      %v1169 = vpop.f32.mrb[0].mxu0
      %v1170 = vpop.f32.mrb[0].mxu0
      %v1171 = vadd.f32 %v1076, %v1170
      %v1172 = vpop.f32.mrb[0].mxu0
      %1173 = vmatprep.mubr.bf16.mxu0 0
      %1174 = vmatmul.mubr.bf16.gmra.mrb[0].mxu0 %v1115
      %v1175 = vpop.f32.mrb[0].mxu0
      %v1176 = vadd.f32 %v1076, %v1175
      %v1177 = vpop.f32.mrb[0].mxu0
      %v1178 = vpop.f32.mrb[0].mxu0
      %v1179 = vadd.f32 %v1076, %v1178
      %v1180 = vpop.f32.mrb[0].mxu0
      %1181 = vdwg.mxu0
      %v1182 = vmax.f32 %v1152, 0.0
      %v1183 = vmax.f32 %v1155, 0.0
      %v1184 = vmax.f32 %v1160, 0.0
      %v1185 = vmax.f32 %v1163, 0.0
      %v1186 = vmax.f32 %v1168, 0.0
      %v1187 = vmax.f32 %v1171, 0.0
      %v1188 = vmax.f32 %v1176, 0.0
      %v1189 = vmax.f32 %v1179, 0.0
      %v1198 = vcombine.high %v1182, %v1182
      %v1200 = vunpack.c.l.s4 1966171168
      %v1201 = vunpack.c.0.s8 %v1200
      %v1202 = vlaneseq
      %v1203 = vshrl.u32 %v1202, 7
      %v1204 = vsub.s32 %v1201, %v1203
      %v1205 = vrot.slane %v1182, %v1204
      %v1207 = vunpack.c.l.s4 1966171168
      %v1208 = vunpack.c.0.s8 %v1207
      %v1209 = vlaneseq
      %v1210 = vshrl.u32 %v1209, 7
      %v1211 = vsub.s32 %v1208, %v1210
      %v1212 = vrot.slane %v1198, %v1211
      %v1213 = vcombine.high %v1205, %v1205
      %v1214 = vcombine.high %v1212, %v1212
      %v1216 = vunpack.c.l.s4 1966171168
      %v1217 = vunpack.c.0.s8 %v1216
      %v1218 = vlaneseq
      %v1219 = vshrl.u32 %v1218, 7
      %v1220 = vsub.s32 %v1217, %v1219
      %v1221 = vrot.slane %v1205, %v1220
      %v1223 = vunpack.c.l.s4 1966171168
      %v1224 = vunpack.c.0.s8 %v1223
      %v1225 = vlaneseq
      %v1226 = vshrl.u32 %v1225, 7
      %v1227 = vsub.s32 %v1224, %v1226
      %v1228 = vrot.slane %v1212, %v1227
      %v1230 = vunpack.c.l.s4 1966171168
      %v1231 = vunpack.c.0.s8 %v1230
      %v1232 = vlaneseq
      %v1233 = vshrl.u32 %v1232, 7
      %v1234 = vsub.s32 %v1231, %v1233
      %v1235 = vrot.slane %v1213, %v1234
      %v1237 = vunpack.c.l.s4 1966171168
      %v1238 = vunpack.c.0.s8 %v1237
      %v1239 = vlaneseq
      %v1240 = vshrl.u32 %v1239, 7
      %v1241 = vsub.s32 %v1238, %v1240
      %v1242 = vrot.slane %v1214, %v1241
      %v1243 = vcombine.high %v1221, %v1221
      %v1244 = vcombine.high %v1228, %v1228
      %v1245 = vcombine.high %v1235, %v1235
      %v1246 = vcombine.high %v1242, %v1242
      %v1247 = vcombine.high %v1183, %v1183
      %v1249 = vunpack.c.l.s4 1966171168
      %v1250 = vunpack.c.0.s8 %v1249
      %v1251 = vlaneseq
      %v1252 = vshrl.u32 %v1251, 7
      %v1253 = vsub.s32 %v1250, %v1252
      %v1254 = vrot.slane %v1183, %v1253
      %v1256 = vunpack.c.l.s4 1966171168
      %v1257 = vunpack.c.0.s8 %v1256
      %v1258 = vlaneseq
      %v1259 = vshrl.u32 %v1258, 7
      %v1260 = vsub.s32 %v1257, %v1259
      %v1261 = vrot.slane %v1247, %v1260
      %v1262 = vcombine.high %v1254, %v1254
      %v1263 = vcombine.high %v1261, %v1261
      %v1265 = vunpack.c.l.s4 1966171168
      %v1266 = vunpack.c.0.s8 %v1265
      %v1267 = vlaneseq
      %v1268 = vshrl.u32 %v1267, 7
      %v1269 = vsub.s32 %v1266, %v1268
      %v1270 = vrot.slane %v1254, %v1269
      %v1272 = vunpack.c.l.s4 1966171168
      %v1273 = vunpack.c.0.s8 %v1272
      %v1274 = vlaneseq
      %v1275 = vshrl.u32 %v1274, 7
      %v1276 = vsub.s32 %v1273, %v1275
      %v1277 = vrot.slane %v1261, %v1276
      %v1279 = vunpack.c.l.s4 1966171168
      %v1280 = vunpack.c.0.s8 %v1279
      %v1281 = vlaneseq
      %v1282 = vshrl.u32 %v1281, 7
      %v1283 = vsub.s32 %v1280, %v1282
      %v1284 = vrot.slane %v1262, %v1283
      %v1286 = vunpack.c.l.s4 1966171168
      %v1287 = vunpack.c.0.s8 %v1286
      %v1288 = vlaneseq
      %v1289 = vshrl.u32 %v1288, 7
      %v1290 = vsub.s32 %v1287, %v1289
      %v1291 = vrot.slane %v1263, %v1290
      %v1292 = vcombine.high %v1270, %v1270
      %v1293 = vcombine.high %v1277, %v1277
      %v1294 = vcombine.high %v1284, %v1284
      %v1295 = vcombine.high %v1291, %v1291
      %v1296 = vcombine.high %v1184, %v1184
      %v1298 = vunpack.c.l.s4 1966171168
      %v1299 = vunpack.c.0.s8 %v1298
      %v1300 = vlaneseq
      %v1301 = vshrl.u32 %v1300, 7
      %v1302 = vsub.s32 %v1299, %v1301
      %v1303 = vrot.slane %v1184, %v1302
      %v1305 = vunpack.c.l.s4 1966171168
      %v1306 = vunpack.c.0.s8 %v1305
      %v1307 = vlaneseq
      %v1308 = vshrl.u32 %v1307, 7
      %v1309 = vsub.s32 %v1306, %v1308
      %v1310 = vrot.slane %v1296, %v1309
      %v1311 = vcombine.high %v1303, %v1303
      %v1312 = vcombine.high %v1310, %v1310
      %v1314 = vunpack.c.l.s4 1966171168
      %v1315 = vunpack.c.0.s8 %v1314
      %v1316 = vlaneseq
      %v1317 = vshrl.u32 %v1316, 7
      %v1318 = vsub.s32 %v1315, %v1317
      %v1319 = vrot.slane %v1303, %v1318
      %v1321 = vunpack.c.l.s4 1966171168
      %v1322 = vunpack.c.0.s8 %v1321
      %v1323 = vlaneseq
      %v1324 = vshrl.u32 %v1323, 7
      %v1325 = vsub.s32 %v1322, %v1324
      %v1326 = vrot.slane %v1310, %v1325
      %v1328 = vunpack.c.l.s4 1966171168
      %v1329 = vunpack.c.0.s8 %v1328
      %v1330 = vlaneseq
      %v1331 = vshrl.u32 %v1330, 7
      %v1332 = vsub.s32 %v1329, %v1331
      %v1333 = vrot.slane %v1311, %v1332
      %v1335 = vunpack.c.l.s4 1966171168
      %v1336 = vunpack.c.0.s8 %v1335
      %v1337 = vlaneseq
      %v1338 = vshrl.u32 %v1337, 7
      %v1339 = vsub.s32 %v1336, %v1338
      %v1340 = vrot.slane %v1312, %v1339
      %v1341 = vcombine.high %v1319, %v1319
      %v1342 = vcombine.high %v1326, %v1326
      %v1343 = vcombine.high %v1333, %v1333
      %v1344 = vcombine.high %v1340, %v1340
      %v1345 = vcombine.high %v1185, %v1185
      %v1347 = vunpack.c.l.s4 1966171168
      %v1348 = vunpack.c.0.s8 %v1347
      %v1349 = vlaneseq
      %v1350 = vshrl.u32 %v1349, 7
      %v1351 = vsub.s32 %v1348, %v1350
      %v1352 = vrot.slane %v1185, %v1351
      %v1354 = vunpack.c.l.s4 1966171168
      %v1355 = vunpack.c.0.s8 %v1354
      %v1356 = vlaneseq
      %v1357 = vshrl.u32 %v1356, 7
      %v1358 = vsub.s32 %v1355, %v1357
      %v1359 = vrot.slane %v1345, %v1358
      %v1360 = vcombine.high %v1352, %v1352
      %v1361 = vcombine.high %v1359, %v1359
      %v1363 = vunpack.c.l.s4 1966171168
      %v1364 = vunpack.c.0.s8 %v1363
      %v1365 = vlaneseq
      %v1366 = vshrl.u32 %v1365, 7
      %v1367 = vsub.s32 %v1364, %v1366
      %v1368 = vrot.slane %v1352, %v1367
      %v1370 = vunpack.c.l.s4 1966171168
      %v1371 = vunpack.c.0.s8 %v1370
      %v1372 = vlaneseq
      %v1373 = vshrl.u32 %v1372, 7
      %v1374 = vsub.s32 %v1371, %v1373
      %v1375 = vrot.slane %v1359, %v1374
      %v1377 = vunpack.c.l.s4 1966171168
      %v1378 = vunpack.c.0.s8 %v1377
      %v1379 = vlaneseq
      %v1380 = vshrl.u32 %v1379, 7
      %v1381 = vsub.s32 %v1378, %v1380
      %v1382 = vrot.slane %v1360, %v1381
      %v1384 = vunpack.c.l.s4 1966171168
      %v1385 = vunpack.c.0.s8 %v1384
      %v1386 = vlaneseq
      %v1387 = vshrl.u32 %v1386, 7
      %v1388 = vsub.s32 %v1385, %v1387
      %v1389 = vrot.slane %v1361, %v1388
      %v1390 = vcombine.high %v1368, %v1368
      %v1391 = vcombine.high %v1375, %v1375
      %v1392 = vcombine.high %v1382, %v1382
      %v1393 = vcombine.high %v1389, %v1389
      %v1394 = vcombine.high %v1186, %v1186
      %v1396 = vunpack.c.l.s4 1966171168
      %v1397 = vunpack.c.0.s8 %v1396
      %v1398 = vlaneseq
      %v1399 = vshrl.u32 %v1398, 7
      %v1400 = vsub.s32 %v1397, %v1399
      %v1401 = vrot.slane %v1186, %v1400
      %v1403 = vunpack.c.l.s4 1966171168
      %v1404 = vunpack.c.0.s8 %v1403
      %v1405 = vlaneseq
      %v1406 = vshrl.u32 %v1405, 7
      %v1407 = vsub.s32 %v1404, %v1406
      %v1408 = vrot.slane %v1394, %v1407
      %v1409 = vcombine.high %v1401, %v1401
      %v1410 = vcombine.high %v1408, %v1408
      %v1412 = vunpack.c.l.s4 1966171168
      %v1413 = vunpack.c.0.s8 %v1412
      %v1414 = vlaneseq
      %v1415 = vshrl.u32 %v1414, 7
      %v1416 = vsub.s32 %v1413, %v1415
      %v1417 = vrot.slane %v1401, %v1416
      %v1419 = vunpack.c.l.s4 1966171168
      %v1420 = vunpack.c.0.s8 %v1419
      %v1421 = vlaneseq
      %v1422 = vshrl.u32 %v1421, 7
      %v1423 = vsub.s32 %v1420, %v1422
      %v1424 = vrot.slane %v1408, %v1423
      %v1426 = vunpack.c.l.s4 1966171168
      %v1427 = vunpack.c.0.s8 %v1426
      %v1428 = vlaneseq
      %v1429 = vshrl.u32 %v1428, 7
      %v1430 = vsub.s32 %v1427, %v1429
      %v1431 = vrot.slane %v1409, %v1430
      %v1433 = vunpack.c.l.s4 1966171168
      %v1434 = vunpack.c.0.s8 %v1433
      %v1435 = vlaneseq
      %v1436 = vshrl.u32 %v1435, 7
      %v1437 = vsub.s32 %v1434, %v1436
      %v1438 = vrot.slane %v1410, %v1437
      %v1439 = vcombine.high %v1417, %v1417
      %v1440 = vcombine.high %v1424, %v1424
      %v1441 = vcombine.high %v1431, %v1431
      %v1442 = vcombine.high %v1438, %v1438
      %v1443 = vcombine.high %v1187, %v1187
      %v1445 = vunpack.c.l.s4 1966171168
      %v1446 = vunpack.c.0.s8 %v1445
      %v1447 = vlaneseq
      %v1448 = vshrl.u32 %v1447, 7
      %v1449 = vsub.s32 %v1446, %v1448
      %v1450 = vrot.slane %v1187, %v1449
      %v1452 = vunpack.c.l.s4 1966171168
      %v1453 = vunpack.c.0.s8 %v1452
      %v1454 = vlaneseq
      %v1455 = vshrl.u32 %v1454, 7
      %v1456 = vsub.s32 %v1453, %v1455
      %v1457 = vrot.slane %v1443, %v1456
      %v1458 = vcombine.high %v1450, %v1450
      %v1459 = vcombine.high %v1457, %v1457
      %v1461 = vunpack.c.l.s4 1966171168
      %v1462 = vunpack.c.0.s8 %v1461
      %v1463 = vlaneseq
      %v1464 = vshrl.u32 %v1463, 7
      %v1465 = vsub.s32 %v1462, %v1464
      %v1466 = vrot.slane %v1450, %v1465
      %v1468 = vunpack.c.l.s4 1966171168
      %v1469 = vunpack.c.0.s8 %v1468
      %v1470 = vlaneseq
      %v1471 = vshrl.u32 %v1470, 7
      %v1472 = vsub.s32 %v1469, %v1471
      %v1473 = vrot.slane %v1457, %v1472
      %v1475 = vunpack.c.l.s4 1966171168
      %v1476 = vunpack.c.0.s8 %v1475
      %v1477 = vlaneseq
      %v1478 = vshrl.u32 %v1477, 7
      %v1479 = vsub.s32 %v1476, %v1478
      %v1480 = vrot.slane %v1458, %v1479
      %v1482 = vunpack.c.l.s4 1966171168
      %v1483 = vunpack.c.0.s8 %v1482
      %v1484 = vlaneseq
      %v1485 = vshrl.u32 %v1484, 7
      %v1486 = vsub.s32 %v1483, %v1485
      %v1487 = vrot.slane %v1459, %v1486
      %v1488 = vcombine.high %v1466, %v1466
      %v1489 = vcombine.high %v1473, %v1473
      %v1490 = vcombine.high %v1480, %v1480
      %v1491 = vcombine.high %v1487, %v1487
      %v1492 = vcombine.high %v1188, %v1188
      %v1494 = vunpack.c.l.s4 1966171168
      %v1495 = vunpack.c.0.s8 %v1494
      %v1496 = vlaneseq
      %v1497 = vshrl.u32 %v1496, 7
      %v1498 = vsub.s32 %v1495, %v1497
      %v1499 = vrot.slane %v1188, %v1498
      %v1501 = vunpack.c.l.s4 1966171168
      %v1502 = vunpack.c.0.s8 %v1501
      %v1503 = vlaneseq
      %v1504 = vshrl.u32 %v1503, 7
      %v1505 = vsub.s32 %v1502, %v1504
      %v1506 = vrot.slane %v1492, %v1505
      %v1507 = vcombine.high %v1499, %v1499
      %v1508 = vcombine.high %v1506, %v1506
      %v1510 = vunpack.c.l.s4 1966171168
      %v1511 = vunpack.c.0.s8 %v1510
      %v1512 = vlaneseq
      %v1513 = vshrl.u32 %v1512, 7
      %v1514 = vsub.s32 %v1511, %v1513
      %v1515 = vrot.slane %v1499, %v1514
      %v1517 = vunpack.c.l.s4 1966171168
      %v1518 = vunpack.c.0.s8 %v1517
      %v1519 = vlaneseq
      %v1520 = vshrl.u32 %v1519, 7
      %v1521 = vsub.s32 %v1518, %v1520
      %v1522 = vrot.slane %v1506, %v1521
      %v1524 = vunpack.c.l.s4 1966171168
      %v1525 = vunpack.c.0.s8 %v1524
      %v1526 = vlaneseq
      %v1527 = vshrl.u32 %v1526, 7
      %v1528 = vsub.s32 %v1525, %v1527
      %v1529 = vrot.slane %v1507, %v1528
      %v1531 = vunpack.c.l.s4 1966171168
      %v1532 = vunpack.c.0.s8 %v1531
      %v1533 = vlaneseq
      %v1534 = vshrl.u32 %v1533, 7
      %v1535 = vsub.s32 %v1532, %v1534
      %v1536 = vrot.slane %v1508, %v1535
      %v1537 = vcombine.high %v1515, %v1515
      %v1538 = vcombine.high %v1522, %v1522
      %v1539 = vcombine.high %v1529, %v1529
      %v1540 = vcombine.high %v1536, %v1536
      %v1541 = vcombine.high %v1189, %v1189
      %v1543 = vunpack.c.l.s4 1966171168
      %v1544 = vunpack.c.0.s8 %v1543
      %v1545 = vlaneseq
      %v1546 = vshrl.u32 %v1545, 7
      %v1547 = vsub.s32 %v1544, %v1546
      %v1548 = vrot.slane %v1189, %v1547
      %v1550 = vunpack.c.l.s4 1966171168
      %v1551 = vunpack.c.0.s8 %v1550
      %v1552 = vlaneseq
      %v1553 = vshrl.u32 %v1552, 7
      %v1554 = vsub.s32 %v1551, %v1553
      %v1555 = vrot.slane %v1541, %v1554
      %v1556 = vcombine.high %v1548, %v1548
      %v1557 = vcombine.high %v1555, %v1555
      %v1559 = vunpack.c.l.s4 1966171168
      %v1560 = vunpack.c.0.s8 %v1559
      %v1561 = vlaneseq
      %v1562 = vshrl.u32 %v1561, 7
      %v1563 = vsub.s32 %v1560, %v1562
      %v1564 = vrot.slane %v1548, %v1563
      %v1566 = vunpack.c.l.s4 1966171168
      %v1567 = vunpack.c.0.s8 %v1566
      %v1568 = vlaneseq
      %v1569 = vshrl.u32 %v1568, 7
      %v1570 = vsub.s32 %v1567, %v1569
      %v1571 = vrot.slane %v1555, %v1570
      %v1573 = vunpack.c.l.s4 1966171168
      %v1574 = vunpack.c.0.s8 %v1573
      %v1575 = vlaneseq
      %v1576 = vshrl.u32 %v1575, 7
      %v1577 = vsub.s32 %v1574, %v1576
      %v1578 = vrot.slane %v1556, %v1577
      %v1580 = vunpack.c.l.s4 1966171168
      %v1581 = vunpack.c.0.s8 %v1580
      %v1582 = vlaneseq
      %v1583 = vshrl.u32 %v1582, 7
      %v1584 = vsub.s32 %v1581, %v1583
      %v1585 = vrot.slane %v1557, %v1584
      %v1586 = vcombine.high %v1564, %v1564
      %v1587 = vcombine.high %v1571, %v1571
      %v1588 = vcombine.high %v1578, %v1578
      %v1589 = vcombine.high %v1585, %v1585
      %v1654 = vlaneseq
      %v1655 = vshrl.u32 %v1654, 7
      %v1656 = vsub.s32 0, %v1655
      %v1657 = vrot.slane %v1221, %v1656
      %v1658 = vlaneseq
      %v1659 = vshrl.u32 %v1658, 7
      %v1660 = vsub.s32 0, %v1659
      %v1661 = vrot.slane %v1235, %v1660
      %v1662 = vlaneseq
      %v1663 = vshrl.u32 %v1662, 7
      %v1664 = vsub.s32 0, %v1663
      %v1665 = vrot.slane %v1243, %v1664
      %v1666 = vlaneseq
      %v1667 = vshrl.u32 %v1666, 7
      %v1668 = vsub.s32 0, %v1667
      %v1669 = vrot.slane %v1245, %v1668
      %v1670 = vlaneseq
      %v1671 = vshrl.u32 %v1670, 7
      %v1672 = vsub.s32 0, %v1671
      %v1673 = vrot.slane %v1228, %v1672
      %v1674 = vlaneseq
      %v1675 = vshrl.u32 %v1674, 7
      %v1676 = vsub.s32 0, %v1675
      %v1677 = vrot.slane %v1242, %v1676
      %v1678 = vlaneseq
      %v1679 = vshrl.u32 %v1678, 7
      %v1680 = vsub.s32 0, %v1679
      %v1681 = vrot.slane %v1244, %v1680
      %v1682 = vlaneseq
      %v1683 = vshrl.u32 %v1682, 7
      %v1684 = vsub.s32 0, %v1683
      %v1685 = vrot.slane %v1246, %v1684
      %v1686 = vlaneseq
      %v1687 = vshrl.u32 %v1686, 7
      %v1688 = vsub.s32 0, %v1687
      %v1689 = vrot.slane %v1270, %v1688
      %v1690 = vlaneseq
      %v1691 = vshrl.u32 %v1690, 7
      %v1692 = vsub.s32 0, %v1691
      %v1693 = vrot.slane %v1284, %v1692
      %v1694 = vlaneseq
      %v1695 = vshrl.u32 %v1694, 7
      %v1696 = vsub.s32 0, %v1695
      %v1697 = vrot.slane %v1292, %v1696
      %v1698 = vlaneseq
      %v1699 = vshrl.u32 %v1698, 7
      %v1700 = vsub.s32 0, %v1699
      %v1701 = vrot.slane %v1294, %v1700
      %v1702 = vlaneseq
      %v1703 = vshrl.u32 %v1702, 7
      %v1704 = vsub.s32 0, %v1703
      %v1705 = vrot.slane %v1277, %v1704
      %v1706 = vlaneseq
      %v1707 = vshrl.u32 %v1706, 7
      %v1708 = vsub.s32 0, %v1707
      %v1709 = vrot.slane %v1291, %v1708
      %v1710 = vlaneseq
      %v1711 = vshrl.u32 %v1710, 7
      %v1712 = vsub.s32 0, %v1711
      %v1713 = vrot.slane %v1293, %v1712
      %v1714 = vlaneseq
      %v1715 = vshrl.u32 %v1714, 7
      %v1716 = vsub.s32 0, %v1715
      %v1717 = vrot.slane %v1295, %v1716
      %v1718 = vlaneseq
      %v1719 = vshrl.u32 %v1718, 7
      %v1720 = vsub.s32 0, %v1719
      %v1721 = vrot.slane %v1319, %v1720
      %v1722 = vlaneseq
      %v1723 = vshrl.u32 %v1722, 7
      %v1724 = vsub.s32 0, %v1723
      %v1725 = vrot.slane %v1333, %v1724
      %v1726 = vlaneseq
      %v1727 = vshrl.u32 %v1726, 7
      %v1728 = vsub.s32 0, %v1727
      %v1729 = vrot.slane %v1341, %v1728
      %v1730 = vlaneseq
      %v1731 = vshrl.u32 %v1730, 7
      %v1732 = vsub.s32 0, %v1731
      %v1733 = vrot.slane %v1343, %v1732
      %v1734 = vlaneseq
      %v1735 = vshrl.u32 %v1734, 7
      %v1736 = vsub.s32 0, %v1735
      %v1737 = vrot.slane %v1326, %v1736
      %v1738 = vlaneseq
      %v1739 = vshrl.u32 %v1738, 7
      %v1740 = vsub.s32 0, %v1739
      %v1741 = vrot.slane %v1340, %v1740
      %v1742 = vlaneseq
      %v1743 = vshrl.u32 %v1742, 7
      %v1744 = vsub.s32 0, %v1743
      %v1745 = vrot.slane %v1342, %v1744
      %v1746 = vlaneseq
      %v1747 = vshrl.u32 %v1746, 7
      %v1748 = vsub.s32 0, %v1747
      %v1749 = vrot.slane %v1344, %v1748
      %v1750 = vlaneseq
      %v1751 = vshrl.u32 %v1750, 7
      %v1752 = vsub.s32 0, %v1751
      %v1753 = vrot.slane %v1368, %v1752
      %v1754 = vlaneseq
      %v1755 = vshrl.u32 %v1754, 7
      %v1756 = vsub.s32 0, %v1755
      %v1757 = vrot.slane %v1382, %v1756
      %v1758 = vlaneseq
      %v1759 = vshrl.u32 %v1758, 7
      %v1760 = vsub.s32 0, %v1759
      %v1761 = vrot.slane %v1390, %v1760
      %v1762 = vlaneseq
      %v1763 = vshrl.u32 %v1762, 7
      %v1764 = vsub.s32 0, %v1763
      %v1765 = vrot.slane %v1392, %v1764
      %v1766 = vlaneseq
      %v1767 = vshrl.u32 %v1766, 7
      %v1768 = vsub.s32 0, %v1767
      %v1769 = vrot.slane %v1375, %v1768
      %v1770 = vlaneseq
      %v1771 = vshrl.u32 %v1770, 7
      %v1772 = vsub.s32 0, %v1771
      %v1773 = vrot.slane %v1389, %v1772
      %v1774 = vlaneseq
      %v1775 = vshrl.u32 %v1774, 7
      %v1776 = vsub.s32 0, %v1775
      %v1777 = vrot.slane %v1391, %v1776
      %v1778 = vlaneseq
      %v1779 = vshrl.u32 %v1778, 7
      %v1780 = vsub.s32 0, %v1779
      %v1781 = vrot.slane %v1393, %v1780
      %v1782 = vlaneseq
      %v1783 = vshrl.u32 %v1782, 7
      %v1784 = vsub.s32 0, %v1783
      %v1785 = vrot.slane %v1417, %v1784
      %v1786 = vlaneseq
      %v1787 = vshrl.u32 %v1786, 7
      %v1788 = vsub.s32 0, %v1787
      %v1789 = vrot.slane %v1431, %v1788
      %v1790 = vlaneseq
      %v1791 = vshrl.u32 %v1790, 7
      %v1792 = vsub.s32 0, %v1791
      %v1793 = vrot.slane %v1439, %v1792
      %v1794 = vlaneseq
      %v1795 = vshrl.u32 %v1794, 7
      %v1796 = vsub.s32 0, %v1795
      %v1797 = vrot.slane %v1441, %v1796
      %v1798 = vlaneseq
      %v1799 = vshrl.u32 %v1798, 7
      %v1800 = vsub.s32 0, %v1799
      %v1801 = vrot.slane %v1424, %v1800
      %v1802 = vlaneseq
      %v1803 = vshrl.u32 %v1802, 7
      %v1804 = vsub.s32 0, %v1803
      %v1805 = vrot.slane %v1438, %v1804
      %v1806 = vlaneseq
      %v1807 = vshrl.u32 %v1806, 7
      %v1808 = vsub.s32 0, %v1807
      %v1809 = vrot.slane %v1440, %v1808
      %v1810 = vlaneseq
      %v1811 = vshrl.u32 %v1810, 7
      %v1812 = vsub.s32 0, %v1811
      %v1813 = vrot.slane %v1442, %v1812
      %v1814 = vlaneseq
      %v1815 = vshrl.u32 %v1814, 7
      %v1816 = vsub.s32 0, %v1815
      %v1817 = vrot.slane %v1466, %v1816
      %v1818 = vlaneseq
      %v1819 = vshrl.u32 %v1818, 7
      %v1820 = vsub.s32 0, %v1819
      %v1821 = vrot.slane %v1480, %v1820
      %v1822 = vlaneseq
      %v1823 = vshrl.u32 %v1822, 7
      %v1824 = vsub.s32 0, %v1823
      %v1825 = vrot.slane %v1488, %v1824
      %v1826 = vlaneseq
      %v1827 = vshrl.u32 %v1826, 7
      %v1828 = vsub.s32 0, %v1827
      %v1829 = vrot.slane %v1490, %v1828
      %v1830 = vlaneseq
      %v1831 = vshrl.u32 %v1830, 7
      %v1832 = vsub.s32 0, %v1831
      %v1833 = vrot.slane %v1473, %v1832
      %v1834 = vlaneseq
      %v1835 = vshrl.u32 %v1834, 7
      %v1836 = vsub.s32 0, %v1835
      %v1837 = vrot.slane %v1487, %v1836
      %v1838 = vlaneseq
      %v1839 = vshrl.u32 %v1838, 7
      %v1840 = vsub.s32 0, %v1839
      %v1841 = vrot.slane %v1489, %v1840
      %v1842 = vlaneseq
      %v1843 = vshrl.u32 %v1842, 7
      %v1844 = vsub.s32 0, %v1843
      %v1845 = vrot.slane %v1491, %v1844
      %v1846 = vlaneseq
      %v1847 = vshrl.u32 %v1846, 7
      %v1848 = vsub.s32 0, %v1847
      %v1849 = vrot.slane %v1515, %v1848
      %v1850 = vlaneseq
      %v1851 = vshrl.u32 %v1850, 7
      %v1852 = vsub.s32 0, %v1851
      %v1853 = vrot.slane %v1529, %v1852
      %v1854 = vlaneseq
      %v1855 = vshrl.u32 %v1854, 7
      %v1856 = vsub.s32 0, %v1855
      %v1857 = vrot.slane %v1537, %v1856
      %v1858 = vlaneseq
      %v1859 = vshrl.u32 %v1858, 7
      %v1860 = vsub.s32 0, %v1859
      %v1861 = vrot.slane %v1539, %v1860
      %v1862 = vlaneseq
      %v1863 = vshrl.u32 %v1862, 7
      %v1864 = vsub.s32 0, %v1863
      %v1865 = vrot.slane %v1522, %v1864
      %v1866 = vlaneseq
      %v1867 = vshrl.u32 %v1866, 7
      %v1868 = vsub.s32 0, %v1867
      %v1869 = vrot.slane %v1536, %v1868
      %v1870 = vlaneseq
      %v1871 = vshrl.u32 %v1870, 7
      %v1872 = vsub.s32 0, %v1871
      %v1873 = vrot.slane %v1538, %v1872
      %v1874 = vlaneseq
      %v1875 = vshrl.u32 %v1874, 7
      %v1876 = vsub.s32 0, %v1875
      %v1877 = vrot.slane %v1540, %v1876
      %v1878 = vlaneseq
      %v1879 = vshrl.u32 %v1878, 7
      %v1880 = vsub.s32 0, %v1879
      %v1881 = vrot.slane %v1564, %v1880
      %v1882 = vlaneseq
      %v1883 = vshrl.u32 %v1882, 7
      %v1884 = vsub.s32 0, %v1883
      %v1885 = vrot.slane %v1578, %v1884
      %v1886 = vlaneseq
      %v1887 = vshrl.u32 %v1886, 7
      %v1888 = vsub.s32 0, %v1887
      %v1889 = vrot.slane %v1586, %v1888
      %v1890 = vlaneseq
      %v1891 = vshrl.u32 %v1890, 7
      %v1892 = vsub.s32 0, %v1891
      %v1893 = vrot.slane %v1588, %v1892
      %v1894 = vlaneseq
      %v1895 = vshrl.u32 %v1894, 7
      %v1896 = vsub.s32 0, %v1895
      %v1897 = vrot.slane %v1571, %v1896
      %v1898 = vlaneseq
      %v1899 = vshrl.u32 %v1898, 7
      %v1900 = vsub.s32 0, %v1899
      %v1901 = vrot.slane %v1585, %v1900
      %v1902 = vlaneseq
      %v1903 = vshrl.u32 %v1902, 7
      %v1904 = vsub.s32 0, %v1903
      %v1905 = vrot.slane %v1587, %v1904
      %v1906 = vlaneseq
      %v1907 = vshrl.u32 %v1906, 7
      %v1908 = vsub.s32 0, %v1907
      %v1909 = vrot.slane %v1589, %v1908
      %1910 = vrot.lane.b32.xlu0 %v1657, 124
      %v1911 = vpop.permute.xlu0 %1910
      %1912 = vrot.lane.b32.xlu0 %v1661, 124
      %v1913 = vpop.permute.xlu0 %1912
      %1914 = vrot.lane.b32.xlu0 %v1665, 124
      %v1915 = vpop.permute.xlu0 %1914
      %1916 = vrot.lane.b32.xlu0 %v1669, 124
      %v1917 = vpop.permute.xlu0 %1916
      %1918 = vrot.lane.b32.xlu0 %v1673, 124
      %v1919 = vpop.permute.xlu0 %1918
      %1920 = vrot.lane.b32.xlu0 %v1677, 124
      %v1921 = vpop.permute.xlu0 %1920
      %1922 = vrot.lane.b32.xlu0 %v1681, 124
      %v1923 = vpop.permute.xlu0 %1922
      %1924 = vrot.lane.b32.xlu0 %v1685, 124
      %v1925 = vpop.permute.xlu0 %1924
      %1926 = vrot.lane.b32.xlu0 %v1689, 124
      %v1927 = vpop.permute.xlu0 %1926
      %1928 = vrot.lane.b32.xlu0 %v1693, 124
      %v1929 = vpop.permute.xlu0 %1928
      %1930 = vrot.lane.b32.xlu0 %v1697, 124
      %v1931 = vpop.permute.xlu0 %1930
      %1932 = vrot.lane.b32.xlu0 %v1701, 124
      %v1933 = vpop.permute.xlu0 %1932
      %1934 = vrot.lane.b32.xlu0 %v1705, 124
      %v1935 = vpop.permute.xlu0 %1934
      %1936 = vrot.lane.b32.xlu0 %v1709, 124
      %v1937 = vpop.permute.xlu0 %1936
      %1938 = vrot.lane.b32.xlu0 %v1713, 124
      %v1939 = vpop.permute.xlu0 %1938
      %1940 = vrot.lane.b32.xlu0 %v1717, 124
      %v1941 = vpop.permute.xlu0 %1940
      %1942 = vrot.lane.b32.xlu0 %v1721, 124
      %v1943 = vpop.permute.xlu0 %1942
      %1944 = vrot.lane.b32.xlu0 %v1725, 124
      %v1945 = vpop.permute.xlu0 %1944
      %1946 = vrot.lane.b32.xlu0 %v1729, 124
      %v1947 = vpop.permute.xlu0 %1946
      %1948 = vrot.lane.b32.xlu0 %v1733, 124
      %v1949 = vpop.permute.xlu0 %1948
      %1950 = vrot.lane.b32.xlu0 %v1737, 124
      %v1951 = vpop.permute.xlu0 %1950
      %1952 = vrot.lane.b32.xlu0 %v1741, 124
      %v1953 = vpop.permute.xlu0 %1952
      %1954 = vrot.lane.b32.xlu0 %v1745, 124
      %v1955 = vpop.permute.xlu0 %1954
      %1956 = vrot.lane.b32.xlu0 %v1749, 124
      %v1957 = vpop.permute.xlu0 %1956
      %1958 = vrot.lane.b32.xlu0 %v1753, 124
      %v1959 = vpop.permute.xlu0 %1958
      %1960 = vrot.lane.b32.xlu0 %v1757, 124
      %v1961 = vpop.permute.xlu0 %1960
      %1962 = vrot.lane.b32.xlu0 %v1761, 124
      %v1963 = vpop.permute.xlu0 %1962
      %1964 = vrot.lane.b32.xlu0 %v1765, 124
      %v1965 = vpop.permute.xlu0 %1964
      %1966 = vrot.lane.b32.xlu0 %v1769, 124
      %v1967 = vpop.permute.xlu0 %1966
      %1968 = vrot.lane.b32.xlu0 %v1773, 124
      %v1969 = vpop.permute.xlu0 %1968
      %1970 = vrot.lane.b32.xlu0 %v1777, 124
      %v1971 = vpop.permute.xlu0 %1970
      %1972 = vrot.lane.b32.xlu0 %v1781, 124
      %v1973 = vpop.permute.xlu0 %1972
      %1974 = vrot.lane.b32.xlu0 %v1785, 124
      %v1975 = vpop.permute.xlu0 %1974
      %1976 = vrot.lane.b32.xlu0 %v1789, 124
      %v1977 = vpop.permute.xlu0 %1976
      %1978 = vrot.lane.b32.xlu0 %v1793, 124
      %v1979 = vpop.permute.xlu0 %1978
      %1980 = vrot.lane.b32.xlu0 %v1797, 124
      %v1981 = vpop.permute.xlu0 %1980
      %1982 = vrot.lane.b32.xlu0 %v1801, 124
      %v1983 = vpop.permute.xlu0 %1982
      %1984 = vrot.lane.b32.xlu0 %v1805, 124
      %v1985 = vpop.permute.xlu0 %1984
      %1986 = vrot.lane.b32.xlu0 %v1809, 124
      %v1987 = vpop.permute.xlu0 %1986
      %1988 = vrot.lane.b32.xlu0 %v1813, 124
      %v1989 = vpop.permute.xlu0 %1988
      %1990 = vrot.lane.b32.xlu0 %v1817, 124
      %v1991 = vpop.permute.xlu0 %1990
      %1992 = vrot.lane.b32.xlu0 %v1821, 124
      %v1993 = vpop.permute.xlu0 %1992
      %1994 = vrot.lane.b32.xlu0 %v1825, 124
      %v1995 = vpop.permute.xlu0 %1994
      %1996 = vrot.lane.b32.xlu0 %v1829, 124
      %v1997 = vpop.permute.xlu0 %1996
      %1998 = vrot.lane.b32.xlu0 %v1833, 124
      %v1999 = vpop.permute.xlu0 %1998
      %2000 = vrot.lane.b32.xlu0 %v1837, 124
      %v2001 = vpop.permute.xlu0 %2000
      %2002 = vrot.lane.b32.xlu0 %v1841, 124
      %v2003 = vpop.permute.xlu0 %2002
      %2004 = vrot.lane.b32.xlu0 %v1845, 124
      %v2005 = vpop.permute.xlu0 %2004
      %2006 = vrot.lane.b32.xlu0 %v1849, 124
      %v2007 = vpop.permute.xlu0 %2006
      %2008 = vrot.lane.b32.xlu0 %v1853, 124
      %v2009 = vpop.permute.xlu0 %2008
      %2010 = vrot.lane.b32.xlu0 %v1857, 124
      %v2011 = vpop.permute.xlu0 %2010
      %2012 = vrot.lane.b32.xlu0 %v1861, 124
      %v2013 = vpop.permute.xlu0 %2012
      %2014 = vrot.lane.b32.xlu0 %v1865, 124
      %v2015 = vpop.permute.xlu0 %2014
      %2016 = vrot.lane.b32.xlu0 %v1869, 124
      %v2017 = vpop.permute.xlu0 %2016
      %2018 = vrot.lane.b32.xlu0 %v1873, 124
      %v2019 = vpop.permute.xlu0 %2018
      %2020 = vrot.lane.b32.xlu0 %v1877, 124
      %v2021 = vpop.permute.xlu0 %2020
      %2022 = vrot.lane.b32.xlu0 %v1881, 124
      %v2023 = vpop.permute.xlu0 %2022
      %2024 = vrot.lane.b32.xlu0 %v1885, 124
      %v2025 = vpop.permute.xlu0 %2024
      %2026 = vrot.lane.b32.xlu0 %v1889, 124
      %v2027 = vpop.permute.xlu0 %2026
      %2028 = vrot.lane.b32.xlu0 %v1893, 124
      %v2029 = vpop.permute.xlu0 %2028
      %2030 = vrot.lane.b32.xlu0 %v1897, 124
      %v2031 = vpop.permute.xlu0 %2030
      %2032 = vrot.lane.b32.xlu0 %v1901, 124
      %v2033 = vpop.permute.xlu0 %2032
      %2034 = vrot.lane.b32.xlu0 %v1905, 124
      %v2035 = vpop.permute.xlu0 %2034
      %2036 = vrot.lane.b32.xlu0 %v1909, 124
      %v2037 = vpop.permute.xlu0 %2036
      %vm2102 = vcmask 1040384
      %v2103 = vsel %vm2102, %v1221, %v1911
      %v2104 = vsel %vm2102, %v1235, %v1913
      %v2105 = vsel %vm2102, %v1243, %v1915
      %v2106 = vsel %vm2102, %v1245, %v1917
      %v2107 = vsel %vm2102, %v1228, %v1919
      %v2108 = vsel %vm2102, %v1242, %v1921
      %v2109 = vsel %vm2102, %v1244, %v1923
      %v2110 = vsel %vm2102, %v1246, %v1925
      %v2111 = vsel %vm2102, %v1270, %v1927
      %v2112 = vsel %vm2102, %v1284, %v1929
      %v2113 = vsel %vm2102, %v1292, %v1931
      %v2114 = vsel %vm2102, %v1294, %v1933
      %v2115 = vsel %vm2102, %v1277, %v1935
      %v2116 = vsel %vm2102, %v1291, %v1937
      %v2117 = vsel %vm2102, %v1293, %v1939
      %v2118 = vsel %vm2102, %v1295, %v1941
      %v2119 = vsel %vm2102, %v1319, %v1943
      %v2120 = vsel %vm2102, %v1333, %v1945
      %v2121 = vsel %vm2102, %v1341, %v1947
      %v2122 = vsel %vm2102, %v1343, %v1949
      %v2123 = vsel %vm2102, %v1326, %v1951
      %v2124 = vsel %vm2102, %v1340, %v1953
      %v2125 = vsel %vm2102, %v1342, %v1955
      %v2126 = vsel %vm2102, %v1344, %v1957
      %v2127 = vsel %vm2102, %v1368, %v1959
      %v2128 = vsel %vm2102, %v1382, %v1961
      %v2129 = vsel %vm2102, %v1390, %v1963
      %v2130 = vsel %vm2102, %v1392, %v1965
      %v2131 = vsel %vm2102, %v1375, %v1967
      %v2132 = vsel %vm2102, %v1389, %v1969
      %v2133 = vsel %vm2102, %v1391, %v1971
      %v2134 = vsel %vm2102, %v1393, %v1973
      %v2135 = vsel %vm2102, %v1417, %v1975
      %v2136 = vsel %vm2102, %v1431, %v1977
      %v2137 = vsel %vm2102, %v1439, %v1979
      %v2138 = vsel %vm2102, %v1441, %v1981
      %v2139 = vsel %vm2102, %v1424, %v1983
      %v2140 = vsel %vm2102, %v1438, %v1985
      %v2141 = vsel %vm2102, %v1440, %v1987
      %v2142 = vsel %vm2102, %v1442, %v1989
      %v2143 = vsel %vm2102, %v1466, %v1991
      %v2144 = vsel %vm2102, %v1480, %v1993
      %v2145 = vsel %vm2102, %v1488, %v1995
      %v2146 = vsel %vm2102, %v1490, %v1997
      %v2147 = vsel %vm2102, %v1473, %v1999
      %v2148 = vsel %vm2102, %v1487, %v2001
      %v2149 = vsel %vm2102, %v1489, %v2003
      %v2150 = vsel %vm2102, %v1491, %v2005
      %v2151 = vsel %vm2102, %v1515, %v2007
      %v2152 = vsel %vm2102, %v1529, %v2009
      %v2153 = vsel %vm2102, %v1537, %v2011
      %v2154 = vsel %vm2102, %v1539, %v2013
      %v2155 = vsel %vm2102, %v1522, %v2015
      %v2156 = vsel %vm2102, %v1536, %v2017
      %v2157 = vsel %vm2102, %v1538, %v2019
      %v2158 = vsel %vm2102, %v1540, %v2021
      %v2159 = vsel %vm2102, %v1564, %v2023
      %v2160 = vsel %vm2102, %v1578, %v2025
      %v2161 = vsel %vm2102, %v1586, %v2027
      %v2162 = vsel %vm2102, %v1588, %v2029
      %v2163 = vsel %vm2102, %v1571, %v2031
      %v2164 = vsel %vm2102, %v1585, %v2033
      %v2165 = vsel %vm2102, %v1587, %v2035
      %v2166 = vsel %vm2102, %v1589, %v2037
      %2231 = vrot.lane.b32.xlu0 %v2103, 120
      %v2232 = vpop.permute.xlu0 %2231
      %2233 = vrot.lane.b32.xlu0 %v2104, 120
      %v2234 = vpop.permute.xlu0 %2233
      %2235 = vrot.lane.b32.xlu0 %v2105, 120
      %v2236 = vpop.permute.xlu0 %2235
      %2237 = vrot.lane.b32.xlu0 %v2106, 120
      %v2238 = vpop.permute.xlu0 %2237
      %2239 = vrot.lane.b32.xlu0 %v2107, 120
      %v2240 = vpop.permute.xlu0 %2239
      %2241 = vrot.lane.b32.xlu0 %v2108, 120
      %v2242 = vpop.permute.xlu0 %2241
      %2243 = vrot.lane.b32.xlu0 %v2109, 120
      %v2244 = vpop.permute.xlu0 %2243
      %2245 = vrot.lane.b32.xlu0 %v2110, 120
      %v2246 = vpop.permute.xlu0 %2245
      %2247 = vrot.lane.b32.xlu0 %v2111, 120
      %v2248 = vpop.permute.xlu0 %2247
      %2249 = vrot.lane.b32.xlu0 %v2112, 120
      %v2250 = vpop.permute.xlu0 %2249
      %2251 = vrot.lane.b32.xlu0 %v2113, 120
      %v2252 = vpop.permute.xlu0 %2251
      %2253 = vrot.lane.b32.xlu0 %v2114, 120
      %v2254 = vpop.permute.xlu0 %2253
      %2255 = vrot.lane.b32.xlu0 %v2115, 120
      %v2256 = vpop.permute.xlu0 %2255
      %2257 = vrot.lane.b32.xlu0 %v2116, 120
      %v2258 = vpop.permute.xlu0 %2257
      %2259 = vrot.lane.b32.xlu0 %v2117, 120
      %v2260 = vpop.permute.xlu0 %2259
      %2261 = vrot.lane.b32.xlu0 %v2118, 120
      %v2262 = vpop.permute.xlu0 %2261
      %2263 = vrot.lane.b32.xlu0 %v2119, 120
      %v2264 = vpop.permute.xlu0 %2263
      %2265 = vrot.lane.b32.xlu0 %v2120, 120
      %v2266 = vpop.permute.xlu0 %2265
      %2267 = vrot.lane.b32.xlu0 %v2121, 120
      %v2268 = vpop.permute.xlu0 %2267
      %2269 = vrot.lane.b32.xlu0 %v2122, 120
      %v2270 = vpop.permute.xlu0 %2269
      %2271 = vrot.lane.b32.xlu0 %v2123, 120
      %v2272 = vpop.permute.xlu0 %2271
      %2273 = vrot.lane.b32.xlu0 %v2124, 120
      %v2274 = vpop.permute.xlu0 %2273
      %2275 = vrot.lane.b32.xlu0 %v2125, 120
      %v2276 = vpop.permute.xlu0 %2275
      %2277 = vrot.lane.b32.xlu0 %v2126, 120
      %v2278 = vpop.permute.xlu0 %2277
      %2279 = vrot.lane.b32.xlu0 %v2127, 120
      %v2280 = vpop.permute.xlu0 %2279
      %2281 = vrot.lane.b32.xlu0 %v2128, 120
      %v2282 = vpop.permute.xlu0 %2281
      %2283 = vrot.lane.b32.xlu0 %v2129, 120
      %v2284 = vpop.permute.xlu0 %2283
      %2285 = vrot.lane.b32.xlu0 %v2130, 120
      %v2286 = vpop.permute.xlu0 %2285
      %2287 = vrot.lane.b32.xlu0 %v2131, 120
      %v2288 = vpop.permute.xlu0 %2287
      %2289 = vrot.lane.b32.xlu0 %v2132, 120
      %v2290 = vpop.permute.xlu0 %2289
      %2291 = vrot.lane.b32.xlu0 %v2133, 120
      %v2292 = vpop.permute.xlu0 %2291
      %2293 = vrot.lane.b32.xlu0 %v2134, 120
      %v2294 = vpop.permute.xlu0 %2293
      %2295 = vrot.lane.b32.xlu0 %v2135, 120
      %v2296 = vpop.permute.xlu0 %2295
      %2297 = vrot.lane.b32.xlu0 %v2136, 120
      %v2298 = vpop.permute.xlu0 %2297
      %2299 = vrot.lane.b32.xlu0 %v2137, 120
      %v2300 = vpop.permute.xlu0 %2299
      %2301 = vrot.lane.b32.xlu0 %v2138, 120
      %v2302 = vpop.permute.xlu0 %2301
      %2303 = vrot.lane.b32.xlu0 %v2139, 120
      %v2304 = vpop.permute.xlu0 %2303
      %2305 = vrot.lane.b32.xlu0 %v2140, 120
      %v2306 = vpop.permute.xlu0 %2305
      %2307 = vrot.lane.b32.xlu0 %v2141, 120
      %v2308 = vpop.permute.xlu0 %2307
      %2309 = vrot.lane.b32.xlu0 %v2142, 120
      %v2310 = vpop.permute.xlu0 %2309
      %2311 = vrot.lane.b32.xlu0 %v2143, 120
      %v2312 = vpop.permute.xlu0 %2311
      %2313 = vrot.lane.b32.xlu0 %v2144, 120
      %v2314 = vpop.permute.xlu0 %2313
      %2315 = vrot.lane.b32.xlu0 %v2145, 120
      %v2316 = vpop.permute.xlu0 %2315
      %2317 = vrot.lane.b32.xlu0 %v2146, 120
      %v2318 = vpop.permute.xlu0 %2317
      %2319 = vrot.lane.b32.xlu0 %v2147, 120
      %v2320 = vpop.permute.xlu0 %2319
      %2321 = vrot.lane.b32.xlu0 %v2148, 120
      %v2322 = vpop.permute.xlu0 %2321
      %2323 = vrot.lane.b32.xlu0 %v2149, 120
      %v2324 = vpop.permute.xlu0 %2323
      %2325 = vrot.lane.b32.xlu0 %v2150, 120
      %v2326 = vpop.permute.xlu0 %2325
      %2327 = vrot.lane.b32.xlu0 %v2151, 120
      %v2328 = vpop.permute.xlu0 %2327
      %2329 = vrot.lane.b32.xlu0 %v2152, 120
      %v2330 = vpop.permute.xlu0 %2329
      %2331 = vrot.lane.b32.xlu0 %v2153, 120
      %v2332 = vpop.permute.xlu0 %2331
      %2333 = vrot.lane.b32.xlu0 %v2154, 120
      %v2334 = vpop.permute.xlu0 %2333
      %2335 = vrot.lane.b32.xlu0 %v2155, 120
      %v2336 = vpop.permute.xlu0 %2335
      %2337 = vrot.lane.b32.xlu0 %v2156, 120
      %v2338 = vpop.permute.xlu0 %2337
      %2339 = vrot.lane.b32.xlu0 %v2157, 120
      %v2340 = vpop.permute.xlu0 %2339
      %2341 = vrot.lane.b32.xlu0 %v2158, 120
      %v2342 = vpop.permute.xlu0 %2341
      %2343 = vrot.lane.b32.xlu0 %v2159, 120
      %v2344 = vpop.permute.xlu0 %2343
      %2345 = vrot.lane.b32.xlu0 %v2160, 120
      %v2346 = vpop.permute.xlu0 %2345
      %2347 = vrot.lane.b32.xlu0 %v2161, 120
      %v2348 = vpop.permute.xlu0 %2347
      %2349 = vrot.lane.b32.xlu0 %v2162, 120
      %v2350 = vpop.permute.xlu0 %2349
      %2351 = vrot.lane.b32.xlu0 %v2163, 120
      %v2352 = vpop.permute.xlu0 %2351
      %2353 = vrot.lane.b32.xlu0 %v2164, 120
      %v2354 = vpop.permute.xlu0 %2353
      %2355 = vrot.lane.b32.xlu0 %v2165, 120
      %v2356 = vpop.permute.xlu0 %2355
      %2357 = vrot.lane.b32.xlu0 %v2166, 120
      %v2358 = vpop.permute.xlu0 %2357
      %v2359 = vcombine.low %v2103, %v2104
      %v2360 = vcombine.low %v2105, %v2106
      %v2362 = vunpack.c.l.s4 1983009808
      %v2363 = vunpack.c.0.s8 %v2362
      %v2364 = vlaneseq
      %v2365 = vshrl.u32 %v2364, 7
      %v2366 = vsub.s32 %v2363, %v2365
      %v2367 = vrot.slane %v2359, %v2366
      %v2369 = vunpack.c.l.s4 1983009808
      %v2370 = vunpack.c.0.s8 %v2369
      %v2371 = vlaneseq
      %v2372 = vshrl.u32 %v2371, 7
      %v2373 = vsub.s32 %v2370, %v2372
      %v2374 = vrot.slane %v2360, %v2373
      %v2375 = vcombine.low %v2367, %v2374
      %v2376 = vcombine.low %v2107, %v2108
      %v2377 = vcombine.low %v2109, %v2110
      %v2379 = vunpack.c.l.s4 1983009808
      %v2380 = vunpack.c.0.s8 %v2379
      %v2381 = vlaneseq
      %v2382 = vshrl.u32 %v2381, 7
      %v2383 = vsub.s32 %v2380, %v2382
      %v2384 = vrot.slane %v2376, %v2383
      %v2386 = vunpack.c.l.s4 1983009808
      %v2387 = vunpack.c.0.s8 %v2386
      %v2388 = vlaneseq
      %v2389 = vshrl.u32 %v2388, 7
      %v2390 = vsub.s32 %v2387, %v2389
      %v2391 = vrot.slane %v2377, %v2390
      %v2392 = vcombine.low %v2384, %v2391
      %v2393 = vcombine.low %v2232, %v2234
      %v2394 = vcombine.low %v2236, %v2238
      %v2396 = vunpack.c.l.s4 1983009808
      %v2397 = vunpack.c.0.s8 %v2396
      %v2398 = vlaneseq
      %v2399 = vshrl.u32 %v2398, 7
      %v2400 = vsub.s32 %v2397, %v2399
      %v2401 = vrot.slane %v2393, %v2400
      %v2403 = vunpack.c.l.s4 1983009808
      %v2404 = vunpack.c.0.s8 %v2403
      %v2405 = vlaneseq
      %v2406 = vshrl.u32 %v2405, 7
      %v2407 = vsub.s32 %v2404, %v2406
      %v2408 = vrot.slane %v2394, %v2407
      %v2409 = vcombine.low %v2401, %v2408
      %v2410 = vcombine.low %v2240, %v2242
      %v2411 = vcombine.low %v2244, %v2246
      %v2413 = vunpack.c.l.s4 1983009808
      %v2414 = vunpack.c.0.s8 %v2413
      %v2415 = vlaneseq
      %v2416 = vshrl.u32 %v2415, 7
      %v2417 = vsub.s32 %v2414, %v2416
      %v2418 = vrot.slane %v2410, %v2417
      %v2420 = vunpack.c.l.s4 1983009808
      %v2421 = vunpack.c.0.s8 %v2420
      %v2422 = vlaneseq
      %v2423 = vshrl.u32 %v2422, 7
      %v2424 = vsub.s32 %v2421, %v2423
      %v2425 = vrot.slane %v2411, %v2424
      %v2426 = vcombine.low %v2418, %v2425
      %v2427 = vcombine.low %v2111, %v2112
      %v2428 = vcombine.low %v2113, %v2114
      %v2430 = vunpack.c.l.s4 1983009808
      %v2431 = vunpack.c.0.s8 %v2430
      %v2432 = vlaneseq
      %v2433 = vshrl.u32 %v2432, 7
      %v2434 = vsub.s32 %v2431, %v2433
      %v2435 = vrot.slane %v2427, %v2434
      %v2437 = vunpack.c.l.s4 1983009808
      %v2438 = vunpack.c.0.s8 %v2437
      %v2439 = vlaneseq
      %v2440 = vshrl.u32 %v2439, 7
      %v2441 = vsub.s32 %v2438, %v2440
      %v2442 = vrot.slane %v2428, %v2441
      %v2443 = vcombine.low %v2435, %v2442
      %v2444 = vcombine.low %v2115, %v2116
      %v2445 = vcombine.low %v2117, %v2118
      %v2447 = vunpack.c.l.s4 1983009808
      %v2448 = vunpack.c.0.s8 %v2447
      %v2449 = vlaneseq
      %v2450 = vshrl.u32 %v2449, 7
      %v2451 = vsub.s32 %v2448, %v2450
      %v2452 = vrot.slane %v2444, %v2451
      %v2454 = vunpack.c.l.s4 1983009808
      %v2455 = vunpack.c.0.s8 %v2454
      %v2456 = vlaneseq
      %v2457 = vshrl.u32 %v2456, 7
      %v2458 = vsub.s32 %v2455, %v2457
      %v2459 = vrot.slane %v2445, %v2458
      %v2460 = vcombine.low %v2452, %v2459
      %v2461 = vcombine.low %v2248, %v2250
      %v2462 = vcombine.low %v2252, %v2254
      %v2464 = vunpack.c.l.s4 1983009808
      %v2465 = vunpack.c.0.s8 %v2464
      %v2466 = vlaneseq
      %v2467 = vshrl.u32 %v2466, 7
      %v2468 = vsub.s32 %v2465, %v2467
      %v2469 = vrot.slane %v2461, %v2468
      %v2471 = vunpack.c.l.s4 1983009808
      %v2472 = vunpack.c.0.s8 %v2471
      %v2473 = vlaneseq
      %v2474 = vshrl.u32 %v2473, 7
      %v2475 = vsub.s32 %v2472, %v2474
      %v2476 = vrot.slane %v2462, %v2475
      %v2477 = vcombine.low %v2469, %v2476
      %v2478 = vcombine.low %v2256, %v2258
      %v2479 = vcombine.low %v2260, %v2262
      %v2481 = vunpack.c.l.s4 1983009808
      %v2482 = vunpack.c.0.s8 %v2481
      %v2483 = vlaneseq
      %v2484 = vshrl.u32 %v2483, 7
      %v2485 = vsub.s32 %v2482, %v2484
      %v2486 = vrot.slane %v2478, %v2485
      %v2488 = vunpack.c.l.s4 1983009808
      %v2489 = vunpack.c.0.s8 %v2488
      %v2490 = vlaneseq
      %v2491 = vshrl.u32 %v2490, 7
      %v2492 = vsub.s32 %v2489, %v2491
      %v2493 = vrot.slane %v2479, %v2492
      %v2494 = vcombine.low %v2486, %v2493
      %v2495 = vcombine.low %v2119, %v2120
      %v2496 = vcombine.low %v2121, %v2122
      %v2498 = vunpack.c.l.s4 1983009808
      %v2499 = vunpack.c.0.s8 %v2498
      %v2500 = vlaneseq
      %v2501 = vshrl.u32 %v2500, 7
      %v2502 = vsub.s32 %v2499, %v2501
      %v2503 = vrot.slane %v2495, %v2502
      %v2505 = vunpack.c.l.s4 1983009808
      %v2506 = vunpack.c.0.s8 %v2505
      %v2507 = vlaneseq
      %v2508 = vshrl.u32 %v2507, 7
      %v2509 = vsub.s32 %v2506, %v2508
      %v2510 = vrot.slane %v2496, %v2509
      %v2511 = vcombine.low %v2503, %v2510
      %v2512 = vcombine.low %v2123, %v2124
      %v2513 = vcombine.low %v2125, %v2126
      %v2515 = vunpack.c.l.s4 1983009808
      %v2516 = vunpack.c.0.s8 %v2515
      %v2517 = vlaneseq
      %v2518 = vshrl.u32 %v2517, 7
      %v2519 = vsub.s32 %v2516, %v2518
      %v2520 = vrot.slane %v2512, %v2519
      %v2522 = vunpack.c.l.s4 1983009808
      %v2523 = vunpack.c.0.s8 %v2522
      %v2524 = vlaneseq
      %v2525 = vshrl.u32 %v2524, 7
      %v2526 = vsub.s32 %v2523, %v2525
      %v2527 = vrot.slane %v2513, %v2526
      %v2528 = vcombine.low %v2520, %v2527
      %v2529 = vcombine.low %v2264, %v2266
      %v2530 = vcombine.low %v2268, %v2270
      %v2532 = vunpack.c.l.s4 1983009808
      %v2533 = vunpack.c.0.s8 %v2532
      %v2534 = vlaneseq
      %v2535 = vshrl.u32 %v2534, 7
      %v2536 = vsub.s32 %v2533, %v2535
      %v2537 = vrot.slane %v2529, %v2536
      %v2539 = vunpack.c.l.s4 1983009808
      %v2540 = vunpack.c.0.s8 %v2539
      %v2541 = vlaneseq
      %v2542 = vshrl.u32 %v2541, 7
      %v2543 = vsub.s32 %v2540, %v2542
      %v2544 = vrot.slane %v2530, %v2543
      %v2545 = vcombine.low %v2537, %v2544
      %v2546 = vcombine.low %v2272, %v2274
      %v2547 = vcombine.low %v2276, %v2278
      %v2549 = vunpack.c.l.s4 1983009808
      %v2550 = vunpack.c.0.s8 %v2549
      %v2551 = vlaneseq
      %v2552 = vshrl.u32 %v2551, 7
      %v2553 = vsub.s32 %v2550, %v2552
      %v2554 = vrot.slane %v2546, %v2553
      %v2556 = vunpack.c.l.s4 1983009808
      %v2557 = vunpack.c.0.s8 %v2556
      %v2558 = vlaneseq
      %v2559 = vshrl.u32 %v2558, 7
      %v2560 = vsub.s32 %v2557, %v2559
      %v2561 = vrot.slane %v2547, %v2560
      %v2562 = vcombine.low %v2554, %v2561
      %v2563 = vcombine.low %v2127, %v2128
      %v2564 = vcombine.low %v2129, %v2130
      %v2566 = vunpack.c.l.s4 1983009808
      %v2567 = vunpack.c.0.s8 %v2566
      %v2568 = vlaneseq
      %v2569 = vshrl.u32 %v2568, 7
      %v2570 = vsub.s32 %v2567, %v2569
      %v2571 = vrot.slane %v2563, %v2570
      %v2573 = vunpack.c.l.s4 1983009808
      %v2574 = vunpack.c.0.s8 %v2573
      %v2575 = vlaneseq
      %v2576 = vshrl.u32 %v2575, 7
      %v2577 = vsub.s32 %v2574, %v2576
      %v2578 = vrot.slane %v2564, %v2577
      %v2579 = vcombine.low %v2571, %v2578
      %v2580 = vcombine.low %v2131, %v2132
      %v2581 = vcombine.low %v2133, %v2134
      %v2583 = vunpack.c.l.s4 1983009808
      %v2584 = vunpack.c.0.s8 %v2583
      %v2585 = vlaneseq
      %v2586 = vshrl.u32 %v2585, 7
      %v2587 = vsub.s32 %v2584, %v2586
      %v2588 = vrot.slane %v2580, %v2587
      %v2590 = vunpack.c.l.s4 1983009808
      %v2591 = vunpack.c.0.s8 %v2590
      %v2592 = vlaneseq
      %v2593 = vshrl.u32 %v2592, 7
      %v2594 = vsub.s32 %v2591, %v2593
      %v2595 = vrot.slane %v2581, %v2594
      %v2596 = vcombine.low %v2588, %v2595
      %v2597 = vcombine.low %v2280, %v2282
      %v2598 = vcombine.low %v2284, %v2286
      %v2600 = vunpack.c.l.s4 1983009808
      %v2601 = vunpack.c.0.s8 %v2600
      %v2602 = vlaneseq
      %v2603 = vshrl.u32 %v2602, 7
      %v2604 = vsub.s32 %v2601, %v2603
      %v2605 = vrot.slane %v2597, %v2604
      %v2607 = vunpack.c.l.s4 1983009808
      %v2608 = vunpack.c.0.s8 %v2607
      %v2609 = vlaneseq
      %v2610 = vshrl.u32 %v2609, 7
      %v2611 = vsub.s32 %v2608, %v2610
      %v2612 = vrot.slane %v2598, %v2611
      %v2613 = vcombine.low %v2605, %v2612
      %v2614 = vcombine.low %v2288, %v2290
      %v2615 = vcombine.low %v2292, %v2294
      %v2617 = vunpack.c.l.s4 1983009808
      %v2618 = vunpack.c.0.s8 %v2617
      %v2619 = vlaneseq
      %v2620 = vshrl.u32 %v2619, 7
      %v2621 = vsub.s32 %v2618, %v2620
      %v2622 = vrot.slane %v2614, %v2621
      %v2624 = vunpack.c.l.s4 1983009808
      %v2625 = vunpack.c.0.s8 %v2624
      %v2626 = vlaneseq
      %v2627 = vshrl.u32 %v2626, 7
      %v2628 = vsub.s32 %v2625, %v2627
      %v2629 = vrot.slane %v2615, %v2628
      %v2630 = vcombine.low %v2622, %v2629
      %v2631 = vcombine.low %v2135, %v2136
      %v2632 = vcombine.low %v2137, %v2138
      %v2634 = vunpack.c.l.s4 1983009808
      %v2635 = vunpack.c.0.s8 %v2634
      %v2636 = vlaneseq
      %v2637 = vshrl.u32 %v2636, 7
      %v2638 = vsub.s32 %v2635, %v2637
      %v2639 = vrot.slane %v2631, %v2638
      %v2641 = vunpack.c.l.s4 1983009808
      %v2642 = vunpack.c.0.s8 %v2641
      %v2643 = vlaneseq
      %v2644 = vshrl.u32 %v2643, 7
      %v2645 = vsub.s32 %v2642, %v2644
      %v2646 = vrot.slane %v2632, %v2645
      %v2647 = vcombine.low %v2639, %v2646
      %v2648 = vcombine.low %v2139, %v2140
      %v2649 = vcombine.low %v2141, %v2142
      %v2651 = vunpack.c.l.s4 1983009808
      %v2652 = vunpack.c.0.s8 %v2651
      %v2653 = vlaneseq
      %v2654 = vshrl.u32 %v2653, 7
      %v2655 = vsub.s32 %v2652, %v2654
      %v2656 = vrot.slane %v2648, %v2655
      %v2658 = vunpack.c.l.s4 1983009808
      %v2659 = vunpack.c.0.s8 %v2658
      %v2660 = vlaneseq
      %v2661 = vshrl.u32 %v2660, 7
      %v2662 = vsub.s32 %v2659, %v2661
      %v2663 = vrot.slane %v2649, %v2662
      %v2664 = vcombine.low %v2656, %v2663
      %v2665 = vcombine.low %v2296, %v2298
      %v2666 = vcombine.low %v2300, %v2302
      %v2668 = vunpack.c.l.s4 1983009808
      %v2669 = vunpack.c.0.s8 %v2668
      %v2670 = vlaneseq
      %v2671 = vshrl.u32 %v2670, 7
      %v2672 = vsub.s32 %v2669, %v2671
      %v2673 = vrot.slane %v2665, %v2672
      %v2675 = vunpack.c.l.s4 1983009808
      %v2676 = vunpack.c.0.s8 %v2675
      %v2677 = vlaneseq
      %v2678 = vshrl.u32 %v2677, 7
      %v2679 = vsub.s32 %v2676, %v2678
      %v2680 = vrot.slane %v2666, %v2679
      %v2681 = vcombine.low %v2673, %v2680
      %v2682 = vcombine.low %v2304, %v2306
      %v2683 = vcombine.low %v2308, %v2310
      %v2685 = vunpack.c.l.s4 1983009808
      %v2686 = vunpack.c.0.s8 %v2685
      %v2687 = vlaneseq
      %v2688 = vshrl.u32 %v2687, 7
      %v2689 = vsub.s32 %v2686, %v2688
      %v2690 = vrot.slane %v2682, %v2689
      %v2692 = vunpack.c.l.s4 1983009808
      %v2693 = vunpack.c.0.s8 %v2692
      %v2694 = vlaneseq
      %v2695 = vshrl.u32 %v2694, 7
      %v2696 = vsub.s32 %v2693, %v2695
      %v2697 = vrot.slane %v2683, %v2696
      %v2698 = vcombine.low %v2690, %v2697
      %v2699 = vcombine.low %v2143, %v2144
      %v2700 = vcombine.low %v2145, %v2146
      %v2702 = vunpack.c.l.s4 1983009808
      %v2703 = vunpack.c.0.s8 %v2702
      %v2704 = vlaneseq
      %v2705 = vshrl.u32 %v2704, 7
      %v2706 = vsub.s32 %v2703, %v2705
      %v2707 = vrot.slane %v2699, %v2706
      %v2709 = vunpack.c.l.s4 1983009808
      %v2710 = vunpack.c.0.s8 %v2709
      %v2711 = vlaneseq
      %v2712 = vshrl.u32 %v2711, 7
      %v2713 = vsub.s32 %v2710, %v2712
      %v2714 = vrot.slane %v2700, %v2713
      %v2715 = vcombine.low %v2707, %v2714
      %v2716 = vcombine.low %v2147, %v2148
      %v2717 = vcombine.low %v2149, %v2150
      %v2719 = vunpack.c.l.s4 1983009808
      %v2720 = vunpack.c.0.s8 %v2719
      %v2721 = vlaneseq
      %v2722 = vshrl.u32 %v2721, 7
      %v2723 = vsub.s32 %v2720, %v2722
      %v2724 = vrot.slane %v2716, %v2723
      %v2726 = vunpack.c.l.s4 1983009808
      %v2727 = vunpack.c.0.s8 %v2726
      %v2728 = vlaneseq
      %v2729 = vshrl.u32 %v2728, 7
      %v2730 = vsub.s32 %v2727, %v2729
      %v2731 = vrot.slane %v2717, %v2730
      %v2732 = vcombine.low %v2724, %v2731
      %v2733 = vcombine.low %v2312, %v2314
      %v2734 = vcombine.low %v2316, %v2318
      %v2736 = vunpack.c.l.s4 1983009808
      %v2737 = vunpack.c.0.s8 %v2736
      %v2738 = vlaneseq
      %v2739 = vshrl.u32 %v2738, 7
      %v2740 = vsub.s32 %v2737, %v2739
      %v2741 = vrot.slane %v2733, %v2740
      %v2743 = vunpack.c.l.s4 1983009808
      %v2744 = vunpack.c.0.s8 %v2743
      %v2745 = vlaneseq
      %v2746 = vshrl.u32 %v2745, 7
      %v2747 = vsub.s32 %v2744, %v2746
      %v2748 = vrot.slane %v2734, %v2747
      %v2749 = vcombine.low %v2741, %v2748
      %v2750 = vcombine.low %v2320, %v2322
      %v2751 = vcombine.low %v2324, %v2326
      %v2753 = vunpack.c.l.s4 1983009808
      %v2754 = vunpack.c.0.s8 %v2753
      %v2755 = vlaneseq
      %v2756 = vshrl.u32 %v2755, 7
      %v2757 = vsub.s32 %v2754, %v2756
      %v2758 = vrot.slane %v2750, %v2757
      %v2760 = vunpack.c.l.s4 1983009808
      %v2761 = vunpack.c.0.s8 %v2760
      %v2762 = vlaneseq
      %v2763 = vshrl.u32 %v2762, 7
      %v2764 = vsub.s32 %v2761, %v2763
      %v2765 = vrot.slane %v2751, %v2764
      %v2766 = vcombine.low %v2758, %v2765
      %v2767 = vcombine.low %v2151, %v2152
      %v2768 = vcombine.low %v2153, %v2154
      %v2770 = vunpack.c.l.s4 1983009808
      %v2771 = vunpack.c.0.s8 %v2770
      %v2772 = vlaneseq
      %v2773 = vshrl.u32 %v2772, 7
      %v2774 = vsub.s32 %v2771, %v2773
      %v2775 = vrot.slane %v2767, %v2774
      %v2777 = vunpack.c.l.s4 1983009808
      %v2778 = vunpack.c.0.s8 %v2777
      %v2779 = vlaneseq
      %v2780 = vshrl.u32 %v2779, 7
      %v2781 = vsub.s32 %v2778, %v2780
      %v2782 = vrot.slane %v2768, %v2781
      %v2783 = vcombine.low %v2775, %v2782
      %v2784 = vcombine.low %v2155, %v2156
      %v2785 = vcombine.low %v2157, %v2158
      %v2787 = vunpack.c.l.s4 1983009808
      %v2788 = vunpack.c.0.s8 %v2787
      %v2789 = vlaneseq
      %v2790 = vshrl.u32 %v2789, 7
      %v2791 = vsub.s32 %v2788, %v2790
      %v2792 = vrot.slane %v2784, %v2791
      %v2794 = vunpack.c.l.s4 1983009808
      %v2795 = vunpack.c.0.s8 %v2794
      %v2796 = vlaneseq
      %v2797 = vshrl.u32 %v2796, 7
      %v2798 = vsub.s32 %v2795, %v2797
      %v2799 = vrot.slane %v2785, %v2798
      %v2800 = vcombine.low %v2792, %v2799
      %v2801 = vcombine.low %v2328, %v2330
      %v2802 = vcombine.low %v2332, %v2334
      %v2804 = vunpack.c.l.s4 1983009808
      %v2805 = vunpack.c.0.s8 %v2804
      %v2806 = vlaneseq
      %v2807 = vshrl.u32 %v2806, 7
      %v2808 = vsub.s32 %v2805, %v2807
      %v2809 = vrot.slane %v2801, %v2808
      %v2811 = vunpack.c.l.s4 1983009808
      %v2812 = vunpack.c.0.s8 %v2811
      %v2813 = vlaneseq
      %v2814 = vshrl.u32 %v2813, 7
      %v2815 = vsub.s32 %v2812, %v2814
      %v2816 = vrot.slane %v2802, %v2815
      %v2817 = vcombine.low %v2809, %v2816
      %v2818 = vcombine.low %v2336, %v2338
      %v2819 = vcombine.low %v2340, %v2342
      %v2821 = vunpack.c.l.s4 1983009808
      %v2822 = vunpack.c.0.s8 %v2821
      %v2823 = vlaneseq
      %v2824 = vshrl.u32 %v2823, 7
      %v2825 = vsub.s32 %v2822, %v2824
      %v2826 = vrot.slane %v2818, %v2825
      %v2828 = vunpack.c.l.s4 1983009808
      %v2829 = vunpack.c.0.s8 %v2828
      %v2830 = vlaneseq
      %v2831 = vshrl.u32 %v2830, 7
      %v2832 = vsub.s32 %v2829, %v2831
      %v2833 = vrot.slane %v2819, %v2832
      %v2834 = vcombine.low %v2826, %v2833
      %v2835 = vcombine.low %v2159, %v2160
      %v2836 = vcombine.low %v2161, %v2162
      %v2838 = vunpack.c.l.s4 1983009808
      %v2839 = vunpack.c.0.s8 %v2838
      %v2840 = vlaneseq
      %v2841 = vshrl.u32 %v2840, 7
      %v2842 = vsub.s32 %v2839, %v2841
      %v2843 = vrot.slane %v2835, %v2842
      %v2845 = vunpack.c.l.s4 1983009808
      %v2846 = vunpack.c.0.s8 %v2845
      %v2847 = vlaneseq
      %v2848 = vshrl.u32 %v2847, 7
      %v2849 = vsub.s32 %v2846, %v2848
      %v2850 = vrot.slane %v2836, %v2849
      %v2851 = vcombine.low %v2843, %v2850
      %v2852 = vcombine.low %v2163, %v2164
      %v2853 = vcombine.low %v2165, %v2166
      %v2855 = vunpack.c.l.s4 1983009808
      %v2856 = vunpack.c.0.s8 %v2855
      %v2857 = vlaneseq
      %v2858 = vshrl.u32 %v2857, 7
      %v2859 = vsub.s32 %v2856, %v2858
      %v2860 = vrot.slane %v2852, %v2859
      %v2862 = vunpack.c.l.s4 1983009808
      %v2863 = vunpack.c.0.s8 %v2862
      %v2864 = vlaneseq
      %v2865 = vshrl.u32 %v2864, 7
      %v2866 = vsub.s32 %v2863, %v2865
      %v2867 = vrot.slane %v2853, %v2866
      %v2868 = vcombine.low %v2860, %v2867
      %v2869 = vcombine.low %v2344, %v2346
      %v2870 = vcombine.low %v2348, %v2350
      %v2872 = vunpack.c.l.s4 1983009808
      %v2873 = vunpack.c.0.s8 %v2872
      %v2874 = vlaneseq
      %v2875 = vshrl.u32 %v2874, 7
      %v2876 = vsub.s32 %v2873, %v2875
      %v2877 = vrot.slane %v2869, %v2876
      %v2879 = vunpack.c.l.s4 1983009808
      %v2880 = vunpack.c.0.s8 %v2879
      %v2881 = vlaneseq
      %v2882 = vshrl.u32 %v2881, 7
      %v2883 = vsub.s32 %v2880, %v2882
      %v2884 = vrot.slane %v2870, %v2883
      %v2885 = vcombine.low %v2877, %v2884
      %v2886 = vcombine.low %v2352, %v2354
      %v2887 = vcombine.low %v2356, %v2358
      %v2889 = vunpack.c.l.s4 1983009808
      %v2890 = vunpack.c.0.s8 %v2889
      %v2891 = vlaneseq
      %v2892 = vshrl.u32 %v2891, 7
      %v2893 = vsub.s32 %v2890, %v2892
      %v2894 = vrot.slane %v2886, %v2893
      %v2896 = vunpack.c.l.s4 1983009808
      %v2897 = vunpack.c.0.s8 %v2896
      %v2898 = vlaneseq
      %v2899 = vshrl.u32 %v2898, 7
      %v2900 = vsub.s32 %v2897, %v2899
      %v2901 = vrot.slane %v2887, %v2900
      %v2902 = vcombine.low %v2894, %v2901
      %v2935 = vpack.c.bf16 %v2392, %v2375
      %v2936 = vpack.c.bf16 %v2426, %v2409
      %v2937 = vpack.c.bf16 %v2460, %v2443
      %v2938 = vpack.c.bf16 %v2494, %v2477
      %v2939 = vpack.c.bf16 %v2528, %v2511
      %v2940 = vpack.c.bf16 %v2562, %v2545
      %v2941 = vpack.c.bf16 %v2596, %v2579
      %v2942 = vpack.c.bf16 %v2630, %v2613
      %v2943 = vpack.c.bf16 %v2664, %v2647
      %v2944 = vpack.c.bf16 %v2698, %v2681
      %v2945 = vpack.c.bf16 %v2732, %v2715
      %v2946 = vpack.c.bf16 %v2766, %v2749
      %v2947 = vpack.c.bf16 %v2800, %v2783
      %v2948 = vpack.c.bf16 %v2834, %v2817
      %v2949 = vpack.c.bf16 %v2868, %v2851
      %v2950 = vpack.c.bf16 %v2902, %v2885
      %v2967 = vunpack.c.l.b16 %v2935
      %v2968 = vunpack.c.h.b16 %v2935
      %v2969 = vunpack.c.l.b16 %v2936
      %v2970 = vunpack.c.h.b16 %v2936
      %v2971 = vunpack.c.l.b16 %v2937
      %v2972 = vunpack.c.h.b16 %v2937
      %v2973 = vunpack.c.l.b16 %v2938
      %v2974 = vunpack.c.h.b16 %v2938
      %v2975 = vunpack.c.l.b16 %v2939
      %v2976 = vunpack.c.h.b16 %v2939
      %v2977 = vunpack.c.l.b16 %v2940
      %v2978 = vunpack.c.h.b16 %v2940
      %v2979 = vunpack.c.l.b16 %v2941
      %v2980 = vunpack.c.h.b16 %v2941
      %v2981 = vunpack.c.l.b16 %v2942
      %v2982 = vunpack.c.h.b16 %v2942
      %v2983 = vunpack.c.l.b16 %v2943
      %v2984 = vunpack.c.h.b16 %v2943
      %v2985 = vunpack.c.l.b16 %v2944
      %v2986 = vunpack.c.h.b16 %v2944
      %v2987 = vunpack.c.l.b16 %v2945
      %v2988 = vunpack.c.h.b16 %v2945
      %v2989 = vunpack.c.l.b16 %v2946
      %v2990 = vunpack.c.h.b16 %v2946
      %v2991 = vunpack.c.l.b16 %v2947
      %v2992 = vunpack.c.h.b16 %v2947
      %v2993 = vunpack.c.l.b16 %v2948
      %v2994 = vunpack.c.h.b16 %v2948
      %v2995 = vunpack.c.l.b16 %v2949
      %v2996 = vunpack.c.h.b16 %v2949
      %v2997 = vunpack.c.l.b16 %v2950
      %v2998 = vunpack.c.h.b16 %v2950
      %v2999 = vpack.c.b16 %v2967, %v2967
      %v3000 = vpack.c.b16 %v2968, %v2968
      %v3001 = vpack.c.b16 %v2969, %v2969
      %v3002 = vpack.c.b16 %v2970, %v2970
      %v3003 = vpack.c.b16 %v2971, %v2971
      %v3004 = vpack.c.b16 %v2972, %v2972
      %v3005 = vpack.c.b16 %v2973, %v2973
      %v3006 = vpack.c.b16 %v2974, %v2974
      %v3007 = vpack.c.b16 %v2975, %v2975
      %v3008 = vpack.c.b16 %v2976, %v2976
      %v3009 = vpack.c.b16 %v2977, %v2977
      %v3010 = vpack.c.b16 %v2978, %v2978
      %v3011 = vpack.c.b16 %v2979, %v2979
      %v3012 = vpack.c.b16 %v2980, %v2980
      %v3013 = vpack.c.b16 %v2981, %v2981
      %v3014 = vpack.c.b16 %v2982, %v2982
      %v3015 = vpack.c.b16 %v2983, %v2983
      %v3016 = vpack.c.b16 %v2984, %v2984
      %v3017 = vpack.c.b16 %v2985, %v2985
      %v3018 = vpack.c.b16 %v2986, %v2986
      %v3019 = vpack.c.b16 %v2987, %v2987
      %v3020 = vpack.c.b16 %v2988, %v2988
      %v3021 = vpack.c.b16 %v2989, %v2989
      %v3022 = vpack.c.b16 %v2990, %v2990
      %v3023 = vpack.c.b16 %v2991, %v2991
      %v3024 = vpack.c.b16 %v2992, %v2992
      %v3025 = vpack.c.b16 %v2993, %v2993
      %v3026 = vpack.c.b16 %v2994, %v2994
      %v3027 = vpack.c.b16 %v2995, %v2995
      %v3028 = vpack.c.b16 %v2996, %v2996
      %v3029 = vpack.c.b16 %v2997, %v2997
      %v3030 = vpack.c.b16 %v2998, %v2998
      %vm3031 = vsmask.f32 4368
      %vm3032 = vmor %vm382, %vm3031
      %v3034 = vshrl.u32 %v2999, 16
      %v3036 = vrot.slane %v3034, 7
      %v3037 = vshll.u32 %v2999, 16
      %v3039 = vor.u32 %v3036, %v3037
      %v3040 = vrot.slane %v3036, 4
      %v3042 = vshrl.u32 %v3000, 16
      %v3044 = vrot.slane %v3042, 7
      %v3045 = vshll.u32 %v3000, 16
      %v3047 = vor.u32 %v3044, %v3045
      %v3048 = vsel %vm3032, %v3040, %v3047
      %v3049 = vrot.slane %v3044, 4
      %v3051 = vshrl.u32 %v3001, 16
      %v3053 = vrot.slane %v3051, 7
      %v3054 = vshll.u32 %v3001, 16
      %v3056 = vor.u32 %v3053, %v3054
      %v3057 = vrot.slane %v3053, 4
      %v3059 = vshrl.u32 %v3002, 16
      %v3061 = vrot.slane %v3059, 7
      %v3062 = vshll.u32 %v3002, 16
      %v3064 = vor.u32 %v3061, %v3062
      %v3065 = vsel %vm3032, %v3057, %v3064
      %v3066 = vrot.slane %v3061, 4
      %v3068 = vshrl.u32 %v3003, 16
      %v3070 = vrot.slane %v3068, 7
      %v3071 = vshll.u32 %v3003, 16
      %v3073 = vor.u32 %v3070, %v3071
      %v3074 = vrot.slane %v3070, 4
      %v3076 = vshrl.u32 %v3004, 16
      %v3078 = vrot.slane %v3076, 7
      %v3079 = vshll.u32 %v3004, 16
      %v3081 = vor.u32 %v3078, %v3079
      %v3082 = vsel %vm3032, %v3074, %v3081
      %v3083 = vrot.slane %v3078, 4
      %v3085 = vshrl.u32 %v3005, 16
      %v3087 = vrot.slane %v3085, 7
      %v3088 = vshll.u32 %v3005, 16
      %v3090 = vor.u32 %v3087, %v3088
      %v3091 = vrot.slane %v3087, 4
      %v3093 = vshrl.u32 %v3006, 16
      %v3095 = vrot.slane %v3093, 7
      %v3096 = vshll.u32 %v3006, 16
      %v3098 = vor.u32 %v3095, %v3096
      %v3099 = vsel %vm3032, %v3091, %v3098
      %v3100 = vrot.slane %v3095, 4
      %v3102 = vshrl.u32 %v3007, 16
      %v3104 = vrot.slane %v3102, 7
      %v3105 = vshll.u32 %v3007, 16
      %v3107 = vor.u32 %v3104, %v3105
      %v3108 = vrot.slane %v3104, 4
      %v3110 = vshrl.u32 %v3008, 16
      %v3112 = vrot.slane %v3110, 7
      %v3113 = vshll.u32 %v3008, 16
      %v3115 = vor.u32 %v3112, %v3113
      %v3116 = vsel %vm3032, %v3108, %v3115
      %v3117 = vrot.slane %v3112, 4
      %v3119 = vshrl.u32 %v3009, 16
      %v3121 = vrot.slane %v3119, 7
      %v3122 = vshll.u32 %v3009, 16
      %v3124 = vor.u32 %v3121, %v3122
      %v3125 = vrot.slane %v3121, 4
      %v3127 = vshrl.u32 %v3010, 16
      %v3129 = vrot.slane %v3127, 7
      %v3130 = vshll.u32 %v3010, 16
      %v3132 = vor.u32 %v3129, %v3130
      %v3133 = vsel %vm3032, %v3125, %v3132
      %v3134 = vrot.slane %v3129, 4
      %v3136 = vshrl.u32 %v3011, 16
      %v3138 = vrot.slane %v3136, 7
      %v3139 = vshll.u32 %v3011, 16
      %v3141 = vor.u32 %v3138, %v3139
      %v3142 = vrot.slane %v3138, 4
      %v3144 = vshrl.u32 %v3012, 16
      %v3146 = vrot.slane %v3144, 7
      %v3147 = vshll.u32 %v3012, 16
      %v3149 = vor.u32 %v3146, %v3147
      %v3150 = vsel %vm3032, %v3142, %v3149
      %v3151 = vrot.slane %v3146, 4
      %v3153 = vshrl.u32 %v3013, 16
      %v3155 = vrot.slane %v3153, 7
      %v3156 = vshll.u32 %v3013, 16
      %v3158 = vor.u32 %v3155, %v3156
      %v3159 = vrot.slane %v3155, 4
      %v3161 = vshrl.u32 %v3014, 16
      %v3163 = vrot.slane %v3161, 7
      %v3164 = vshll.u32 %v3014, 16
      %v3166 = vor.u32 %v3163, %v3164
      %v3167 = vsel %vm3032, %v3159, %v3166
      %v3168 = vrot.slane %v3163, 4
      %v3170 = vshrl.u32 %v3015, 16
      %v3172 = vrot.slane %v3170, 7
      %v3173 = vshll.u32 %v3015, 16
      %v3175 = vor.u32 %v3172, %v3173
      %v3176 = vrot.slane %v3172, 4
      %v3178 = vshrl.u32 %v3016, 16
      %v3180 = vrot.slane %v3178, 7
      %v3181 = vshll.u32 %v3016, 16
      %v3183 = vor.u32 %v3180, %v3181
      %v3184 = vsel %vm3032, %v3176, %v3183
      %v3185 = vrot.slane %v3180, 4
      %v3187 = vshrl.u32 %v3017, 16
      %v3189 = vrot.slane %v3187, 7
      %v3190 = vshll.u32 %v3017, 16
      %v3192 = vor.u32 %v3189, %v3190
      %v3193 = vrot.slane %v3189, 4
      %v3195 = vshrl.u32 %v3018, 16
      %v3197 = vrot.slane %v3195, 7
      %v3198 = vshll.u32 %v3018, 16
      %v3200 = vor.u32 %v3197, %v3198
      %v3201 = vsel %vm3032, %v3193, %v3200
      %v3202 = vrot.slane %v3197, 4
      %v3204 = vshrl.u32 %v3019, 16
      %v3206 = vrot.slane %v3204, 7
      %v3207 = vshll.u32 %v3019, 16
      %v3209 = vor.u32 %v3206, %v3207
      %v3210 = vrot.slane %v3206, 4
      %v3212 = vshrl.u32 %v3020, 16
      %v3214 = vrot.slane %v3212, 7
      %v3215 = vshll.u32 %v3020, 16
      %v3217 = vor.u32 %v3214, %v3215
      %v3218 = vsel %vm3032, %v3210, %v3217
      %v3219 = vrot.slane %v3214, 4
      %v3221 = vshrl.u32 %v3021, 16
      %v3223 = vrot.slane %v3221, 7
      %v3224 = vshll.u32 %v3021, 16
      %v3226 = vor.u32 %v3223, %v3224
      %v3227 = vrot.slane %v3223, 4
      %v3229 = vshrl.u32 %v3022, 16
      %v3231 = vrot.slane %v3229, 7
      %v3232 = vshll.u32 %v3022, 16
      %v3234 = vor.u32 %v3231, %v3232
      %v3235 = vsel %vm3032, %v3227, %v3234
      %v3236 = vrot.slane %v3231, 4
      %v3238 = vshrl.u32 %v3023, 16
      %v3240 = vrot.slane %v3238, 7
      %v3241 = vshll.u32 %v3023, 16
      %v3243 = vor.u32 %v3240, %v3241
      %v3244 = vrot.slane %v3240, 4
      %v3246 = vshrl.u32 %v3024, 16
      %v3248 = vrot.slane %v3246, 7
      %v3249 = vshll.u32 %v3024, 16
      %v3251 = vor.u32 %v3248, %v3249
      %v3252 = vsel %vm3032, %v3244, %v3251
      %v3253 = vrot.slane %v3248, 4
      %v3255 = vshrl.u32 %v3025, 16
      %v3257 = vrot.slane %v3255, 7
      %v3258 = vshll.u32 %v3025, 16
      %v3260 = vor.u32 %v3257, %v3258
      %v3261 = vrot.slane %v3257, 4
      %v3263 = vshrl.u32 %v3026, 16
      %v3265 = vrot.slane %v3263, 7
      %v3266 = vshll.u32 %v3026, 16
      %v3268 = vor.u32 %v3265, %v3266
      %v3269 = vsel %vm3032, %v3261, %v3268
      %v3270 = vrot.slane %v3265, 4
      %v3272 = vshrl.u32 %v3027, 16
      %v3274 = vrot.slane %v3272, 7
      %v3275 = vshll.u32 %v3027, 16
      %v3277 = vor.u32 %v3274, %v3275
      %v3278 = vrot.slane %v3274, 4
      %v3280 = vshrl.u32 %v3028, 16
      %v3282 = vrot.slane %v3280, 7
      %v3283 = vshll.u32 %v3028, 16
      %v3285 = vor.u32 %v3282, %v3283
      %v3286 = vsel %vm3032, %v3278, %v3285
      %v3287 = vrot.slane %v3282, 4
      %v3289 = vshrl.u32 %v3029, 16
      %v3291 = vrot.slane %v3289, 7
      %v3292 = vshll.u32 %v3029, 16
      %v3294 = vor.u32 %v3291, %v3292
      %v3295 = vrot.slane %v3291, 4
      %v3297 = vshrl.u32 %v3030, 16
      %v3299 = vrot.slane %v3297, 7
      %v3300 = vshll.u32 %v3030, 16
      %v3302 = vor.u32 %v3299, %v3300
      %v3303 = vsel %vm3032, %v3295, %v3302
      %v3304 = vrot.slane %v3299, 4
      %s3353 = scalar_lea.vmem [#allocation3], 12
      %vm3354 = vcmask 27648
      %vm3355 = vmand %vm3354, %vm479
      %v3356 = vld [vmem:[%s3353] sm:$0xf]
      %v3357 = vsel %vm3355, %v3039, %v3356
      %3358 = vst [vmem:[%s3353] sm:$0xf] %v3357
      %3359 = vst.msk [vmem:[%s3353 + $0x4] sm:$0xf] %vm379, %v3048
      %v3360 = vld [vmem:[%s3353 + $0x8] sm:$0x1]
      %v3361 = vsel %vm383, %v3049, %v3360
      %3362 = vst [vmem:[%s3353 + $0x8] sm:$0x1] %v3361
      %v3363 = vld [vmem:[%s3353 + $0xc] sm:$0xf]
      %v3364 = vsel %vm3355, %v3056, %v3363
      %3365 = vst [vmem:[%s3353 + $0xc] sm:$0xf] %v3364
      %3366 = vst.msk [vmem:[%s3353 + $0x10] sm:$0xf] %vm379, %v3065
      %v3367 = vld [vmem:[%s3353 + $0x14] sm:$0x1]
      %v3368 = vsel %vm383, %v3066, %v3367
      %3369 = vst [vmem:[%s3353 + $0x14] sm:$0x1] %v3368
      %v3370 = vld [vmem:[%s3353 + $0x18] sm:$0xf]
      %v3371 = vsel %vm3355, %v3073, %v3370
      %3372 = vst [vmem:[%s3353 + $0x18] sm:$0xf] %v3371
      %3373 = vst.msk [vmem:[%s3353 + $0x1c] sm:$0xf] %vm379, %v3082
      %v3374 = vld [vmem:[%s3353 + $0x20] sm:$0x1]
      %v3375 = vsel %vm383, %v3083, %v3374
      %3376 = vst [vmem:[%s3353 + $0x20] sm:$0x1] %v3375
      %v3377 = vld [vmem:[%s3353 + $0x24] sm:$0xf]
      %v3378 = vsel %vm3355, %v3090, %v3377
      %3379 = vst [vmem:[%s3353 + $0x24] sm:$0xf] %v3378
      %3380 = vst.msk [vmem:[%s3353 + $0x28] sm:$0xf] %vm379, %v3099
      %v3381 = vld [vmem:[%s3353 + $0x2c] sm:$0x1]
      %v3382 = vsel %vm383, %v3100, %v3381
      %3383 = vst [vmem:[%s3353 + $0x2c] sm:$0x1] %v3382
      %v3384 = vld [vmem:[%s3353 + $0x30] sm:$0xf]
      %v3385 = vsel %vm3355, %v3107, %v3384
      %3386 = vst [vmem:[%s3353 + $0x30] sm:$0xf] %v3385
      %3387 = vst.msk [vmem:[%s3353 + $0x34] sm:$0xf] %vm379, %v3116
      %v3388 = vld [vmem:[%s3353 + $0x38] sm:$0x1]
      %v3389 = vsel %vm383, %v3117, %v3388
      %3390 = vst [vmem:[%s3353 + $0x38] sm:$0x1] %v3389
      %v3391 = vld [vmem:[%s3353 + $0x3c] sm:$0xf]
      %v3392 = vsel %vm3355, %v3124, %v3391
      %3393 = vst [vmem:[%s3353 + $0x3c] sm:$0xf] %v3392
      %3394 = vst.msk [vmem:[%s3353 + $0x40] sm:$0xf] %vm379, %v3133
      %v3395 = vld [vmem:[%s3353 + $0x44] sm:$0x1]
      %v3396 = vsel %vm383, %v3134, %v3395
      %3397 = vst [vmem:[%s3353 + $0x44] sm:$0x1] %v3396
      %v3398 = vld [vmem:[%s3353 + $0x48] sm:$0xf]
      %v3399 = vsel %vm3355, %v3141, %v3398
      %3400 = vst [vmem:[%s3353 + $0x48] sm:$0xf] %v3399
      %3401 = vst.msk [vmem:[%s3353 + $0x4c] sm:$0xf] %vm379, %v3150
      %v3402 = vld [vmem:[%s3353 + $0x50] sm:$0x1]
      %v3403 = vsel %vm383, %v3151, %v3402
      %3404 = vst [vmem:[%s3353 + $0x50] sm:$0x1] %v3403
      %v3405 = vld [vmem:[%s3353 + $0x54] sm:$0xf]
      %v3406 = vsel %vm3355, %v3158, %v3405
      %3407 = vst [vmem:[%s3353 + $0x54] sm:$0xf] %v3406
      %3408 = vst.msk [vmem:[%s3353 + $0x58] sm:$0xf] %vm379, %v3167
      %v3409 = vld [vmem:[%s3353 + $0x5c] sm:$0x1]
      %v3410 = vsel %vm383, %v3168, %v3409
      %3411 = vst [vmem:[%s3353 + $0x5c] sm:$0x1] %v3410
      %v3412 = vld [vmem:[%s3353 + $0x60] sm:$0xf]
      %v3413 = vsel %vm3355, %v3175, %v3412
      %3414 = vst [vmem:[%s3353 + $0x60] sm:$0xf] %v3413
      %3415 = vst.msk [vmem:[%s3353 + $0x64] sm:$0xf] %vm379, %v3184
      %v3416 = vld [vmem:[%s3353 + $0x68] sm:$0x1]
      %v3417 = vsel %vm383, %v3185, %v3416
      %3418 = vst [vmem:[%s3353 + $0x68] sm:$0x1] %v3417
      %v3419 = vld [vmem:[%s3353 + $0x6c] sm:$0xf]
      %v3420 = vsel %vm3355, %v3192, %v3419
      %3421 = vst [vmem:[%s3353 + $0x6c] sm:$0xf] %v3420
      %3422 = vst.msk [vmem:[%s3353 + $0x70] sm:$0xf] %vm379, %v3201
      %v3423 = vld [vmem:[%s3353 + $0x74] sm:$0x1]
      %v3424 = vsel %vm383, %v3202, %v3423
      %3425 = vst [vmem:[%s3353 + $0x74] sm:$0x1] %v3424
      %v3426 = vld [vmem:[%s3353 + $0x78] sm:$0xf]
      %v3427 = vsel %vm3355, %v3209, %v3426
      %3428 = vst [vmem:[%s3353 + $0x78] sm:$0xf] %v3427
      %3429 = vst.msk [vmem:[%s3353 + $0x7c] sm:$0xf] %vm379, %v3218
      %v3430 = vld [vmem:[%s3353 + $0x80] sm:$0x1]
      %v3431 = vsel %vm383, %v3219, %v3430
      %3432 = vst [vmem:[%s3353 + $0x80] sm:$0x1] %v3431
      %v3433 = vld [vmem:[%s3353 + $0x84] sm:$0xf]
      %v3434 = vsel %vm3355, %v3226, %v3433
      %3435 = vst [vmem:[%s3353 + $0x84] sm:$0xf] %v3434
      %3436 = vst.msk [vmem:[%s3353 + $0x88] sm:$0xf] %vm379, %v3235
      %v3437 = vld [vmem:[%s3353 + $0x8c] sm:$0x1]
      %v3438 = vsel %vm383, %v3236, %v3437
      %3439 = vst [vmem:[%s3353 + $0x8c] sm:$0x1] %v3438
      %v3440 = vld [vmem:[%s3353 + $0x90] sm:$0xf]
      %v3441 = vsel %vm3355, %v3243, %v3440
      %3442 = vst [vmem:[%s3353 + $0x90] sm:$0xf] %v3441
      %3443 = vst.msk [vmem:[%s3353 + $0x94] sm:$0xf] %vm379, %v3252
      %v3444 = vld [vmem:[%s3353 + $0x98] sm:$0x1]
      %v3445 = vsel %vm383, %v3253, %v3444
      %3446 = vst [vmem:[%s3353 + $0x98] sm:$0x1] %v3445
      %v3447 = vld [vmem:[%s3353 + $0x9c] sm:$0xf]
      %v3448 = vsel %vm3355, %v3260, %v3447
      %3449 = vst [vmem:[%s3353 + $0x9c] sm:$0xf] %v3448
      %3450 = vst.msk [vmem:[%s3353 + $0xa0] sm:$0xf] %vm379, %v3269
      %v3451 = vld [vmem:[%s3353 + $0xa4] sm:$0x1]
      %v3452 = vsel %vm383, %v3270, %v3451
      %3453 = vst [vmem:[%s3353 + $0xa4] sm:$0x1] %v3452
      %v3454 = vld [vmem:[%s3353 + $0xa8] sm:$0xf]
      %v3455 = vsel %vm3355, %v3277, %v3454
      %3456 = vst [vmem:[%s3353 + $0xa8] sm:$0xf] %v3455
      %3457 = vst.msk [vmem:[%s3353 + $0xac] sm:$0xf] %vm379, %v3286
      %v3458 = vld [vmem:[%s3353 + $0xb0] sm:$0x1]
      %v3459 = vsel %vm383, %v3287, %v3458
      %3460 = vst [vmem:[%s3353 + $0xb0] sm:$0x1] %v3459
      %v3461 = vld [vmem:[%s3353 + $0xb4] sm:$0xf]
      %v3462 = vsel %vm3355, %v3294, %v3461
      %3463 = vst [vmem:[%s3353 + $0xb4] sm:$0xf] %v3462
      %3464 = vst.msk [vmem:[%s3353 + $0xb8] sm:$0xf] %vm379, %v3303
      %v3465 = vld [vmem:[%s3353 + $0xbc] sm:$0x1]
      %v3466 = vsel %vm383, %v3304, %v3465
      %3467 = vst [vmem:[%s3353 + $0xbc] sm:$0x1] %v3466
      %v3468 = vld [vmem:[%s371] sm:$0xff]
      %v3470 = vcombine.high %v3468, %v3468
      %3472 = vxpose.xlu0.b32.start [1/16] %v3468, 128
      %3473 = vxpose.xlu0.b32.cont [2/16] 0.0, 128
      %3474 = vxpose.xlu0.b32.cont [3/16] 0.0, 128
      %3475 = vxpose.xlu0.b32.cont [4/16] 0.0, 128
      %3476 = vxpose.xlu0.b32.cont [5/16] 0.0, 128
      %3477 = vxpose.xlu0.b32.cont [6/16] 0.0, 128
      %3478 = vxpose.xlu0.b32.cont [7/16] 0.0, 128
      %3479 = vxpose.xlu0.b32.cont [8/16] 0.0, 128
      %3480 = vxpose.xlu0.b32.cont [9/16] 0.0, 128
      %3481 = vxpose.xlu0.b32.cont [10/16] 0.0, 128
      %3482 = vxpose.xlu0.b32.cont [11/16] 0.0, 128
      %3483 = vxpose.xlu0.b32.cont [12/16] 0.0, 128
      %3484 = vxpose.xlu0.b32.cont [13/16] 0.0, 128
      %3485 = vxpose.xlu0.b32.cont [14/16] 0.0, 128
      %3486 = vxpose.xlu0.b32.cont [15/16] 0.0, 128
      %3487 = vxpose.xlu0.b32.end [16/16] 0.0, 128
      %v3488 = vpop.trf.xlu0
      %v3489 = vpop.trf.xlu0
      %v3490 = vpop.trf.xlu0
      %v3491 = vpop.trf.xlu0
      %v3492 = vpop.trf.xlu0
      %v3493 = vpop.trf.xlu0
      %v3494 = vpop.trf.xlu0
      %v3495 = vpop.trf.xlu0
      %v3496 = vpop.trf.xlu0
      %v3497 = vpop.trf.xlu0
      %v3498 = vpop.trf.xlu0
      %v3499 = vpop.trf.xlu0
      %v3500 = vpop.trf.xlu0
      %v3501 = vpop.trf.xlu0
      %v3502 = vpop.trf.xlu0
      %v3503 = vpop.trf.xlu0
      %3504 = vxpose.xlu0.b32.start [1/16] %v3470, 128
      %3505 = vxpose.xlu0.b32.cont [2/16] 0.0, 128
      %3506 = vxpose.xlu0.b32.cont [3/16] 0.0, 128
      %3507 = vxpose.xlu0.b32.cont [4/16] 0.0, 128
      %3508 = vxpose.xlu0.b32.cont [5/16] 0.0, 128
      %3509 = vxpose.xlu0.b32.cont [6/16] 0.0, 128
      %3510 = vxpose.xlu0.b32.cont [7/16] 0.0, 128
      %3511 = vxpose.xlu0.b32.cont [8/16] 0.0, 128
      %3512 = vxpose.xlu0.b32.cont [9/16] 0.0, 128
      %3513 = vxpose.xlu0.b32.cont [10/16] 0.0, 128
      %3514 = vxpose.xlu0.b32.cont [11/16] 0.0, 128
      %3515 = vxpose.xlu0.b32.cont [12/16] 0.0, 128
      %3516 = vxpose.xlu0.b32.cont [13/16] 0.0, 128
      %3517 = vxpose.xlu0.b32.cont [14/16] 0.0, 128
      %3518 = vxpose.xlu0.b32.cont [15/16] 0.0, 128
      %3519 = vxpose.xlu0.b32.end [16/16] 0.0, 128
      %v3520 = vpop.trf.xlu0
      %v3521 = vpop.trf.xlu0
      %v3522 = vpop.trf.xlu0
      %v3523 = vpop.trf.xlu0
      %v3524 = vpop.trf.xlu0
      %v3525 = vpop.trf.xlu0
      %v3526 = vpop.trf.xlu0
      %v3527 = vpop.trf.xlu0
      %v3528 = vpop.trf.xlu0
      %v3529 = vpop.trf.xlu0
      %v3530 = vpop.trf.xlu0
      %v3531 = vpop.trf.xlu0
      %v3532 = vpop.trf.xlu0
      %v3533 = vpop.trf.xlu0
      %v3534 = vpop.trf.xlu0
      %v3535 = vpop.trf.xlu0
      %v3536 = vpack.c.bf16 %v3489, %v3488
      %v3537 = vpack.c.bf16 %v3491, %v3490
      %v3538 = vpack.c.bf16 %v3493, %v3492
      %v3539 = vpack.c.bf16 %v3495, %v3494
      %v3540 = vpack.c.bf16 %v3497, %v3496
      %v3541 = vpack.c.bf16 %v3499, %v3498
      %v3542 = vpack.c.bf16 %v3501, %v3500
      %v3543 = vpack.c.bf16 %v3503, %v3502
      %v3544 = vpack.c.bf16 %v3521, %v3520
      %v3545 = vpack.c.bf16 %v3523, %v3522
      %v3546 = vpack.c.bf16 %v3525, %v3524
      %v3547 = vpack.c.bf16 %v3527, %v3526
      %v3548 = vpack.c.bf16 %v3529, %v3528
      %v3549 = vpack.c.bf16 %v3531, %v3530
      %v3550 = vpack.c.bf16 %v3533, %v3532
      %v3551 = vpack.c.bf16 %v3535, %v3534
      %v3568 = vunpack.c.l.b16 %v3536
      %v3569 = vunpack.c.h.b16 %v3536
      %v3570 = vunpack.c.l.b16 %v3537
      %v3571 = vunpack.c.h.b16 %v3537
      %v3572 = vunpack.c.l.b16 %v3538
      %v3573 = vunpack.c.h.b16 %v3538
      %v3574 = vunpack.c.l.b16 %v3539
      %v3575 = vunpack.c.h.b16 %v3539
      %v3576 = vunpack.c.l.b16 %v3540
      %v3577 = vunpack.c.h.b16 %v3540
      %v3578 = vunpack.c.l.b16 %v3541
      %v3579 = vunpack.c.h.b16 %v3541
      %v3580 = vunpack.c.l.b16 %v3542
      %v3581 = vunpack.c.h.b16 %v3542
      %v3582 = vunpack.c.l.b16 %v3543
      %v3583 = vunpack.c.h.b16 %v3543
      %v3584 = vunpack.c.l.b16 %v3544
      %v3585 = vunpack.c.h.b16 %v3544
      %v3586 = vunpack.c.l.b16 %v3545
      %v3587 = vunpack.c.h.b16 %v3545
      %v3588 = vunpack.c.l.b16 %v3546
      %v3589 = vunpack.c.h.b16 %v3546
      %v3590 = vunpack.c.l.b16 %v3547
      %v3591 = vunpack.c.h.b16 %v3547
      %v3592 = vunpack.c.l.b16 %v3548
      %v3593 = vunpack.c.h.b16 %v3548
      %v3594 = vunpack.c.l.b16 %v3549
      %v3595 = vunpack.c.h.b16 %v3549
      %v3596 = vunpack.c.l.b16 %v3550
      %v3597 = vunpack.c.h.b16 %v3550
      %v3598 = vunpack.c.l.b16 %v3551
      %v3599 = vunpack.c.h.b16 %v3551
      %v3600 = vpack.c.b16 %v3568, %v3568
      %v3601 = vpack.c.b16 %v3569, %v3569
      %v3602 = vpack.c.b16 %v3570, %v3570
      %v3603 = vpack.c.b16 %v3571, %v3571
      %v3604 = vpack.c.b16 %v3572, %v3572
      %v3605 = vpack.c.b16 %v3573, %v3573
      %v3606 = vpack.c.b16 %v3574, %v3574
      %v3607 = vpack.c.b16 %v3575, %v3575
      %v3608 = vpack.c.b16 %v3576, %v3576
      %v3609 = vpack.c.b16 %v3577, %v3577
      %v3610 = vpack.c.b16 %v3578, %v3578
      %v3611 = vpack.c.b16 %v3579, %v3579
      %v3612 = vpack.c.b16 %v3580, %v3580
      %v3613 = vpack.c.b16 %v3581, %v3581
      %v3614 = vpack.c.b16 %v3582, %v3582
      %v3615 = vpack.c.b16 %v3583, %v3583
      %v3616 = vpack.c.b16 %v3584, %v3584
      %v3617 = vpack.c.b16 %v3585, %v3585
      %v3618 = vpack.c.b16 %v3586, %v3586
      %v3619 = vpack.c.b16 %v3587, %v3587
      %v3620 = vpack.c.b16 %v3588, %v3588
      %v3621 = vpack.c.b16 %v3589, %v3589
      %v3622 = vpack.c.b16 %v3590, %v3590
      %v3623 = vpack.c.b16 %v3591, %v3591
      %v3624 = vpack.c.b16 %v3592, %v3592
      %v3625 = vpack.c.b16 %v3593, %v3593
      %v3626 = vpack.c.b16 %v3594, %v3594
      %v3627 = vpack.c.b16 %v3595, %v3595
      %v3628 = vpack.c.b16 %v3596, %v3596
      %v3629 = vpack.c.b16 %v3597, %v3597
      %v3630 = vpack.c.b16 %v3598, %v3598
      %v3631 = vpack.c.b16 %v3599, %v3599
      %v3633 = vshrl.u32 %v3600, 16
      %v3635 = vrot.slane %v3633, 7
      %v3636 = vshll.u32 %v3600, 16
      %v3638 = vor.u32 %v3635, %v3636
      %v3639 = vrot.slane %v3635, 4
      %v3641 = vshrl.u32 %v3601, 16
      %v3643 = vrot.slane %v3641, 7
      %v3644 = vshll.u32 %v3601, 16
      %v3646 = vor.u32 %v3643, %v3644
      %v3647 = vsel %vm3032, %v3639, %v3646
      %v3648 = vrot.slane %v3643, 4
      %v3650 = vshrl.u32 %v3602, 16
      %v3652 = vrot.slane %v3650, 7
      %v3653 = vshll.u32 %v3602, 16
      %v3655 = vor.u32 %v3652, %v3653
      %v3656 = vrot.slane %v3652, 4
      %v3658 = vshrl.u32 %v3603, 16
      %v3660 = vrot.slane %v3658, 7
      %v3661 = vshll.u32 %v3603, 16
      %v3663 = vor.u32 %v3660, %v3661
      %v3664 = vsel %vm3032, %v3656, %v3663
      %v3665 = vrot.slane %v3660, 4
      %v3667 = vshrl.u32 %v3604, 16
      %v3669 = vrot.slane %v3667, 7
      %v3670 = vshll.u32 %v3604, 16
      %v3672 = vor.u32 %v3669, %v3670
      %v3673 = vrot.slane %v3669, 4
      %v3675 = vshrl.u32 %v3605, 16
      %v3677 = vrot.slane %v3675, 7
      %v3678 = vshll.u32 %v3605, 16
      %v3680 = vor.u32 %v3677, %v3678
      %v3681 = vsel %vm3032, %v3673, %v3680
      %v3682 = vrot.slane %v3677, 4
      %v3684 = vshrl.u32 %v3606, 16
      %v3686 = vrot.slane %v3684, 7
      %v3687 = vshll.u32 %v3606, 16
      %v3689 = vor.u32 %v3686, %v3687
      %v3690 = vrot.slane %v3686, 4
      %v3692 = vshrl.u32 %v3607, 16
      %v3694 = vrot.slane %v3692, 7
      %v3695 = vshll.u32 %v3607, 16
      %v3697 = vor.u32 %v3694, %v3695
      %v3698 = vsel %vm3032, %v3690, %v3697
      %v3699 = vrot.slane %v3694, 4
      %v3701 = vshrl.u32 %v3608, 16
      %v3703 = vrot.slane %v3701, 7
      %v3704 = vshll.u32 %v3608, 16
      %v3706 = vor.u32 %v3703, %v3704
      %v3707 = vrot.slane %v3703, 4
      %v3709 = vshrl.u32 %v3609, 16
      %v3711 = vrot.slane %v3709, 7
      %v3712 = vshll.u32 %v3609, 16
      %v3714 = vor.u32 %v3711, %v3712
      %v3715 = vsel %vm3032, %v3707, %v3714
      %v3716 = vrot.slane %v3711, 4
      %v3718 = vshrl.u32 %v3610, 16
      %v3720 = vrot.slane %v3718, 7
      %v3721 = vshll.u32 %v3610, 16
      %v3723 = vor.u32 %v3720, %v3721
      %v3724 = vrot.slane %v3720, 4
      %v3726 = vshrl.u32 %v3611, 16
      %v3728 = vrot.slane %v3726, 7
      %v3729 = vshll.u32 %v3611, 16
      %v3731 = vor.u32 %v3728, %v3729
      %v3732 = vsel %vm3032, %v3724, %v3731
      %v3733 = vrot.slane %v3728, 4
      %v3735 = vshrl.u32 %v3612, 16
      %v3737 = vrot.slane %v3735, 7
      %v3738 = vshll.u32 %v3612, 16
      %v3740 = vor.u32 %v3737, %v3738
      %v3741 = vrot.slane %v3737, 4
      %v3743 = vshrl.u32 %v3613, 16
      %v3745 = vrot.slane %v3743, 7
      %v3746 = vshll.u32 %v3613, 16
      %v3748 = vor.u32 %v3745, %v3746
      %v3749 = vsel %vm3032, %v3741, %v3748
      %v3750 = vrot.slane %v3745, 4
      %v3752 = vshrl.u32 %v3614, 16
      %v3754 = vrot.slane %v3752, 7
      %v3755 = vshll.u32 %v3614, 16
      %v3757 = vor.u32 %v3754, %v3755
      %v3758 = vrot.slane %v3754, 4
      %v3760 = vshrl.u32 %v3615, 16
      %v3762 = vrot.slane %v3760, 7
      %v3763 = vshll.u32 %v3615, 16
      %v3765 = vor.u32 %v3762, %v3763
      %v3766 = vsel %vm3032, %v3758, %v3765
      %v3767 = vrot.slane %v3762, 4
      %v3769 = vshrl.u32 %v3616, 16
      %v3771 = vrot.slane %v3769, 7
      %v3772 = vshll.u32 %v3616, 16
      %v3774 = vor.u32 %v3771, %v3772
      %v3775 = vrot.slane %v3771, 4
      %v3777 = vshrl.u32 %v3617, 16
      %v3779 = vrot.slane %v3777, 7
      %v3780 = vshll.u32 %v3617, 16
      %v3782 = vor.u32 %v3779, %v3780
      %v3783 = vsel %vm3032, %v3775, %v3782
      %v3784 = vrot.slane %v3779, 4
      %v3786 = vshrl.u32 %v3618, 16
      %v3788 = vrot.slane %v3786, 7
      %v3789 = vshll.u32 %v3618, 16
      %v3791 = vor.u32 %v3788, %v3789
      %v3792 = vrot.slane %v3788, 4
      %v3794 = vshrl.u32 %v3619, 16
      %v3796 = vrot.slane %v3794, 7
      %v3797 = vshll.u32 %v3619, 16
      %v3799 = vor.u32 %v3796, %v3797
      %v3800 = vsel %vm3032, %v3792, %v3799
      %v3801 = vrot.slane %v3796, 4
      %v3803 = vshrl.u32 %v3620, 16
      %v3805 = vrot.slane %v3803, 7
      %v3806 = vshll.u32 %v3620, 16
      %v3808 = vor.u32 %v3805, %v3806
      %v3809 = vrot.slane %v3805, 4
      %v3811 = vshrl.u32 %v3621, 16
      %v3813 = vrot.slane %v3811, 7
      %v3814 = vshll.u32 %v3621, 16
      %v3816 = vor.u32 %v3813, %v3814
      %v3817 = vsel %vm3032, %v3809, %v3816
      %v3818 = vrot.slane %v3813, 4
      %v3820 = vshrl.u32 %v3622, 16
      %v3822 = vrot.slane %v3820, 7
      %v3823 = vshll.u32 %v3622, 16
      %v3825 = vor.u32 %v3822, %v3823
      %v3826 = vrot.slane %v3822, 4
      %v3828 = vshrl.u32 %v3623, 16
      %v3830 = vrot.slane %v3828, 7
      %v3831 = vshll.u32 %v3623, 16
      %v3833 = vor.u32 %v3830, %v3831
      %v3834 = vsel %vm3032, %v3826, %v3833
      %v3835 = vrot.slane %v3830, 4
      %v3837 = vshrl.u32 %v3624, 16
      %v3839 = vrot.slane %v3837, 7
      %v3840 = vshll.u32 %v3624, 16
      %v3842 = vor.u32 %v3839, %v3840
      %v3843 = vrot.slane %v3839, 4
      %v3845 = vshrl.u32 %v3625, 16
      %v3847 = vrot.slane %v3845, 7
      %v3848 = vshll.u32 %v3625, 16
      %v3850 = vor.u32 %v3847, %v3848
      %v3851 = vsel %vm3032, %v3843, %v3850
      %v3852 = vrot.slane %v3847, 4
      %v3854 = vshrl.u32 %v3626, 16
      %v3856 = vrot.slane %v3854, 7
      %v3857 = vshll.u32 %v3626, 16
      %v3859 = vor.u32 %v3856, %v3857
      %v3860 = vrot.slane %v3856, 4
      %v3862 = vshrl.u32 %v3627, 16
      %v3864 = vrot.slane %v3862, 7
      %v3865 = vshll.u32 %v3627, 16
      %v3867 = vor.u32 %v3864, %v3865
      %v3868 = vsel %vm3032, %v3860, %v3867
      %v3869 = vrot.slane %v3864, 4
      %v3871 = vshrl.u32 %v3628, 16
      %v3873 = vrot.slane %v3871, 7
      %v3874 = vshll.u32 %v3628, 16
      %v3876 = vor.u32 %v3873, %v3874
      %v3877 = vrot.slane %v3873, 4
      %v3879 = vshrl.u32 %v3629, 16
      %v3881 = vrot.slane %v3879, 7
      %v3882 = vshll.u32 %v3629, 16
      %v3884 = vor.u32 %v3881, %v3882
      %v3885 = vsel %vm3032, %v3877, %v3884
      %v3886 = vrot.slane %v3881, 4
      %v3888 = vshrl.u32 %v3630, 16
      %v3890 = vrot.slane %v3888, 7
      %v3891 = vshll.u32 %v3630, 16
      %v3893 = vor.u32 %v3890, %v3891
      %v3894 = vrot.slane %v3890, 4
      %v3896 = vshrl.u32 %v3631, 16
      %v3898 = vrot.slane %v3896, 7
      %v3899 = vshll.u32 %v3631, 16
      %v3901 = vor.u32 %v3898, %v3899
      %v3902 = vsel %vm3032, %v3894, %v3901
      %v3903 = vrot.slane %v3898, 4
      %3904 = vrot.lane.b32.xlu0 %v3638, 4
      %v3905 = vpop.permute.xlu0 %3904
      %3906 = vrot.lane.b32.xlu0 %v3647, 4
      %v3907 = vpop.permute.xlu0 %3906
      %3908 = vrot.lane.b32.xlu0 %v3648, 4
      %v3909 = vpop.permute.xlu0 %3908
      %3910 = vrot.lane.b32.xlu0 %v3655, 4
      %v3911 = vpop.permute.xlu0 %3910
      %3912 = vrot.lane.b32.xlu0 %v3664, 4
      %v3913 = vpop.permute.xlu0 %3912
      %3914 = vrot.lane.b32.xlu0 %v3665, 4
      %v3915 = vpop.permute.xlu0 %3914
      %3916 = vrot.lane.b32.xlu0 %v3672, 4
      %v3917 = vpop.permute.xlu0 %3916
      %3918 = vrot.lane.b32.xlu0 %v3681, 4
      %v3919 = vpop.permute.xlu0 %3918
      %3920 = vrot.lane.b32.xlu0 %v3682, 4
      %v3921 = vpop.permute.xlu0 %3920
      %3922 = vrot.lane.b32.xlu0 %v3689, 4
      %v3923 = vpop.permute.xlu0 %3922
      %3924 = vrot.lane.b32.xlu0 %v3698, 4
      %v3925 = vpop.permute.xlu0 %3924
      %3926 = vrot.lane.b32.xlu0 %v3699, 4
      %v3927 = vpop.permute.xlu0 %3926
      %3928 = vrot.lane.b32.xlu0 %v3706, 4
      %v3929 = vpop.permute.xlu0 %3928
      %3930 = vrot.lane.b32.xlu0 %v3715, 4
      %v3931 = vpop.permute.xlu0 %3930
      %3932 = vrot.lane.b32.xlu0 %v3716, 4
      %v3933 = vpop.permute.xlu0 %3932
      %3934 = vrot.lane.b32.xlu0 %v3723, 4
      %v3935 = vpop.permute.xlu0 %3934
      %3936 = vrot.lane.b32.xlu0 %v3732, 4
      %v3937 = vpop.permute.xlu0 %3936
      %3938 = vrot.lane.b32.xlu0 %v3733, 4
      %v3939 = vpop.permute.xlu0 %3938
      %3940 = vrot.lane.b32.xlu0 %v3740, 4
      %v3941 = vpop.permute.xlu0 %3940
      %3942 = vrot.lane.b32.xlu0 %v3749, 4
      %v3943 = vpop.permute.xlu0 %3942
      %3944 = vrot.lane.b32.xlu0 %v3750, 4
      %v3945 = vpop.permute.xlu0 %3944
      %3946 = vrot.lane.b32.xlu0 %v3757, 4
      %v3947 = vpop.permute.xlu0 %3946
      %3948 = vrot.lane.b32.xlu0 %v3766, 4
      %v3949 = vpop.permute.xlu0 %3948
      %3950 = vrot.lane.b32.xlu0 %v3767, 4
      %v3951 = vpop.permute.xlu0 %3950
      %3952 = vrot.lane.b32.xlu0 %v3774, 4
      %v3953 = vpop.permute.xlu0 %3952
      %3954 = vrot.lane.b32.xlu0 %v3783, 4
      %v3955 = vpop.permute.xlu0 %3954
      %3956 = vrot.lane.b32.xlu0 %v3784, 4
      %v3957 = vpop.permute.xlu0 %3956
      %3958 = vrot.lane.b32.xlu0 %v3791, 4
      %v3959 = vpop.permute.xlu0 %3958
      %3960 = vrot.lane.b32.xlu0 %v3800, 4
      %v3961 = vpop.permute.xlu0 %3960
      %3962 = vrot.lane.b32.xlu0 %v3801, 4
      %v3963 = vpop.permute.xlu0 %3962
      %3964 = vrot.lane.b32.xlu0 %v3808, 4
      %v3965 = vpop.permute.xlu0 %3964
      %3966 = vrot.lane.b32.xlu0 %v3817, 4
      %v3967 = vpop.permute.xlu0 %3966
      %3968 = vrot.lane.b32.xlu0 %v3818, 4
      %v3969 = vpop.permute.xlu0 %3968
      %3970 = vrot.lane.b32.xlu0 %v3825, 4
      %v3971 = vpop.permute.xlu0 %3970
      %3972 = vrot.lane.b32.xlu0 %v3834, 4
      %v3973 = vpop.permute.xlu0 %3972
      %3974 = vrot.lane.b32.xlu0 %v3835, 4
      %v3975 = vpop.permute.xlu0 %3974
      %3976 = vrot.lane.b32.xlu0 %v3842, 4
      %v3977 = vpop.permute.xlu0 %3976
      %3978 = vrot.lane.b32.xlu0 %v3851, 4
      %v3979 = vpop.permute.xlu0 %3978
      %3980 = vrot.lane.b32.xlu0 %v3852, 4
      %v3981 = vpop.permute.xlu0 %3980
      %3982 = vrot.lane.b32.xlu0 %v3859, 4
      %v3983 = vpop.permute.xlu0 %3982
      %3984 = vrot.lane.b32.xlu0 %v3868, 4
      %v3985 = vpop.permute.xlu0 %3984
      %3986 = vrot.lane.b32.xlu0 %v3869, 4
      %v3987 = vpop.permute.xlu0 %3986
      %3988 = vrot.lane.b32.xlu0 %v3876, 4
      %v3989 = vpop.permute.xlu0 %3988
      %3990 = vrot.lane.b32.xlu0 %v3885, 4
      %v3991 = vpop.permute.xlu0 %3990
      %3992 = vrot.lane.b32.xlu0 %v3886, 4
      %v3993 = vpop.permute.xlu0 %3992
      %3994 = vrot.lane.b32.xlu0 %v3893, 4
      %v3995 = vpop.permute.xlu0 %3994
      %3996 = vrot.lane.b32.xlu0 %v3902, 4
      %v3997 = vpop.permute.xlu0 %3996
      %3998 = vrot.lane.b32.xlu0 %v3903, 4
      %v3999 = vpop.permute.xlu0 %3998
      %vm4048 = vcmask 60448
      %vm4049 = vmand %vm4048, %vm479
      %v4050 = vld [vmem:[%s3353] sm:$0xf]
      %v4051 = vsel %vm4049, %v3905, %v4050
      %4052 = vst [vmem:[%s3353] sm:$0xf] %v4051
      %vm4053 = vcmask 60448
      %4054 = vst.msk [vmem:[%s3353 + $0x4] sm:$0xf] %vm4053, %v3907
      %vm4055 = vcmask 57376
      %vm4056 = vmand %vm4055, %vm382
      %v4057 = vld [vmem:[%s3353 + $0x8] sm:$0x1]
      %v4058 = vsel %vm4056, %v3909, %v4057
      %4059 = vst [vmem:[%s3353 + $0x8] sm:$0x1] %v4058
      %v4060 = vld [vmem:[%s3353 + $0xc] sm:$0xf]
      %v4061 = vsel %vm4049, %v3911, %v4060
      %4062 = vst [vmem:[%s3353 + $0xc] sm:$0xf] %v4061
      %4063 = vst.msk [vmem:[%s3353 + $0x10] sm:$0xf] %vm4053, %v3913
      %v4064 = vld [vmem:[%s3353 + $0x14] sm:$0x1]
      %v4065 = vsel %vm4056, %v3915, %v4064
      %4066 = vst [vmem:[%s3353 + $0x14] sm:$0x1] %v4065
      %v4067 = vld [vmem:[%s3353 + $0x18] sm:$0xf]
      %v4068 = vsel %vm4049, %v3917, %v4067
      %4069 = vst [vmem:[%s3353 + $0x18] sm:$0xf] %v4068
      %4070 = vst.msk [vmem:[%s3353 + $0x1c] sm:$0xf] %vm4053, %v3919
      %v4071 = vld [vmem:[%s3353 + $0x20] sm:$0x1]
      %v4072 = vsel %vm4056, %v3921, %v4071
      %4073 = vst [vmem:[%s3353 + $0x20] sm:$0x1] %v4072
      %v4074 = vld [vmem:[%s3353 + $0x24] sm:$0xf]
      %v4075 = vsel %vm4049, %v3923, %v4074
      %4076 = vst [vmem:[%s3353 + $0x24] sm:$0xf] %v4075
      %4077 = vst.msk [vmem:[%s3353 + $0x28] sm:$0xf] %vm4053, %v3925
      %v4078 = vld [vmem:[%s3353 + $0x2c] sm:$0x1]
      %v4079 = vsel %vm4056, %v3927, %v4078
      %4080 = vst [vmem:[%s3353 + $0x2c] sm:$0x1] %v4079
      %v4081 = vld [vmem:[%s3353 + $0x30] sm:$0xf]
      %v4082 = vsel %vm4049, %v3929, %v4081
      %4083 = vst [vmem:[%s3353 + $0x30] sm:$0xf] %v4082
      %4084 = vst.msk [vmem:[%s3353 + $0x34] sm:$0xf] %vm4053, %v3931
      %v4085 = vld [vmem:[%s3353 + $0x38] sm:$0x1]
      %v4086 = vsel %vm4056, %v3933, %v4085
      %4087 = vst [vmem:[%s3353 + $0x38] sm:$0x1] %v4086
      %v4088 = vld [vmem:[%s3353 + $0x3c] sm:$0xf]
      %v4089 = vsel %vm4049, %v3935, %v4088
      %4090 = vst [vmem:[%s3353 + $0x3c] sm:$0xf] %v4089
      %4091 = vst.msk [vmem:[%s3353 + $0x40] sm:$0xf] %vm4053, %v3937
      %v4092 = vld [vmem:[%s3353 + $0x44] sm:$0x1]
      %v4093 = vsel %vm4056, %v3939, %v4092
      %4094 = vst [vmem:[%s3353 + $0x44] sm:$0x1] %v4093
      %v4095 = vld [vmem:[%s3353 + $0x48] sm:$0xf]
      %v4096 = vsel %vm4049, %v3941, %v4095
      %4097 = vst [vmem:[%s3353 + $0x48] sm:$0xf] %v4096
      %4098 = vst.msk [vmem:[%s3353 + $0x4c] sm:$0xf] %vm4053, %v3943
      %v4099 = vld [vmem:[%s3353 + $0x50] sm:$0x1]
      %v4100 = vsel %vm4056, %v3945, %v4099
      %4101 = vst [vmem:[%s3353 + $0x50] sm:$0x1] %v4100
      %v4102 = vld [vmem:[%s3353 + $0x54] sm:$0xf]
      %v4103 = vsel %vm4049, %v3947, %v4102
      %4104 = vst [vmem:[%s3353 + $0x54] sm:$0xf] %v4103
      %4105 = vst.msk [vmem:[%s3353 + $0x58] sm:$0xf] %vm4053, %v3949
      %v4106 = vld [vmem:[%s3353 + $0x5c] sm:$0x1]
      %v4107 = vsel %vm4056, %v3951, %v4106
      %4108 = vst [vmem:[%s3353 + $0x5c] sm:$0x1] %v4107
      %v4109 = vld [vmem:[%s3353 + $0x60] sm:$0xf]
      %v4110 = vsel %vm4049, %v3953, %v4109
      %4111 = vst [vmem:[%s3353 + $0x60] sm:$0xf] %v4110
      %4112 = vst.msk [vmem:[%s3353 + $0x64] sm:$0xf] %vm4053, %v3955
      %v4113 = vld [vmem:[%s3353 + $0x68] sm:$0x1]
      %v4114 = vsel %vm4056, %v3957, %v4113
      %4115 = vst [vmem:[%s3353 + $0x68] sm:$0x1] %v4114
      %v4116 = vld [vmem:[%s3353 + $0x6c] sm:$0xf]
      %v4117 = vsel %vm4049, %v3959, %v4116
      %4118 = vst [vmem:[%s3353 + $0x6c] sm:$0xf] %v4117
      %4119 = vst.msk [vmem:[%s3353 + $0x70] sm:$0xf] %vm4053, %v3961
      %v4120 = vld [vmem:[%s3353 + $0x74] sm:$0x1]
      %v4121 = vsel %vm4056, %v3963, %v4120
      %4122 = vst [vmem:[%s3353 + $0x74] sm:$0x1] %v4121
      %v4123 = vld [vmem:[%s3353 + $0x78] sm:$0xf]
      %v4124 = vsel %vm4049, %v3965, %v4123
      %4125 = vst [vmem:[%s3353 + $0x78] sm:$0xf] %v4124
      %4126 = vst.msk [vmem:[%s3353 + $0x7c] sm:$0xf] %vm4053, %v3967
      %v4127 = vld [vmem:[%s3353 + $0x80] sm:$0x1]
      %v4128 = vsel %vm4056, %v3969, %v4127
      %4129 = vst [vmem:[%s3353 + $0x80] sm:$0x1] %v4128
      %v4130 = vld [vmem:[%s3353 + $0x84] sm:$0xf]
      %v4131 = vsel %vm4049, %v3971, %v4130
      %4132 = vst [vmem:[%s3353 + $0x84] sm:$0xf] %v4131
      %4133 = vst.msk [vmem:[%s3353 + $0x88] sm:$0xf] %vm4053, %v3973
      %v4134 = vld [vmem:[%s3353 + $0x8c] sm:$0x1]
      %v4135 = vsel %vm4056, %v3975, %v4134
      %4136 = vst [vmem:[%s3353 + $0x8c] sm:$0x1] %v4135
      %v4137 = vld [vmem:[%s3353 + $0x90] sm:$0xf]
      %v4138 = vsel %vm4049, %v3977, %v4137
      %4139 = vst [vmem:[%s3353 + $0x90] sm:$0xf] %v4138
      %4140 = vst.msk [vmem:[%s3353 + $0x94] sm:$0xf] %vm4053, %v3979
      %v4141 = vld [vmem:[%s3353 + $0x98] sm:$0x1]
      %v4142 = vsel %vm4056, %v3981, %v4141
      %4143 = vst [vmem:[%s3353 + $0x98] sm:$0x1] %v4142
      %v4144 = vld [vmem:[%s3353 + $0x9c] sm:$0xf]
      %v4145 = vsel %vm4049, %v3983, %v4144
      %4146 = vst [vmem:[%s3353 + $0x9c] sm:$0xf] %v4145
      %4147 = vst.msk [vmem:[%s3353 + $0xa0] sm:$0xf] %vm4053, %v3985
      %v4148 = vld [vmem:[%s3353 + $0xa4] sm:$0x1]
      %v4149 = vsel %vm4056, %v3987, %v4148
      %4150 = vst [vmem:[%s3353 + $0xa4] sm:$0x1] %v4149
      %v4151 = vld [vmem:[%s3353 + $0xa8] sm:$0xf]
      %v4152 = vsel %vm4049, %v3989, %v4151
      %4153 = vst [vmem:[%s3353 + $0xa8] sm:$0xf] %v4152
      %4154 = vst.msk [vmem:[%s3353 + $0xac] sm:$0xf] %vm4053, %v3991
      %v4155 = vld [vmem:[%s3353 + $0xb0] sm:$0x1]
      %v4156 = vsel %vm4056, %v3993, %v4155
      %4157 = vst [vmem:[%s3353 + $0xb0] sm:$0x1] %v4156
      %v4158 = vld [vmem:[%s3353 + $0xb4] sm:$0xf]
      %v4159 = vsel %vm4049, %v3995, %v4158
      %4160 = vst [vmem:[%s3353 + $0xb4] sm:$0xf] %v4159
      %4161 = vst.msk [vmem:[%s3353 + $0xb8] sm:$0xf] %vm4053, %v3997
      %v4162 = vld [vmem:[%s3353 + $0xbc] sm:$0x1]
      %v4163 = vsel %vm4056, %v3999, %v4162
      %4164 = vst [vmem:[%s3353 + $0xbc] sm:$0x1] %v4163
      %v4165 = vld [vmem:[#allocation3] sm:$0xf]
      %v4166 = vld [vmem:[#allocation3 + $0x4] sm:$0xf]
      %v4167 = vld [vmem:[#allocation3 + $0xc] sm:$0xf]
      %v4168 = vld [vmem:[#allocation3 + $0x10] sm:$0xf]
      %v4169 = vld [vmem:[#allocation3 + $0x18] sm:$0xf]
      %v4170 = vld [vmem:[#allocation3 + $0x1c] sm:$0xf]
      %v4171 = vld [vmem:[#allocation3 + $0x24] sm:$0xf]
      %v4172 = vld [vmem:[#allocation3 + $0x28] sm:$0xf]
      %v4173 = vld [vmem:[#allocation3 + $0x30] sm:$0xf]
      %v4174 = vld [vmem:[#allocation3 + $0x34] sm:$0xf]
      %v4175 = vld [vmem:[#allocation3 + $0x3c] sm:$0xf]
      %v4176 = vld [vmem:[#allocation3 + $0x40] sm:$0xf]
      %v4177 = vld [vmem:[#allocation3 + $0x48] sm:$0xf]
      %v4178 = vld [vmem:[#allocation3 + $0x4c] sm:$0xf]
      %v4179 = vld [vmem:[#allocation3 + $0x54] sm:$0xf]
      %v4180 = vld [vmem:[#allocation3 + $0x58] sm:$0xf]
      %v4181 = vld [vmem:[#allocation3 + $0x60] sm:$0xf]
      %v4182 = vld [vmem:[#allocation3 + $0x64] sm:$0xf]
      %v4183 = vld [vmem:[#allocation3 + $0x6c] sm:$0xf]
      %v4184 = vld [vmem:[#allocation3 + $0x70] sm:$0xf]
      %v4185 = vld [vmem:[#allocation3 + $0x78] sm:$0xf]
      %v4186 = vld [vmem:[#allocation3 + $0x7c] sm:$0xf]
      %v4187 = vld [vmem:[#allocation3 + $0x84] sm:$0xf]
      %v4188 = vld [vmem:[#allocation3 + $0x88] sm:$0xf]
      %v4189 = vld [vmem:[#allocation3 + $0x90] sm:$0xf]
      %v4190 = vld [vmem:[#allocation3 + $0x94] sm:$0xf]
      %v4191 = vld [vmem:[#allocation3 + $0x9c] sm:$0xf]
      %v4192 = vld [vmem:[#allocation3 + $0xa0] sm:$0xf]
      %v4193 = vld [vmem:[#allocation3 + $0xa8] sm:$0xf]
      %v4194 = vld [vmem:[#allocation3 + $0xac] sm:$0xf]
      %v4195 = vld [vmem:[#allocation3 + $0xb4] sm:$0xf]
      %v4196 = vld [vmem:[#allocation3 + $0xb8] sm:$0xf]
      %v4197 = vld [vmem:[#allocation3 + $0x8] sm:$0x1]
      %v4198 = vld [vmem:[#allocation3 + $0x14] sm:$0x1]
      %v4199 = vld [vmem:[#allocation3 + $0x20] sm:$0x1]
      %v4200 = vld [vmem:[#allocation3 + $0x2c] sm:$0x1]
      %v4201 = vld [vmem:[#allocation3 + $0x38] sm:$0x1]
      %v4202 = vld [vmem:[#allocation3 + $0x44] sm:$0x1]
      %v4203 = vld [vmem:[#allocation3 + $0x50] sm:$0x1]
      %v4204 = vld [vmem:[#allocation3 + $0x5c] sm:$0x1]
      %v4205 = vld [vmem:[#allocation3 + $0x68] sm:$0x1]
      %v4206 = vld [vmem:[#allocation3 + $0x74] sm:$0x1]
      %v4207 = vld [vmem:[#allocation3 + $0x80] sm:$0x1]
      %v4208 = vld [vmem:[#allocation3 + $0x8c] sm:$0x1]
      %v4209 = vld [vmem:[#allocation3 + $0x98] sm:$0x1]
      %v4210 = vld [vmem:[#allocation3 + $0xa4] sm:$0x1]
      %v4211 = vld [vmem:[#allocation3 + $0xb0] sm:$0x1]
      %v4212 = vld [vmem:[#allocation3 + $0xbc] sm:$0x1]
      %v4213 = vld [vmem:[#allocation3] sm:$0xe]
      %v4214 = vld [vmem:[#allocation3 + $0xc] sm:$0xe]
      %v4215 = vld [vmem:[#allocation3 + $0x18] sm:$0xe]
      %v4216 = vld [vmem:[#allocation3 + $0x24] sm:$0xe]
      %v4217 = vld [vmem:[#allocation3 + $0x30] sm:$0xe]
      %v4218 = vld [vmem:[#allocation3 + $0x3c] sm:$0xe]
      %v4219 = vld [vmem:[#allocation3 + $0x48] sm:$0xe]
      %v4220 = vld [vmem:[#allocation3 + $0x54] sm:$0xe]
      %v4221 = vld [vmem:[#allocation3 + $0x60] sm:$0xe]
      %v4222 = vld [vmem:[#allocation3 + $0x6c] sm:$0xe]
      %v4223 = vld [vmem:[#allocation3 + $0x78] sm:$0xe]
      %v4224 = vld [vmem:[#allocation3 + $0x84] sm:$0xe]
      %v4225 = vld [vmem:[#allocation3 + $0x90] sm:$0xe]
      %v4226 = vld [vmem:[#allocation3 + $0x9c] sm:$0xe]
      %v4227 = vld [vmem:[#allocation3 + $0xa8] sm:$0xe]
      %v4228 = vld [vmem:[#allocation3 + $0xb4] sm:$0xe]
      %v4229 = vld [vmem:[%s3353] sm:$0xf]
      %v4230 = vld [vmem:[%s3353 + $0x4] sm:$0xf]
      %v4231 = vld [vmem:[%s3353 + $0xc] sm:$0xf]
      %v4232 = vld [vmem:[%s3353 + $0x10] sm:$0xf]
      %v4233 = vld [vmem:[%s3353 + $0x18] sm:$0xf]
      %v4234 = vld [vmem:[%s3353 + $0x1c] sm:$0xf]
      %v4235 = vld [vmem:[%s3353 + $0x24] sm:$0xf]
      %v4236 = vld [vmem:[%s3353 + $0x28] sm:$0xf]
      %v4237 = vld [vmem:[%s3353 + $0x30] sm:$0xf]
      %v4238 = vld [vmem:[%s3353 + $0x34] sm:$0xf]
      %v4239 = vld [vmem:[%s3353 + $0x3c] sm:$0xf]
      %v4240 = vld [vmem:[%s3353 + $0x40] sm:$0xf]
      %v4241 = vld [vmem:[%s3353 + $0x48] sm:$0xf]
      %v4242 = vld [vmem:[%s3353 + $0x4c] sm:$0xf]
      %v4243 = vld [vmem:[%s3353 + $0x54] sm:$0xf]
      %v4244 = vld [vmem:[%s3353 + $0x58] sm:$0xf]
      %v4245 = vld [vmem:[%s3353 + $0x60] sm:$0xf]
      %v4246 = vld [vmem:[%s3353 + $0x64] sm:$0xf]
      %v4247 = vld [vmem:[%s3353 + $0x6c] sm:$0xf]
      %v4248 = vld [vmem:[%s3353 + $0x70] sm:$0xf]
      %v4249 = vld [vmem:[%s3353 + $0x78] sm:$0xf]
      %v4250 = vld [vmem:[%s3353 + $0x7c] sm:$0xf]
      %v4251 = vld [vmem:[%s3353 + $0x84] sm:$0xf]
      %v4252 = vld [vmem:[%s3353 + $0x88] sm:$0xf]
      %v4253 = vld [vmem:[%s3353 + $0x90] sm:$0xf]
      %v4254 = vld [vmem:[%s3353 + $0x94] sm:$0xf]
      %v4255 = vld [vmem:[%s3353 + $0x9c] sm:$0xf]
      %v4256 = vld [vmem:[%s3353 + $0xa0] sm:$0xf]
      %v4257 = vld [vmem:[%s3353 + $0xa8] sm:$0xf]
      %v4258 = vld [vmem:[%s3353 + $0xac] sm:$0xf]
      %v4259 = vld [vmem:[%s3353 + $0xb4] sm:$0xf]
      %v4260 = vld [vmem:[%s3353 + $0xb8] sm:$0xf]
      %v4261 = vld [vmem:[%s3353 + $0x8] sm:$0x1]
      %v4262 = vld [vmem:[%s3353 + $0x14] sm:$0x1]
      %v4263 = vld [vmem:[%s3353 + $0x20] sm:$0x1]
      %v4264 = vld [vmem:[%s3353 + $0x2c] sm:$0x1]
      %v4265 = vld [vmem:[%s3353 + $0x38] sm:$0x1]
      %v4266 = vld [vmem:[%s3353 + $0x44] sm:$0x1]
      %v4267 = vld [vmem:[%s3353 + $0x50] sm:$0x1]
      %v4268 = vld [vmem:[%s3353 + $0x5c] sm:$0x1]
      %v4269 = vld [vmem:[%s3353 + $0x68] sm:$0x1]
      %v4270 = vld [vmem:[%s3353 + $0x74] sm:$0x1]
      %v4271 = vld [vmem:[%s3353 + $0x80] sm:$0x1]
      %v4272 = vld [vmem:[%s3353 + $0x8c] sm:$0x1]
      %v4273 = vld [vmem:[%s3353 + $0x98] sm:$0x1]
      %v4274 = vld [vmem:[%s3353 + $0xa4] sm:$0x1]
      %v4275 = vld [vmem:[%s3353 + $0xb0] sm:$0x1]
      %v4276 = vld [vmem:[%s3353 + $0xbc] sm:$0x1]
      %v4277 = vld [vmem:[%s3353] sm:$0xe]
      %v4278 = vld [vmem:[%s3353 + $0xc] sm:$0xe]
      %v4279 = vld [vmem:[%s3353 + $0x18] sm:$0xe]
      %v4280 = vld [vmem:[%s3353 + $0x24] sm:$0xe]
      %v4281 = vld [vmem:[%s3353 + $0x30] sm:$0xe]
      %v4282 = vld [vmem:[%s3353 + $0x3c] sm:$0xe]
      %v4283 = vld [vmem:[%s3353 + $0x48] sm:$0xe]
      %v4284 = vld [vmem:[%s3353 + $0x54] sm:$0xe]
      %v4285 = vld [vmem:[%s3353 + $0x60] sm:$0xe]
      %v4286 = vld [vmem:[%s3353 + $0x6c] sm:$0xe]
      %v4287 = vld [vmem:[%s3353 + $0x78] sm:$0xe]
      %v4288 = vld [vmem:[%s3353 + $0x84] sm:$0xe]
      %v4289 = vld [vmem:[%s3353 + $0x90] sm:$0xe]
      %v4290 = vld [vmem:[%s3353 + $0x9c] sm:$0xe]
      %v4291 = vld [vmem:[%s3353 + $0xa8] sm:$0xe]
      %v4292 = vld [vmem:[%s3353 + $0xb4] sm:$0xe]
      %s4293 = scalar_lea.vmem [#allocation3], 24
      %v4294 = vld [vmem:[%s4293] sm:$0xf]
      %v4295 = vld [vmem:[%s4293 + $0x4] sm:$0xf]
      %v4296 = vld [vmem:[%s4293 + $0xc] sm:$0xf]
      %v4297 = vld [vmem:[%s4293 + $0x10] sm:$0xf]
      %v4298 = vld [vmem:[%s4293 + $0x18] sm:$0xf]
      %v4299 = vld [vmem:[%s4293 + $0x1c] sm:$0xf]
      %v4300 = vld [vmem:[%s4293 + $0x24] sm:$0xf]
      %v4301 = vld [vmem:[%s4293 + $0x28] sm:$0xf]
      %v4302 = vld [vmem:[%s4293 + $0x30] sm:$0xf]
      %v4303 = vld [vmem:[%s4293 + $0x34] sm:$0xf]
      %v4304 = vld [vmem:[%s4293 + $0x3c] sm:$0xf]
      %v4305 = vld [vmem:[%s4293 + $0x40] sm:$0xf]
      %v4306 = vld [vmem:[%s4293 + $0x48] sm:$0xf]
      %v4307 = vld [vmem:[%s4293 + $0x4c] sm:$0xf]
      %v4308 = vld [vmem:[%s4293 + $0x54] sm:$0xf]
      %v4309 = vld [vmem:[%s4293 + $0x58] sm:$0xf]
      %v4310 = vld [vmem:[%s4293 + $0x60] sm:$0xf]
      %v4311 = vld [vmem:[%s4293 + $0x64] sm:$0xf]
      %v4312 = vld [vmem:[%s4293 + $0x6c] sm:$0xf]
      %v4313 = vld [vmem:[%s4293 + $0x70] sm:$0xf]
      %v4314 = vld [vmem:[%s4293 + $0x78] sm:$0xf]
      %v4315 = vld [vmem:[%s4293 + $0x7c] sm:$0xf]
      %v4316 = vld [vmem:[%s4293 + $0x84] sm:$0xf]
      %v4317 = vld [vmem:[%s4293 + $0x88] sm:$0xf]
      %v4318 = vld [vmem:[%s4293 + $0x90] sm:$0xf]
      %v4319 = vld [vmem:[%s4293 + $0x94] sm:$0xf]
      %v4320 = vld [vmem:[%s4293 + $0x9c] sm:$0xf]
      %v4321 = vld [vmem:[%s4293 + $0xa0] sm:$0xf]
      %v4322 = vld [vmem:[%s4293 + $0xa8] sm:$0xf]
      %v4323 = vld [vmem:[%s4293 + $0xac] sm:$0xf]
      %v4324 = vld [vmem:[%s4293 + $0xb4] sm:$0xf]
      %v4325 = vld [vmem:[%s4293 + $0xb8] sm:$0xf]
      %v4326 = vld [vmem:[%s4293 + $0x8] sm:$0x1]
      %v4327 = vld [vmem:[%s4293 + $0x14] sm:$0x1]
      %v4328 = vld [vmem:[%s4293 + $0x20] sm:$0x1]
      %v4329 = vld [vmem:[%s4293 + $0x2c] sm:$0x1]
      %v4330 = vld [vmem:[%s4293 + $0x38] sm:$0x1]
      %v4331 = vld [vmem:[%s4293 + $0x44] sm:$0x1]
      %v4332 = vld [vmem:[%s4293 + $0x50] sm:$0x1]
      %v4333 = vld [vmem:[%s4293 + $0x5c] sm:$0x1]
      %v4334 = vld [vmem:[%s4293 + $0x68] sm:$0x1]
      %v4335 = vld [vmem:[%s4293 + $0x74] sm:$0x1]
      %v4336 = vld [vmem:[%s4293 + $0x80] sm:$0x1]
      %v4337 = vld [vmem:[%s4293 + $0x8c] sm:$0x1]
      %v4338 = vld [vmem:[%s4293 + $0x98] sm:$0x1]
      %v4339 = vld [vmem:[%s4293 + $0xa4] sm:$0x1]
      %v4340 = vld [vmem:[%s4293 + $0xb0] sm:$0x1]
      %v4341 = vld [vmem:[%s4293 + $0xbc] sm:$0x1]
      %v4342 = vld [vmem:[%s4293] sm:$0xe]
      %v4343 = vld [vmem:[%s4293 + $0xc] sm:$0xe]
      %v4344 = vld [vmem:[%s4293 + $0x18] sm:$0xe]
      %v4345 = vld [vmem:[%s4293 + $0x24] sm:$0xe]
      %v4346 = vld [vmem:[%s4293 + $0x30] sm:$0xe]
      %v4347 = vld [vmem:[%s4293 + $0x3c] sm:$0xe]
      %v4348 = vld [vmem:[%s4293 + $0x48] sm:$0xe]
      %v4349 = vld [vmem:[%s4293 + $0x54] sm:$0xe]
      %v4350 = vld [vmem:[%s4293 + $0x60] sm:$0xe]
      %v4351 = vld [vmem:[%s4293 + $0x6c] sm:$0xe]
      %v4352 = vld [vmem:[%s4293 + $0x78] sm:$0xe]
      %v4353 = vld [vmem:[%s4293 + $0x84] sm:$0xe]
      %v4354 = vld [vmem:[%s4293 + $0x90] sm:$0xe]
      %v4355 = vld [vmem:[%s4293 + $0x9c] sm:$0xe]
      %v4356 = vld [vmem:[%s4293 + $0xa8] sm:$0xe]
      %v4357 = vld [vmem:[%s4293 + $0xb4] sm:$0xe]
      %v4390 = vunpack.c.l.b16 %v4165
      %v4391 = vunpack.c.l.b16 %v4166
      %v4392 = vunpack.c.l.b16 %v4167
      %v4393 = vunpack.c.l.b16 %v4168
      %v4394 = vunpack.c.l.b16 %v4169
      %v4395 = vunpack.c.l.b16 %v4170
      %v4396 = vunpack.c.l.b16 %v4171
      %v4397 = vunpack.c.l.b16 %v4172
      %v4398 = vunpack.c.l.b16 %v4173
      %v4399 = vunpack.c.l.b16 %v4174
      %v4400 = vunpack.c.l.b16 %v4175
      %v4401 = vunpack.c.l.b16 %v4176
      %v4402 = vunpack.c.l.b16 %v4177
      %v4403 = vunpack.c.l.b16 %v4178
      %v4404 = vunpack.c.l.b16 %v4179
      %v4405 = vunpack.c.l.b16 %v4180
      %v4406 = vunpack.c.l.b16 %v4181
      %v4407 = vunpack.c.l.b16 %v4182
      %v4408 = vunpack.c.l.b16 %v4183
      %v4409 = vunpack.c.l.b16 %v4184
      %v4410 = vunpack.c.l.b16 %v4185
      %v4411 = vunpack.c.l.b16 %v4186
      %v4412 = vunpack.c.l.b16 %v4187
      %v4413 = vunpack.c.l.b16 %v4188
      %v4414 = vunpack.c.l.b16 %v4189
      %v4415 = vunpack.c.l.b16 %v4190
      %v4416 = vunpack.c.l.b16 %v4191
      %v4417 = vunpack.c.l.b16 %v4192
      %v4418 = vunpack.c.l.b16 %v4193
      %v4419 = vunpack.c.l.b16 %v4194
      %v4420 = vunpack.c.l.b16 %v4195
      %v4421 = vunpack.c.l.b16 %v4196
      %v4422 = vpack.c.b16 %v4391, %v4390
      %v4423 = vpack.c.b16 %v4393, %v4392
      %v4424 = vpack.c.b16 %v4395, %v4394
      %v4425 = vpack.c.b16 %v4397, %v4396
      %v4426 = vpack.c.b16 %v4399, %v4398
      %v4427 = vpack.c.b16 %v4401, %v4400
      %v4428 = vpack.c.b16 %v4403, %v4402
      %v4429 = vpack.c.b16 %v4405, %v4404
      %v4430 = vpack.c.b16 %v4407, %v4406
      %v4431 = vpack.c.b16 %v4409, %v4408
      %v4432 = vpack.c.b16 %v4411, %v4410
      %v4433 = vpack.c.b16 %v4413, %v4412
      %v4434 = vpack.c.b16 %v4415, %v4414
      %v4435 = vpack.c.b16 %v4417, %v4416
      %v4436 = vpack.c.b16 %v4419, %v4418
      %v4437 = vpack.c.b16 %v4421, %v4420
      %v4454 = vunpack.c.l.b16 %v4197
      %v4455 = vunpack.c.l.b16 %v4198
      %v4456 = vunpack.c.l.b16 %v4199
      %v4457 = vunpack.c.l.b16 %v4200
      %v4458 = vunpack.c.l.b16 %v4201
      %v4459 = vunpack.c.l.b16 %v4202
      %v4460 = vunpack.c.l.b16 %v4203
      %v4461 = vunpack.c.l.b16 %v4204
      %v4462 = vunpack.c.l.b16 %v4205
      %v4463 = vunpack.c.l.b16 %v4206
      %v4464 = vunpack.c.l.b16 %v4207
      %v4465 = vunpack.c.l.b16 %v4208
      %v4466 = vunpack.c.l.b16 %v4209
      %v4467 = vunpack.c.l.b16 %v4210
      %v4468 = vunpack.c.l.b16 %v4211
      %v4469 = vunpack.c.l.b16 %v4212
      %v4470 = vpack.c.b16 %v4454, %v4454
      %v4471 = vpack.c.b16 %v4455, %v4455
      %v4472 = vpack.c.b16 %v4456, %v4456
      %v4473 = vpack.c.b16 %v4457, %v4457
      %v4474 = vpack.c.b16 %v4458, %v4458
      %v4475 = vpack.c.b16 %v4459, %v4459
      %v4476 = vpack.c.b16 %v4460, %v4460
      %v4477 = vpack.c.b16 %v4461, %v4461
      %v4478 = vpack.c.b16 %v4462, %v4462
      %v4479 = vpack.c.b16 %v4463, %v4463
      %v4480 = vpack.c.b16 %v4464, %v4464
      %v4481 = vpack.c.b16 %v4465, %v4465
      %v4482 = vpack.c.b16 %v4466, %v4466
      %v4483 = vpack.c.b16 %v4467, %v4467
      %v4484 = vpack.c.b16 %v4468, %v4468
      %v4485 = vpack.c.b16 %v4469, %v4469
      %vm4486 = vsmask.f32 7424
      %v4488 = vshrl.u32 %v4422, 16
      %v4490 = vshll.u32 %v4422, 16
      %v4492 = vrot.slane %v4490, 1
      %v4493 = vor.u32 %v4488, %v4492
      %v4495 = vshll.u32 %v4470, 16
      %v4497 = vrot.slane %v4495, 1
      %v4498 = vsel %vm4486, %v4493, %v4497
      %v4500 = vshrl.u32 %v4423, 16
      %v4502 = vshll.u32 %v4423, 16
      %v4504 = vrot.slane %v4502, 1
      %v4505 = vor.u32 %v4500, %v4504
      %v4507 = vshll.u32 %v4471, 16
      %v4509 = vrot.slane %v4507, 1
      %v4510 = vsel %vm4486, %v4505, %v4509
      %v4512 = vshrl.u32 %v4424, 16
      %v4514 = vshll.u32 %v4424, 16
      %v4516 = vrot.slane %v4514, 1
      %v4517 = vor.u32 %v4512, %v4516
      %v4519 = vshll.u32 %v4472, 16
      %v4521 = vrot.slane %v4519, 1
      %v4522 = vsel %vm4486, %v4517, %v4521
      %v4524 = vshrl.u32 %v4425, 16
      %v4526 = vshll.u32 %v4425, 16
      %v4528 = vrot.slane %v4526, 1
      %v4529 = vor.u32 %v4524, %v4528
      %v4531 = vshll.u32 %v4473, 16
      %v4533 = vrot.slane %v4531, 1
      %v4534 = vsel %vm4486, %v4529, %v4533
      %v4536 = vshrl.u32 %v4426, 16
      %v4538 = vshll.u32 %v4426, 16
      %v4540 = vrot.slane %v4538, 1
      %v4541 = vor.u32 %v4536, %v4540
      %v4543 = vshll.u32 %v4474, 16
      %v4545 = vrot.slane %v4543, 1
      %v4546 = vsel %vm4486, %v4541, %v4545
      %v4548 = vshrl.u32 %v4427, 16
      %v4550 = vshll.u32 %v4427, 16
      %v4552 = vrot.slane %v4550, 1
      %v4553 = vor.u32 %v4548, %v4552
      %v4555 = vshll.u32 %v4475, 16
      %v4557 = vrot.slane %v4555, 1
      %v4558 = vsel %vm4486, %v4553, %v4557
      %v4560 = vshrl.u32 %v4428, 16
      %v4562 = vshll.u32 %v4428, 16
      %v4564 = vrot.slane %v4562, 1
      %v4565 = vor.u32 %v4560, %v4564
      %v4567 = vshll.u32 %v4476, 16
      %v4569 = vrot.slane %v4567, 1
      %v4570 = vsel %vm4486, %v4565, %v4569
      %v4572 = vshrl.u32 %v4429, 16
      %v4574 = vshll.u32 %v4429, 16
      %v4576 = vrot.slane %v4574, 1
      %v4577 = vor.u32 %v4572, %v4576
      %v4579 = vshll.u32 %v4477, 16
      %v4581 = vrot.slane %v4579, 1
      %v4582 = vsel %vm4486, %v4577, %v4581
      %v4584 = vshrl.u32 %v4430, 16
      %v4586 = vshll.u32 %v4430, 16
      %v4588 = vrot.slane %v4586, 1
      %v4589 = vor.u32 %v4584, %v4588
      %v4591 = vshll.u32 %v4478, 16
      %v4593 = vrot.slane %v4591, 1
      %v4594 = vsel %vm4486, %v4589, %v4593
      %v4596 = vshrl.u32 %v4431, 16
      %v4598 = vshll.u32 %v4431, 16
      %v4600 = vrot.slane %v4598, 1
      %v4601 = vor.u32 %v4596, %v4600
      %v4603 = vshll.u32 %v4479, 16
      %v4605 = vrot.slane %v4603, 1
      %v4606 = vsel %vm4486, %v4601, %v4605
      %v4608 = vshrl.u32 %v4432, 16
      %v4610 = vshll.u32 %v4432, 16
      %v4612 = vrot.slane %v4610, 1
      %v4613 = vor.u32 %v4608, %v4612
      %v4615 = vshll.u32 %v4480, 16
      %v4617 = vrot.slane %v4615, 1
      %v4618 = vsel %vm4486, %v4613, %v4617
      %v4620 = vshrl.u32 %v4433, 16
      %v4622 = vshll.u32 %v4433, 16
      %v4624 = vrot.slane %v4622, 1
      %v4625 = vor.u32 %v4620, %v4624
      %v4627 = vshll.u32 %v4481, 16
      %v4629 = vrot.slane %v4627, 1
      %v4630 = vsel %vm4486, %v4625, %v4629
      %v4632 = vshrl.u32 %v4434, 16
      %v4634 = vshll.u32 %v4434, 16
      %v4636 = vrot.slane %v4634, 1
      %v4637 = vor.u32 %v4632, %v4636
      %v4639 = vshll.u32 %v4482, 16
      %v4641 = vrot.slane %v4639, 1
      %v4642 = vsel %vm4486, %v4637, %v4641
      %v4644 = vshrl.u32 %v4435, 16
      %v4646 = vshll.u32 %v4435, 16
      %v4648 = vrot.slane %v4646, 1
      %v4649 = vor.u32 %v4644, %v4648
      %v4651 = vshll.u32 %v4483, 16
      %v4653 = vrot.slane %v4651, 1
      %v4654 = vsel %vm4486, %v4649, %v4653
      %v4656 = vshrl.u32 %v4436, 16
      %v4658 = vshll.u32 %v4436, 16
      %v4660 = vrot.slane %v4658, 1
      %v4661 = vor.u32 %v4656, %v4660
      %v4663 = vshll.u32 %v4484, 16
      %v4665 = vrot.slane %v4663, 1
      %v4666 = vsel %vm4486, %v4661, %v4665
      %v4668 = vshrl.u32 %v4437, 16
      %v4670 = vshll.u32 %v4437, 16
      %v4672 = vrot.slane %v4670, 1
      %v4673 = vor.u32 %v4668, %v4672
      %v4675 = vshll.u32 %v4485, 16
      %v4677 = vrot.slane %v4675, 1
      %v4678 = vsel %vm4486, %v4673, %v4677
      %4679 = vrot.lane.b32.xlu0 %v4498, 8
      %v4680 = vpop.permute.xlu0 %4679
      %4681 = vrot.lane.b32.xlu0 %v4510, 8
      %v4682 = vpop.permute.xlu0 %4681
      %4683 = vrot.lane.b32.xlu0 %v4522, 8
      %v4684 = vpop.permute.xlu0 %4683
      %4685 = vrot.lane.b32.xlu0 %v4534, 8
      %v4686 = vpop.permute.xlu0 %4685
      %4687 = vrot.lane.b32.xlu0 %v4546, 8
      %v4688 = vpop.permute.xlu0 %4687
      %4689 = vrot.lane.b32.xlu0 %v4558, 8
      %v4690 = vpop.permute.xlu0 %4689
      %4691 = vrot.lane.b32.xlu0 %v4570, 8
      %v4692 = vpop.permute.xlu0 %4691
      %4693 = vrot.lane.b32.xlu0 %v4582, 8
      %v4694 = vpop.permute.xlu0 %4693
      %4695 = vrot.lane.b32.xlu0 %v4594, 8
      %v4696 = vpop.permute.xlu0 %4695
      %4697 = vrot.lane.b32.xlu0 %v4606, 8
      %v4698 = vpop.permute.xlu0 %4697
      %4699 = vrot.lane.b32.xlu0 %v4618, 8
      %v4700 = vpop.permute.xlu0 %4699
      %4701 = vrot.lane.b32.xlu0 %v4630, 8
      %v4702 = vpop.permute.xlu0 %4701
      %4703 = vrot.lane.b32.xlu0 %v4642, 8
      %v4704 = vpop.permute.xlu0 %4703
      %4705 = vrot.lane.b32.xlu0 %v4654, 8
      %v4706 = vpop.permute.xlu0 %4705
      %4707 = vrot.lane.b32.xlu0 %v4666, 8
      %v4708 = vpop.permute.xlu0 %4707
      %4709 = vrot.lane.b32.xlu0 %v4678, 8
      %v4710 = vpop.permute.xlu0 %4709
      %v4727 = vunpack.c.l.b16 %v4213
      %v4728 = vunpack.c.l.b16 %v4214
      %v4729 = vunpack.c.l.b16 %v4215
      %v4730 = vunpack.c.l.b16 %v4216
      %v4731 = vunpack.c.l.b16 %v4217
      %v4732 = vunpack.c.l.b16 %v4218
      %v4733 = vunpack.c.l.b16 %v4219
      %v4734 = vunpack.c.l.b16 %v4220
      %v4735 = vunpack.c.l.b16 %v4221
      %v4736 = vunpack.c.l.b16 %v4222
      %v4737 = vunpack.c.l.b16 %v4223
      %v4738 = vunpack.c.l.b16 %v4224
      %v4739 = vunpack.c.l.b16 %v4225
      %v4740 = vunpack.c.l.b16 %v4226
      %v4741 = vunpack.c.l.b16 %v4227
      %v4742 = vunpack.c.l.b16 %v4228
      %v4743 = vpack.c.b16 %v4391, %v4727
      %v4744 = vpack.c.b16 %v4393, %v4728
      %v4745 = vpack.c.b16 %v4395, %v4729
      %v4746 = vpack.c.b16 %v4397, %v4730
      %v4747 = vpack.c.b16 %v4399, %v4731
      %v4748 = vpack.c.b16 %v4401, %v4732
      %v4749 = vpack.c.b16 %v4403, %v4733
      %v4750 = vpack.c.b16 %v4405, %v4734
      %v4751 = vpack.c.b16 %v4407, %v4735
      %v4752 = vpack.c.b16 %v4409, %v4736
      %v4753 = vpack.c.b16 %v4411, %v4737
      %v4754 = vpack.c.b16 %v4413, %v4738
      %v4755 = vpack.c.b16 %v4415, %v4739
      %v4756 = vpack.c.b16 %v4417, %v4740
      %v4757 = vpack.c.b16 %v4419, %v4741
      %v4758 = vpack.c.b16 %v4421, %v4742
      %vm4759 = vcmask 1046528
      %v4760 = vrot.slane %v4743, 1
      %v4761 = vrot.slane %v4470, 1
      %v4762 = vsel %vm4759, %v4760, %v4761
      %v4763 = vrot.slane %v4744, 1
      %v4764 = vrot.slane %v4471, 1
      %v4765 = vsel %vm4759, %v4763, %v4764
      %v4766 = vrot.slane %v4745, 1
      %v4767 = vrot.slane %v4472, 1
      %v4768 = vsel %vm4759, %v4766, %v4767
      %v4769 = vrot.slane %v4746, 1
      %v4770 = vrot.slane %v4473, 1
      %v4771 = vsel %vm4759, %v4769, %v4770
      %v4772 = vrot.slane %v4747, 1
      %v4773 = vrot.slane %v4474, 1
      %v4774 = vsel %vm4759, %v4772, %v4773
      %v4775 = vrot.slane %v4748, 1
      %v4776 = vrot.slane %v4475, 1
      %v4777 = vsel %vm4759, %v4775, %v4776
      %v4778 = vrot.slane %v4749, 1
      %v4779 = vrot.slane %v4476, 1
      %v4780 = vsel %vm4759, %v4778, %v4779
      %v4781 = vrot.slane %v4750, 1
      %v4782 = vrot.slane %v4477, 1
      %v4783 = vsel %vm4759, %v4781, %v4782
      %v4784 = vrot.slane %v4751, 1
      %v4785 = vrot.slane %v4478, 1
      %v4786 = vsel %vm4759, %v4784, %v4785
      %v4787 = vrot.slane %v4752, 1
      %v4788 = vrot.slane %v4479, 1
      %v4789 = vsel %vm4759, %v4787, %v4788
      %v4790 = vrot.slane %v4753, 1
      %v4791 = vrot.slane %v4480, 1
      %v4792 = vsel %vm4759, %v4790, %v4791
      %v4793 = vrot.slane %v4754, 1
      %v4794 = vrot.slane %v4481, 1
      %v4795 = vsel %vm4759, %v4793, %v4794
      %v4796 = vrot.slane %v4755, 1
      %v4797 = vrot.slane %v4482, 1
      %v4798 = vsel %vm4759, %v4796, %v4797
      %v4799 = vrot.slane %v4756, 1
      %v4800 = vrot.slane %v4483, 1
      %v4801 = vsel %vm4759, %v4799, %v4800
      %v4802 = vrot.slane %v4757, 1
      %v4803 = vrot.slane %v4484, 1
      %v4804 = vsel %vm4759, %v4802, %v4803
      %v4805 = vrot.slane %v4758, 1
      %v4806 = vrot.slane %v4485, 1
      %v4807 = vsel %vm4759, %v4805, %v4806
      %4808 = vrot.lane.b32.xlu0 %v4762, 16
      %v4809 = vpop.permute.xlu0 %4808
      %4810 = vrot.lane.b32.xlu0 %v4765, 16
      %v4811 = vpop.permute.xlu0 %4810
      %4812 = vrot.lane.b32.xlu0 %v4768, 16
      %v4813 = vpop.permute.xlu0 %4812
      %4814 = vrot.lane.b32.xlu0 %v4771, 16
      %v4815 = vpop.permute.xlu0 %4814
      %4816 = vrot.lane.b32.xlu0 %v4774, 16
      %v4817 = vpop.permute.xlu0 %4816
      %4818 = vrot.lane.b32.xlu0 %v4777, 16
      %v4819 = vpop.permute.xlu0 %4818
      %4820 = vrot.lane.b32.xlu0 %v4780, 16
      %v4821 = vpop.permute.xlu0 %4820
      %4822 = vrot.lane.b32.xlu0 %v4783, 16
      %v4823 = vpop.permute.xlu0 %4822
      %4824 = vrot.lane.b32.xlu0 %v4786, 16
      %v4825 = vpop.permute.xlu0 %4824
      %4826 = vrot.lane.b32.xlu0 %v4789, 16
      %v4827 = vpop.permute.xlu0 %4826
      %4828 = vrot.lane.b32.xlu0 %v4792, 16
      %v4829 = vpop.permute.xlu0 %4828
      %4830 = vrot.lane.b32.xlu0 %v4795, 16
      %v4831 = vpop.permute.xlu0 %4830
      %4832 = vrot.lane.b32.xlu0 %v4798, 16
      %v4833 = vpop.permute.xlu0 %4832
      %4834 = vrot.lane.b32.xlu0 %v4801, 16
      %v4835 = vpop.permute.xlu0 %4834
      %4836 = vrot.lane.b32.xlu0 %v4804, 16
      %v4837 = vpop.permute.xlu0 %4836
      %4838 = vrot.lane.b32.xlu0 %v4807, 16
      %v4839 = vpop.permute.xlu0 %4838
      %v4872 = vunpack.c.l.b16 %v4229
      %v4873 = vunpack.c.l.b16 %v4230
      %v4874 = vunpack.c.l.b16 %v4231
      %v4875 = vunpack.c.l.b16 %v4232
      %v4876 = vunpack.c.l.b16 %v4233
      %v4877 = vunpack.c.l.b16 %v4234
      %v4878 = vunpack.c.l.b16 %v4235
      %v4879 = vunpack.c.l.b16 %v4236
      %v4880 = vunpack.c.l.b16 %v4237
      %v4881 = vunpack.c.l.b16 %v4238
      %v4882 = vunpack.c.l.b16 %v4239
      %v4883 = vunpack.c.l.b16 %v4240
      %v4884 = vunpack.c.l.b16 %v4241
      %v4885 = vunpack.c.l.b16 %v4242
      %v4886 = vunpack.c.l.b16 %v4243
      %v4887 = vunpack.c.l.b16 %v4244
      %v4888 = vunpack.c.l.b16 %v4245
      %v4889 = vunpack.c.l.b16 %v4246
      %v4890 = vunpack.c.l.b16 %v4247
      %v4891 = vunpack.c.l.b16 %v4248
      %v4892 = vunpack.c.l.b16 %v4249
      %v4893 = vunpack.c.l.b16 %v4250
      %v4894 = vunpack.c.l.b16 %v4251
      %v4895 = vunpack.c.l.b16 %v4252
      %v4896 = vunpack.c.l.b16 %v4253
      %v4897 = vunpack.c.l.b16 %v4254
      %v4898 = vunpack.c.l.b16 %v4255
      %v4899 = vunpack.c.l.b16 %v4256
      %v4900 = vunpack.c.l.b16 %v4257
      %v4901 = vunpack.c.l.b16 %v4258
      %v4902 = vunpack.c.l.b16 %v4259
      %v4903 = vunpack.c.l.b16 %v4260
      %v4904 = vpack.c.b16 %v4873, %v4872
      %v4905 = vpack.c.b16 %v4875, %v4874
      %v4906 = vpack.c.b16 %v4877, %v4876
      %v4907 = vpack.c.b16 %v4879, %v4878
      %v4908 = vpack.c.b16 %v4881, %v4880
      %v4909 = vpack.c.b16 %v4883, %v4882
      %v4910 = vpack.c.b16 %v4885, %v4884
      %v4911 = vpack.c.b16 %v4887, %v4886
      %v4912 = vpack.c.b16 %v4889, %v4888
      %v4913 = vpack.c.b16 %v4891, %v4890
      %v4914 = vpack.c.b16 %v4893, %v4892
      %v4915 = vpack.c.b16 %v4895, %v4894
      %v4916 = vpack.c.b16 %v4897, %v4896
      %v4917 = vpack.c.b16 %v4899, %v4898
      %v4918 = vpack.c.b16 %v4901, %v4900
      %v4919 = vpack.c.b16 %v4903, %v4902
      %4920 = vrot.lane.b32.xlu0 %v4904, 24
      %v4921 = vpop.permute.xlu0 %4920
      %4922 = vrot.lane.b32.xlu0 %v4905, 24
      %v4923 = vpop.permute.xlu0 %4922
      %4924 = vrot.lane.b32.xlu0 %v4906, 24
      %v4925 = vpop.permute.xlu0 %4924
      %4926 = vrot.lane.b32.xlu0 %v4907, 24
      %v4927 = vpop.permute.xlu0 %4926
      %4928 = vrot.lane.b32.xlu0 %v4908, 24
      %v4929 = vpop.permute.xlu0 %4928
      %4930 = vrot.lane.b32.xlu0 %v4909, 24
      %v4931 = vpop.permute.xlu0 %4930
      %4932 = vrot.lane.b32.xlu0 %v4910, 24
      %v4933 = vpop.permute.xlu0 %4932
      %4934 = vrot.lane.b32.xlu0 %v4911, 24
      %v4935 = vpop.permute.xlu0 %4934
      %4936 = vrot.lane.b32.xlu0 %v4912, 24
      %v4937 = vpop.permute.xlu0 %4936
      %4938 = vrot.lane.b32.xlu0 %v4913, 24
      %v4939 = vpop.permute.xlu0 %4938
      %4940 = vrot.lane.b32.xlu0 %v4914, 24
      %v4941 = vpop.permute.xlu0 %4940
      %4942 = vrot.lane.b32.xlu0 %v4915, 24
      %v4943 = vpop.permute.xlu0 %4942
      %4944 = vrot.lane.b32.xlu0 %v4916, 24
      %v4945 = vpop.permute.xlu0 %4944
      %4946 = vrot.lane.b32.xlu0 %v4917, 24
      %v4947 = vpop.permute.xlu0 %4946
      %4948 = vrot.lane.b32.xlu0 %v4918, 24
      %v4949 = vpop.permute.xlu0 %4948
      %4950 = vrot.lane.b32.xlu0 %v4919, 24
      %v4951 = vpop.permute.xlu0 %4950
      %v4968 = vunpack.c.l.b16 %v4261
      %v4969 = vunpack.c.l.b16 %v4262
      %v4970 = vunpack.c.l.b16 %v4263
      %v4971 = vunpack.c.l.b16 %v4264
      %v4972 = vunpack.c.l.b16 %v4265
      %v4973 = vunpack.c.l.b16 %v4266
      %v4974 = vunpack.c.l.b16 %v4267
      %v4975 = vunpack.c.l.b16 %v4268
      %v4976 = vunpack.c.l.b16 %v4269
      %v4977 = vunpack.c.l.b16 %v4270
      %v4978 = vunpack.c.l.b16 %v4271
      %v4979 = vunpack.c.l.b16 %v4272
      %v4980 = vunpack.c.l.b16 %v4273
      %v4981 = vunpack.c.l.b16 %v4274
      %v4982 = vunpack.c.l.b16 %v4275
      %v4983 = vunpack.c.l.b16 %v4276
      %v4984 = vpack.c.b16 %v4968, %v4968
      %v4985 = vpack.c.b16 %v4969, %v4969
      %v4986 = vpack.c.b16 %v4970, %v4970
      %v4987 = vpack.c.b16 %v4971, %v4971
      %v4988 = vpack.c.b16 %v4972, %v4972
      %v4989 = vpack.c.b16 %v4973, %v4973
      %v4990 = vpack.c.b16 %v4974, %v4974
      %v4991 = vpack.c.b16 %v4975, %v4975
      %v4992 = vpack.c.b16 %v4976, %v4976
      %v4993 = vpack.c.b16 %v4977, %v4977
      %v4994 = vpack.c.b16 %v4978, %v4978
      %v4995 = vpack.c.b16 %v4979, %v4979
      %v4996 = vpack.c.b16 %v4980, %v4980
      %v4997 = vpack.c.b16 %v4981, %v4981
      %v4998 = vpack.c.b16 %v4982, %v4982
      %v4999 = vpack.c.b16 %v4983, %v4983
      %v5001 = vshrl.u32 %v4904, 16
      %v5003 = vshll.u32 %v4904, 16
      %v5005 = vrot.slane %v5003, 1
      %v5006 = vor.u32 %v5001, %v5005
      %v5008 = vshll.u32 %v4984, 16
      %v5010 = vrot.slane %v5008, 1
      %v5011 = vsel %vm4486, %v5006, %v5010
      %v5013 = vshrl.u32 %v4905, 16
      %v5015 = vshll.u32 %v4905, 16
      %v5017 = vrot.slane %v5015, 1
      %v5018 = vor.u32 %v5013, %v5017
      %v5020 = vshll.u32 %v4985, 16
      %v5022 = vrot.slane %v5020, 1
      %v5023 = vsel %vm4486, %v5018, %v5022
      %v5025 = vshrl.u32 %v4906, 16
      %v5027 = vshll.u32 %v4906, 16
      %v5029 = vrot.slane %v5027, 1
      %v5030 = vor.u32 %v5025, %v5029
      %v5032 = vshll.u32 %v4986, 16
      %v5034 = vrot.slane %v5032, 1
      %v5035 = vsel %vm4486, %v5030, %v5034
      %v5037 = vshrl.u32 %v4907, 16
      %v5039 = vshll.u32 %v4907, 16
      %v5041 = vrot.slane %v5039, 1
      %v5042 = vor.u32 %v5037, %v5041
      %v5044 = vshll.u32 %v4987, 16
      %v5046 = vrot.slane %v5044, 1
      %v5047 = vsel %vm4486, %v5042, %v5046
      %v5049 = vshrl.u32 %v4908, 16
      %v5051 = vshll.u32 %v4908, 16
      %v5053 = vrot.slane %v5051, 1
      %v5054 = vor.u32 %v5049, %v5053
      %v5056 = vshll.u32 %v4988, 16
      %v5058 = vrot.slane %v5056, 1
      %v5059 = vsel %vm4486, %v5054, %v5058
      %v5061 = vshrl.u32 %v4909, 16
      %v5063 = vshll.u32 %v4909, 16
      %v5065 = vrot.slane %v5063, 1
      %v5066 = vor.u32 %v5061, %v5065
      %v5068 = vshll.u32 %v4989, 16
      %v5070 = vrot.slane %v5068, 1
      %v5071 = vsel %vm4486, %v5066, %v5070
      %v5073 = vshrl.u32 %v4910, 16
      %v5075 = vshll.u32 %v4910, 16
      %v5077 = vrot.slane %v5075, 1
      %v5078 = vor.u32 %v5073, %v5077
      %v5080 = vshll.u32 %v4990, 16
      %v5082 = vrot.slane %v5080, 1
      %v5083 = vsel %vm4486, %v5078, %v5082
      %v5085 = vshrl.u32 %v4911, 16
      %v5087 = vshll.u32 %v4911, 16
      %v5089 = vrot.slane %v5087, 1
      %v5090 = vor.u32 %v5085, %v5089
      %v5092 = vshll.u32 %v4991, 16
      %v5094 = vrot.slane %v5092, 1
      %v5095 = vsel %vm4486, %v5090, %v5094
      %v5097 = vshrl.u32 %v4912, 16
      %v5099 = vshll.u32 %v4912, 16
      %v5101 = vrot.slane %v5099, 1
      %v5102 = vor.u32 %v5097, %v5101
      %v5104 = vshll.u32 %v4992, 16
      %v5106 = vrot.slane %v5104, 1
      %v5107 = vsel %vm4486, %v5102, %v5106
      %v5109 = vshrl.u32 %v4913, 16
      %v5111 = vshll.u32 %v4913, 16
      %v5113 = vrot.slane %v5111, 1
      %v5114 = vor.u32 %v5109, %v5113
      %v5116 = vshll.u32 %v4993, 16
      %v5118 = vrot.slane %v5116, 1
      %v5119 = vsel %vm4486, %v5114, %v5118
      %v5121 = vshrl.u32 %v4914, 16
      %v5123 = vshll.u32 %v4914, 16
      %v5125 = vrot.slane %v5123, 1
      %v5126 = vor.u32 %v5121, %v5125
      %v5128 = vshll.u32 %v4994, 16
      %v5130 = vrot.slane %v5128, 1
      %v5131 = vsel %vm4486, %v5126, %v5130
      %v5133 = vshrl.u32 %v4915, 16
      %v5135 = vshll.u32 %v4915, 16
      %v5137 = vrot.slane %v5135, 1
      %v5138 = vor.u32 %v5133, %v5137
      %v5140 = vshll.u32 %v4995, 16
      %v5142 = vrot.slane %v5140, 1
      %v5143 = vsel %vm4486, %v5138, %v5142
      %v5145 = vshrl.u32 %v4916, 16
      %v5147 = vshll.u32 %v4916, 16
      %v5149 = vrot.slane %v5147, 1
      %v5150 = vor.u32 %v5145, %v5149
      %v5152 = vshll.u32 %v4996, 16
      %v5154 = vrot.slane %v5152, 1
      %v5155 = vsel %vm4486, %v5150, %v5154
      %v5157 = vshrl.u32 %v4917, 16
      %v5159 = vshll.u32 %v4917, 16
      %v5161 = vrot.slane %v5159, 1
      %v5162 = vor.u32 %v5157, %v5161
      %v5164 = vshll.u32 %v4997, 16
      %v5166 = vrot.slane %v5164, 1
      %v5167 = vsel %vm4486, %v5162, %v5166
      %v5169 = vshrl.u32 %v4918, 16
      %v5171 = vshll.u32 %v4918, 16
      %v5173 = vrot.slane %v5171, 1
      %v5174 = vor.u32 %v5169, %v5173
      %v5176 = vshll.u32 %v4998, 16
      %v5178 = vrot.slane %v5176, 1
      %v5179 = vsel %vm4486, %v5174, %v5178
      %v5181 = vshrl.u32 %v4919, 16
      %v5183 = vshll.u32 %v4919, 16
      %v5185 = vrot.slane %v5183, 1
      %v5186 = vor.u32 %v5181, %v5185
      %v5188 = vshll.u32 %v4999, 16
      %v5190 = vrot.slane %v5188, 1
      %v5191 = vsel %vm4486, %v5186, %v5190
      %5192 = vrot.lane.b32.xlu0 %v5011, 32
      %v5193 = vpop.permute.xlu0 %5192
      %5194 = vrot.lane.b32.xlu0 %v5023, 32
      %v5195 = vpop.permute.xlu0 %5194
      %5196 = vrot.lane.b32.xlu0 %v5035, 32
      %v5197 = vpop.permute.xlu0 %5196
      %5198 = vrot.lane.b32.xlu0 %v5047, 32
      %v5199 = vpop.permute.xlu0 %5198
      %5200 = vrot.lane.b32.xlu0 %v5059, 32
      %v5201 = vpop.permute.xlu0 %5200
      %5202 = vrot.lane.b32.xlu0 %v5071, 32
      %v5203 = vpop.permute.xlu0 %5202
      %5204 = vrot.lane.b32.xlu0 %v5083, 32
      %v5205 = vpop.permute.xlu0 %5204
      %5206 = vrot.lane.b32.xlu0 %v5095, 32
      %v5207 = vpop.permute.xlu0 %5206
      %5208 = vrot.lane.b32.xlu0 %v5107, 32
      %v5209 = vpop.permute.xlu0 %5208
      %5210 = vrot.lane.b32.xlu0 %v5119, 32
      %v5211 = vpop.permute.xlu0 %5210
      %5212 = vrot.lane.b32.xlu0 %v5131, 32
      %v5213 = vpop.permute.xlu0 %5212
      %5214 = vrot.lane.b32.xlu0 %v5143, 32
      %v5215 = vpop.permute.xlu0 %5214
      %5216 = vrot.lane.b32.xlu0 %v5155, 32
      %v5217 = vpop.permute.xlu0 %5216
      %5218 = vrot.lane.b32.xlu0 %v5167, 32
      %v5219 = vpop.permute.xlu0 %5218
      %5220 = vrot.lane.b32.xlu0 %v5179, 32
      %v5221 = vpop.permute.xlu0 %5220
      %5222 = vrot.lane.b32.xlu0 %v5191, 32
      %v5223 = vpop.permute.xlu0 %5222
      %v5240 = vunpack.c.l.b16 %v4277
      %v5241 = vunpack.c.l.b16 %v4278
      %v5242 = vunpack.c.l.b16 %v4279
      %v5243 = vunpack.c.l.b16 %v4280
      %v5244 = vunpack.c.l.b16 %v4281
      %v5245 = vunpack.c.l.b16 %v4282
      %v5246 = vunpack.c.l.b16 %v4283
      %v5247 = vunpack.c.l.b16 %v4284
      %v5248 = vunpack.c.l.b16 %v4285
      %v5249 = vunpack.c.l.b16 %v4286
      %v5250 = vunpack.c.l.b16 %v4287
      %v5251 = vunpack.c.l.b16 %v4288
      %v5252 = vunpack.c.l.b16 %v4289
      %v5253 = vunpack.c.l.b16 %v4290
      %v5254 = vunpack.c.l.b16 %v4291
      %v5255 = vunpack.c.l.b16 %v4292
      %v5256 = vpack.c.b16 %v4873, %v5240
      %v5257 = vpack.c.b16 %v4875, %v5241
      %v5258 = vpack.c.b16 %v4877, %v5242
      %v5259 = vpack.c.b16 %v4879, %v5243
      %v5260 = vpack.c.b16 %v4881, %v5244
      %v5261 = vpack.c.b16 %v4883, %v5245
      %v5262 = vpack.c.b16 %v4885, %v5246
      %v5263 = vpack.c.b16 %v4887, %v5247
      %v5264 = vpack.c.b16 %v4889, %v5248
      %v5265 = vpack.c.b16 %v4891, %v5249
      %v5266 = vpack.c.b16 %v4893, %v5250
      %v5267 = vpack.c.b16 %v4895, %v5251
      %v5268 = vpack.c.b16 %v4897, %v5252
      %v5269 = vpack.c.b16 %v4899, %v5253
      %v5270 = vpack.c.b16 %v4901, %v5254
      %v5271 = vpack.c.b16 %v4903, %v5255
      %v5272 = vrot.slane %v5256, 1
      %v5273 = vrot.slane %v4984, 1
      %v5274 = vsel %vm4759, %v5272, %v5273
      %v5275 = vrot.slane %v5257, 1
      %v5276 = vrot.slane %v4985, 1
      %v5277 = vsel %vm4759, %v5275, %v5276
      %v5278 = vrot.slane %v5258, 1
      %v5279 = vrot.slane %v4986, 1
      %v5280 = vsel %vm4759, %v5278, %v5279
      %v5281 = vrot.slane %v5259, 1
      %v5282 = vrot.slane %v4987, 1
      %v5283 = vsel %vm4759, %v5281, %v5282
      %v5284 = vrot.slane %v5260, 1
      %v5285 = vrot.slane %v4988, 1
      %v5286 = vsel %vm4759, %v5284, %v5285
      %v5287 = vrot.slane %v5261, 1
      %v5288 = vrot.slane %v4989, 1
      %v5289 = vsel %vm4759, %v5287, %v5288
      %v5290 = vrot.slane %v5262, 1
      %v5291 = vrot.slane %v4990, 1
      %v5292 = vsel %vm4759, %v5290, %v5291
      %v5293 = vrot.slane %v5263, 1
      %v5294 = vrot.slane %v4991, 1
      %v5295 = vsel %vm4759, %v5293, %v5294
      %v5296 = vrot.slane %v5264, 1
      %v5297 = vrot.slane %v4992, 1
      %v5298 = vsel %vm4759, %v5296, %v5297
      %v5299 = vrot.slane %v5265, 1
      %v5300 = vrot.slane %v4993, 1
      %v5301 = vsel %vm4759, %v5299, %v5300
      %v5302 = vrot.slane %v5266, 1
      %v5303 = vrot.slane %v4994, 1
      %v5304 = vsel %vm4759, %v5302, %v5303
      %v5305 = vrot.slane %v5267, 1
      %v5306 = vrot.slane %v4995, 1
      %v5307 = vsel %vm4759, %v5305, %v5306
      %v5308 = vrot.slane %v5268, 1
      %v5309 = vrot.slane %v4996, 1
      %v5310 = vsel %vm4759, %v5308, %v5309
      %v5311 = vrot.slane %v5269, 1
      %v5312 = vrot.slane %v4997, 1
      %v5313 = vsel %vm4759, %v5311, %v5312
      %v5314 = vrot.slane %v5270, 1
      %v5315 = vrot.slane %v4998, 1
      %v5316 = vsel %vm4759, %v5314, %v5315
      %v5317 = vrot.slane %v5271, 1
      %v5318 = vrot.slane %v4999, 1
      %v5319 = vsel %vm4759, %v5317, %v5318
      %5320 = vrot.lane.b32.xlu0 %v5274, 40
      %v5321 = vpop.permute.xlu0 %5320
      %5322 = vrot.lane.b32.xlu0 %v5277, 40
      %v5323 = vpop.permute.xlu0 %5322
      %5324 = vrot.lane.b32.xlu0 %v5280, 40
      %v5325 = vpop.permute.xlu0 %5324
      %5326 = vrot.lane.b32.xlu0 %v5283, 40
      %v5327 = vpop.permute.xlu0 %5326
      %5328 = vrot.lane.b32.xlu0 %v5286, 40
      %v5329 = vpop.permute.xlu0 %5328
      %5330 = vrot.lane.b32.xlu0 %v5289, 40
      %v5331 = vpop.permute.xlu0 %5330
      %5332 = vrot.lane.b32.xlu0 %v5292, 40
      %v5333 = vpop.permute.xlu0 %5332
      %5334 = vrot.lane.b32.xlu0 %v5295, 40
      %v5335 = vpop.permute.xlu0 %5334
      %5336 = vrot.lane.b32.xlu0 %v5298, 40
      %v5337 = vpop.permute.xlu0 %5336
      %5338 = vrot.lane.b32.xlu0 %v5301, 40
      %v5339 = vpop.permute.xlu0 %5338
      %5340 = vrot.lane.b32.xlu0 %v5304, 40
      %v5341 = vpop.permute.xlu0 %5340
      %5342 = vrot.lane.b32.xlu0 %v5307, 40
      %v5343 = vpop.permute.xlu0 %5342
      %5344 = vrot.lane.b32.xlu0 %v5310, 40
      %v5345 = vpop.permute.xlu0 %5344
      %5346 = vrot.lane.b32.xlu0 %v5313, 40
      %v5347 = vpop.permute.xlu0 %5346
      %5348 = vrot.lane.b32.xlu0 %v5316, 40
      %v5349 = vpop.permute.xlu0 %5348
      %5350 = vrot.lane.b32.xlu0 %v5319, 40
      %v5351 = vpop.permute.xlu0 %5350
      %v5384 = vunpack.c.l.b16 %v4294
      %v5385 = vunpack.c.l.b16 %v4295
      %v5386 = vunpack.c.l.b16 %v4296
      %v5387 = vunpack.c.l.b16 %v4297
      %v5388 = vunpack.c.l.b16 %v4298
      %v5389 = vunpack.c.l.b16 %v4299
      %v5390 = vunpack.c.l.b16 %v4300
      %v5391 = vunpack.c.l.b16 %v4301
      %v5392 = vunpack.c.l.b16 %v4302
      %v5393 = vunpack.c.l.b16 %v4303
      %v5394 = vunpack.c.l.b16 %v4304
      %v5395 = vunpack.c.l.b16 %v4305
      %v5396 = vunpack.c.l.b16 %v4306
      %v5397 = vunpack.c.l.b16 %v4307
      %v5398 = vunpack.c.l.b16 %v4308
      %v5399 = vunpack.c.l.b16 %v4309
      %v5400 = vunpack.c.l.b16 %v4310
      %v5401 = vunpack.c.l.b16 %v4311
      %v5402 = vunpack.c.l.b16 %v4312
      %v5403 = vunpack.c.l.b16 %v4313
      %v5404 = vunpack.c.l.b16 %v4314
      %v5405 = vunpack.c.l.b16 %v4315
      %v5406 = vunpack.c.l.b16 %v4316
      %v5407 = vunpack.c.l.b16 %v4317
      %v5408 = vunpack.c.l.b16 %v4318
      %v5409 = vunpack.c.l.b16 %v4319
      %v5410 = vunpack.c.l.b16 %v4320
      %v5411 = vunpack.c.l.b16 %v4321
      %v5412 = vunpack.c.l.b16 %v4322
      %v5413 = vunpack.c.l.b16 %v4323
      %v5414 = vunpack.c.l.b16 %v4324
      %v5415 = vunpack.c.l.b16 %v4325
      %v5416 = vpack.c.b16 %v5385, %v5384
      %v5417 = vpack.c.b16 %v5387, %v5386
      %v5418 = vpack.c.b16 %v5389, %v5388
      %v5419 = vpack.c.b16 %v5391, %v5390
      %v5420 = vpack.c.b16 %v5393, %v5392
      %v5421 = vpack.c.b16 %v5395, %v5394
      %v5422 = vpack.c.b16 %v5397, %v5396
      %v5423 = vpack.c.b16 %v5399, %v5398
      %v5424 = vpack.c.b16 %v5401, %v5400
      %v5425 = vpack.c.b16 %v5403, %v5402
      %v5426 = vpack.c.b16 %v5405, %v5404
      %v5427 = vpack.c.b16 %v5407, %v5406
      %v5428 = vpack.c.b16 %v5409, %v5408
      %v5429 = vpack.c.b16 %v5411, %v5410
      %v5430 = vpack.c.b16 %v5413, %v5412
      %v5431 = vpack.c.b16 %v5415, %v5414
      %5432 = vrot.lane.b32.xlu0 %v5416, 48
      %v5433 = vpop.permute.xlu0 %5432
      %5434 = vrot.lane.b32.xlu0 %v5417, 48
      %v5435 = vpop.permute.xlu0 %5434
      %5436 = vrot.lane.b32.xlu0 %v5418, 48
      %v5437 = vpop.permute.xlu0 %5436
      %5438 = vrot.lane.b32.xlu0 %v5419, 48
      %v5439 = vpop.permute.xlu0 %5438
      %5440 = vrot.lane.b32.xlu0 %v5420, 48
      %v5441 = vpop.permute.xlu0 %5440
      %5442 = vrot.lane.b32.xlu0 %v5421, 48
      %v5443 = vpop.permute.xlu0 %5442
      %5444 = vrot.lane.b32.xlu0 %v5422, 48
      %v5445 = vpop.permute.xlu0 %5444
      %5446 = vrot.lane.b32.xlu0 %v5423, 48
      %v5447 = vpop.permute.xlu0 %5446
      %5448 = vrot.lane.b32.xlu0 %v5424, 48
      %v5449 = vpop.permute.xlu0 %5448
      %5450 = vrot.lane.b32.xlu0 %v5425, 48
      %v5451 = vpop.permute.xlu0 %5450
      %5452 = vrot.lane.b32.xlu0 %v5426, 48
      %v5453 = vpop.permute.xlu0 %5452
      %5454 = vrot.lane.b32.xlu0 %v5427, 48
      %v5455 = vpop.permute.xlu0 %5454
      %5456 = vrot.lane.b32.xlu0 %v5428, 48
      %v5457 = vpop.permute.xlu0 %5456
      %5458 = vrot.lane.b32.xlu0 %v5429, 48
      %v5459 = vpop.permute.xlu0 %5458
      %5460 = vrot.lane.b32.xlu0 %v5430, 48
      %v5461 = vpop.permute.xlu0 %5460
      %5462 = vrot.lane.b32.xlu0 %v5431, 48
      %v5463 = vpop.permute.xlu0 %5462
      %v5480 = vunpack.c.l.b16 %v4326
      %v5481 = vunpack.c.l.b16 %v4327
      %v5482 = vunpack.c.l.b16 %v4328
      %v5483 = vunpack.c.l.b16 %v4329
      %v5484 = vunpack.c.l.b16 %v4330
      %v5485 = vunpack.c.l.b16 %v4331
      %v5486 = vunpack.c.l.b16 %v4332
      %v5487 = vunpack.c.l.b16 %v4333
      %v5488 = vunpack.c.l.b16 %v4334
      %v5489 = vunpack.c.l.b16 %v4335
      %v5490 = vunpack.c.l.b16 %v4336
      %v5491 = vunpack.c.l.b16 %v4337
      %v5492 = vunpack.c.l.b16 %v4338
      %v5493 = vunpack.c.l.b16 %v4339
      %v5494 = vunpack.c.l.b16 %v4340
      %v5495 = vunpack.c.l.b16 %v4341
      %v5496 = vpack.c.b16 %v5480, %v5480
      %v5497 = vpack.c.b16 %v5481, %v5481
      %v5498 = vpack.c.b16 %v5482, %v5482
      %v5499 = vpack.c.b16 %v5483, %v5483
      %v5500 = vpack.c.b16 %v5484, %v5484
      %v5501 = vpack.c.b16 %v5485, %v5485
      %v5502 = vpack.c.b16 %v5486, %v5486
      %v5503 = vpack.c.b16 %v5487, %v5487
      %v5504 = vpack.c.b16 %v5488, %v5488
      %v5505 = vpack.c.b16 %v5489, %v5489
      %v5506 = vpack.c.b16 %v5490, %v5490
      %v5507 = vpack.c.b16 %v5491, %v5491
      %v5508 = vpack.c.b16 %v5492, %v5492
      %v5509 = vpack.c.b16 %v5493, %v5493
      %v5510 = vpack.c.b16 %v5494, %v5494
      %v5511 = vpack.c.b16 %v5495, %v5495
      %v5513 = vshrl.u32 %v5416, 16
      %v5515 = vshll.u32 %v5416, 16
      %v5517 = vrot.slane %v5515, 1
      %v5518 = vor.u32 %v5513, %v5517
      %v5520 = vshll.u32 %v5496, 16
      %v5522 = vrot.slane %v5520, 1
      %v5523 = vsel %vm4486, %v5518, %v5522
      %v5525 = vshrl.u32 %v5417, 16
      %v5527 = vshll.u32 %v5417, 16
      %v5529 = vrot.slane %v5527, 1
      %v5530 = vor.u32 %v5525, %v5529
      %v5532 = vshll.u32 %v5497, 16
      %v5534 = vrot.slane %v5532, 1
      %v5535 = vsel %vm4486, %v5530, %v5534
      %v5537 = vshrl.u32 %v5418, 16
      %v5539 = vshll.u32 %v5418, 16
      %v5541 = vrot.slane %v5539, 1
      %v5542 = vor.u32 %v5537, %v5541
      %v5544 = vshll.u32 %v5498, 16
      %v5546 = vrot.slane %v5544, 1
      %v5547 = vsel %vm4486, %v5542, %v5546
      %v5549 = vshrl.u32 %v5419, 16
      %v5551 = vshll.u32 %v5419, 16
      %v5553 = vrot.slane %v5551, 1
      %v5554 = vor.u32 %v5549, %v5553
      %v5556 = vshll.u32 %v5499, 16
      %v5558 = vrot.slane %v5556, 1
      %v5559 = vsel %vm4486, %v5554, %v5558
      %v5561 = vshrl.u32 %v5420, 16
      %v5563 = vshll.u32 %v5420, 16
      %v5565 = vrot.slane %v5563, 1
      %v5566 = vor.u32 %v5561, %v5565
      %v5568 = vshll.u32 %v5500, 16
      %v5570 = vrot.slane %v5568, 1
      %v5571 = vsel %vm4486, %v5566, %v5570
      %v5573 = vshrl.u32 %v5421, 16
      %v5575 = vshll.u32 %v5421, 16
      %v5577 = vrot.slane %v5575, 1
      %v5578 = vor.u32 %v5573, %v5577
      %v5580 = vshll.u32 %v5501, 16
      %v5582 = vrot.slane %v5580, 1
      %v5583 = vsel %vm4486, %v5578, %v5582
      %v5585 = vshrl.u32 %v5422, 16
      %v5587 = vshll.u32 %v5422, 16
      %v5589 = vrot.slane %v5587, 1
      %v5590 = vor.u32 %v5585, %v5589
      %v5592 = vshll.u32 %v5502, 16
      %v5594 = vrot.slane %v5592, 1
      %v5595 = vsel %vm4486, %v5590, %v5594
      %v5597 = vshrl.u32 %v5423, 16
      %v5599 = vshll.u32 %v5423, 16
      %v5601 = vrot.slane %v5599, 1
      %v5602 = vor.u32 %v5597, %v5601
      %v5604 = vshll.u32 %v5503, 16
      %v5606 = vrot.slane %v5604, 1
      %v5607 = vsel %vm4486, %v5602, %v5606
      %v5609 = vshrl.u32 %v5424, 16
      %v5611 = vshll.u32 %v5424, 16
      %v5613 = vrot.slane %v5611, 1
      %v5614 = vor.u32 %v5609, %v5613
      %v5616 = vshll.u32 %v5504, 16
      %v5618 = vrot.slane %v5616, 1
      %v5619 = vsel %vm4486, %v5614, %v5618
      %v5621 = vshrl.u32 %v5425, 16
      %v5623 = vshll.u32 %v5425, 16
      %v5625 = vrot.slane %v5623, 1
      %v5626 = vor.u32 %v5621, %v5625
      %v5628 = vshll.u32 %v5505, 16
      %v5630 = vrot.slane %v5628, 1
      %v5631 = vsel %vm4486, %v5626, %v5630
      %v5633 = vshrl.u32 %v5426, 16
      %v5635 = vshll.u32 %v5426, 16
      %v5637 = vrot.slane %v5635, 1
      %v5638 = vor.u32 %v5633, %v5637
      %v5640 = vshll.u32 %v5506, 16
      %v5642 = vrot.slane %v5640, 1
      %v5643 = vsel %vm4486, %v5638, %v5642
      %v5645 = vshrl.u32 %v5427, 16
      %v5647 = vshll.u32 %v5427, 16
      %v5649 = vrot.slane %v5647, 1
      %v5650 = vor.u32 %v5645, %v5649
      %v5652 = vshll.u32 %v5507, 16
      %v5654 = vrot.slane %v5652, 1
      %v5655 = vsel %vm4486, %v5650, %v5654
      %v5657 = vshrl.u32 %v5428, 16
      %v5659 = vshll.u32 %v5428, 16
      %v5661 = vrot.slane %v5659, 1
      %v5662 = vor.u32 %v5657, %v5661
      %v5664 = vshll.u32 %v5508, 16
      %v5666 = vrot.slane %v5664, 1
      %v5667 = vsel %vm4486, %v5662, %v5666
      %v5669 = vshrl.u32 %v5429, 16
      %v5671 = vshll.u32 %v5429, 16
      %v5673 = vrot.slane %v5671, 1
      %v5674 = vor.u32 %v5669, %v5673
      %v5676 = vshll.u32 %v5509, 16
      %v5678 = vrot.slane %v5676, 1
      %v5679 = vsel %vm4486, %v5674, %v5678
      %v5681 = vshrl.u32 %v5430, 16
      %v5683 = vshll.u32 %v5430, 16
      %v5685 = vrot.slane %v5683, 1
      %v5686 = vor.u32 %v5681, %v5685
      %v5688 = vshll.u32 %v5510, 16
      %v5690 = vrot.slane %v5688, 1
      %v5691 = vsel %vm4486, %v5686, %v5690
      %v5693 = vshrl.u32 %v5431, 16
      %v5695 = vshll.u32 %v5431, 16
      %v5697 = vrot.slane %v5695, 1
      %v5698 = vor.u32 %v5693, %v5697
      %v5700 = vshll.u32 %v5511, 16
      %v5702 = vrot.slane %v5700, 1
      %v5703 = vsel %vm4486, %v5698, %v5702
      %5704 = vrot.lane.b32.xlu0 %v5523, 56
      %v5705 = vpop.permute.xlu0 %5704
      %5706 = vrot.lane.b32.xlu0 %v5535, 56
      %v5707 = vpop.permute.xlu0 %5706
      %5708 = vrot.lane.b32.xlu0 %v5547, 56
      %v5709 = vpop.permute.xlu0 %5708
      %5710 = vrot.lane.b32.xlu0 %v5559, 56
      %v5711 = vpop.permute.xlu0 %5710
      %5712 = vrot.lane.b32.xlu0 %v5571, 56
      %v5713 = vpop.permute.xlu0 %5712
      %5714 = vrot.lane.b32.xlu0 %v5583, 56
      %v5715 = vpop.permute.xlu0 %5714
      %5716 = vrot.lane.b32.xlu0 %v5595, 56
      %v5717 = vpop.permute.xlu0 %5716
      %5718 = vrot.lane.b32.xlu0 %v5607, 56
      %v5719 = vpop.permute.xlu0 %5718
      %5720 = vrot.lane.b32.xlu0 %v5619, 56
      %v5721 = vpop.permute.xlu0 %5720
      %5722 = vrot.lane.b32.xlu0 %v5631, 56
      %v5723 = vpop.permute.xlu0 %5722
      %5724 = vrot.lane.b32.xlu0 %v5643, 56
      %v5725 = vpop.permute.xlu0 %5724
      %5726 = vrot.lane.b32.xlu0 %v5655, 56
      %v5727 = vpop.permute.xlu0 %5726
      %5728 = vrot.lane.b32.xlu0 %v5667, 56
      %v5729 = vpop.permute.xlu0 %5728
      %5730 = vrot.lane.b32.xlu0 %v5679, 56
      %v5731 = vpop.permute.xlu0 %5730
      %5732 = vrot.lane.b32.xlu0 %v5691, 56
      %v5733 = vpop.permute.xlu0 %5732
      %5734 = vrot.lane.b32.xlu0 %v5703, 56
      %v5735 = vpop.permute.xlu0 %5734
      %v5752 = vunpack.c.l.b16 %v4342
      %v5753 = vunpack.c.l.b16 %v4343
      %v5754 = vunpack.c.l.b16 %v4344
      %v5755 = vunpack.c.l.b16 %v4345
      %v5756 = vunpack.c.l.b16 %v4346
      %v5757 = vunpack.c.l.b16 %v4347
      %v5758 = vunpack.c.l.b16 %v4348
      %v5759 = vunpack.c.l.b16 %v4349
      %v5760 = vunpack.c.l.b16 %v4350
      %v5761 = vunpack.c.l.b16 %v4351
      %v5762 = vunpack.c.l.b16 %v4352
      %v5763 = vunpack.c.l.b16 %v4353
      %v5764 = vunpack.c.l.b16 %v4354
      %v5765 = vunpack.c.l.b16 %v4355
      %v5766 = vunpack.c.l.b16 %v4356
      %v5767 = vunpack.c.l.b16 %v4357
      %v5768 = vpack.c.b16 %v5385, %v5752
      %v5769 = vpack.c.b16 %v5387, %v5753
      %v5770 = vpack.c.b16 %v5389, %v5754
      %v5771 = vpack.c.b16 %v5391, %v5755
      %v5772 = vpack.c.b16 %v5393, %v5756
      %v5773 = vpack.c.b16 %v5395, %v5757
      %v5774 = vpack.c.b16 %v5397, %v5758
      %v5775 = vpack.c.b16 %v5399, %v5759
      %v5776 = vpack.c.b16 %v5401, %v5760
      %v5777 = vpack.c.b16 %v5403, %v5761
      %v5778 = vpack.c.b16 %v5405, %v5762
      %v5779 = vpack.c.b16 %v5407, %v5763
      %v5780 = vpack.c.b16 %v5409, %v5764
      %v5781 = vpack.c.b16 %v5411, %v5765
      %v5782 = vpack.c.b16 %v5413, %v5766
      %v5783 = vpack.c.b16 %v5415, %v5767
      %v5784 = vrot.slane %v5768, 1
      %v5785 = vrot.slane %v5496, 1
      %v5786 = vsel %vm4759, %v5784, %v5785
      %v5787 = vrot.slane %v5769, 1
      %v5788 = vrot.slane %v5497, 1
      %v5789 = vsel %vm4759, %v5787, %v5788
      %v5790 = vrot.slane %v5770, 1
      %v5791 = vrot.slane %v5498, 1
      %v5792 = vsel %vm4759, %v5790, %v5791
      %v5793 = vrot.slane %v5771, 1
      %v5794 = vrot.slane %v5499, 1
      %v5795 = vsel %vm4759, %v5793, %v5794
      %v5796 = vrot.slane %v5772, 1
      %v5797 = vrot.slane %v5500, 1
      %v5798 = vsel %vm4759, %v5796, %v5797
      %v5799 = vrot.slane %v5773, 1
      %v5800 = vrot.slane %v5501, 1
      %v5801 = vsel %vm4759, %v5799, %v5800
      %v5802 = vrot.slane %v5774, 1
      %v5803 = vrot.slane %v5502, 1
      %v5804 = vsel %vm4759, %v5802, %v5803
      %v5805 = vrot.slane %v5775, 1
      %v5806 = vrot.slane %v5503, 1
      %v5807 = vsel %vm4759, %v5805, %v5806
      %v5808 = vrot.slane %v5776, 1
      %v5809 = vrot.slane %v5504, 1
      %v5810 = vsel %vm4759, %v5808, %v5809
      %v5811 = vrot.slane %v5777, 1
      %v5812 = vrot.slane %v5505, 1
      %v5813 = vsel %vm4759, %v5811, %v5812
      %v5814 = vrot.slane %v5778, 1
      %v5815 = vrot.slane %v5506, 1
      %v5816 = vsel %vm4759, %v5814, %v5815
      %v5817 = vrot.slane %v5779, 1
      %v5818 = vrot.slane %v5507, 1
      %v5819 = vsel %vm4759, %v5817, %v5818
      %v5820 = vrot.slane %v5780, 1
      %v5821 = vrot.slane %v5508, 1
      %v5822 = vsel %vm4759, %v5820, %v5821
      %v5823 = vrot.slane %v5781, 1
      %v5824 = vrot.slane %v5509, 1
      %v5825 = vsel %vm4759, %v5823, %v5824
      %v5826 = vrot.slane %v5782, 1
      %v5827 = vrot.slane %v5510, 1
      %v5828 = vsel %vm4759, %v5826, %v5827
      %v5829 = vrot.slane %v5783, 1
      %v5830 = vrot.slane %v5511, 1
      %v5831 = vsel %vm4759, %v5829, %v5830
      %5832 = vrot.lane.b32.xlu0 %v5786, 64
      %v5833 = vpop.permute.xlu0 %5832
      %5834 = vrot.lane.b32.xlu0 %v5789, 64
      %v5835 = vpop.permute.xlu0 %5834
      %5836 = vrot.lane.b32.xlu0 %v5792, 64
      %v5837 = vpop.permute.xlu0 %5836
      %5838 = vrot.lane.b32.xlu0 %v5795, 64
      %v5839 = vpop.permute.xlu0 %5838
      %5840 = vrot.lane.b32.xlu0 %v5798, 64
      %v5841 = vpop.permute.xlu0 %5840
      %5842 = vrot.lane.b32.xlu0 %v5801, 64
      %v5843 = vpop.permute.xlu0 %5842
      %5844 = vrot.lane.b32.xlu0 %v5804, 64
      %v5845 = vpop.permute.xlu0 %5844
      %5846 = vrot.lane.b32.xlu0 %v5807, 64
      %v5847 = vpop.permute.xlu0 %5846
      %5848 = vrot.lane.b32.xlu0 %v5810, 64
      %v5849 = vpop.permute.xlu0 %5848
      %5850 = vrot.lane.b32.xlu0 %v5813, 64
      %v5851 = vpop.permute.xlu0 %5850
      %5852 = vrot.lane.b32.xlu0 %v5816, 64
      %v5853 = vpop.permute.xlu0 %5852
      %5854 = vrot.lane.b32.xlu0 %v5819, 64
      %v5855 = vpop.permute.xlu0 %5854
      %5856 = vrot.lane.b32.xlu0 %v5822, 64
      %v5857 = vpop.permute.xlu0 %5856
      %5858 = vrot.lane.b32.xlu0 %v5825, 64
      %v5859 = vpop.permute.xlu0 %5858
      %5860 = vrot.lane.b32.xlu0 %v5828, 64
      %v5861 = vpop.permute.xlu0 %5860
      %5862 = vrot.lane.b32.xlu0 %v5831, 64
      %v5863 = vpop.permute.xlu0 %5862
      %v5865 = vsel %vm1035, %v4422, %v4680
      %v5867 = vsel %vm1035, %v4423, %v4682
      %v5869 = vsel %vm1035, %v4424, %v4684
      %v5871 = vsel %vm1035, %v4425, %v4686
      %v5873 = vsel %vm1035, %v4426, %v4688
      %v5875 = vsel %vm1035, %v4427, %v4690
      %v5877 = vsel %vm1035, %v4428, %v4692
      %v5879 = vsel %vm1035, %v4429, %v4694
      %v5881 = vsel %vm1035, %v4430, %v4696
      %v5883 = vsel %vm1035, %v4431, %v4698
      %v5885 = vsel %vm1035, %v4432, %v4700
      %v5887 = vsel %vm1035, %v4433, %v4702
      %v5889 = vsel %vm1035, %v4434, %v4704
      %v5891 = vsel %vm1035, %v4435, %v4706
      %v5893 = vsel %vm1035, %v4436, %v4708
      %v5895 = vsel %vm1035, %v4437, %v4710
      %v5897 = vsel %vm1104, %v5865, %v4809
      %v5899 = vsel %vm1104, %v5867, %v4811
      %v5901 = vsel %vm1104, %v5869, %v4813
      %v5903 = vsel %vm1104, %v5871, %v4815
      %v5905 = vsel %vm1104, %v5873, %v4817
      %v5907 = vsel %vm1104, %v5875, %v4819
      %v5909 = vsel %vm1104, %v5877, %v4821
      %v5911 = vsel %vm1104, %v5879, %v4823
      %v5913 = vsel %vm1104, %v5881, %v4825
      %v5915 = vsel %vm1104, %v5883, %v4827
      %v5917 = vsel %vm1104, %v5885, %v4829
      %v5919 = vsel %vm1104, %v5887, %v4831
      %v5921 = vsel %vm1104, %v5889, %v4833
      %v5923 = vsel %vm1104, %v5891, %v4835
      %v5925 = vsel %vm1104, %v5893, %v4837
      %v5927 = vsel %vm1104, %v5895, %v4839
      %vm5928 = vcmask 195584
      %v5930 = vsel %vm5928, %v5897, %v4921
      %v5932 = vsel %vm5928, %v5899, %v4923
      %v5934 = vsel %vm5928, %v5901, %v4925
      %v5936 = vsel %vm5928, %v5903, %v4927
      %v5938 = vsel %vm5928, %v5905, %v4929
      %v5940 = vsel %vm5928, %v5907, %v4931
      %v5942 = vsel %vm5928, %v5909, %v4933
      %v5944 = vsel %vm5928, %v5911, %v4935
      %v5946 = vsel %vm5928, %v5913, %v4937
      %v5948 = vsel %vm5928, %v5915, %v4939
      %v5950 = vsel %vm5928, %v5917, %v4941
      %v5952 = vsel %vm5928, %v5919, %v4943
      %v5954 = vsel %vm5928, %v5921, %v4945
      %v5956 = vsel %vm5928, %v5923, %v4947
      %v5958 = vsel %vm5928, %v5925, %v4949
      %v5960 = vsel %vm5928, %v5927, %v4951
      %vm5961 = vcmask 261120
      %v5963 = vsel %vm5961, %v5930, %v5193
      %v5965 = vsel %vm5961, %v5932, %v5195
      %v5967 = vsel %vm5961, %v5934, %v5197
      %v5969 = vsel %vm5961, %v5936, %v5199
      %v5971 = vsel %vm5961, %v5938, %v5201
      %v5973 = vsel %vm5961, %v5940, %v5203
      %v5975 = vsel %vm5961, %v5942, %v5205
      %v5977 = vsel %vm5961, %v5944, %v5207
      %v5979 = vsel %vm5961, %v5946, %v5209
      %v5981 = vsel %vm5961, %v5948, %v5211
      %v5983 = vsel %vm5961, %v5950, %v5213
      %v5985 = vsel %vm5961, %v5952, %v5215
      %v5987 = vsel %vm5961, %v5954, %v5217
      %v5989 = vsel %vm5961, %v5956, %v5219
      %v5991 = vsel %vm5961, %v5958, %v5221
      %v5993 = vsel %vm5961, %v5960, %v5223
      %vm5994 = vcmask 326656
      %v5996 = vsel %vm5994, %v5963, %v5321
      %v5998 = vsel %vm5994, %v5965, %v5323
      %v6000 = vsel %vm5994, %v5967, %v5325
      %v6002 = vsel %vm5994, %v5969, %v5327
      %v6004 = vsel %vm5994, %v5971, %v5329
      %v6006 = vsel %vm5994, %v5973, %v5331
      %v6008 = vsel %vm5994, %v5975, %v5333
      %v6010 = vsel %vm5994, %v5977, %v5335
      %v6012 = vsel %vm5994, %v5979, %v5337
      %v6014 = vsel %vm5994, %v5981, %v5339
      %v6016 = vsel %vm5994, %v5983, %v5341
      %v6018 = vsel %vm5994, %v5985, %v5343
      %v6020 = vsel %vm5994, %v5987, %v5345
      %v6022 = vsel %vm5994, %v5989, %v5347
      %v6024 = vsel %vm5994, %v5991, %v5349
      %v6026 = vsel %vm5994, %v5993, %v5351
      %vm6027 = vcmask 392192
      %v6029 = vsel %vm6027, %v5996, %v5433
      %v6031 = vsel %vm6027, %v5998, %v5435
      %v6033 = vsel %vm6027, %v6000, %v5437
      %v6035 = vsel %vm6027, %v6002, %v5439
      %v6037 = vsel %vm6027, %v6004, %v5441
      %v6039 = vsel %vm6027, %v6006, %v5443
      %v6041 = vsel %vm6027, %v6008, %v5445
      %v6043 = vsel %vm6027, %v6010, %v5447
      %v6045 = vsel %vm6027, %v6012, %v5449
      %v6047 = vsel %vm6027, %v6014, %v5451
      %v6049 = vsel %vm6027, %v6016, %v5453
      %v6051 = vsel %vm6027, %v6018, %v5455
      %v6053 = vsel %vm6027, %v6020, %v5457
      %v6055 = vsel %vm6027, %v6022, %v5459
      %v6057 = vsel %vm6027, %v6024, %v5461
      %v6059 = vsel %vm6027, %v6026, %v5463
      %vm6060 = vcmask 457728
      %v6062 = vsel %vm6060, %v6029, %v5705
      %v6064 = vsel %vm6060, %v6031, %v5707
      %v6066 = vsel %vm6060, %v6033, %v5709
      %v6068 = vsel %vm6060, %v6035, %v5711
      %v6070 = vsel %vm6060, %v6037, %v5713
      %v6072 = vsel %vm6060, %v6039, %v5715
      %v6074 = vsel %vm6060, %v6041, %v5717
      %v6076 = vsel %vm6060, %v6043, %v5719
      %v6078 = vsel %vm6060, %v6045, %v5721
      %v6080 = vsel %vm6060, %v6047, %v5723
      %v6082 = vsel %vm6060, %v6049, %v5725
      %v6084 = vsel %vm6060, %v6051, %v5727
      %v6086 = vsel %vm6060, %v6053, %v5729
      %v6088 = vsel %vm6060, %v6055, %v5731
      %v6090 = vsel %vm6060, %v6057, %v5733
      %v6092 = vsel %vm6060, %v6059, %v5735
      %vm6093 = vcmask 523264
      %v6095 = vsel %vm6093, %v6062, %v5833
      %v6097 = vsel %vm6093, %v6064, %v5835
      %v6099 = vsel %vm6093, %v6066, %v5837
      %v6101 = vsel %vm6093, %v6068, %v5839
      %v6103 = vsel %vm6093, %v6070, %v5841
      %v6105 = vsel %vm6093, %v6072, %v5843
      %v6107 = vsel %vm6093, %v6074, %v5845
      %v6109 = vsel %vm6093, %v6076, %v5847
      %v6111 = vsel %vm6093, %v6078, %v5849
      %v6113 = vsel %vm6093, %v6080, %v5851
      %v6115 = vsel %vm6093, %v6082, %v5853
      %v6117 = vsel %vm6093, %v6084, %v5855
      %v6119 = vsel %vm6093, %v6086, %v5857
      %v6121 = vsel %vm6093, %v6088, %v5859
      %v6123 = vsel %vm6093, %v6090, %v5861
      %v6125 = vsel %vm6093, %v6092, %v5863
      %v6126 = vld [vmem:[%s6] sm:$0xf]
      %v6127 = vld [vmem:[%s6 + $0x4] sm:$0xf]
      %v6128 = vld [vmem:[%s6 + $0x8] sm:$0xf]
      %v6129 = vld [vmem:[%s6 + $0xc] sm:$0xf]
      %v6130 = vld [vmem:[%s6 + $0x10] sm:$0xf]
      %v6131 = vld [vmem:[%s6 + $0x14] sm:$0xf]
      %v6132 = vld [vmem:[%s6 + $0x18] sm:$0xf]
      %v6133 = vld [vmem:[%s6 + $0x1c] sm:$0xf]
      %v6134 = vld [vmem:[%s6 + $0x20] sm:$0xf]
      %v6135 = vld [vmem:[%s7] sm:$0x1]
      %v6137 = vlaneseq
      %v6138 = vshrl.u32 %v6137, 7
      %v6139 = vsub.s32 0, %v6138
      %v6140 = vrot.slane %v6135, %v6139
      %v6151 = vunpack.c.l.b16 %v6126
      %v6152 = vunpack.c.l.b16 %v6127
      %v6153 = vunpack.c.l.b16 %v6128
      %v6154 = vunpack.c.l.b16 %v6129
      %v6155 = vunpack.c.l.b16 %v6130
      %v6156 = vunpack.c.l.b16 %v6131
      %v6157 = vunpack.c.l.b16 %v6132
      %v6158 = vunpack.c.l.b16 %v6133
      %v6159 = vunpack.c.l.b16 %v6134
      %v6160 = vpack.c.b16 %v6152, %v6151
      %v6161 = vpack.c.b16 %v6154, %v6153
      %v6162 = vpack.c.b16 %v6156, %v6155
      %v6163 = vpack.c.b16 %v6158, %v6157
      %v6164 = vpack.c.b16 %v6159, %v6159
      %vm6169 = vcmask 588800
      %v6170 = vsel %vm6169, %v6095, 0
      %v6172 = vsel %vm6169, %v6097, 0
      %v6174 = vsel %vm6169, %v6099, 0
      %v6176 = vsel %vm6169, %v6101, 0
      %v6178 = vsel %vm6169, %v6103, 0
      %v6180 = vsel %vm6169, %v6105, 0
      %v6182 = vsel %vm6169, %v6107, 0
      %v6184 = vsel %vm6169, %v6109, 0
      %v6186 = vsel %vm6169, %v6111, 0
      %v6188 = vsel %vm6169, %v6113, 0
      %v6190 = vsel %vm6169, %v6115, 0
      %v6192 = vsel %vm6169, %v6117, 0
      %v6194 = vsel %vm6169, %v6119, 0
      %v6196 = vsel %vm6169, %v6121, 0
      %v6198 = vsel %vm6169, %v6123, 0
      %v6200 = vsel %vm6169, %v6125, 0
      %vm6202 = vcmask 1043456
      %v6204 = vsel %vm6202, %v6164, 0
      %6206 = vmatprep.subr.bf16.mxu0 0
      %6207 = vmatpush1.bf16.msra.mxu0 %v6160
      %6208 = vmatprep.subr.bf16.mxu0 0
      %6209 = vmatpush1.bf16.msra.mxu0 %v6161
      %6210 = vmatprep.subr.bf16.mxu0 0
      %6211 = vmatpush1.bf16.msra.mxu0 %v6162
      %6212 = vmatprep.subr.bf16.mxu0 0
      %6213 = vmatpush1.bf16.msra.mxu0 %v6163
      %6214 = vmatprep.subr.bf16.mxu0 0
      %6215 = vmatpush1.bf16.msra.mxu0 %v6204
      %6216 = vmatprep.subr.bf16.mxu0 0
      %6217 = vmatpush1.bf16.msra.mxu0 0
      %6218 = vmatprep.subr.bf16.mxu0 0
      %6219 = vmatpush1.bf16.msra.mxu0 0
      %6220 = vmatprep.subr.bf16.mxu0 0
      %6221 = vmatpush1.bf16.msra.mxu0 0
      %6222 = vmatprep.subr.bf16.mxu0 0
      %6223 = vmatpush1.bf16.msra.mxu0 0
      %6224 = vmatprep.subr.bf16.mxu0 0
      %6225 = vmatpush1.bf16.msra.mxu0 0
      %6226 = vmatprep.subr.bf16.mxu0 0
      %6227 = vmatpush1.bf16.msra.mxu0 0
      %6228 = vmatprep.subr.bf16.mxu0 0
      %6229 = vmatpush1.bf16.msra.mxu0 0
      %6230 = vmatprep.subr.bf16.mxu0 0
      %6231 = vmatpush1.bf16.msra.mxu0 0
      %6232 = vmatprep.subr.bf16.mxu0 0
      %6233 = vmatpush1.bf16.msra.mxu0 0
      %6234 = vmatprep.subr.bf16.mxu0 0
      %6235 = vmatpush1.bf16.msra.mxu0 0
      %6236 = vmatprep.subr.bf16.mxu0 0
      %6237 = vmatpush1.bf16.msra.mxu0 0
      %6238 = vmatprep.mubr.bf16.mxu0 0
      %6239 = vmatmul.mubr.bf16.gmra.mrb[0].mxu0 %v6170
      %v6240 = vpop.f32.mrb[0].mxu0
      %v6241 = vadd.f32 %v6140, %v6240
      %v6242 = vpop.f32.mrb[0].mxu0
      %v6243 = vpop.f32.mrb[0].mxu0
      %v6244 = vadd.f32 %v6140, %v6243
      %v6245 = vpop.f32.mrb[0].mxu0
      %6246 = vmatprep.mubr.bf16.mxu0 0
      %6247 = vmatmul.mubr.bf16.gmra.mrb[0].mxu0 %v6172
      %v6248 = vpop.f32.mrb[0].mxu0
      %v6249 = vadd.f32 %v6140, %v6248
      %v6250 = vpop.f32.mrb[0].mxu0
      %v6251 = vpop.f32.mrb[0].mxu0
      %v6252 = vadd.f32 %v6140, %v6251
      %v6253 = vpop.f32.mrb[0].mxu0
      %6254 = vmatprep.mubr.bf16.mxu0 0
      %6255 = vmatmul.mubr.bf16.gmra.mrb[0].mxu0 %v6174
      %v6256 = vpop.f32.mrb[0].mxu0
      %v6257 = vadd.f32 %v6140, %v6256
      %v6258 = vpop.f32.mrb[0].mxu0
      %v6259 = vpop.f32.mrb[0].mxu0
      %v6260 = vadd.f32 %v6140, %v6259
      %v6261 = vpop.f32.mrb[0].mxu0
      %6262 = vmatprep.mubr.bf16.mxu0 0
      %6263 = vmatmul.mubr.bf16.gmra.mrb[0].mxu0 %v6176
      %v6264 = vpop.f32.mrb[0].mxu0
      %v6265 = vadd.f32 %v6140, %v6264
      %v6266 = vpop.f32.mrb[0].mxu0
      %v6267 = vpop.f32.mrb[0].mxu0
      %v6268 = vadd.f32 %v6140, %v6267
      %v6269 = vpop.f32.mrb[0].mxu0
      %6270 = vmatprep.mubr.bf16.mxu0 0
      %6271 = vmatmul.mubr.bf16.gmra.mrb[0].mxu0 %v6178
      %v6272 = vpop.f32.mrb[0].mxu0
      %v6273 = vadd.f32 %v6140, %v6272
      %v6274 = vpop.f32.mrb[0].mxu0
      %v6275 = vpop.f32.mrb[0].mxu0
      %v6276 = vadd.f32 %v6140, %v6275
      %v6277 = vpop.f32.mrb[0].mxu0
      %6278 = vmatprep.mubr.bf16.mxu0 0
      %6279 = vmatmul.mubr.bf16.gmra.mrb[0].mxu0 %v6180
      %v6280 = vpop.f32.mrb[0].mxu0
      %v6281 = vadd.f32 %v6140, %v6280
      %v6282 = vpop.f32.mrb[0].mxu0
      %v6283 = vpop.f32.mrb[0].mxu0
      %v6284 = vadd.f32 %v6140, %v6283
      %v6285 = vpop.f32.mrb[0].mxu0
      %6286 = vmatprep.mubr.bf16.mxu0 0
      %6287 = vmatmul.mubr.bf16.gmra.mrb[0].mxu0 %v6182
      %v6288 = vpop.f32.mrb[0].mxu0
      %v6289 = vadd.f32 %v6140, %v6288
      %v6290 = vpop.f32.mrb[0].mxu0
      %v6291 = vpop.f32.mrb[0].mxu0
      %v6292 = vadd.f32 %v6140, %v6291
      %v6293 = vpop.f32.mrb[0].mxu0
      %6294 = vmatprep.mubr.bf16.mxu0 0
      %6295 = vmatmul.mubr.bf16.gmra.mrb[0].mxu0 %v6184
      %v6296 = vpop.f32.mrb[0].mxu0
      %v6297 = vadd.f32 %v6140, %v6296
      %v6298 = vpop.f32.mrb[0].mxu0
      %v6299 = vpop.f32.mrb[0].mxu0
      %v6300 = vadd.f32 %v6140, %v6299
      %v6301 = vpop.f32.mrb[0].mxu0
      %6302 = vmatprep.mubr.bf16.mxu0 0
      %6303 = vmatmul.mubr.bf16.gmra.mrb[0].mxu0 %v6186
      %v6304 = vpop.f32.mrb[0].mxu0
      %v6305 = vadd.f32 %v6140, %v6304
      %v6306 = vpop.f32.mrb[0].mxu0
      %v6307 = vpop.f32.mrb[0].mxu0
      %v6308 = vadd.f32 %v6140, %v6307
      %v6309 = vpop.f32.mrb[0].mxu0
      %6310 = vmatprep.mubr.bf16.mxu0 0
      %6311 = vmatmul.mubr.bf16.gmra.mrb[0].mxu0 %v6188
      %v6312 = vpop.f32.mrb[0].mxu0
      %v6313 = vadd.f32 %v6140, %v6312
      %v6314 = vpop.f32.mrb[0].mxu0
      %v6315 = vpop.f32.mrb[0].mxu0
      %v6316 = vadd.f32 %v6140, %v6315
      %v6317 = vpop.f32.mrb[0].mxu0
      %6318 = vmatprep.mubr.bf16.mxu0 0
      %6319 = vmatmul.mubr.bf16.gmra.mrb[0].mxu0 %v6190
      %v6320 = vpop.f32.mrb[0].mxu0
      %v6321 = vadd.f32 %v6140, %v6320
      %v6322 = vpop.f32.mrb[0].mxu0
      %v6323 = vpop.f32.mrb[0].mxu0
      %v6324 = vadd.f32 %v6140, %v6323
      %v6325 = vpop.f32.mrb[0].mxu0
      %6326 = vmatprep.mubr.bf16.mxu0 0
      %6327 = vmatmul.mubr.bf16.gmra.mrb[0].mxu0 %v6192
      %v6328 = vpop.f32.mrb[0].mxu0
      %v6329 = vadd.f32 %v6140, %v6328
      %v6330 = vpop.f32.mrb[0].mxu0
      %v6331 = vpop.f32.mrb[0].mxu0
      %v6332 = vadd.f32 %v6140, %v6331
      %v6333 = vpop.f32.mrb[0].mxu0
      %6334 = vmatprep.mubr.bf16.mxu0 0
      %6335 = vmatmul.mubr.bf16.gmra.mrb[0].mxu0 %v6194
      %v6336 = vpop.f32.mrb[0].mxu0
      %v6337 = vadd.f32 %v6140, %v6336
      %v6338 = vpop.f32.mrb[0].mxu0
      %v6339 = vpop.f32.mrb[0].mxu0
      %v6340 = vadd.f32 %v6140, %v6339
      %v6341 = vpop.f32.mrb[0].mxu0
      %6342 = vmatprep.mubr.bf16.mxu0 0
      %6343 = vmatmul.mubr.bf16.gmra.mrb[0].mxu0 %v6196
      %v6344 = vpop.f32.mrb[0].mxu0
      %v6345 = vadd.f32 %v6140, %v6344
      %v6346 = vpop.f32.mrb[0].mxu0
      %v6347 = vpop.f32.mrb[0].mxu0
      %v6348 = vadd.f32 %v6140, %v6347
      %v6349 = vpop.f32.mrb[0].mxu0
      %6350 = vmatprep.mubr.bf16.mxu0 0
      %6351 = vmatmul.mubr.bf16.gmra.mrb[0].mxu0 %v6198
      %v6352 = vpop.f32.mrb[0].mxu0
      %v6353 = vadd.f32 %v6140, %v6352
      %v6354 = vpop.f32.mrb[0].mxu0
      %v6355 = vpop.f32.mrb[0].mxu0
      %v6356 = vadd.f32 %v6140, %v6355
      %v6357 = vpop.f32.mrb[0].mxu0
      %6358 = vmatprep.mubr.bf16.mxu0 0
      %6359 = vmatmul.mubr.bf16.gmra.mrb[0].mxu0 %v6200
      %v6360 = vpop.f32.mrb[0].mxu0
      %v6361 = vadd.f32 %v6140, %v6360
      %v6362 = vpop.f32.mrb[0].mxu0
      %v6363 = vpop.f32.mrb[0].mxu0
      %v6364 = vadd.f32 %v6140, %v6363
      %v6365 = vpop.f32.mrb[0].mxu0
      %6366 = vdwg.mxu0
      %v6367 = vmax.f32 %v6241, 0.0
      %v6368 = vmax.f32 %v6244, 0.0
      %v6369 = vmax.f32 %v6249, 0.0
      %v6370 = vmax.f32 %v6252, 0.0
      %v6371 = vmax.f32 %v6257, 0.0
      %v6372 = vmax.f32 %v6260, 0.0
      %v6373 = vmax.f32 %v6265, 0.0
      %v6374 = vmax.f32 %v6268, 0.0
      %v6375 = vmax.f32 %v6273, 0.0
      %v6376 = vmax.f32 %v6276, 0.0
      %v6377 = vmax.f32 %v6281, 0.0
      %v6378 = vmax.f32 %v6284, 0.0
      %v6379 = vmax.f32 %v6289, 0.0
      %v6380 = vmax.f32 %v6292, 0.0
      %v6381 = vmax.f32 %v6297, 0.0
      %v6382 = vmax.f32 %v6300, 0.0
      %v6383 = vmax.f32 %v6305, 0.0
      %v6384 = vmax.f32 %v6308, 0.0
      %v6385 = vmax.f32 %v6313, 0.0
      %v6386 = vmax.f32 %v6316, 0.0
      %v6387 = vmax.f32 %v6321, 0.0
      %v6388 = vmax.f32 %v6324, 0.0
      %v6389 = vmax.f32 %v6329, 0.0
      %v6390 = vmax.f32 %v6332, 0.0
      %v6391 = vmax.f32 %v6337, 0.0
      %v6392 = vmax.f32 %v6340, 0.0
      %v6393 = vmax.f32 %v6345, 0.0
      %v6394 = vmax.f32 %v6348, 0.0
      %v6395 = vmax.f32 %v6353, 0.0
      %v6396 = vmax.f32 %v6356, 0.0
      %v6397 = vmax.f32 %v6361, 0.0
      %v6398 = vmax.f32 %v6364, 0.0
      %v6399 = vpack.c.bf16 %v6368, %v6367
      %v6400 = vpack.c.bf16 %v6370, %v6369
      %v6401 = vpack.c.bf16 %v6372, %v6371
      %v6402 = vpack.c.bf16 %v6374, %v6373
      %v6403 = vpack.c.bf16 %v6376, %v6375
      %v6404 = vpack.c.bf16 %v6378, %v6377
      %v6405 = vpack.c.bf16 %v6380, %v6379
      %v6406 = vpack.c.bf16 %v6382, %v6381
      %v6407 = vpack.c.bf16 %v6384, %v6383
      %v6408 = vpack.c.bf16 %v6386, %v6385
      %v6409 = vpack.c.bf16 %v6388, %v6387
      %v6410 = vpack.c.bf16 %v6390, %v6389
      %v6411 = vpack.c.bf16 %v6392, %v6391
      %v6412 = vpack.c.bf16 %v6394, %v6393
      %v6413 = vpack.c.bf16 %v6396, %v6395
      %v6414 = vpack.c.bf16 %v6398, %v6397
      %v6431 = vunpack.c.l.b16 %v6399
      %v6432 = vunpack.c.h.b16 %v6399
      %v6433 = vunpack.c.l.b16 %v6400
      %v6434 = vunpack.c.h.b16 %v6400
      %v6435 = vunpack.c.l.b16 %v6401
      %v6436 = vunpack.c.h.b16 %v6401
      %v6437 = vunpack.c.l.b16 %v6402
      %v6438 = vunpack.c.h.b16 %v6402
      %v6439 = vunpack.c.l.b16 %v6403
      %v6440 = vunpack.c.h.b16 %v6403
      %v6441 = vunpack.c.l.b16 %v6404
      %v6442 = vunpack.c.h.b16 %v6404
      %v6443 = vunpack.c.l.b16 %v6405
      %v6444 = vunpack.c.h.b16 %v6405
      %v6445 = vunpack.c.l.b16 %v6406
      %v6446 = vunpack.c.h.b16 %v6406
      %v6447 = vunpack.c.l.b16 %v6407
      %v6448 = vunpack.c.h.b16 %v6407
      %v6449 = vunpack.c.l.b16 %v6408
      %v6450 = vunpack.c.h.b16 %v6408
      %v6451 = vunpack.c.l.b16 %v6409
      %v6452 = vunpack.c.h.b16 %v6409
      %v6453 = vunpack.c.l.b16 %v6410
      %v6454 = vunpack.c.h.b16 %v6410
      %v6455 = vunpack.c.l.b16 %v6411
      %v6456 = vunpack.c.h.b16 %v6411
      %v6457 = vunpack.c.l.b16 %v6412
      %v6458 = vunpack.c.h.b16 %v6412
      %v6459 = vunpack.c.l.b16 %v6413
      %v6460 = vunpack.c.h.b16 %v6413
      %v6461 = vunpack.c.l.b16 %v6414
      %v6462 = vunpack.c.h.b16 %v6414
      %v6463 = vpack.c.b16 %v6431, %v6431
      %v6464 = vpack.c.b16 %v6432, %v6432
      %v6465 = vpack.c.b16 %v6433, %v6433
      %v6466 = vpack.c.b16 %v6434, %v6434
      %v6467 = vpack.c.b16 %v6435, %v6435
      %v6468 = vpack.c.b16 %v6436, %v6436
      %v6469 = vpack.c.b16 %v6437, %v6437
      %v6470 = vpack.c.b16 %v6438, %v6438
      %v6471 = vpack.c.b16 %v6439, %v6439
      %v6472 = vpack.c.b16 %v6440, %v6440
      %v6473 = vpack.c.b16 %v6441, %v6441
      %v6474 = vpack.c.b16 %v6442, %v6442
      %v6475 = vpack.c.b16 %v6443, %v6443
      %v6476 = vpack.c.b16 %v6444, %v6444
      %v6477 = vpack.c.b16 %v6445, %v6445
      %v6478 = vpack.c.b16 %v6446, %v6446
      %v6479 = vpack.c.b16 %v6447, %v6447
      %v6480 = vpack.c.b16 %v6448, %v6448
      %v6481 = vpack.c.b16 %v6449, %v6449
      %v6482 = vpack.c.b16 %v6450, %v6450
      %v6483 = vpack.c.b16 %v6451, %v6451
      %v6484 = vpack.c.b16 %v6452, %v6452
      %v6485 = vpack.c.b16 %v6453, %v6453
      %v6486 = vpack.c.b16 %v6454, %v6454
      %v6487 = vpack.c.b16 %v6455, %v6455
      %v6488 = vpack.c.b16 %v6456, %v6456
      %v6489 = vpack.c.b16 %v6457, %v6457
      %v6490 = vpack.c.b16 %v6458, %v6458
      %v6491 = vpack.c.b16 %v6459, %v6459
      %v6492 = vpack.c.b16 %v6460, %v6460
      %v6493 = vpack.c.b16 %v6461, %v6461
      %v6494 = vpack.c.b16 %v6462, %v6462
      %v6496 = vshrl.u32 %v6463, 16
      %v6498 = vrot.slane %v6496, 7
      %v6499 = vshll.u32 %v6463, 16
      %v6501 = vor.u32 %v6498, %v6499
      %v6502 = vrot.slane %v6498, 4
      %v6504 = vshrl.u32 %v6464, 16
      %v6506 = vrot.slane %v6504, 7
      %v6507 = vshll.u32 %v6464, 16
      %v6509 = vor.u32 %v6506, %v6507
      %v6510 = vsel %vm3032, %v6502, %v6509
      %v6511 = vrot.slane %v6506, 4
      %v6513 = vshrl.u32 %v6465, 16
      %v6515 = vrot.slane %v6513, 7
      %v6516 = vshll.u32 %v6465, 16
      %v6518 = vor.u32 %v6515, %v6516
      %v6519 = vrot.slane %v6515, 4
      %v6521 = vshrl.u32 %v6466, 16
      %v6523 = vrot.slane %v6521, 7
      %v6524 = vshll.u32 %v6466, 16
      %v6526 = vor.u32 %v6523, %v6524
      %v6527 = vsel %vm3032, %v6519, %v6526
      %v6528 = vrot.slane %v6523, 4
      %v6530 = vshrl.u32 %v6467, 16
      %v6532 = vrot.slane %v6530, 7
      %v6533 = vshll.u32 %v6467, 16
      %v6535 = vor.u32 %v6532, %v6533
      %v6536 = vrot.slane %v6532, 4
      %v6538 = vshrl.u32 %v6468, 16
      %v6540 = vrot.slane %v6538, 7
      %v6541 = vshll.u32 %v6468, 16
      %v6543 = vor.u32 %v6540, %v6541
      %v6544 = vsel %vm3032, %v6536, %v6543
      %v6545 = vrot.slane %v6540, 4
      %v6547 = vshrl.u32 %v6469, 16
      %v6549 = vrot.slane %v6547, 7
      %v6550 = vshll.u32 %v6469, 16
      %v6552 = vor.u32 %v6549, %v6550
      %v6553 = vrot.slane %v6549, 4
      %v6555 = vshrl.u32 %v6470, 16
      %v6557 = vrot.slane %v6555, 7
      %v6558 = vshll.u32 %v6470, 16
      %v6560 = vor.u32 %v6557, %v6558
      %v6561 = vsel %vm3032, %v6553, %v6560
      %v6562 = vrot.slane %v6557, 4
      %v6564 = vshrl.u32 %v6471, 16
      %v6566 = vrot.slane %v6564, 7
      %v6567 = vshll.u32 %v6471, 16
      %v6569 = vor.u32 %v6566, %v6567
      %v6570 = vrot.slane %v6566, 4
      %v6572 = vshrl.u32 %v6472, 16
      %v6574 = vrot.slane %v6572, 7
      %v6575 = vshll.u32 %v6472, 16
      %v6577 = vor.u32 %v6574, %v6575
      %v6578 = vsel %vm3032, %v6570, %v6577
      %v6579 = vrot.slane %v6574, 4
      %v6581 = vshrl.u32 %v6473, 16
      %v6583 = vrot.slane %v6581, 7
      %v6584 = vshll.u32 %v6473, 16
      %v6586 = vor.u32 %v6583, %v6584
      %v6587 = vrot.slane %v6583, 4
      %v6589 = vshrl.u32 %v6474, 16
      %v6591 = vrot.slane %v6589, 7
      %v6592 = vshll.u32 %v6474, 16
      %v6594 = vor.u32 %v6591, %v6592
      %v6595 = vsel %vm3032, %v6587, %v6594
      %v6596 = vrot.slane %v6591, 4
      %v6598 = vshrl.u32 %v6475, 16
      %v6600 = vrot.slane %v6598, 7
      %v6601 = vshll.u32 %v6475, 16
      %v6603 = vor.u32 %v6600, %v6601
      %v6604 = vrot.slane %v6600, 4
      %v6606 = vshrl.u32 %v6476, 16
      %v6608 = vrot.slane %v6606, 7
      %v6609 = vshll.u32 %v6476, 16
      %v6611 = vor.u32 %v6608, %v6609
      %v6612 = vsel %vm3032, %v6604, %v6611
      %v6613 = vrot.slane %v6608, 4
      %v6615 = vshrl.u32 %v6477, 16
      %v6617 = vrot.slane %v6615, 7
      %v6618 = vshll.u32 %v6477, 16
      %v6620 = vor.u32 %v6617, %v6618
      %v6621 = vrot.slane %v6617, 4
      %v6623 = vshrl.u32 %v6478, 16
      %v6625 = vrot.slane %v6623, 7
      %v6626 = vshll.u32 %v6478, 16
      %v6628 = vor.u32 %v6625, %v6626
      %v6629 = vsel %vm3032, %v6621, %v6628
      %v6630 = vrot.slane %v6625, 4
      %v6632 = vshrl.u32 %v6479, 16
      %v6634 = vrot.slane %v6632, 7
      %v6635 = vshll.u32 %v6479, 16
      %v6637 = vor.u32 %v6634, %v6635
      %v6638 = vrot.slane %v6634, 4
      %v6640 = vshrl.u32 %v6480, 16
      %v6642 = vrot.slane %v6640, 7
      %v6643 = vshll.u32 %v6480, 16
      %v6645 = vor.u32 %v6642, %v6643
      %v6646 = vsel %vm3032, %v6638, %v6645
      %v6647 = vrot.slane %v6642, 4
      %v6649 = vshrl.u32 %v6481, 16
      %v6651 = vrot.slane %v6649, 7
      %v6652 = vshll.u32 %v6481, 16
      %v6654 = vor.u32 %v6651, %v6652
      %v6655 = vrot.slane %v6651, 4
      %v6657 = vshrl.u32 %v6482, 16
      %v6659 = vrot.slane %v6657, 7
      %v6660 = vshll.u32 %v6482, 16
      %v6662 = vor.u32 %v6659, %v6660
      %v6663 = vsel %vm3032, %v6655, %v6662
      %v6664 = vrot.slane %v6659, 4
      %v6666 = vshrl.u32 %v6483, 16
      %v6668 = vrot.slane %v6666, 7
      %v6669 = vshll.u32 %v6483, 16
      %v6671 = vor.u32 %v6668, %v6669
      %v6672 = vrot.slane %v6668, 4
      %v6674 = vshrl.u32 %v6484, 16
      %v6676 = vrot.slane %v6674, 7
      %v6677 = vshll.u32 %v6484, 16
      %v6679 = vor.u32 %v6676, %v6677
      %v6680 = vsel %vm3032, %v6672, %v6679
      %v6681 = vrot.slane %v6676, 4
      %v6683 = vshrl.u32 %v6485, 16
      %v6685 = vrot.slane %v6683, 7
      %v6686 = vshll.u32 %v6485, 16
      %v6688 = vor.u32 %v6685, %v6686
      %v6689 = vrot.slane %v6685, 4
      %v6691 = vshrl.u32 %v6486, 16
      %v6693 = vrot.slane %v6691, 7
      %v6694 = vshll.u32 %v6486, 16
      %v6696 = vor.u32 %v6693, %v6694
      %v6697 = vsel %vm3032, %v6689, %v6696
      %v6698 = vrot.slane %v6693, 4
      %v6700 = vshrl.u32 %v6487, 16
      %v6702 = vrot.slane %v6700, 7
      %v6703 = vshll.u32 %v6487, 16
      %v6705 = vor.u32 %v6702, %v6703
      %v6706 = vrot.slane %v6702, 4
      %v6708 = vshrl.u32 %v6488, 16
      %v6710 = vrot.slane %v6708, 7
      %v6711 = vshll.u32 %v6488, 16
      %v6713 = vor.u32 %v6710, %v6711
      %v6714 = vsel %vm3032, %v6706, %v6713
      %v6715 = vrot.slane %v6710, 4
      %v6717 = vshrl.u32 %v6489, 16
      %v6719 = vrot.slane %v6717, 7
      %v6720 = vshll.u32 %v6489, 16
      %v6722 = vor.u32 %v6719, %v6720
      %v6723 = vrot.slane %v6719, 4
      %v6725 = vshrl.u32 %v6490, 16
      %v6727 = vrot.slane %v6725, 7
      %v6728 = vshll.u32 %v6490, 16
      %v6730 = vor.u32 %v6727, %v6728
      %v6731 = vsel %vm3032, %v6723, %v6730
      %v6732 = vrot.slane %v6727, 4
      %v6734 = vshrl.u32 %v6491, 16
      %v6736 = vrot.slane %v6734, 7
      %v6737 = vshll.u32 %v6491, 16
      %v6739 = vor.u32 %v6736, %v6737
      %v6740 = vrot.slane %v6736, 4
      %v6742 = vshrl.u32 %v6492, 16
      %v6744 = vrot.slane %v6742, 7
      %v6745 = vshll.u32 %v6492, 16
      %v6747 = vor.u32 %v6744, %v6745
      %v6748 = vsel %vm3032, %v6740, %v6747
      %v6749 = vrot.slane %v6744, 4
      %v6751 = vshrl.u32 %v6493, 16
      %v6753 = vrot.slane %v6751, 7
      %v6754 = vshll.u32 %v6493, 16
      %v6756 = vor.u32 %v6753, %v6754
      %v6757 = vrot.slane %v6753, 4
      %v6759 = vshrl.u32 %v6494, 16
      %v6761 = vrot.slane %v6759, 7
      %v6762 = vshll.u32 %v6494, 16
      %v6764 = vor.u32 %v6761, %v6762
      %v6765 = vsel %vm3032, %v6757, %v6764
      %v6766 = vrot.slane %v6761, 4
      %s6815 = scalar_lea.vmem [#allocation4], 12
      %vm6816 = vcmask 60416
      %vm6817 = vmand %vm6816, %vm479
      %v6818 = vld [vmem:[%s6815] sm:$0xf]
      %v6819 = vsel %vm6817, %v6501, %v6818
      %6820 = vst [vmem:[%s6815] sm:$0xf] %v6819
      %6821 = vst.msk [vmem:[%s6815 + $0x4] sm:$0xf] %vm414, %v6510
      %v6822 = vld [vmem:[%s6815 + $0x8] sm:$0x1]
      %v6823 = vsel %vm424, %v6511, %v6822
      %6824 = vst [vmem:[%s6815 + $0x8] sm:$0x1] %v6823
      %v6825 = vld [vmem:[%s6815 + $0xc] sm:$0xf]
      %v6826 = vsel %vm6817, %v6518, %v6825
      %6827 = vst [vmem:[%s6815 + $0xc] sm:$0xf] %v6826
      %6828 = vst.msk [vmem:[%s6815 + $0x10] sm:$0xf] %vm414, %v6527
      %v6829 = vld [vmem:[%s6815 + $0x14] sm:$0x1]
      %v6830 = vsel %vm424, %v6528, %v6829
      %6831 = vst [vmem:[%s6815 + $0x14] sm:$0x1] %v6830
      %v6832 = vld [vmem:[%s6815 + $0x18] sm:$0xf]
      %v6833 = vsel %vm6817, %v6535, %v6832
      %6834 = vst [vmem:[%s6815 + $0x18] sm:$0xf] %v6833
      %6835 = vst.msk [vmem:[%s6815 + $0x1c] sm:$0xf] %vm414, %v6544
      %v6836 = vld [vmem:[%s6815 + $0x20] sm:$0x1]
      %v6837 = vsel %vm424, %v6545, %v6836
      %6838 = vst [vmem:[%s6815 + $0x20] sm:$0x1] %v6837
      %v6839 = vld [vmem:[%s6815 + $0x24] sm:$0xf]
      %v6840 = vsel %vm6817, %v6552, %v6839
      %6841 = vst [vmem:[%s6815 + $0x24] sm:$0xf] %v6840
      %6842 = vst.msk [vmem:[%s6815 + $0x28] sm:$0xf] %vm414, %v6561
      %v6843 = vld [vmem:[%s6815 + $0x2c] sm:$0x1]
      %v6844 = vsel %vm424, %v6562, %v6843
      %6845 = vst [vmem:[%s6815 + $0x2c] sm:$0x1] %v6844
      %v6846 = vld [vmem:[%s6815 + $0x30] sm:$0xf]
      %v6847 = vsel %vm6817, %v6569, %v6846
      %6848 = vst [vmem:[%s6815 + $0x30] sm:$0xf] %v6847
      %6849 = vst.msk [vmem:[%s6815 + $0x34] sm:$0xf] %vm414, %v6578
      %v6850 = vld [vmem:[%s6815 + $0x38] sm:$0x1]
      %v6851 = vsel %vm424, %v6579, %v6850
      %6852 = vst [vmem:[%s6815 + $0x38] sm:$0x1] %v6851
      %v6853 = vld [vmem:[%s6815 + $0x3c] sm:$0xf]
      %v6854 = vsel %vm6817, %v6586, %v6853
      %6855 = vst [vmem:[%s6815 + $0x3c] sm:$0xf] %v6854
      %6856 = vst.msk [vmem:[%s6815 + $0x40] sm:$0xf] %vm414, %v6595
      %v6857 = vld [vmem:[%s6815 + $0x44] sm:$0x1]
      %v6858 = vsel %vm424, %v6596, %v6857
      %6859 = vst [vmem:[%s6815 + $0x44] sm:$0x1] %v6858
      %v6860 = vld [vmem:[%s6815 + $0x48] sm:$0xf]
      %v6861 = vsel %vm6817, %v6603, %v6860
      %6862 = vst [vmem:[%s6815 + $0x48] sm:$0xf] %v6861
      %6863 = vst.msk [vmem:[%s6815 + $0x4c] sm:$0xf] %vm414, %v6612
      %v6864 = vld [vmem:[%s6815 + $0x50] sm:$0x1]
      %v6865 = vsel %vm424, %v6613, %v6864
      %6866 = vst [vmem:[%s6815 + $0x50] sm:$0x1] %v6865
      %v6867 = vld [vmem:[%s6815 + $0x54] sm:$0xf]
      %v6868 = vsel %vm6817, %v6620, %v6867
      %6869 = vst [vmem:[%s6815 + $0x54] sm:$0xf] %v6868
      %6870 = vst.msk [vmem:[%s6815 + $0x58] sm:$0xf] %vm414, %v6629
      %v6871 = vld [vmem:[%s6815 + $0x5c] sm:$0x1]
      %v6872 = vsel %vm424, %v6630, %v6871
      %6873 = vst [vmem:[%s6815 + $0x5c] sm:$0x1] %v6872
      %v6874 = vld [vmem:[%s6815 + $0x60] sm:$0xf]
      %v6875 = vsel %vm6817, %v6637, %v6874
      %6876 = vst [vmem:[%s6815 + $0x60] sm:$0xf] %v6875
      %6877 = vst.msk [vmem:[%s6815 + $0x64] sm:$0xf] %vm414, %v6646
      %v6878 = vld [vmem:[%s6815 + $0x68] sm:$0x1]
      %v6879 = vsel %vm424, %v6647, %v6878
      %6880 = vst [vmem:[%s6815 + $0x68] sm:$0x1] %v6879
      %v6881 = vld [vmem:[%s6815 + $0x6c] sm:$0xf]
      %v6882 = vsel %vm6817, %v6654, %v6881
      %6883 = vst [vmem:[%s6815 + $0x6c] sm:$0xf] %v6882
      %6884 = vst.msk [vmem:[%s6815 + $0x70] sm:$0xf] %vm414, %v6663
      %v6885 = vld [vmem:[%s6815 + $0x74] sm:$0x1]
      %v6886 = vsel %vm424, %v6664, %v6885
      %6887 = vst [vmem:[%s6815 + $0x74] sm:$0x1] %v6886
      %v6888 = vld [vmem:[%s6815 + $0x78] sm:$0xf]
      %v6889 = vsel %vm6817, %v6671, %v6888
      %6890 = vst [vmem:[%s6815 + $0x78] sm:$0xf] %v6889
      %6891 = vst.msk [vmem:[%s6815 + $0x7c] sm:$0xf] %vm414, %v6680
      %v6892 = vld [vmem:[%s6815 + $0x80] sm:$0x1]
      %v6893 = vsel %vm424, %v6681, %v6892
      %6894 = vst [vmem:[%s6815 + $0x80] sm:$0x1] %v6893
      %v6895 = vld [vmem:[%s6815 + $0x84] sm:$0xf]
      %v6896 = vsel %vm6817, %v6688, %v6895
      %6897 = vst [vmem:[%s6815 + $0x84] sm:$0xf] %v6896
      %6898 = vst.msk [vmem:[%s6815 + $0x88] sm:$0xf] %vm414, %v6697
      %v6899 = vld [vmem:[%s6815 + $0x8c] sm:$0x1]
      %v6900 = vsel %vm424, %v6698, %v6899
      %6901 = vst [vmem:[%s6815 + $0x8c] sm:$0x1] %v6900
      %v6902 = vld [vmem:[%s6815 + $0x90] sm:$0xf]
      %v6903 = vsel %vm6817, %v6705, %v6902
      %6904 = vst [vmem:[%s6815 + $0x90] sm:$0xf] %v6903
      %6905 = vst.msk [vmem:[%s6815 + $0x94] sm:$0xf] %vm414, %v6714
      %v6906 = vld [vmem:[%s6815 + $0x98] sm:$0x1]
      %v6907 = vsel %vm424, %v6715, %v6906
      %6908 = vst [vmem:[%s6815 + $0x98] sm:$0x1] %v6907
      %v6909 = vld [vmem:[%s6815 + $0x9c] sm:$0xf]
      %v6910 = vsel %vm6817, %v6722, %v6909
      %6911 = vst [vmem:[%s6815 + $0x9c] sm:$0xf] %v6910
      %6912 = vst.msk [vmem:[%s6815 + $0xa0] sm:$0xf] %vm414, %v6731
      %v6913 = vld [vmem:[%s6815 + $0xa4] sm:$0x1]
      %v6914 = vsel %vm424, %v6732, %v6913
      %6915 = vst [vmem:[%s6815 + $0xa4] sm:$0x1] %v6914
      %v6916 = vld [vmem:[%s6815 + $0xa8] sm:$0xf]
      %v6917 = vsel %vm6817, %v6739, %v6916
      %6918 = vst [vmem:[%s6815 + $0xa8] sm:$0xf] %v6917
      %6919 = vst.msk [vmem:[%s6815 + $0xac] sm:$0xf] %vm414, %v6748
      %v6920 = vld [vmem:[%s6815 + $0xb0] sm:$0x1]
      %v6921 = vsel %vm424, %v6749, %v6920
      %6922 = vst [vmem:[%s6815 + $0xb0] sm:$0x1] %v6921
      %v6923 = vld [vmem:[%s6815 + $0xb4] sm:$0xf]
      %v6924 = vsel %vm6817, %v6756, %v6923
      %6925 = vst [vmem:[%s6815 + $0xb4] sm:$0xf] %v6924
      %6926 = vst.msk [vmem:[%s6815 + $0xb8] sm:$0xf] %vm414, %v6765
      %v6927 = vld [vmem:[%s6815 + $0xbc] sm:$0x1]
      %v6928 = vsel %vm424, %v6766, %v6927
      %6929 = vst [vmem:[%s6815 + $0xbc] sm:$0x1] %v6928
      %v6930 = vld [vmem:[#allocation4] sm:$0xf]
      %v6931 = vld [vmem:[#allocation4 + $0x4] sm:$0xf]
      %v6932 = vld [vmem:[#allocation4 + $0xc] sm:$0xf]
      %v6933 = vld [vmem:[#allocation4 + $0x10] sm:$0xf]
      %v6934 = vld [vmem:[#allocation4 + $0x18] sm:$0xf]
      %v6935 = vld [vmem:[#allocation4 + $0x1c] sm:$0xf]
      %v6936 = vld [vmem:[#allocation4 + $0x24] sm:$0xf]
      %v6937 = vld [vmem:[#allocation4 + $0x28] sm:$0xf]
      %v6938 = vld [vmem:[#allocation4 + $0x30] sm:$0xf]
      %v6939 = vld [vmem:[#allocation4 + $0x34] sm:$0xf]
      %v6940 = vld [vmem:[#allocation4 + $0x3c] sm:$0xf]
      %v6941 = vld [vmem:[#allocation4 + $0x40] sm:$0xf]
      %v6942 = vld [vmem:[#allocation4 + $0x48] sm:$0xf]
      %v6943 = vld [vmem:[#allocation4 + $0x4c] sm:$0xf]
      %v6944 = vld [vmem:[#allocation4 + $0x54] sm:$0xf]
      %v6945 = vld [vmem:[#allocation4 + $0x58] sm:$0xf]
      %v6946 = vld [vmem:[#allocation4 + $0x60] sm:$0xf]
      %v6947 = vld [vmem:[#allocation4 + $0x64] sm:$0xf]
      %v6948 = vld [vmem:[#allocation4 + $0x6c] sm:$0xf]
      %v6949 = vld [vmem:[#allocation4 + $0x70] sm:$0xf]
      %v6950 = vld [vmem:[#allocation4 + $0x78] sm:$0xf]
      %v6951 = vld [vmem:[#allocation4 + $0x7c] sm:$0xf]
      %v6952 = vld [vmem:[#allocation4 + $0x84] sm:$0xf]
      %v6953 = vld [vmem:[#allocation4 + $0x88] sm:$0xf]
      %v6954 = vld [vmem:[#allocation4 + $0x90] sm:$0xf]
      %v6955 = vld [vmem:[#allocation4 + $0x94] sm:$0xf]
      %v6956 = vld [vmem:[#allocation4 + $0x9c] sm:$0xf]
      %v6957 = vld [vmem:[#allocation4 + $0xa0] sm:$0xf]
      %v6958 = vld [vmem:[#allocation4 + $0xa8] sm:$0xf]
      %v6959 = vld [vmem:[#allocation4 + $0xac] sm:$0xf]
      %v6960 = vld [vmem:[#allocation4 + $0xb4] sm:$0xf]
      %v6961 = vld [vmem:[#allocation4 + $0xb8] sm:$0xf]
      %v6962 = vld [vmem:[#allocation4 + $0x8] sm:$0x1]
      %v6963 = vld [vmem:[#allocation4 + $0x14] sm:$0x1]
      %v6964 = vld [vmem:[#allocation4 + $0x20] sm:$0x1]
      %v6965 = vld [vmem:[#allocation4 + $0x2c] sm:$0x1]
      %v6966 = vld [vmem:[#allocation4 + $0x38] sm:$0x1]
      %v6967 = vld [vmem:[#allocation4 + $0x44] sm:$0x1]
      %v6968 = vld [vmem:[#allocation4 + $0x50] sm:$0x1]
      %v6969 = vld [vmem:[#allocation4 + $0x5c] sm:$0x1]
      %v6970 = vld [vmem:[#allocation4 + $0x68] sm:$0x1]
      %v6971 = vld [vmem:[#allocation4 + $0x74] sm:$0x1]
      %v6972 = vld [vmem:[#allocation4 + $0x80] sm:$0x1]
      %v6973 = vld [vmem:[#allocation4 + $0x8c] sm:$0x1]
      %v6974 = vld [vmem:[#allocation4 + $0x98] sm:$0x1]
      %v6975 = vld [vmem:[#allocation4 + $0xa4] sm:$0x1]
      %v6976 = vld [vmem:[#allocation4 + $0xb0] sm:$0x1]
      %v6977 = vld [vmem:[#allocation4 + $0xbc] sm:$0x1]
      %v6978 = vld [vmem:[#allocation4] sm:$0xe]
      %v6979 = vld [vmem:[#allocation4 + $0xc] sm:$0xe]
      %v6980 = vld [vmem:[#allocation4 + $0x18] sm:$0xe]
      %v6981 = vld [vmem:[#allocation4 + $0x24] sm:$0xe]
      %v6982 = vld [vmem:[#allocation4 + $0x30] sm:$0xe]
      %v6983 = vld [vmem:[#allocation4 + $0x3c] sm:$0xe]
      %v6984 = vld [vmem:[#allocation4 + $0x48] sm:$0xe]
      %v6985 = vld [vmem:[#allocation4 + $0x54] sm:$0xe]
      %v6986 = vld [vmem:[#allocation4 + $0x60] sm:$0xe]
      %v6987 = vld [vmem:[#allocation4 + $0x6c] sm:$0xe]
      %v6988 = vld [vmem:[#allocation4 + $0x78] sm:$0xe]
      %v6989 = vld [vmem:[#allocation4 + $0x84] sm:$0xe]
      %v6990 = vld [vmem:[#allocation4 + $0x90] sm:$0xe]
      %v6991 = vld [vmem:[#allocation4 + $0x9c] sm:$0xe]
      %v6992 = vld [vmem:[#allocation4 + $0xa8] sm:$0xe]
      %v6993 = vld [vmem:[#allocation4 + $0xb4] sm:$0xe]
      %v6994 = vld [vmem:[%s6815] sm:$0xf]
      %v6995 = vld [vmem:[%s6815 + $0x4] sm:$0xf]
      %v6996 = vld [vmem:[%s6815 + $0xc] sm:$0xf]
      %v6997 = vld [vmem:[%s6815 + $0x10] sm:$0xf]
      %v6998 = vld [vmem:[%s6815 + $0x18] sm:$0xf]
      %v6999 = vld [vmem:[%s6815 + $0x1c] sm:$0xf]
      %v7000 = vld [vmem:[%s6815 + $0x24] sm:$0xf]
      %v7001 = vld [vmem:[%s6815 + $0x28] sm:$0xf]
      %v7002 = vld [vmem:[%s6815 + $0x30] sm:$0xf]
      %v7003 = vld [vmem:[%s6815 + $0x34] sm:$0xf]
      %v7004 = vld [vmem:[%s6815 + $0x3c] sm:$0xf]
      %v7005 = vld [vmem:[%s6815 + $0x40] sm:$0xf]
      %v7006 = vld [vmem:[%s6815 + $0x48] sm:$0xf]
      %v7007 = vld [vmem:[%s6815 + $0x4c] sm:$0xf]
      %v7008 = vld [vmem:[%s6815 + $0x54] sm:$0xf]
      %v7009 = vld [vmem:[%s6815 + $0x58] sm:$0xf]
      %v7010 = vld [vmem:[%s6815 + $0x60] sm:$0xf]
      %v7011 = vld [vmem:[%s6815 + $0x64] sm:$0xf]
      %v7012 = vld [vmem:[%s6815 + $0x6c] sm:$0xf]
      %v7013 = vld [vmem:[%s6815 + $0x70] sm:$0xf]
      %v7014 = vld [vmem:[%s6815 + $0x78] sm:$0xf]
      %v7015 = vld [vmem:[%s6815 + $0x7c] sm:$0xf]
      %v7016 = vld [vmem:[%s6815 + $0x84] sm:$0xf]
      %v7017 = vld [vmem:[%s6815 + $0x88] sm:$0xf]
      %v7018 = vld [vmem:[%s6815 + $0x90] sm:$0xf]
      %v7019 = vld [vmem:[%s6815 + $0x94] sm:$0xf]
      %v7020 = vld [vmem:[%s6815 + $0x9c] sm:$0xf]
      %v7021 = vld [vmem:[%s6815 + $0xa0] sm:$0xf]
      %v7022 = vld [vmem:[%s6815 + $0xa8] sm:$0xf]
      %v7023 = vld [vmem:[%s6815 + $0xac] sm:$0xf]
      %v7024 = vld [vmem:[%s6815 + $0xb4] sm:$0xf]
      %v7025 = vld [vmem:[%s6815 + $0xb8] sm:$0xf]
      %v7026 = vld [vmem:[%s6815 + $0x8] sm:$0x1]
      %v7027 = vld [vmem:[%s6815 + $0x14] sm:$0x1]
      %v7028 = vld [vmem:[%s6815 + $0x20] sm:$0x1]
      %v7029 = vld [vmem:[%s6815 + $0x2c] sm:$0x1]
      %v7030 = vld [vmem:[%s6815 + $0x38] sm:$0x1]
      %v7031 = vld [vmem:[%s6815 + $0x44] sm:$0x1]
      %v7032 = vld [vmem:[%s6815 + $0x50] sm:$0x1]
      %v7033 = vld [vmem:[%s6815 + $0x5c] sm:$0x1]
      %v7034 = vld [vmem:[%s6815 + $0x68] sm:$0x1]
      %v7035 = vld [vmem:[%s6815 + $0x74] sm:$0x1]
      %v7036 = vld [vmem:[%s6815 + $0x80] sm:$0x1]
      %v7037 = vld [vmem:[%s6815 + $0x8c] sm:$0x1]
      %v7038 = vld [vmem:[%s6815 + $0x98] sm:$0x1]
      %v7039 = vld [vmem:[%s6815 + $0xa4] sm:$0x1]
      %v7040 = vld [vmem:[%s6815 + $0xb0] sm:$0x1]
      %v7041 = vld [vmem:[%s6815 + $0xbc] sm:$0x1]
      %v7042 = vld [vmem:[%s6815] sm:$0xe]
      %v7043 = vld [vmem:[%s6815 + $0xc] sm:$0xe]
      %v7044 = vld [vmem:[%s6815 + $0x18] sm:$0xe]
      %v7045 = vld [vmem:[%s6815 + $0x24] sm:$0xe]
      %v7046 = vld [vmem:[%s6815 + $0x30] sm:$0xe]
      %v7047 = vld [vmem:[%s6815 + $0x3c] sm:$0xe]
      %v7048 = vld [vmem:[%s6815 + $0x48] sm:$0xe]
      %v7049 = vld [vmem:[%s6815 + $0x54] sm:$0xe]
      %v7050 = vld [vmem:[%s6815 + $0x60] sm:$0xe]
      %v7051 = vld [vmem:[%s6815 + $0x6c] sm:$0xe]
      %v7052 = vld [vmem:[%s6815 + $0x78] sm:$0xe]
      %v7053 = vld [vmem:[%s6815 + $0x84] sm:$0xe]
      %v7054 = vld [vmem:[%s6815 + $0x90] sm:$0xe]
      %v7055 = vld [vmem:[%s6815 + $0x9c] sm:$0xe]
      %v7056 = vld [vmem:[%s6815 + $0xa8] sm:$0xe]
      %v7057 = vld [vmem:[%s6815 + $0xb4] sm:$0xe]
      %s7058 = scalar_lea.vmem [#allocation4], 24
      %v7059 = vld [vmem:[%s7058] sm:$0xf]
      %v7060 = vld [vmem:[%s7058 + $0x4] sm:$0xf]
      %v7061 = vld [vmem:[%s7058 + $0xc] sm:$0xf]
      %v7062 = vld [vmem:[%s7058 + $0x10] sm:$0xf]
      %v7063 = vld [vmem:[%s7058 + $0x18] sm:$0xf]
      %v7064 = vld [vmem:[%s7058 + $0x1c] sm:$0xf]
      %v7065 = vld [vmem:[%s7058 + $0x24] sm:$0xf]
      %v7066 = vld [vmem:[%s7058 + $0x28] sm:$0xf]
      %v7067 = vld [vmem:[%s7058 + $0x30] sm:$0xf]
      %v7068 = vld [vmem:[%s7058 + $0x34] sm:$0xf]
      %v7069 = vld [vmem:[%s7058 + $0x3c] sm:$0xf]
      %v7070 = vld [vmem:[%s7058 + $0x40] sm:$0xf]
      %v7071 = vld [vmem:[%s7058 + $0x48] sm:$0xf]
      %v7072 = vld [vmem:[%s7058 + $0x4c] sm:$0xf]
      %v7073 = vld [vmem:[%s7058 + $0x54] sm:$0xf]
      %v7074 = vld [vmem:[%s7058 + $0x58] sm:$0xf]
      %v7075 = vld [vmem:[%s7058 + $0x60] sm:$0xf]
      %v7076 = vld [vmem:[%s7058 + $0x64] sm:$0xf]
      %v7077 = vld [vmem:[%s7058 + $0x6c] sm:$0xf]
      %v7078 = vld [vmem:[%s7058 + $0x70] sm:$0xf]
      %v7079 = vld [vmem:[%s7058 + $0x78] sm:$0xf]
      %v7080 = vld [vmem:[%s7058 + $0x7c] sm:$0xf]
      %v7081 = vld [vmem:[%s7058 + $0x84] sm:$0xf]
      %v7082 = vld [vmem:[%s7058 + $0x88] sm:$0xf]
      %v7083 = vld [vmem:[%s7058 + $0x90] sm:$0xf]
      %v7084 = vld [vmem:[%s7058 + $0x94] sm:$0xf]
      %v7085 = vld [vmem:[%s7058 + $0x9c] sm:$0xf]
      %v7086 = vld [vmem:[%s7058 + $0xa0] sm:$0xf]
      %v7087 = vld [vmem:[%s7058 + $0xa8] sm:$0xf]
      %v7088 = vld [vmem:[%s7058 + $0xac] sm:$0xf]
      %v7089 = vld [vmem:[%s7058 + $0xb4] sm:$0xf]
      %v7090 = vld [vmem:[%s7058 + $0xb8] sm:$0xf]
      %v7091 = vld [vmem:[%s7058 + $0x8] sm:$0x1]
      %v7092 = vld [vmem:[%s7058 + $0x14] sm:$0x1]
      %v7093 = vld [vmem:[%s7058 + $0x20] sm:$0x1]
      %v7094 = vld [vmem:[%s7058 + $0x2c] sm:$0x1]
      %v7095 = vld [vmem:[%s7058 + $0x38] sm:$0x1]
      %v7096 = vld [vmem:[%s7058 + $0x44] sm:$0x1]
      %v7097 = vld [vmem:[%s7058 + $0x50] sm:$0x1]
      %v7098 = vld [vmem:[%s7058 + $0x5c] sm:$0x1]
      %v7099 = vld [vmem:[%s7058 + $0x68] sm:$0x1]
      %v7100 = vld [vmem:[%s7058 + $0x74] sm:$0x1]
      %v7101 = vld [vmem:[%s7058 + $0x80] sm:$0x1]
      %v7102 = vld [vmem:[%s7058 + $0x8c] sm:$0x1]
      %v7103 = vld [vmem:[%s7058 + $0x98] sm:$0x1]
      %v7104 = vld [vmem:[%s7058 + $0xa4] sm:$0x1]
      %v7105 = vld [vmem:[%s7058 + $0xb0] sm:$0x1]
      %v7106 = vld [vmem:[%s7058 + $0xbc] sm:$0x1]
      %v7107 = vld [vmem:[%s7058] sm:$0xe]
      %v7108 = vld [vmem:[%s7058 + $0xc] sm:$0xe]
      %v7109 = vld [vmem:[%s7058 + $0x18] sm:$0xe]
      %v7110 = vld [vmem:[%s7058 + $0x24] sm:$0xe]
      %v7111 = vld [vmem:[%s7058 + $0x30] sm:$0xe]
      %v7112 = vld [vmem:[%s7058 + $0x3c] sm:$0xe]
      %v7113 = vld [vmem:[%s7058 + $0x48] sm:$0xe]
      %v7114 = vld [vmem:[%s7058 + $0x54] sm:$0xe]
      %v7115 = vld [vmem:[%s7058 + $0x60] sm:$0xe]
      %v7116 = vld [vmem:[%s7058 + $0x6c] sm:$0xe]
      %v7117 = vld [vmem:[%s7058 + $0x78] sm:$0xe]
      %v7118 = vld [vmem:[%s7058 + $0x84] sm:$0xe]
      %v7119 = vld [vmem:[%s7058 + $0x90] sm:$0xe]
      %v7120 = vld [vmem:[%s7058 + $0x9c] sm:$0xe]
      %v7121 = vld [vmem:[%s7058 + $0xa8] sm:$0xe]
      %v7122 = vld [vmem:[%s7058 + $0xb4] sm:$0xe]
      %v7155 = vunpack.c.l.b16 %v6930
      %v7156 = vunpack.c.l.b16 %v6931
      %v7157 = vunpack.c.l.b16 %v6932
      %v7158 = vunpack.c.l.b16 %v6933
      %v7159 = vunpack.c.l.b16 %v6934
      %v7160 = vunpack.c.l.b16 %v6935
      %v7161 = vunpack.c.l.b16 %v6936
      %v7162 = vunpack.c.l.b16 %v6937
      %v7163 = vunpack.c.l.b16 %v6938
      %v7164 = vunpack.c.l.b16 %v6939
      %v7165 = vunpack.c.l.b16 %v6940
      %v7166 = vunpack.c.l.b16 %v6941
      %v7167 = vunpack.c.l.b16 %v6942
      %v7168 = vunpack.c.l.b16 %v6943
      %v7169 = vunpack.c.l.b16 %v6944
      %v7170 = vunpack.c.l.b16 %v6945
      %v7171 = vunpack.c.l.b16 %v6946
      %v7172 = vunpack.c.l.b16 %v6947
      %v7173 = vunpack.c.l.b16 %v6948
      %v7174 = vunpack.c.l.b16 %v6949
      %v7175 = vunpack.c.l.b16 %v6950
      %v7176 = vunpack.c.l.b16 %v6951
      %v7177 = vunpack.c.l.b16 %v6952
      %v7178 = vunpack.c.l.b16 %v6953
      %v7179 = vunpack.c.l.b16 %v6954
      %v7180 = vunpack.c.l.b16 %v6955
      %v7181 = vunpack.c.l.b16 %v6956
      %v7182 = vunpack.c.l.b16 %v6957
      %v7183 = vunpack.c.l.b16 %v6958
      %v7184 = vunpack.c.l.b16 %v6959
      %v7185 = vunpack.c.l.b16 %v6960
      %v7186 = vunpack.c.l.b16 %v6961
      %v7187 = vpack.c.b16 %v7156, %v7155
      %v7188 = vpack.c.b16 %v7158, %v7157
      %v7189 = vpack.c.b16 %v7160, %v7159
      %v7190 = vpack.c.b16 %v7162, %v7161
      %v7191 = vpack.c.b16 %v7164, %v7163
      %v7192 = vpack.c.b16 %v7166, %v7165
      %v7193 = vpack.c.b16 %v7168, %v7167
      %v7194 = vpack.c.b16 %v7170, %v7169
      %v7195 = vpack.c.b16 %v7172, %v7171
      %v7196 = vpack.c.b16 %v7174, %v7173
      %v7197 = vpack.c.b16 %v7176, %v7175
      %v7198 = vpack.c.b16 %v7178, %v7177
      %v7199 = vpack.c.b16 %v7180, %v7179
      %v7200 = vpack.c.b16 %v7182, %v7181
      %v7201 = vpack.c.b16 %v7184, %v7183
      %v7202 = vpack.c.b16 %v7186, %v7185
      %v7219 = vunpack.c.l.b16 %v6962
      %v7220 = vunpack.c.l.b16 %v6963
      %v7221 = vunpack.c.l.b16 %v6964
      %v7222 = vunpack.c.l.b16 %v6965
      %v7223 = vunpack.c.l.b16 %v6966
      %v7224 = vunpack.c.l.b16 %v6967
      %v7225 = vunpack.c.l.b16 %v6968
      %v7226 = vunpack.c.l.b16 %v6969
      %v7227 = vunpack.c.l.b16 %v6970
      %v7228 = vunpack.c.l.b16 %v6971
      %v7229 = vunpack.c.l.b16 %v6972
      %v7230 = vunpack.c.l.b16 %v6973
      %v7231 = vunpack.c.l.b16 %v6974
      %v7232 = vunpack.c.l.b16 %v6975
      %v7233 = vunpack.c.l.b16 %v6976
      %v7234 = vunpack.c.l.b16 %v6977
      %v7235 = vpack.c.b16 %v7219, %v7219
      %v7236 = vpack.c.b16 %v7220, %v7220
      %v7237 = vpack.c.b16 %v7221, %v7221
      %v7238 = vpack.c.b16 %v7222, %v7222
      %v7239 = vpack.c.b16 %v7223, %v7223
      %v7240 = vpack.c.b16 %v7224, %v7224
      %v7241 = vpack.c.b16 %v7225, %v7225
      %v7242 = vpack.c.b16 %v7226, %v7226
      %v7243 = vpack.c.b16 %v7227, %v7227
      %v7244 = vpack.c.b16 %v7228, %v7228
      %v7245 = vpack.c.b16 %v7229, %v7229
      %v7246 = vpack.c.b16 %v7230, %v7230
      %v7247 = vpack.c.b16 %v7231, %v7231
      %v7248 = vpack.c.b16 %v7232, %v7232
      %v7249 = vpack.c.b16 %v7233, %v7233
      %v7250 = vpack.c.b16 %v7234, %v7234
      %v7252 = vshrl.u32 %v7187, 16
      %v7254 = vshll.u32 %v7187, 16
      %v7256 = vrot.slane %v7254, 1
      %v7257 = vor.u32 %v7252, %v7256
      %v7259 = vshll.u32 %v7235, 16
      %v7261 = vrot.slane %v7259, 1
      %v7262 = vsel %vm4486, %v7257, %v7261
      %v7264 = vshrl.u32 %v7188, 16
      %v7266 = vshll.u32 %v7188, 16
      %v7268 = vrot.slane %v7266, 1
      %v7269 = vor.u32 %v7264, %v7268
      %v7271 = vshll.u32 %v7236, 16
      %v7273 = vrot.slane %v7271, 1
      %v7274 = vsel %vm4486, %v7269, %v7273
      %v7276 = vshrl.u32 %v7189, 16
      %v7278 = vshll.u32 %v7189, 16
      %v7280 = vrot.slane %v7278, 1
      %v7281 = vor.u32 %v7276, %v7280
      %v7283 = vshll.u32 %v7237, 16
      %v7285 = vrot.slane %v7283, 1
      %v7286 = vsel %vm4486, %v7281, %v7285
      %v7288 = vshrl.u32 %v7190, 16
      %v7290 = vshll.u32 %v7190, 16
      %v7292 = vrot.slane %v7290, 1
      %v7293 = vor.u32 %v7288, %v7292
      %v7295 = vshll.u32 %v7238, 16
      %v7297 = vrot.slane %v7295, 1
      %v7298 = vsel %vm4486, %v7293, %v7297
      %v7300 = vshrl.u32 %v7191, 16
      %v7302 = vshll.u32 %v7191, 16
      %v7304 = vrot.slane %v7302, 1
      %v7305 = vor.u32 %v7300, %v7304
      %v7307 = vshll.u32 %v7239, 16
      %v7309 = vrot.slane %v7307, 1
      %v7310 = vsel %vm4486, %v7305, %v7309
      %v7312 = vshrl.u32 %v7192, 16
      %v7314 = vshll.u32 %v7192, 16
      %v7316 = vrot.slane %v7314, 1
      %v7317 = vor.u32 %v7312, %v7316
      %v7319 = vshll.u32 %v7240, 16
      %v7321 = vrot.slane %v7319, 1
      %v7322 = vsel %vm4486, %v7317, %v7321
      %v7324 = vshrl.u32 %v7193, 16
      %v7326 = vshll.u32 %v7193, 16
      %v7328 = vrot.slane %v7326, 1
      %v7329 = vor.u32 %v7324, %v7328
      %v7331 = vshll.u32 %v7241, 16
      %v7333 = vrot.slane %v7331, 1
      %v7334 = vsel %vm4486, %v7329, %v7333
      %v7336 = vshrl.u32 %v7194, 16
      %v7338 = vshll.u32 %v7194, 16
      %v7340 = vrot.slane %v7338, 1
      %v7341 = vor.u32 %v7336, %v7340
      %v7343 = vshll.u32 %v7242, 16
      %v7345 = vrot.slane %v7343, 1
      %v7346 = vsel %vm4486, %v7341, %v7345
      %v7348 = vshrl.u32 %v7195, 16
      %v7350 = vshll.u32 %v7195, 16
      %v7352 = vrot.slane %v7350, 1
      %v7353 = vor.u32 %v7348, %v7352
      %v7355 = vshll.u32 %v7243, 16
      %v7357 = vrot.slane %v7355, 1
      %v7358 = vsel %vm4486, %v7353, %v7357
      %v7360 = vshrl.u32 %v7196, 16
      %v7362 = vshll.u32 %v7196, 16
      %v7364 = vrot.slane %v7362, 1
      %v7365 = vor.u32 %v7360, %v7364
      %v7367 = vshll.u32 %v7244, 16
      %v7369 = vrot.slane %v7367, 1
      %v7370 = vsel %vm4486, %v7365, %v7369
      %v7372 = vshrl.u32 %v7197, 16
      %v7374 = vshll.u32 %v7197, 16
      %v7376 = vrot.slane %v7374, 1
      %v7377 = vor.u32 %v7372, %v7376
      %v7379 = vshll.u32 %v7245, 16
      %v7381 = vrot.slane %v7379, 1
      %v7382 = vsel %vm4486, %v7377, %v7381
      %v7384 = vshrl.u32 %v7198, 16
      %v7386 = vshll.u32 %v7198, 16
      %v7388 = vrot.slane %v7386, 1
      %v7389 = vor.u32 %v7384, %v7388
      %v7391 = vshll.u32 %v7246, 16
      %v7393 = vrot.slane %v7391, 1
      %v7394 = vsel %vm4486, %v7389, %v7393
      %v7396 = vshrl.u32 %v7199, 16
      %v7398 = vshll.u32 %v7199, 16
      %v7400 = vrot.slane %v7398, 1
      %v7401 = vor.u32 %v7396, %v7400
      %v7403 = vshll.u32 %v7247, 16
      %v7405 = vrot.slane %v7403, 1
      %v7406 = vsel %vm4486, %v7401, %v7405
      %v7408 = vshrl.u32 %v7200, 16
      %v7410 = vshll.u32 %v7200, 16
      %v7412 = vrot.slane %v7410, 1
      %v7413 = vor.u32 %v7408, %v7412
      %v7415 = vshll.u32 %v7248, 16
      %v7417 = vrot.slane %v7415, 1
      %v7418 = vsel %vm4486, %v7413, %v7417
      %v7420 = vshrl.u32 %v7201, 16
      %v7422 = vshll.u32 %v7201, 16
      %v7424 = vrot.slane %v7422, 1
      %v7425 = vor.u32 %v7420, %v7424
      %v7427 = vshll.u32 %v7249, 16
      %v7429 = vrot.slane %v7427, 1
      %v7430 = vsel %vm4486, %v7425, %v7429
      %v7432 = vshrl.u32 %v7202, 16
      %v7434 = vshll.u32 %v7202, 16
      %v7436 = vrot.slane %v7434, 1
      %v7437 = vor.u32 %v7432, %v7436
      %v7439 = vshll.u32 %v7250, 16
      %v7441 = vrot.slane %v7439, 1
      %v7442 = vsel %vm4486, %v7437, %v7441
      %7443 = vrot.lane.b32.xlu0 %v7262, 8
      %v7444 = vpop.permute.xlu0 %7443
      %7445 = vrot.lane.b32.xlu0 %v7274, 8
      %v7446 = vpop.permute.xlu0 %7445
      %7447 = vrot.lane.b32.xlu0 %v7286, 8
      %v7448 = vpop.permute.xlu0 %7447
      %7449 = vrot.lane.b32.xlu0 %v7298, 8
      %v7450 = vpop.permute.xlu0 %7449
      %7451 = vrot.lane.b32.xlu0 %v7310, 8
      %v7452 = vpop.permute.xlu0 %7451
      %7453 = vrot.lane.b32.xlu0 %v7322, 8
      %v7454 = vpop.permute.xlu0 %7453
      %7455 = vrot.lane.b32.xlu0 %v7334, 8
      %v7456 = vpop.permute.xlu0 %7455
      %7457 = vrot.lane.b32.xlu0 %v7346, 8
      %v7458 = vpop.permute.xlu0 %7457
      %7459 = vrot.lane.b32.xlu0 %v7358, 8
      %v7460 = vpop.permute.xlu0 %7459
      %7461 = vrot.lane.b32.xlu0 %v7370, 8
      %v7462 = vpop.permute.xlu0 %7461
      %7463 = vrot.lane.b32.xlu0 %v7382, 8
      %v7464 = vpop.permute.xlu0 %7463
      %7465 = vrot.lane.b32.xlu0 %v7394, 8
      %v7466 = vpop.permute.xlu0 %7465
      %7467 = vrot.lane.b32.xlu0 %v7406, 8
      %v7468 = vpop.permute.xlu0 %7467
      %7469 = vrot.lane.b32.xlu0 %v7418, 8
      %v7470 = vpop.permute.xlu0 %7469
      %7471 = vrot.lane.b32.xlu0 %v7430, 8
      %v7472 = vpop.permute.xlu0 %7471
      %7473 = vrot.lane.b32.xlu0 %v7442, 8
      %v7474 = vpop.permute.xlu0 %7473
      %v7491 = vunpack.c.l.b16 %v6978
      %v7492 = vunpack.c.l.b16 %v6979
      %v7493 = vunpack.c.l.b16 %v6980
      %v7494 = vunpack.c.l.b16 %v6981
      %v7495 = vunpack.c.l.b16 %v6982
      %v7496 = vunpack.c.l.b16 %v6983
      %v7497 = vunpack.c.l.b16 %v6984
      %v7498 = vunpack.c.l.b16 %v6985
      %v7499 = vunpack.c.l.b16 %v6986
      %v7500 = vunpack.c.l.b16 %v6987
      %v7501 = vunpack.c.l.b16 %v6988
      %v7502 = vunpack.c.l.b16 %v6989
      %v7503 = vunpack.c.l.b16 %v6990
      %v7504 = vunpack.c.l.b16 %v6991
      %v7505 = vunpack.c.l.b16 %v6992
      %v7506 = vunpack.c.l.b16 %v6993
      %v7507 = vpack.c.b16 %v7156, %v7491
      %v7508 = vpack.c.b16 %v7158, %v7492
      %v7509 = vpack.c.b16 %v7160, %v7493
      %v7510 = vpack.c.b16 %v7162, %v7494
      %v7511 = vpack.c.b16 %v7164, %v7495
      %v7512 = vpack.c.b16 %v7166, %v7496
      %v7513 = vpack.c.b16 %v7168, %v7497
      %v7514 = vpack.c.b16 %v7170, %v7498
      %v7515 = vpack.c.b16 %v7172, %v7499
      %v7516 = vpack.c.b16 %v7174, %v7500
      %v7517 = vpack.c.b16 %v7176, %v7501
      %v7518 = vpack.c.b16 %v7178, %v7502
      %v7519 = vpack.c.b16 %v7180, %v7503
      %v7520 = vpack.c.b16 %v7182, %v7504
      %v7521 = vpack.c.b16 %v7184, %v7505
      %v7522 = vpack.c.b16 %v7186, %v7506
      %v7523 = vrot.slane %v7507, 1
      %v7524 = vrot.slane %v7235, 1
      %v7525 = vsel %vm4759, %v7523, %v7524
      %v7526 = vrot.slane %v7508, 1
      %v7527 = vrot.slane %v7236, 1
      %v7528 = vsel %vm4759, %v7526, %v7527
      %v7529 = vrot.slane %v7509, 1
      %v7530 = vrot.slane %v7237, 1
      %v7531 = vsel %vm4759, %v7529, %v7530
      %v7532 = vrot.slane %v7510, 1
      %v7533 = vrot.slane %v7238, 1
      %v7534 = vsel %vm4759, %v7532, %v7533
      %v7535 = vrot.slane %v7511, 1
      %v7536 = vrot.slane %v7239, 1
      %v7537 = vsel %vm4759, %v7535, %v7536
      %v7538 = vrot.slane %v7512, 1
      %v7539 = vrot.slane %v7240, 1
      %v7540 = vsel %vm4759, %v7538, %v7539
      %v7541 = vrot.slane %v7513, 1
      %v7542 = vrot.slane %v7241, 1
      %v7543 = vsel %vm4759, %v7541, %v7542
      %v7544 = vrot.slane %v7514, 1
      %v7545 = vrot.slane %v7242, 1
      %v7546 = vsel %vm4759, %v7544, %v7545
      %v7547 = vrot.slane %v7515, 1
      %v7548 = vrot.slane %v7243, 1
      %v7549 = vsel %vm4759, %v7547, %v7548
      %v7550 = vrot.slane %v7516, 1
      %v7551 = vrot.slane %v7244, 1
      %v7552 = vsel %vm4759, %v7550, %v7551
      %v7553 = vrot.slane %v7517, 1
      %v7554 = vrot.slane %v7245, 1
      %v7555 = vsel %vm4759, %v7553, %v7554
      %v7556 = vrot.slane %v7518, 1
      %v7557 = vrot.slane %v7246, 1
      %v7558 = vsel %vm4759, %v7556, %v7557
      %v7559 = vrot.slane %v7519, 1
      %v7560 = vrot.slane %v7247, 1
      %v7561 = vsel %vm4759, %v7559, %v7560
      %v7562 = vrot.slane %v7520, 1
      %v7563 = vrot.slane %v7248, 1
      %v7564 = vsel %vm4759, %v7562, %v7563
      %v7565 = vrot.slane %v7521, 1
      %v7566 = vrot.slane %v7249, 1
      %v7567 = vsel %vm4759, %v7565, %v7566
      %v7568 = vrot.slane %v7522, 1
      %v7569 = vrot.slane %v7250, 1
      %v7570 = vsel %vm4759, %v7568, %v7569
      %7571 = vrot.lane.b32.xlu0 %v7525, 16
      %v7572 = vpop.permute.xlu0 %7571
      %7573 = vrot.lane.b32.xlu0 %v7528, 16
      %v7574 = vpop.permute.xlu0 %7573
      %7575 = vrot.lane.b32.xlu0 %v7531, 16
      %v7576 = vpop.permute.xlu0 %7575
      %7577 = vrot.lane.b32.xlu0 %v7534, 16
      %v7578 = vpop.permute.xlu0 %7577
      %7579 = vrot.lane.b32.xlu0 %v7537, 16
      %v7580 = vpop.permute.xlu0 %7579
      %7581 = vrot.lane.b32.xlu0 %v7540, 16
      %v7582 = vpop.permute.xlu0 %7581
      %7583 = vrot.lane.b32.xlu0 %v7543, 16
      %v7584 = vpop.permute.xlu0 %7583
      %7585 = vrot.lane.b32.xlu0 %v7546, 16
      %v7586 = vpop.permute.xlu0 %7585
      %7587 = vrot.lane.b32.xlu0 %v7549, 16
      %v7588 = vpop.permute.xlu0 %7587
      %7589 = vrot.lane.b32.xlu0 %v7552, 16
      %v7590 = vpop.permute.xlu0 %7589
      %7591 = vrot.lane.b32.xlu0 %v7555, 16
      %v7592 = vpop.permute.xlu0 %7591
      %7593 = vrot.lane.b32.xlu0 %v7558, 16
      %v7594 = vpop.permute.xlu0 %7593
      %7595 = vrot.lane.b32.xlu0 %v7561, 16
      %v7596 = vpop.permute.xlu0 %7595
      %7597 = vrot.lane.b32.xlu0 %v7564, 16
      %v7598 = vpop.permute.xlu0 %7597
      %7599 = vrot.lane.b32.xlu0 %v7567, 16
      %v7600 = vpop.permute.xlu0 %7599
      %7601 = vrot.lane.b32.xlu0 %v7570, 16
      %v7602 = vpop.permute.xlu0 %7601
      %v7635 = vunpack.c.l.b16 %v6994
      %v7636 = vunpack.c.l.b16 %v6995
      %v7637 = vunpack.c.l.b16 %v6996
      %v7638 = vunpack.c.l.b16 %v6997
      %v7639 = vunpack.c.l.b16 %v6998
      %v7640 = vunpack.c.l.b16 %v6999
      %v7641 = vunpack.c.l.b16 %v7000
      %v7642 = vunpack.c.l.b16 %v7001
      %v7643 = vunpack.c.l.b16 %v7002
      %v7644 = vunpack.c.l.b16 %v7003
      %v7645 = vunpack.c.l.b16 %v7004
      %v7646 = vunpack.c.l.b16 %v7005
      %v7647 = vunpack.c.l.b16 %v7006
      %v7648 = vunpack.c.l.b16 %v7007
      %v7649 = vunpack.c.l.b16 %v7008
      %v7650 = vunpack.c.l.b16 %v7009
      %v7651 = vunpack.c.l.b16 %v7010
      %v7652 = vunpack.c.l.b16 %v7011
      %v7653 = vunpack.c.l.b16 %v7012
      %v7654 = vunpack.c.l.b16 %v7013
      %v7655 = vunpack.c.l.b16 %v7014
      %v7656 = vunpack.c.l.b16 %v7015
      %v7657 = vunpack.c.l.b16 %v7016
      %v7658 = vunpack.c.l.b16 %v7017
      %v7659 = vunpack.c.l.b16 %v7018
      %v7660 = vunpack.c.l.b16 %v7019
      %v7661 = vunpack.c.l.b16 %v7020
      %v7662 = vunpack.c.l.b16 %v7021
      %v7663 = vunpack.c.l.b16 %v7022
      %v7664 = vunpack.c.l.b16 %v7023
      %v7665 = vunpack.c.l.b16 %v7024
      %v7666 = vunpack.c.l.b16 %v7025
      %v7667 = vpack.c.b16 %v7636, %v7635
      %v7668 = vpack.c.b16 %v7638, %v7637
      %v7669 = vpack.c.b16 %v7640, %v7639
      %v7670 = vpack.c.b16 %v7642, %v7641
      %v7671 = vpack.c.b16 %v7644, %v7643
      %v7672 = vpack.c.b16 %v7646, %v7645
      %v7673 = vpack.c.b16 %v7648, %v7647
      %v7674 = vpack.c.b16 %v7650, %v7649
      %v7675 = vpack.c.b16 %v7652, %v7651
      %v7676 = vpack.c.b16 %v7654, %v7653
      %v7677 = vpack.c.b16 %v7656, %v7655
      %v7678 = vpack.c.b16 %v7658, %v7657
      %v7679 = vpack.c.b16 %v7660, %v7659
      %v7680 = vpack.c.b16 %v7662, %v7661
      %v7681 = vpack.c.b16 %v7664, %v7663
      %v7682 = vpack.c.b16 %v7666, %v7665
      %7683 = vrot.lane.b32.xlu0 %v7667, 24
      %v7684 = vpop.permute.xlu0 %7683
      %7685 = vrot.lane.b32.xlu0 %v7668, 24
      %v7686 = vpop.permute.xlu0 %7685
      %7687 = vrot.lane.b32.xlu0 %v7669, 24
      %v7688 = vpop.permute.xlu0 %7687
      %7689 = vrot.lane.b32.xlu0 %v7670, 24
      %v7690 = vpop.permute.xlu0 %7689
      %7691 = vrot.lane.b32.xlu0 %v7671, 24
      %v7692 = vpop.permute.xlu0 %7691
      %7693 = vrot.lane.b32.xlu0 %v7672, 24
      %v7694 = vpop.permute.xlu0 %7693
      %7695 = vrot.lane.b32.xlu0 %v7673, 24
      %v7696 = vpop.permute.xlu0 %7695
      %7697 = vrot.lane.b32.xlu0 %v7674, 24
      %v7698 = vpop.permute.xlu0 %7697
      %7699 = vrot.lane.b32.xlu0 %v7675, 24
      %v7700 = vpop.permute.xlu0 %7699
      %7701 = vrot.lane.b32.xlu0 %v7676, 24
      %v7702 = vpop.permute.xlu0 %7701
      %7703 = vrot.lane.b32.xlu0 %v7677, 24
      %v7704 = vpop.permute.xlu0 %7703
      %7705 = vrot.lane.b32.xlu0 %v7678, 24
      %v7706 = vpop.permute.xlu0 %7705
      %7707 = vrot.lane.b32.xlu0 %v7679, 24
      %v7708 = vpop.permute.xlu0 %7707
      %7709 = vrot.lane.b32.xlu0 %v7680, 24
      %v7710 = vpop.permute.xlu0 %7709
      %7711 = vrot.lane.b32.xlu0 %v7681, 24
      %v7712 = vpop.permute.xlu0 %7711
      %7713 = vrot.lane.b32.xlu0 %v7682, 24
      %v7714 = vpop.permute.xlu0 %7713
      %v7731 = vunpack.c.l.b16 %v7026
      %v7732 = vunpack.c.l.b16 %v7027
      %v7733 = vunpack.c.l.b16 %v7028
      %v7734 = vunpack.c.l.b16 %v7029
      %v7735 = vunpack.c.l.b16 %v7030
      %v7736 = vunpack.c.l.b16 %v7031
      %v7737 = vunpack.c.l.b16 %v7032
      %v7738 = vunpack.c.l.b16 %v7033
      %v7739 = vunpack.c.l.b16 %v7034
      %v7740 = vunpack.c.l.b16 %v7035
      %v7741 = vunpack.c.l.b16 %v7036
      %v7742 = vunpack.c.l.b16 %v7037
      %v7743 = vunpack.c.l.b16 %v7038
      %v7744 = vunpack.c.l.b16 %v7039
      %v7745 = vunpack.c.l.b16 %v7040
      %v7746 = vunpack.c.l.b16 %v7041
      %v7747 = vpack.c.b16 %v7731, %v7731
      %v7748 = vpack.c.b16 %v7732, %v7732
      %v7749 = vpack.c.b16 %v7733, %v7733
      %v7750 = vpack.c.b16 %v7734, %v7734
      %v7751 = vpack.c.b16 %v7735, %v7735
      %v7752 = vpack.c.b16 %v7736, %v7736
      %v7753 = vpack.c.b16 %v7737, %v7737
      %v7754 = vpack.c.b16 %v7738, %v7738
      %v7755 = vpack.c.b16 %v7739, %v7739
      %v7756 = vpack.c.b16 %v7740, %v7740
      %v7757 = vpack.c.b16 %v7741, %v7741
      %v7758 = vpack.c.b16 %v7742, %v7742
      %v7759 = vpack.c.b16 %v7743, %v7743
      %v7760 = vpack.c.b16 %v7744, %v7744
      %v7761 = vpack.c.b16 %v7745, %v7745
      %v7762 = vpack.c.b16 %v7746, %v7746
      %v7764 = vshrl.u32 %v7667, 16
      %v7766 = vshll.u32 %v7667, 16
      %v7768 = vrot.slane %v7766, 1
      %v7769 = vor.u32 %v7764, %v7768
      %v7771 = vshll.u32 %v7747, 16
      %v7773 = vrot.slane %v7771, 1
      %v7774 = vsel %vm4486, %v7769, %v7773
      %v7776 = vshrl.u32 %v7668, 16
      %v7778 = vshll.u32 %v7668, 16
      %v7780 = vrot.slane %v7778, 1
      %v7781 = vor.u32 %v7776, %v7780
      %v7783 = vshll.u32 %v7748, 16
      %v7785 = vrot.slane %v7783, 1
      %v7786 = vsel %vm4486, %v7781, %v7785
      %v7788 = vshrl.u32 %v7669, 16
      %v7790 = vshll.u32 %v7669, 16
      %v7792 = vrot.slane %v7790, 1
      %v7793 = vor.u32 %v7788, %v7792
      %v7795 = vshll.u32 %v7749, 16
      %v7797 = vrot.slane %v7795, 1
      %v7798 = vsel %vm4486, %v7793, %v7797
      %v7800 = vshrl.u32 %v7670, 16
      %v7802 = vshll.u32 %v7670, 16
      %v7804 = vrot.slane %v7802, 1
      %v7805 = vor.u32 %v7800, %v7804
      %v7807 = vshll.u32 %v7750, 16
      %v7809 = vrot.slane %v7807, 1
      %v7810 = vsel %vm4486, %v7805, %v7809
      %v7812 = vshrl.u32 %v7671, 16
      %v7814 = vshll.u32 %v7671, 16
      %v7816 = vrot.slane %v7814, 1
      %v7817 = vor.u32 %v7812, %v7816
      %v7819 = vshll.u32 %v7751, 16
      %v7821 = vrot.slane %v7819, 1
      %v7822 = vsel %vm4486, %v7817, %v7821
      %v7824 = vshrl.u32 %v7672, 16
      %v7826 = vshll.u32 %v7672, 16
      %v7828 = vrot.slane %v7826, 1
      %v7829 = vor.u32 %v7824, %v7828
      %v7831 = vshll.u32 %v7752, 16
      %v7833 = vrot.slane %v7831, 1
      %v7834 = vsel %vm4486, %v7829, %v7833
      %v7836 = vshrl.u32 %v7673, 16
      %v7838 = vshll.u32 %v7673, 16
      %v7840 = vrot.slane %v7838, 1
      %v7841 = vor.u32 %v7836, %v7840
      %v7843 = vshll.u32 %v7753, 16
      %v7845 = vrot.slane %v7843, 1
      %v7846 = vsel %vm4486, %v7841, %v7845
      %v7848 = vshrl.u32 %v7674, 16
      %v7850 = vshll.u32 %v7674, 16
      %v7852 = vrot.slane %v7850, 1
      %v7853 = vor.u32 %v7848, %v7852
      %v7855 = vshll.u32 %v7754, 16
      %v7857 = vrot.slane %v7855, 1
      %v7858 = vsel %vm4486, %v7853, %v7857
      %v7860 = vshrl.u32 %v7675, 16
      %v7862 = vshll.u32 %v7675, 16
      %v7864 = vrot.slane %v7862, 1
      %v7865 = vor.u32 %v7860, %v7864
      %v7867 = vshll.u32 %v7755, 16
      %v7869 = vrot.slane %v7867, 1
      %v7870 = vsel %vm4486, %v7865, %v7869
      %v7872 = vshrl.u32 %v7676, 16
      %v7874 = vshll.u32 %v7676, 16
      %v7876 = vrot.slane %v7874, 1
      %v7877 = vor.u32 %v7872, %v7876
      %v7879 = vshll.u32 %v7756, 16
      %v7881 = vrot.slane %v7879, 1
      %v7882 = vsel %vm4486, %v7877, %v7881
      %v7884 = vshrl.u32 %v7677, 16
      %v7886 = vshll.u32 %v7677, 16
      %v7888 = vrot.slane %v7886, 1
      %v7889 = vor.u32 %v7884, %v7888
      %v7891 = vshll.u32 %v7757, 16
      %v7893 = vrot.slane %v7891, 1
      %v7894 = vsel %vm4486, %v7889, %v7893
      %v7896 = vshrl.u32 %v7678, 16
      %v7898 = vshll.u32 %v7678, 16
      %v7900 = vrot.slane %v7898, 1
      %v7901 = vor.u32 %v7896, %v7900
      %v7903 = vshll.u32 %v7758, 16
      %v7905 = vrot.slane %v7903, 1
      %v7906 = vsel %vm4486, %v7901, %v7905
      %v7908 = vshrl.u32 %v7679, 16
      %v7910 = vshll.u32 %v7679, 16
      %v7912 = vrot.slane %v7910, 1
      %v7913 = vor.u32 %v7908, %v7912
      %v7915 = vshll.u32 %v7759, 16
      %v7917 = vrot.slane %v7915, 1
      %v7918 = vsel %vm4486, %v7913, %v7917
      %v7920 = vshrl.u32 %v7680, 16
      %v7922 = vshll.u32 %v7680, 16
      %v7924 = vrot.slane %v7922, 1
      %v7925 = vor.u32 %v7920, %v7924
      %v7927 = vshll.u32 %v7760, 16
      %v7929 = vrot.slane %v7927, 1
      %v7930 = vsel %vm4486, %v7925, %v7929
      %v7932 = vshrl.u32 %v7681, 16
      %v7934 = vshll.u32 %v7681, 16
      %v7936 = vrot.slane %v7934, 1
      %v7937 = vor.u32 %v7932, %v7936
      %v7939 = vshll.u32 %v7761, 16
      %v7941 = vrot.slane %v7939, 1
      %v7942 = vsel %vm4486, %v7937, %v7941
      %v7944 = vshrl.u32 %v7682, 16
      %v7946 = vshll.u32 %v7682, 16
      %v7948 = vrot.slane %v7946, 1
      %v7949 = vor.u32 %v7944, %v7948
      %v7951 = vshll.u32 %v7762, 16
      %v7953 = vrot.slane %v7951, 1
      %v7954 = vsel %vm4486, %v7949, %v7953
      %7955 = vrot.lane.b32.xlu0 %v7774, 32
      %v7956 = vpop.permute.xlu0 %7955
      %7957 = vrot.lane.b32.xlu0 %v7786, 32
      %v7958 = vpop.permute.xlu0 %7957
      %7959 = vrot.lane.b32.xlu0 %v7798, 32
      %v7960 = vpop.permute.xlu0 %7959
      %7961 = vrot.lane.b32.xlu0 %v7810, 32
      %v7962 = vpop.permute.xlu0 %7961
      %7963 = vrot.lane.b32.xlu0 %v7822, 32
      %v7964 = vpop.permute.xlu0 %7963
      %7965 = vrot.lane.b32.xlu0 %v7834, 32
      %v7966 = vpop.permute.xlu0 %7965
      %7967 = vrot.lane.b32.xlu0 %v7846, 32
      %v7968 = vpop.permute.xlu0 %7967
      %7969 = vrot.lane.b32.xlu0 %v7858, 32
      %v7970 = vpop.permute.xlu0 %7969
      %7971 = vrot.lane.b32.xlu0 %v7870, 32
      %v7972 = vpop.permute.xlu0 %7971
      %7973 = vrot.lane.b32.xlu0 %v7882, 32
      %v7974 = vpop.permute.xlu0 %7973
      %7975 = vrot.lane.b32.xlu0 %v7894, 32
      %v7976 = vpop.permute.xlu0 %7975
      %7977 = vrot.lane.b32.xlu0 %v7906, 32
      %v7978 = vpop.permute.xlu0 %7977
      %7979 = vrot.lane.b32.xlu0 %v7918, 32
      %v7980 = vpop.permute.xlu0 %7979
      %7981 = vrot.lane.b32.xlu0 %v7930, 32
      %v7982 = vpop.permute.xlu0 %7981
      %7983 = vrot.lane.b32.xlu0 %v7942, 32
      %v7984 = vpop.permute.xlu0 %7983
      %7985 = vrot.lane.b32.xlu0 %v7954, 32
      %v7986 = vpop.permute.xlu0 %7985
      %v8003 = vunpack.c.l.b16 %v7042
      %v8004 = vunpack.c.l.b16 %v7043
      %v8005 = vunpack.c.l.b16 %v7044
      %v8006 = vunpack.c.l.b16 %v7045
      %v8007 = vunpack.c.l.b16 %v7046
      %v8008 = vunpack.c.l.b16 %v7047
      %v8009 = vunpack.c.l.b16 %v7048
      %v8010 = vunpack.c.l.b16 %v7049
      %v8011 = vunpack.c.l.b16 %v7050
      %v8012 = vunpack.c.l.b16 %v7051
      %v8013 = vunpack.c.l.b16 %v7052
      %v8014 = vunpack.c.l.b16 %v7053
      %v8015 = vunpack.c.l.b16 %v7054
      %v8016 = vunpack.c.l.b16 %v7055
      %v8017 = vunpack.c.l.b16 %v7056
      %v8018 = vunpack.c.l.b16 %v7057
      %v8019 = vpack.c.b16 %v7636, %v8003
      %v8020 = vpack.c.b16 %v7638, %v8004
      %v8021 = vpack.c.b16 %v7640, %v8005
      %v8022 = vpack.c.b16 %v7642, %v8006
      %v8023 = vpack.c.b16 %v7644, %v8007
      %v8024 = vpack.c.b16 %v7646, %v8008
      %v8025 = vpack.c.b16 %v7648, %v8009
      %v8026 = vpack.c.b16 %v7650, %v8010
      %v8027 = vpack.c.b16 %v7652, %v8011
      %v8028 = vpack.c.b16 %v7654, %v8012
      %v8029 = vpack.c.b16 %v7656, %v8013
      %v8030 = vpack.c.b16 %v7658, %v8014
      %v8031 = vpack.c.b16 %v7660, %v8015
      %v8032 = vpack.c.b16 %v7662, %v8016
      %v8033 = vpack.c.b16 %v7664, %v8017
      %v8034 = vpack.c.b16 %v7666, %v8018
      %v8035 = vrot.slane %v8019, 1
      %v8036 = vrot.slane %v7747, 1
      %v8037 = vsel %vm4759, %v8035, %v8036
      %v8038 = vrot.slane %v8020, 1
      %v8039 = vrot.slane %v7748, 1
      %v8040 = vsel %vm4759, %v8038, %v8039
      %v8041 = vrot.slane %v8021, 1
      %v8042 = vrot.slane %v7749, 1
      %v8043 = vsel %vm4759, %v8041, %v8042
      %v8044 = vrot.slane %v8022, 1
      %v8045 = vrot.slane %v7750, 1
      %v8046 = vsel %vm4759, %v8044, %v8045
      %v8047 = vrot.slane %v8023, 1
      %v8048 = vrot.slane %v7751, 1
      %v8049 = vsel %vm4759, %v8047, %v8048
      %v8050 = vrot.slane %v8024, 1
      %v8051 = vrot.slane %v7752, 1
      %v8052 = vsel %vm4759, %v8050, %v8051
      %v8053 = vrot.slane %v8025, 1
      %v8054 = vrot.slane %v7753, 1
      %v8055 = vsel %vm4759, %v8053, %v8054
      %v8056 = vrot.slane %v8026, 1
      %v8057 = vrot.slane %v7754, 1
      %v8058 = vsel %vm4759, %v8056, %v8057
      %v8059 = vrot.slane %v8027, 1
      %v8060 = vrot.slane %v7755, 1
      %v8061 = vsel %vm4759, %v8059, %v8060
      %v8062 = vrot.slane %v8028, 1
      %v8063 = vrot.slane %v7756, 1
      %v8064 = vsel %vm4759, %v8062, %v8063
      %v8065 = vrot.slane %v8029, 1
      %v8066 = vrot.slane %v7757, 1
      %v8067 = vsel %vm4759, %v8065, %v8066
      %v8068 = vrot.slane %v8030, 1
      %v8069 = vrot.slane %v7758, 1
      %v8070 = vsel %vm4759, %v8068, %v8069
      %v8071 = vrot.slane %v8031, 1
      %v8072 = vrot.slane %v7759, 1
      %v8073 = vsel %vm4759, %v8071, %v8072
      %v8074 = vrot.slane %v8032, 1
      %v8075 = vrot.slane %v7760, 1
      %v8076 = vsel %vm4759, %v8074, %v8075
      %v8077 = vrot.slane %v8033, 1
      %v8078 = vrot.slane %v7761, 1
      %v8079 = vsel %vm4759, %v8077, %v8078
      %v8080 = vrot.slane %v8034, 1
      %v8081 = vrot.slane %v7762, 1
      %v8082 = vsel %vm4759, %v8080, %v8081
      %8083 = vrot.lane.b32.xlu0 %v8037, 40
      %v8084 = vpop.permute.xlu0 %8083
      %8085 = vrot.lane.b32.xlu0 %v8040, 40
      %v8086 = vpop.permute.xlu0 %8085
      %8087 = vrot.lane.b32.xlu0 %v8043, 40
      %v8088 = vpop.permute.xlu0 %8087
      %8089 = vrot.lane.b32.xlu0 %v8046, 40
      %v8090 = vpop.permute.xlu0 %8089
      %8091 = vrot.lane.b32.xlu0 %v8049, 40
      %v8092 = vpop.permute.xlu0 %8091
      %8093 = vrot.lane.b32.xlu0 %v8052, 40
      %v8094 = vpop.permute.xlu0 %8093
      %8095 = vrot.lane.b32.xlu0 %v8055, 40
      %v8096 = vpop.permute.xlu0 %8095
      %8097 = vrot.lane.b32.xlu0 %v8058, 40
      %v8098 = vpop.permute.xlu0 %8097
      %8099 = vrot.lane.b32.xlu0 %v8061, 40
      %v8100 = vpop.permute.xlu0 %8099
      %8101 = vrot.lane.b32.xlu0 %v8064, 40
      %v8102 = vpop.permute.xlu0 %8101
      %8103 = vrot.lane.b32.xlu0 %v8067, 40
      %v8104 = vpop.permute.xlu0 %8103
      %8105 = vrot.lane.b32.xlu0 %v8070, 40
      %v8106 = vpop.permute.xlu0 %8105
      %8107 = vrot.lane.b32.xlu0 %v8073, 40
      %v8108 = vpop.permute.xlu0 %8107
      %8109 = vrot.lane.b32.xlu0 %v8076, 40
      %v8110 = vpop.permute.xlu0 %8109
      %8111 = vrot.lane.b32.xlu0 %v8079, 40
      %v8112 = vpop.permute.xlu0 %8111
      %8113 = vrot.lane.b32.xlu0 %v8082, 40
      %v8114 = vpop.permute.xlu0 %8113
      %v8147 = vunpack.c.l.b16 %v7059
      %v8148 = vunpack.c.l.b16 %v7060
      %v8149 = vunpack.c.l.b16 %v7061
      %v8150 = vunpack.c.l.b16 %v7062
      %v8151 = vunpack.c.l.b16 %v7063
      %v8152 = vunpack.c.l.b16 %v7064
      %v8153 = vunpack.c.l.b16 %v7065
      %v8154 = vunpack.c.l.b16 %v7066
      %v8155 = vunpack.c.l.b16 %v7067
      %v8156 = vunpack.c.l.b16 %v7068
      %v8157 = vunpack.c.l.b16 %v7069
      %v8158 = vunpack.c.l.b16 %v7070
      %v8159 = vunpack.c.l.b16 %v7071
      %v8160 = vunpack.c.l.b16 %v7072
      %v8161 = vunpack.c.l.b16 %v7073
      %v8162 = vunpack.c.l.b16 %v7074
      %v8163 = vunpack.c.l.b16 %v7075
      %v8164 = vunpack.c.l.b16 %v7076
      %v8165 = vunpack.c.l.b16 %v7077
      %v8166 = vunpack.c.l.b16 %v7078
      %v8167 = vunpack.c.l.b16 %v7079
      %v8168 = vunpack.c.l.b16 %v7080
      %v8169 = vunpack.c.l.b16 %v7081
      %v8170 = vunpack.c.l.b16 %v7082
      %v8171 = vunpack.c.l.b16 %v7083
      %v8172 = vunpack.c.l.b16 %v7084
      %v8173 = vunpack.c.l.b16 %v7085
      %v8174 = vunpack.c.l.b16 %v7086
      %v8175 = vunpack.c.l.b16 %v7087
      %v8176 = vunpack.c.l.b16 %v7088
      %v8177 = vunpack.c.l.b16 %v7089
      %v8178 = vunpack.c.l.b16 %v7090
      %v8179 = vpack.c.b16 %v8148, %v8147
      %v8180 = vpack.c.b16 %v8150, %v8149
      %v8181 = vpack.c.b16 %v8152, %v8151
      %v8182 = vpack.c.b16 %v8154, %v8153
      %v8183 = vpack.c.b16 %v8156, %v8155
      %v8184 = vpack.c.b16 %v8158, %v8157
      %v8185 = vpack.c.b16 %v8160, %v8159
      %v8186 = vpack.c.b16 %v8162, %v8161
      %v8187 = vpack.c.b16 %v8164, %v8163
      %v8188 = vpack.c.b16 %v8166, %v8165
      %v8189 = vpack.c.b16 %v8168, %v8167
      %v8190 = vpack.c.b16 %v8170, %v8169
      %v8191 = vpack.c.b16 %v8172, %v8171
      %v8192 = vpack.c.b16 %v8174, %v8173
      %v8193 = vpack.c.b16 %v8176, %v8175
      %v8194 = vpack.c.b16 %v8178, %v8177
      %8195 = vrot.lane.b32.xlu0 %v8179, 48
      %v8196 = vpop.permute.xlu0 %8195
      %8197 = vrot.lane.b32.xlu0 %v8180, 48
      %v8198 = vpop.permute.xlu0 %8197
      %8199 = vrot.lane.b32.xlu0 %v8181, 48
      %v8200 = vpop.permute.xlu0 %8199
      %8201 = vrot.lane.b32.xlu0 %v8182, 48
      %v8202 = vpop.permute.xlu0 %8201
      %8203 = vrot.lane.b32.xlu0 %v8183, 48
      %v8204 = vpop.permute.xlu0 %8203
      %8205 = vrot.lane.b32.xlu0 %v8184, 48
      %v8206 = vpop.permute.xlu0 %8205
      %8207 = vrot.lane.b32.xlu0 %v8185, 48
      %v8208 = vpop.permute.xlu0 %8207
      %8209 = vrot.lane.b32.xlu0 %v8186, 48
      %v8210 = vpop.permute.xlu0 %8209
      %8211 = vrot.lane.b32.xlu0 %v8187, 48
      %v8212 = vpop.permute.xlu0 %8211
      %8213 = vrot.lane.b32.xlu0 %v8188, 48
      %v8214 = vpop.permute.xlu0 %8213
      %8215 = vrot.lane.b32.xlu0 %v8189, 48
      %v8216 = vpop.permute.xlu0 %8215
      %8217 = vrot.lane.b32.xlu0 %v8190, 48
      %v8218 = vpop.permute.xlu0 %8217
      %8219 = vrot.lane.b32.xlu0 %v8191, 48
      %v8220 = vpop.permute.xlu0 %8219
      %8221 = vrot.lane.b32.xlu0 %v8192, 48
      %v8222 = vpop.permute.xlu0 %8221
      %8223 = vrot.lane.b32.xlu0 %v8193, 48
      %v8224 = vpop.permute.xlu0 %8223
      %8225 = vrot.lane.b32.xlu0 %v8194, 48
      %v8226 = vpop.permute.xlu0 %8225
      %v8243 = vunpack.c.l.b16 %v7091
      %v8244 = vunpack.c.l.b16 %v7092
      %v8245 = vunpack.c.l.b16 %v7093
      %v8246 = vunpack.c.l.b16 %v7094
      %v8247 = vunpack.c.l.b16 %v7095
      %v8248 = vunpack.c.l.b16 %v7096
      %v8249 = vunpack.c.l.b16 %v7097
      %v8250 = vunpack.c.l.b16 %v7098
      %v8251 = vunpack.c.l.b16 %v7099
      %v8252 = vunpack.c.l.b16 %v7100
      %v8253 = vunpack.c.l.b16 %v7101
      %v8254 = vunpack.c.l.b16 %v7102
      %v8255 = vunpack.c.l.b16 %v7103
      %v8256 = vunpack.c.l.b16 %v7104
      %v8257 = vunpack.c.l.b16 %v7105
      %v8258 = vunpack.c.l.b16 %v7106
      %v8259 = vpack.c.b16 %v8243, %v8243
      %v8260 = vpack.c.b16 %v8244, %v8244
      %v8261 = vpack.c.b16 %v8245, %v8245
      %v8262 = vpack.c.b16 %v8246, %v8246
      %v8263 = vpack.c.b16 %v8247, %v8247
      %v8264 = vpack.c.b16 %v8248, %v8248
      %v8265 = vpack.c.b16 %v8249, %v8249
      %v8266 = vpack.c.b16 %v8250, %v8250
      %v8267 = vpack.c.b16 %v8251, %v8251
      %v8268 = vpack.c.b16 %v8252, %v8252
      %v8269 = vpack.c.b16 %v8253, %v8253
      %v8270 = vpack.c.b16 %v8254, %v8254
      %v8271 = vpack.c.b16 %v8255, %v8255
      %v8272 = vpack.c.b16 %v8256, %v8256
      %v8273 = vpack.c.b16 %v8257, %v8257
      %v8274 = vpack.c.b16 %v8258, %v8258
      %v8276 = vshrl.u32 %v8179, 16
      %v8278 = vshll.u32 %v8179, 16
      %v8280 = vrot.slane %v8278, 1
      %v8281 = vor.u32 %v8276, %v8280
      %v8283 = vshll.u32 %v8259, 16
      %v8285 = vrot.slane %v8283, 1
      %v8286 = vsel %vm4486, %v8281, %v8285
      %v8288 = vshrl.u32 %v8180, 16
      %v8290 = vshll.u32 %v8180, 16
      %v8292 = vrot.slane %v8290, 1
      %v8293 = vor.u32 %v8288, %v8292
      %v8295 = vshll.u32 %v8260, 16
      %v8297 = vrot.slane %v8295, 1
      %v8298 = vsel %vm4486, %v8293, %v8297
      %v8300 = vshrl.u32 %v8181, 16
      %v8302 = vshll.u32 %v8181, 16
      %v8304 = vrot.slane %v8302, 1
      %v8305 = vor.u32 %v8300, %v8304
      %v8307 = vshll.u32 %v8261, 16
      %v8309 = vrot.slane %v8307, 1
      %v8310 = vsel %vm4486, %v8305, %v8309
      %v8312 = vshrl.u32 %v8182, 16
      %v8314 = vshll.u32 %v8182, 16
      %v8316 = vrot.slane %v8314, 1
      %v8317 = vor.u32 %v8312, %v8316
      %v8319 = vshll.u32 %v8262, 16
      %v8321 = vrot.slane %v8319, 1
      %v8322 = vsel %vm4486, %v8317, %v8321
      %v8324 = vshrl.u32 %v8183, 16
      %v8326 = vshll.u32 %v8183, 16
      %v8328 = vrot.slane %v8326, 1
      %v8329 = vor.u32 %v8324, %v8328
      %v8331 = vshll.u32 %v8263, 16
      %v8333 = vrot.slane %v8331, 1
      %v8334 = vsel %vm4486, %v8329, %v8333
      %v8336 = vshrl.u32 %v8184, 16
      %v8338 = vshll.u32 %v8184, 16
      %v8340 = vrot.slane %v8338, 1
      %v8341 = vor.u32 %v8336, %v8340
      %v8343 = vshll.u32 %v8264, 16
      %v8345 = vrot.slane %v8343, 1
      %v8346 = vsel %vm4486, %v8341, %v8345
      %v8348 = vshrl.u32 %v8185, 16
      %v8350 = vshll.u32 %v8185, 16
      %v8352 = vrot.slane %v8350, 1
      %v8353 = vor.u32 %v8348, %v8352
      %v8355 = vshll.u32 %v8265, 16
      %v8357 = vrot.slane %v8355, 1
      %v8358 = vsel %vm4486, %v8353, %v8357
      %v8360 = vshrl.u32 %v8186, 16
      %v8362 = vshll.u32 %v8186, 16
      %v8364 = vrot.slane %v8362, 1
      %v8365 = vor.u32 %v8360, %v8364
      %v8367 = vshll.u32 %v8266, 16
      %v8369 = vrot.slane %v8367, 1
      %v8370 = vsel %vm4486, %v8365, %v8369
      %v8372 = vshrl.u32 %v8187, 16
      %v8374 = vshll.u32 %v8187, 16
      %v8376 = vrot.slane %v8374, 1
      %v8377 = vor.u32 %v8372, %v8376
      %v8379 = vshll.u32 %v8267, 16
      %v8381 = vrot.slane %v8379, 1
      %v8382 = vsel %vm4486, %v8377, %v8381
      %v8384 = vshrl.u32 %v8188, 16
      %v8386 = vshll.u32 %v8188, 16
      %v8388 = vrot.slane %v8386, 1
      %v8389 = vor.u32 %v8384, %v8388
      %v8391 = vshll.u32 %v8268, 16
      %v8393 = vrot.slane %v8391, 1
      %v8394 = vsel %vm4486, %v8389, %v8393
      %v8396 = vshrl.u32 %v8189, 16
      %v8398 = vshll.u32 %v8189, 16
      %v8400 = vrot.slane %v8398, 1
      %v8401 = vor.u32 %v8396, %v8400
      %v8403 = vshll.u32 %v8269, 16
      %v8405 = vrot.slane %v8403, 1
      %v8406 = vsel %vm4486, %v8401, %v8405
      %v8408 = vshrl.u32 %v8190, 16
      %v8410 = vshll.u32 %v8190, 16
      %v8412 = vrot.slane %v8410, 1
      %v8413 = vor.u32 %v8408, %v8412
      %v8415 = vshll.u32 %v8270, 16
      %v8417 = vrot.slane %v8415, 1
      %v8418 = vsel %vm4486, %v8413, %v8417
      %v8420 = vshrl.u32 %v8191, 16
      %v8422 = vshll.u32 %v8191, 16
      %v8424 = vrot.slane %v8422, 1
      %v8425 = vor.u32 %v8420, %v8424
      %v8427 = vshll.u32 %v8271, 16
      %v8429 = vrot.slane %v8427, 1
      %v8430 = vsel %vm4486, %v8425, %v8429
      %v8432 = vshrl.u32 %v8192, 16
      %v8434 = vshll.u32 %v8192, 16
      %v8436 = vrot.slane %v8434, 1
      %v8437 = vor.u32 %v8432, %v8436
      %v8439 = vshll.u32 %v8272, 16
      %v8441 = vrot.slane %v8439, 1
      %v8442 = vsel %vm4486, %v8437, %v8441
      %v8444 = vshrl.u32 %v8193, 16
      %v8446 = vshll.u32 %v8193, 16
      %v8448 = vrot.slane %v8446, 1
      %v8449 = vor.u32 %v8444, %v8448
      %v8451 = vshll.u32 %v8273, 16
      %v8453 = vrot.slane %v8451, 1
      %v8454 = vsel %vm4486, %v8449, %v8453
      %v8456 = vshrl.u32 %v8194, 16
      %v8458 = vshll.u32 %v8194, 16
      %v8460 = vrot.slane %v8458, 1
      %v8461 = vor.u32 %v8456, %v8460
      %v8463 = vshll.u32 %v8274, 16
      %v8465 = vrot.slane %v8463, 1
      %v8466 = vsel %vm4486, %v8461, %v8465
      %8467 = vrot.lane.b32.xlu0 %v8286, 56
      %v8468 = vpop.permute.xlu0 %8467
      %8469 = vrot.lane.b32.xlu0 %v8298, 56
      %v8470 = vpop.permute.xlu0 %8469
      %8471 = vrot.lane.b32.xlu0 %v8310, 56
      %v8472 = vpop.permute.xlu0 %8471
      %8473 = vrot.lane.b32.xlu0 %v8322, 56
      %v8474 = vpop.permute.xlu0 %8473
      %8475 = vrot.lane.b32.xlu0 %v8334, 56
      %v8476 = vpop.permute.xlu0 %8475
      %8477 = vrot.lane.b32.xlu0 %v8346, 56
      %v8478 = vpop.permute.xlu0 %8477
      %8479 = vrot.lane.b32.xlu0 %v8358, 56
      %v8480 = vpop.permute.xlu0 %8479
      %8481 = vrot.lane.b32.xlu0 %v8370, 56
      %v8482 = vpop.permute.xlu0 %8481
      %8483 = vrot.lane.b32.xlu0 %v8382, 56
      %v8484 = vpop.permute.xlu0 %8483
      %8485 = vrot.lane.b32.xlu0 %v8394, 56
      %v8486 = vpop.permute.xlu0 %8485
      %8487 = vrot.lane.b32.xlu0 %v8406, 56
      %v8488 = vpop.permute.xlu0 %8487
      %8489 = vrot.lane.b32.xlu0 %v8418, 56
      %v8490 = vpop.permute.xlu0 %8489
      %8491 = vrot.lane.b32.xlu0 %v8430, 56
      %v8492 = vpop.permute.xlu0 %8491
      %8493 = vrot.lane.b32.xlu0 %v8442, 56
      %v8494 = vpop.permute.xlu0 %8493
      %8495 = vrot.lane.b32.xlu0 %v8454, 56
      %v8496 = vpop.permute.xlu0 %8495
      %8497 = vrot.lane.b32.xlu0 %v8466, 56
      %v8498 = vpop.permute.xlu0 %8497
      %v8515 = vunpack.c.l.b16 %v7107
      %v8516 = vunpack.c.l.b16 %v7108
      %v8517 = vunpack.c.l.b16 %v7109
      %v8518 = vunpack.c.l.b16 %v7110
      %v8519 = vunpack.c.l.b16 %v7111
      %v8520 = vunpack.c.l.b16 %v7112
      %v8521 = vunpack.c.l.b16 %v7113
      %v8522 = vunpack.c.l.b16 %v7114
      %v8523 = vunpack.c.l.b16 %v7115
      %v8524 = vunpack.c.l.b16 %v7116
      %v8525 = vunpack.c.l.b16 %v7117
      %v8526 = vunpack.c.l.b16 %v7118
      %v8527 = vunpack.c.l.b16 %v7119
      %v8528 = vunpack.c.l.b16 %v7120
      %v8529 = vunpack.c.l.b16 %v7121
      %v8530 = vunpack.c.l.b16 %v7122
      %v8531 = vpack.c.b16 %v8148, %v8515
      %v8532 = vpack.c.b16 %v8150, %v8516
      %v8533 = vpack.c.b16 %v8152, %v8517
      %v8534 = vpack.c.b16 %v8154, %v8518
      %v8535 = vpack.c.b16 %v8156, %v8519
      %v8536 = vpack.c.b16 %v8158, %v8520
      %v8537 = vpack.c.b16 %v8160, %v8521
      %v8538 = vpack.c.b16 %v8162, %v8522
      %v8539 = vpack.c.b16 %v8164, %v8523
      %v8540 = vpack.c.b16 %v8166, %v8524
      %v8541 = vpack.c.b16 %v8168, %v8525
      %v8542 = vpack.c.b16 %v8170, %v8526
      %v8543 = vpack.c.b16 %v8172, %v8527
      %v8544 = vpack.c.b16 %v8174, %v8528
      %v8545 = vpack.c.b16 %v8176, %v8529
      %v8546 = vpack.c.b16 %v8178, %v8530
      %v8547 = vrot.slane %v8531, 1
      %v8548 = vrot.slane %v8259, 1
      %v8549 = vsel %vm4759, %v8547, %v8548
      %v8550 = vrot.slane %v8532, 1
      %v8551 = vrot.slane %v8260, 1
      %v8552 = vsel %vm4759, %v8550, %v8551
      %v8553 = vrot.slane %v8533, 1
      %v8554 = vrot.slane %v8261, 1
      %v8555 = vsel %vm4759, %v8553, %v8554
      %v8556 = vrot.slane %v8534, 1
      %v8557 = vrot.slane %v8262, 1
      %v8558 = vsel %vm4759, %v8556, %v8557
      %v8559 = vrot.slane %v8535, 1
      %v8560 = vrot.slane %v8263, 1
      %v8561 = vsel %vm4759, %v8559, %v8560
      %v8562 = vrot.slane %v8536, 1
      %v8563 = vrot.slane %v8264, 1
      %v8564 = vsel %vm4759, %v8562, %v8563
      %v8565 = vrot.slane %v8537, 1
      %v8566 = vrot.slane %v8265, 1
      %v8567 = vsel %vm4759, %v8565, %v8566
      %v8568 = vrot.slane %v8538, 1
      %v8569 = vrot.slane %v8266, 1
      %v8570 = vsel %vm4759, %v8568, %v8569
      %v8571 = vrot.slane %v8539, 1
      %v8572 = vrot.slane %v8267, 1
      %v8573 = vsel %vm4759, %v8571, %v8572
      %v8574 = vrot.slane %v8540, 1
      %v8575 = vrot.slane %v8268, 1
      %v8576 = vsel %vm4759, %v8574, %v8575
      %v8577 = vrot.slane %v8541, 1
      %v8578 = vrot.slane %v8269, 1
      %v8579 = vsel %vm4759, %v8577, %v8578
      %v8580 = vrot.slane %v8542, 1
      %v8581 = vrot.slane %v8270, 1
      %v8582 = vsel %vm4759, %v8580, %v8581
      %v8583 = vrot.slane %v8543, 1
      %v8584 = vrot.slane %v8271, 1
      %v8585 = vsel %vm4759, %v8583, %v8584
      %v8586 = vrot.slane %v8544, 1
      %v8587 = vrot.slane %v8272, 1
      %v8588 = vsel %vm4759, %v8586, %v8587
      %v8589 = vrot.slane %v8545, 1
      %v8590 = vrot.slane %v8273, 1
      %v8591 = vsel %vm4759, %v8589, %v8590
      %v8592 = vrot.slane %v8546, 1
      %v8593 = vrot.slane %v8274, 1
      %v8594 = vsel %vm4759, %v8592, %v8593
      %8595 = vrot.lane.b32.xlu0 %v8549, 64
      %v8596 = vpop.permute.xlu0 %8595
      %8597 = vrot.lane.b32.xlu0 %v8552, 64
      %v8598 = vpop.permute.xlu0 %8597
      %8599 = vrot.lane.b32.xlu0 %v8555, 64
      %v8600 = vpop.permute.xlu0 %8599
      %8601 = vrot.lane.b32.xlu0 %v8558, 64
      %v8602 = vpop.permute.xlu0 %8601
      %8603 = vrot.lane.b32.xlu0 %v8561, 64
      %v8604 = vpop.permute.xlu0 %8603
      %8605 = vrot.lane.b32.xlu0 %v8564, 64
      %v8606 = vpop.permute.xlu0 %8605
      %8607 = vrot.lane.b32.xlu0 %v8567, 64
      %v8608 = vpop.permute.xlu0 %8607
      %8609 = vrot.lane.b32.xlu0 %v8570, 64
      %v8610 = vpop.permute.xlu0 %8609
      %8611 = vrot.lane.b32.xlu0 %v8573, 64
      %v8612 = vpop.permute.xlu0 %8611
      %8613 = vrot.lane.b32.xlu0 %v8576, 64
      %v8614 = vpop.permute.xlu0 %8613
      %8615 = vrot.lane.b32.xlu0 %v8579, 64
      %v8616 = vpop.permute.xlu0 %8615
      %8617 = vrot.lane.b32.xlu0 %v8582, 64
      %v8618 = vpop.permute.xlu0 %8617
      %8619 = vrot.lane.b32.xlu0 %v8585, 64
      %v8620 = vpop.permute.xlu0 %8619
      %8621 = vrot.lane.b32.xlu0 %v8588, 64
      %v8622 = vpop.permute.xlu0 %8621
      %8623 = vrot.lane.b32.xlu0 %v8591, 64
      %v8624 = vpop.permute.xlu0 %8623
      %8625 = vrot.lane.b32.xlu0 %v8594, 64
      %v8626 = vpop.permute.xlu0 %8625
      %v8628 = vsel %vm1035, %v7187, %v7444
      %v8630 = vsel %vm1035, %v7188, %v7446
      %v8632 = vsel %vm1035, %v7189, %v7448
      %v8634 = vsel %vm1035, %v7190, %v7450
      %v8636 = vsel %vm1035, %v7191, %v7452
      %v8638 = vsel %vm1035, %v7192, %v7454
      %v8640 = vsel %vm1035, %v7193, %v7456
      %v8642 = vsel %vm1035, %v7194, %v7458
      %v8644 = vsel %vm1035, %v7195, %v7460
      %v8646 = vsel %vm1035, %v7196, %v7462
      %v8648 = vsel %vm1035, %v7197, %v7464
      %v8650 = vsel %vm1035, %v7198, %v7466
      %v8652 = vsel %vm1035, %v7199, %v7468
      %v8654 = vsel %vm1035, %v7200, %v7470
      %v8656 = vsel %vm1035, %v7201, %v7472
      %v8658 = vsel %vm1035, %v7202, %v7474
      %v8660 = vsel %vm1104, %v8628, %v7572
      %v8662 = vsel %vm1104, %v8630, %v7574
      %v8664 = vsel %vm1104, %v8632, %v7576
      %v8666 = vsel %vm1104, %v8634, %v7578
      %v8668 = vsel %vm1104, %v8636, %v7580
      %v8670 = vsel %vm1104, %v8638, %v7582
      %v8672 = vsel %vm1104, %v8640, %v7584
      %v8674 = vsel %vm1104, %v8642, %v7586
      %v8676 = vsel %vm1104, %v8644, %v7588
      %v8678 = vsel %vm1104, %v8646, %v7590
      %v8680 = vsel %vm1104, %v8648, %v7592
      %v8682 = vsel %vm1104, %v8650, %v7594
      %v8684 = vsel %vm1104, %v8652, %v7596
      %v8686 = vsel %vm1104, %v8654, %v7598
      %v8688 = vsel %vm1104, %v8656, %v7600
      %v8690 = vsel %vm1104, %v8658, %v7602
      %v8692 = vsel %vm5928, %v8660, %v7684
      %v8694 = vsel %vm5928, %v8662, %v7686
      %v8696 = vsel %vm5928, %v8664, %v7688
      %v8698 = vsel %vm5928, %v8666, %v7690
      %v8700 = vsel %vm5928, %v8668, %v7692
      %v8702 = vsel %vm5928, %v8670, %v7694
      %v8704 = vsel %vm5928, %v8672, %v7696
      %v8706 = vsel %vm5928, %v8674, %v7698
      %v8708 = vsel %vm5928, %v8676, %v7700
      %v8710 = vsel %vm5928, %v8678, %v7702
      %v8712 = vsel %vm5928, %v8680, %v7704
      %v8714 = vsel %vm5928, %v8682, %v7706
      %v8716 = vsel %vm5928, %v8684, %v7708
      %v8718 = vsel %vm5928, %v8686, %v7710
      %v8720 = vsel %vm5928, %v8688, %v7712
      %v8722 = vsel %vm5928, %v8690, %v7714
      %v8724 = vsel %vm5961, %v8692, %v7956
      %v8726 = vsel %vm5961, %v8694, %v7958
      %v8728 = vsel %vm5961, %v8696, %v7960
      %v8730 = vsel %vm5961, %v8698, %v7962
      %v8732 = vsel %vm5961, %v8700, %v7964
      %v8734 = vsel %vm5961, %v8702, %v7966
      %v8736 = vsel %vm5961, %v8704, %v7968
      %v8738 = vsel %vm5961, %v8706, %v7970
      %v8740 = vsel %vm5961, %v8708, %v7972
      %v8742 = vsel %vm5961, %v8710, %v7974
      %v8744 = vsel %vm5961, %v8712, %v7976
      %v8746 = vsel %vm5961, %v8714, %v7978
      %v8748 = vsel %vm5961, %v8716, %v7980
      %v8750 = vsel %vm5961, %v8718, %v7982
      %v8752 = vsel %vm5961, %v8720, %v7984
      %v8754 = vsel %vm5961, %v8722, %v7986
      %v8756 = vsel %vm5994, %v8724, %v8084
      %v8758 = vsel %vm5994, %v8726, %v8086
      %v8760 = vsel %vm5994, %v8728, %v8088
      %v8762 = vsel %vm5994, %v8730, %v8090
      %v8764 = vsel %vm5994, %v8732, %v8092
      %v8766 = vsel %vm5994, %v8734, %v8094
      %v8768 = vsel %vm5994, %v8736, %v8096
      %v8770 = vsel %vm5994, %v8738, %v8098
      %v8772 = vsel %vm5994, %v8740, %v8100
      %v8774 = vsel %vm5994, %v8742, %v8102
      %v8776 = vsel %vm5994, %v8744, %v8104
      %v8778 = vsel %vm5994, %v8746, %v8106
      %v8780 = vsel %vm5994, %v8748, %v8108
      %v8782 = vsel %vm5994, %v8750, %v8110
      %v8784 = vsel %vm5994, %v8752, %v8112
      %v8786 = vsel %vm5994, %v8754, %v8114
      %v8788 = vsel %vm6027, %v8756, %v8196
      %v8790 = vsel %vm6027, %v8758, %v8198
      %v8792 = vsel %vm6027, %v8760, %v8200
      %v8794 = vsel %vm6027, %v8762, %v8202
      %v8796 = vsel %vm6027, %v8764, %v8204
      %v8798 = vsel %vm6027, %v8766, %v8206
      %v8800 = vsel %vm6027, %v8768, %v8208
      %v8802 = vsel %vm6027, %v8770, %v8210
      %v8804 = vsel %vm6027, %v8772, %v8212
      %v8806 = vsel %vm6027, %v8774, %v8214
      %v8808 = vsel %vm6027, %v8776, %v8216
      %v8810 = vsel %vm6027, %v8778, %v8218
      %v8812 = vsel %vm6027, %v8780, %v8220
      %v8814 = vsel %vm6027, %v8782, %v8222
      %v8816 = vsel %vm6027, %v8784, %v8224
      %v8818 = vsel %vm6027, %v8786, %v8226
      %v8820 = vsel %vm6060, %v8788, %v8468
      %v8822 = vsel %vm6060, %v8790, %v8470
      %v8824 = vsel %vm6060, %v8792, %v8472
      %v8826 = vsel %vm6060, %v8794, %v8474
      %v8828 = vsel %vm6060, %v8796, %v8476
      %v8830 = vsel %vm6060, %v8798, %v8478
      %v8832 = vsel %vm6060, %v8800, %v8480
      %v8834 = vsel %vm6060, %v8802, %v8482
      %v8836 = vsel %vm6060, %v8804, %v8484
      %v8838 = vsel %vm6060, %v8806, %v8486
      %v8840 = vsel %vm6060, %v8808, %v8488
      %v8842 = vsel %vm6060, %v8810, %v8490
      %v8844 = vsel %vm6060, %v8812, %v8492
      %v8846 = vsel %vm6060, %v8814, %v8494
      %v8848 = vsel %vm6060, %v8816, %v8496
      %v8850 = vsel %vm6060, %v8818, %v8498
      %v8852 = vsel %vm6093, %v8820, %v8596
      %v8854 = vsel %vm6093, %v8822, %v8598
      %v8856 = vsel %vm6093, %v8824, %v8600
      %v8858 = vsel %vm6093, %v8826, %v8602
      %v8860 = vsel %vm6093, %v8828, %v8604
      %v8862 = vsel %vm6093, %v8830, %v8606
      %v8864 = vsel %vm6093, %v8832, %v8608
      %v8866 = vsel %vm6093, %v8834, %v8610
      %v8868 = vsel %vm6093, %v8836, %v8612
      %v8870 = vsel %vm6093, %v8838, %v8614
      %v8872 = vsel %vm6093, %v8840, %v8616
      %v8874 = vsel %vm6093, %v8842, %v8618
      %v8876 = vsel %vm6093, %v8844, %v8620
      %v8878 = vsel %vm6093, %v8846, %v8622
      %v8880 = vsel %vm6093, %v8848, %v8624
      %v8882 = vsel %vm6093, %v8850, %v8626
      %v8883 = vld [vmem:[%s8] sm:$0xf]
      %v8884 = vld [vmem:[%s8 + $0x4] sm:$0xf]
      %v8885 = vld [vmem:[%s8 + $0x8] sm:$0xf]
      %v8886 = vld [vmem:[%s8 + $0xc] sm:$0xf]
      %v8887 = vld [vmem:[%s8 + $0x10] sm:$0xf]
      %v8888 = vld [vmem:[%s8 + $0x14] sm:$0xf]
      %v8889 = vld [vmem:[%s8 + $0x18] sm:$0xf]
      %v8890 = vld [vmem:[%s8 + $0x1c] sm:$0xf]
      %v8891 = vld [vmem:[%s8 + $0x20] sm:$0xf]
      %v8892 = vld [vmem:[%s9] sm:$0x1]
      %v8894 = vlaneseq
      %v8895 = vshrl.u32 %v8894, 7
      %v8896 = vsub.s32 0, %v8895
      %v8897 = vrot.slane %v8892, %v8896
      %v8908 = vunpack.c.l.b16 %v8883
      %v8909 = vunpack.c.l.b16 %v8884
      %v8910 = vunpack.c.l.b16 %v8885
      %v8911 = vunpack.c.l.b16 %v8886
      %v8912 = vunpack.c.l.b16 %v8887
      %v8913 = vunpack.c.l.b16 %v8888
      %v8914 = vunpack.c.l.b16 %v8889
      %v8915 = vunpack.c.l.b16 %v8890
      %v8916 = vunpack.c.l.b16 %v8891
      %v8917 = vpack.c.b16 %v8909, %v8908
      %v8918 = vpack.c.b16 %v8911, %v8910
      %v8919 = vpack.c.b16 %v8913, %v8912
      %v8920 = vpack.c.b16 %v8915, %v8914
      %v8921 = vpack.c.b16 %v8916, %v8916
      %v8926 = vsel %vm6169, %v8852, 0
      %v8928 = vsel %vm6169, %v8854, 0
      %v8930 = vsel %vm6169, %v8856, 0
      %v8932 = vsel %vm6169, %v8858, 0
      %v8934 = vsel %vm6169, %v8860, 0
      %v8936 = vsel %vm6169, %v8862, 0
      %v8938 = vsel %vm6169, %v8864, 0
      %v8940 = vsel %vm6169, %v8866, 0
      %v8942 = vsel %vm6169, %v8868, 0
      %v8944 = vsel %vm6169, %v8870, 0
      %v8946 = vsel %vm6169, %v8872, 0
      %v8948 = vsel %vm6169, %v8874, 0
      %v8950 = vsel %vm6169, %v8876, 0
      %v8952 = vsel %vm6169, %v8878, 0
      %v8954 = vsel %vm6169, %v8880, 0
      %v8956 = vsel %vm6169, %v8882, 0
      %v8959 = vsel %vm6202, %v8921, 0
      %8961 = vmatprep.subr.bf16.mxu0 0
      %8962 = vmatpush1.bf16.msra.mxu0 %v8917
      %8963 = vmatprep.subr.bf16.mxu0 0
      %8964 = vmatpush1.bf16.msra.mxu0 %v8918
      %8965 = vmatprep.subr.bf16.mxu0 0
      %8966 = vmatpush1.bf16.msra.mxu0 %v8919
      %8967 = vmatprep.subr.bf16.mxu0 0
      %8968 = vmatpush1.bf16.msra.mxu0 %v8920
      %8969 = vmatprep.subr.bf16.mxu0 0
      %8970 = vmatpush1.bf16.msra.mxu0 %v8959
      %8971 = vmatprep.subr.bf16.mxu0 0
      %8972 = vmatpush1.bf16.msra.mxu0 0
      %8973 = vmatprep.subr.bf16.mxu0 0
      %8974 = vmatpush1.bf16.msra.mxu0 0
      %8975 = vmatprep.subr.bf16.mxu0 0
      %8976 = vmatpush1.bf16.msra.mxu0 0
      %8977 = vmatprep.subr.bf16.mxu0 0
      %8978 = vmatpush1.bf16.msra.mxu0 0
      %8979 = vmatprep.subr.bf16.mxu0 0
      %8980 = vmatpush1.bf16.msra.mxu0 0
      %8981 = vmatprep.subr.bf16.mxu0 0
      %8982 = vmatpush1.bf16.msra.mxu0 0
      %8983 = vmatprep.subr.bf16.mxu0 0
      %8984 = vmatpush1.bf16.msra.mxu0 0
      %8985 = vmatprep.subr.bf16.mxu0 0
      %8986 = vmatpush1.bf16.msra.mxu0 0
      %8987 = vmatprep.subr.bf16.mxu0 0
      %8988 = vmatpush1.bf16.msra.mxu0 0
      %8989 = vmatprep.subr.bf16.mxu0 0
      %8990 = vmatpush1.bf16.msra.mxu0 0
      %8991 = vmatprep.subr.bf16.mxu0 0
      %8992 = vmatpush1.bf16.msra.mxu0 0
      %8993 = vmatprep.mubr.bf16.mxu0 0
      %8994 = vmatmul.mubr.bf16.gmra.mrb[0].mxu0 %v8926
      %v8995 = vpop.f32.mrb[0].mxu0
      %v8996 = vadd.f32 %v8897, %v8995
      %v8997 = vpop.f32.mrb[0].mxu0
      %v8998 = vpop.f32.mrb[0].mxu0
      %v8999 = vadd.f32 %v8897, %v8998
      %v9000 = vpop.f32.mrb[0].mxu0
      %9001 = vmatprep.mubr.bf16.mxu0 0
      %9002 = vmatmul.mubr.bf16.gmra.mrb[0].mxu0 %v8928
      %v9003 = vpop.f32.mrb[0].mxu0
      %v9004 = vadd.f32 %v8897, %v9003
      %v9005 = vpop.f32.mrb[0].mxu0
      %v9006 = vpop.f32.mrb[0].mxu0
      %v9007 = vadd.f32 %v8897, %v9006
      %v9008 = vpop.f32.mrb[0].mxu0
      %9009 = vmatprep.mubr.bf16.mxu0 0
      %9010 = vmatmul.mubr.bf16.gmra.mrb[0].mxu0 %v8930
      %v9011 = vpop.f32.mrb[0].mxu0
      %v9012 = vadd.f32 %v8897, %v9011
      %v9013 = vpop.f32.mrb[0].mxu0
      %v9014 = vpop.f32.mrb[0].mxu0
      %v9015 = vadd.f32 %v8897, %v9014
      %v9016 = vpop.f32.mrb[0].mxu0
      %9017 = vmatprep.mubr.bf16.mxu0 0
      %9018 = vmatmul.mubr.bf16.gmra.mrb[0].mxu0 %v8932
      %v9019 = vpop.f32.mrb[0].mxu0
      %v9020 = vadd.f32 %v8897, %v9019
      %v9021 = vpop.f32.mrb[0].mxu0
      %v9022 = vpop.f32.mrb[0].mxu0
      %v9023 = vadd.f32 %v8897, %v9022
      %v9024 = vpop.f32.mrb[0].mxu0
      %9025 = vmatprep.mubr.bf16.mxu0 0
      %9026 = vmatmul.mubr.bf16.gmra.mrb[0].mxu0 %v8934
      %v9027 = vpop.f32.mrb[0].mxu0
      %v9028 = vadd.f32 %v8897, %v9027
      %v9029 = vpop.f32.mrb[0].mxu0
      %v9030 = vpop.f32.mrb[0].mxu0
      %v9031 = vadd.f32 %v8897, %v9030
      %v9032 = vpop.f32.mrb[0].mxu0
      %9033 = vmatprep.mubr.bf16.mxu0 0
      %9034 = vmatmul.mubr.bf16.gmra.mrb[0].mxu0 %v8936
      %v9035 = vpop.f32.mrb[0].mxu0
      %v9036 = vadd.f32 %v8897, %v9035
      %v9037 = vpop.f32.mrb[0].mxu0
      %v9038 = vpop.f32.mrb[0].mxu0
      %v9039 = vadd.f32 %v8897, %v9038
      %v9040 = vpop.f32.mrb[0].mxu0
      %9041 = vmatprep.mubr.bf16.mxu0 0
      %9042 = vmatmul.mubr.bf16.gmra.mrb[0].mxu0 %v8938
      %v9043 = vpop.f32.mrb[0].mxu0
      %v9044 = vadd.f32 %v8897, %v9043
      %v9045 = vpop.f32.mrb[0].mxu0
      %v9046 = vpop.f32.mrb[0].mxu0
      %v9047 = vadd.f32 %v8897, %v9046
      %v9048 = vpop.f32.mrb[0].mxu0
      %9049 = vmatprep.mubr.bf16.mxu0 0
      %9050 = vmatmul.mubr.bf16.gmra.mrb[0].mxu0 %v8940
      %v9051 = vpop.f32.mrb[0].mxu0
      %v9052 = vadd.f32 %v8897, %v9051
      %v9053 = vpop.f32.mrb[0].mxu0
      %v9054 = vpop.f32.mrb[0].mxu0
      %v9055 = vadd.f32 %v8897, %v9054
      %v9056 = vpop.f32.mrb[0].mxu0
      %9057 = vmatprep.mubr.bf16.mxu0 0
      %9058 = vmatmul.mubr.bf16.gmra.mrb[0].mxu0 %v8942
      %v9059 = vpop.f32.mrb[0].mxu0
      %v9060 = vadd.f32 %v8897, %v9059
      %v9061 = vpop.f32.mrb[0].mxu0
      %v9062 = vpop.f32.mrb[0].mxu0
      %v9063 = vadd.f32 %v8897, %v9062
      %v9064 = vpop.f32.mrb[0].mxu0
      %9065 = vmatprep.mubr.bf16.mxu0 0
      %9066 = vmatmul.mubr.bf16.gmra.mrb[0].mxu0 %v8944
      %v9067 = vpop.f32.mrb[0].mxu0
      %v9068 = vadd.f32 %v8897, %v9067
      %v9069 = vpop.f32.mrb[0].mxu0
      %v9070 = vpop.f32.mrb[0].mxu0
      %v9071 = vadd.f32 %v8897, %v9070
      %v9072 = vpop.f32.mrb[0].mxu0
      %9073 = vmatprep.mubr.bf16.mxu0 0
      %9074 = vmatmul.mubr.bf16.gmra.mrb[0].mxu0 %v8946
      %v9075 = vpop.f32.mrb[0].mxu0
      %v9076 = vadd.f32 %v8897, %v9075
      %v9077 = vpop.f32.mrb[0].mxu0
      %v9078 = vpop.f32.mrb[0].mxu0
      %v9079 = vadd.f32 %v8897, %v9078
      %v9080 = vpop.f32.mrb[0].mxu0
      %9081 = vmatprep.mubr.bf16.mxu0 0
      %9082 = vmatmul.mubr.bf16.gmra.mrb[0].mxu0 %v8948
      %v9083 = vpop.f32.mrb[0].mxu0
      %v9084 = vadd.f32 %v8897, %v9083
      %v9085 = vpop.f32.mrb[0].mxu0
      %v9086 = vpop.f32.mrb[0].mxu0
      %v9087 = vadd.f32 %v8897, %v9086
      %v9088 = vpop.f32.mrb[0].mxu0
      %9089 = vmatprep.mubr.bf16.mxu0 0
      %9090 = vmatmul.mubr.bf16.gmra.mrb[0].mxu0 %v8950
      %v9091 = vpop.f32.mrb[0].mxu0
      %v9092 = vadd.f32 %v8897, %v9091
      %v9093 = vpop.f32.mrb[0].mxu0
      %v9094 = vpop.f32.mrb[0].mxu0
      %v9095 = vadd.f32 %v8897, %v9094
      %v9096 = vpop.f32.mrb[0].mxu0
      %9097 = vmatprep.mubr.bf16.mxu0 0
      %9098 = vmatmul.mubr.bf16.gmra.mrb[0].mxu0 %v8952
      %v9099 = vpop.f32.mrb[0].mxu0
      %v9100 = vadd.f32 %v8897, %v9099
      %v9101 = vpop.f32.mrb[0].mxu0
      %v9102 = vpop.f32.mrb[0].mxu0
      %v9103 = vadd.f32 %v8897, %v9102
      %v9104 = vpop.f32.mrb[0].mxu0
      %9105 = vmatprep.mubr.bf16.mxu0 0
      %9106 = vmatmul.mubr.bf16.gmra.mrb[0].mxu0 %v8954
      %v9107 = vpop.f32.mrb[0].mxu0
      %v9108 = vadd.f32 %v8897, %v9107
      %v9109 = vpop.f32.mrb[0].mxu0
      %v9110 = vpop.f32.mrb[0].mxu0
      %v9111 = vadd.f32 %v8897, %v9110
      %v9112 = vpop.f32.mrb[0].mxu0
      %9113 = vmatprep.mubr.bf16.mxu0 0
      %9114 = vmatmul.mubr.bf16.gmra.mrb[0].mxu0 %v8956
      %v9115 = vpop.f32.mrb[0].mxu0
      %v9116 = vadd.f32 %v8897, %v9115
      %v9117 = vpop.f32.mrb[0].mxu0
      %v9118 = vpop.f32.mrb[0].mxu0
      %v9119 = vadd.f32 %v8897, %v9118
      %v9120 = vpop.f32.mrb[0].mxu0
      %9121 = vdwg.mxu0
      %v9122 = vmax.f32 %v8996, 0.0
      %v9123 = vmax.f32 %v8999, 0.0
      %v9124 = vmax.f32 %v9004, 0.0
      %v9125 = vmax.f32 %v9007, 0.0
      %v9126 = vmax.f32 %v9012, 0.0
      %v9127 = vmax.f32 %v9015, 0.0
      %v9128 = vmax.f32 %v9020, 0.0
      %v9129 = vmax.f32 %v9023, 0.0
      %v9130 = vmax.f32 %v9028, 0.0
      %v9131 = vmax.f32 %v9031, 0.0
      %v9132 = vmax.f32 %v9036, 0.0
      %v9133 = vmax.f32 %v9039, 0.0
      %v9134 = vmax.f32 %v9044, 0.0
      %v9135 = vmax.f32 %v9047, 0.0
      %v9136 = vmax.f32 %v9052, 0.0
      %v9137 = vmax.f32 %v9055, 0.0
      %v9138 = vmax.f32 %v9060, 0.0
      %v9139 = vmax.f32 %v9063, 0.0
      %v9140 = vmax.f32 %v9068, 0.0
      %v9141 = vmax.f32 %v9071, 0.0
      %v9142 = vmax.f32 %v9076, 0.0
      %v9143 = vmax.f32 %v9079, 0.0
      %v9144 = vmax.f32 %v9084, 0.0
      %v9145 = vmax.f32 %v9087, 0.0
      %v9146 = vmax.f32 %v9092, 0.0
      %v9147 = vmax.f32 %v9095, 0.0
      %v9148 = vmax.f32 %v9100, 0.0
      %v9149 = vmax.f32 %v9103, 0.0
      %v9150 = vmax.f32 %v9108, 0.0
      %v9151 = vmax.f32 %v9111, 0.0
      %v9152 = vmax.f32 %v9116, 0.0
      %v9153 = vmax.f32 %v9119, 0.0
      %9154 = vxpose.xlu0.b32.start [1/16] %v9122, 128
      %9155 = vxpose.xlu0.b32.cont [2/16] %v9123, 128
      %9156 = vxpose.xlu0.b32.cont [3/16] %v9124, 128
      %9157 = vxpose.xlu0.b32.cont [4/16] %v9125, 128
      %9158 = vxpose.xlu0.b32.cont [5/16] %v9126, 128
      %9159 = vxpose.xlu0.b32.cont [6/16] %v9127, 128
      %9160 = vxpose.xlu0.b32.cont [7/16] %v9128, 128
      %9161 = vxpose.xlu0.b32.cont [8/16] %v9129, 128
      %9162 = vxpose.xlu0.b32.cont [9/16] %v9130, 128
      %9163 = vxpose.xlu0.b32.cont [10/16] %v9131, 128
      %9164 = vxpose.xlu0.b32.cont [11/16] %v9132, 128
      %9165 = vxpose.xlu0.b32.cont [12/16] %v9133, 128
      %9166 = vxpose.xlu0.b32.cont [13/16] %v9134, 128
      %9167 = vxpose.xlu0.b32.cont [14/16] %v9135, 128
      %9168 = vxpose.xlu0.b32.cont [15/16] %v9136, 128
      %9169 = vxpose.xlu0.b32.end [16/16] %v9137, 128
      %v9170 = vpop.trf.xlu0
      %v9171 = vpop.trf.xlu0
      %v9172 = vpop.trf.xlu0
      %v9173 = vpop.trf.xlu0
      %v9174 = vpop.trf.xlu0
      %v9175 = vpop.trf.xlu0
      %v9176 = vpop.trf.xlu0
      %v9177 = vpop.trf.xlu0
      %v9178 = vpop.trf.xlu0
      %v9179 = vpop.trf.xlu0
      %v9180 = vpop.trf.xlu0
      %v9181 = vpop.trf.xlu0
      %v9182 = vpop.trf.xlu0
      %v9183 = vpop.trf.xlu0
      %v9184 = vpop.trf.xlu0
      %v9185 = vpop.trf.xlu0
      %9186 = vxpose.xlu0.b32.start [1/16] %v9138, 128
      %9187 = vxpose.xlu0.b32.cont [2/16] %v9139, 128
      %9188 = vxpose.xlu0.b32.cont [3/16] %v9140, 128
      %9189 = vxpose.xlu0.b32.cont [4/16] %v9141, 128
      %9190 = vxpose.xlu0.b32.cont [5/16] %v9142, 128
      %9191 = vxpose.xlu0.b32.cont [6/16] %v9143, 128
      %9192 = vxpose.xlu0.b32.cont [7/16] %v9144, 128
      %9193 = vxpose.xlu0.b32.cont [8/16] %v9145, 128
      %9194 = vxpose.xlu0.b32.cont [9/16] %v9146, 128
      %9195 = vxpose.xlu0.b32.cont [10/16] %v9147, 128
      %9196 = vxpose.xlu0.b32.cont [11/16] %v9148, 128
      %9197 = vxpose.xlu0.b32.cont [12/16] %v9149, 128
      %9198 = vxpose.xlu0.b32.cont [13/16] %v9150, 128
      %9199 = vxpose.xlu0.b32.cont [14/16] %v9151, 128
      %9200 = vxpose.xlu0.b32.cont [15/16] %v9152, 128
      %9201 = vxpose.xlu0.b32.end [16/16] %v9153, 128
      %v9202 = vpop.trf.xlu0
      %v9203 = vpop.trf.xlu0
      %v9204 = vpop.trf.xlu0
      %v9205 = vpop.trf.xlu0
      %v9206 = vpop.trf.xlu0
      %v9207 = vpop.trf.xlu0
      %v9208 = vpop.trf.xlu0
      %v9209 = vpop.trf.xlu0
      %v9210 = vpop.trf.xlu0
      %v9211 = vpop.trf.xlu0
      %v9212 = vpop.trf.xlu0
      %v9213 = vpop.trf.xlu0
      %v9214 = vpop.trf.xlu0
      %v9215 = vpop.trf.xlu0
      %v9216 = vpop.trf.xlu0
      %v9217 = vpop.trf.xlu0
      %9218 = vst [vmem:[%s376] sm:$0xff] %v9170
      %9219 = vst [vmem:[%s376 + $0x8] sm:$0xff] %v9202
      %p9220 = scmp.lt.s32.totalorder %s21, 1
      %s9221 = scalar_select %p9220, %s21, 1
      %s9222 = smul.addr %s9221, 2
      %s9223 = smul.addr %s9222, 8
      %s9224 = scalar_lea.vmem %s10, %s9223
      // Predicated region
      $region61: #{decoder_block_forward.1} parent=59 // pred_check
        %p9225 = pneg %p259
      $region62: #{decoder_block_forward.1} parent=59 // pred_check_branch
        %9227 = sbr.rel (%p9225) target = $region64
      $region63: #{decoder_block_forward.1} parent=59 // pred_region
        _
      $region64: #{decoder_block_forward.1} parent=59 // pred_fallthru
        _
    $region60: #{decoder_block_forward.1} parent=5 // pred_fallthru
      _
    %p9228 = scmp.le.s32.totalorder 2, %s16
    // Predicated region
    $region65: #{decoder_block_forward.1} parent=5 // pred_check
      %p9229 = pneg %p9228
    $region66: #{decoder_block_forward.1} parent=5 // pred_check_branch
      %9231 = sbr.rel (%p9229) target = $region68
    $region67: #{decoder_block_forward.1} parent=5 // pred_region
      %s9232 = ssub.s32 %s16, 2
      // Predicated region
      $region69: #{decoder_block_forward.1} parent=67 // pred_check
        %p9233 = pneg %p265
      $region70: #{decoder_block_forward.1} parent=67 // pred_check_branch
        %9235 = sbr.rel (%p9233) target = $region72
      $region71: #{decoder_block_forward.1} parent=67 // pred_region
        %p9236 = scmp.lt.s32.totalorder %s22, 1
        %s9237 = scalar_select %p9236, %s22, 1
        %s9238 = smul.addr %s9237, 2
        %s9239 = smul.addr %s9238, 8
        %s9240 = scalar_lea.vmem %s10, %s9239
      $region72: #{decoder_block_forward.1} parent=67 // pred_fallthru
        _
    $region68: #{decoder_block_forward.1} parent=5 // pred_fallthru
      _
  $region6: #{decoder_block_forward.1} parent=0 // loop_footer
    %s20 = sadd.s32 1, %s16
  $region7: #{decoder_block_forward.1} parent=0 // loop_footer_branch
    %15 = sbr.rel target = $region3
  $region8: #{decoder_block_forward.1} parent=0 // loop_exit
    _

</llo_original>
